<compile_context>
chip_gen: v7x
topology: tpu7x:2x2x1
jax: 0.10.0
libtpu: 0.0.40
codegen_flags: <defaults>
</compile_context>

<pallas_src>
import functools

import jax
import jax.numpy as jnp
import numpy as np
from jax.experimental import pallas as pl
from jax.experimental.pallas import tpu as pltpu


# ----------------------------------------------------------------------------
# Fused kernel: embedding -> num_layers encoder layers -> last step -> fc_out
# ----------------------------------------------------------------------------
def _fused_forward_kernel(x_ref, bias_ref, valid_ref, pe_ref,
                          emb_w_ref, emb_b_ref,
                          wq_ref, bq_ref, wk_ref, bk_ref, wv_ref, bv_ref,
                          wo_ref, bo_ref, g1_ref, be1_ref,
                          w1_ref, b1_ref, w2_ref, b2_ref, g2_ref, be2_ref,
                          fc_w_ref, fc_b_ref, o_ref,
                          *, num_heads, num_layers):
    Bh, S, In = x_ref.shape                  # Bh = rows handled by this grid step
    D = emb_w_ref.shape[1]
    hd = D // num_heads
    scale = 1.0 / float(np.sqrt(hd))

    # ---- embedding Linear + positional encoding (M = Bh*S rows at once) ----
    x2 = x_ref[...].reshape(Bh * S, In)
    emb = jnp.dot(x2, emb_w_ref[...],
                  preferred_element_type=jnp.float32) + emb_b_ref[...]
    x3 = emb.reshape(Bh, S, D) + pe_ref[...][None, :, :]

    # Additive key-padding bias, broadcast once (hoisted out of head loop).
    bias_b = jnp.broadcast_to(bias_ref[...], (Bh, S, S))

    # ---- post-norm TransformerEncoderLayer stack (static unroll) ----
    for l in range(num_layers):
        x2 = x3.reshape(Bh * S, D)
        q = jnp.dot(x2, wq_ref[l], preferred_element_type=jnp.float32) + bq_ref[l]
        k = jnp.dot(x2, wk_ref[l], preferred_element_type=jnp.float32) + bk_ref[l]
        v = jnp.dot(x2, wv_ref[l], preferred_element_type=jnp.float32) + bv_ref[l]
        q3 = q.reshape(Bh, S, D)
        k3 = k.reshape(Bh, S, D)
        v3 = v.reshape(Bh, S, D)

        # Multi-head attention, batched over the Bh rows per head.
        ctx_heads = []
        for h in range(num_heads):
            lo = h * hd
            qh = q3[:, :, lo:lo + hd]
            kh = k3[:, :, lo:lo + hd]
            vh = v3[:, :, lo:lo + hd]
            s = jnp.einsum("bqd,bkd->bqk", qh, kh,
                           preferred_element_type=jnp.float32) * scale
            s = s + bias_b
            s = s - jnp.max(s, axis=-1, keepdims=True)
            p = jnp.exp(s)
            p = p / jnp.sum(p, axis=-1, keepdims=True)
            ctx_heads.append(jnp.einsum("bqk,bkd->bqd", p, vh,
                                        preferred_element_type=jnp.float32))
        # Single K=D output projection (concat(heads) @ Wo).
        ctx2 = jnp.concatenate(ctx_heads, axis=-1).reshape(Bh * S, D)
        attn = jnp.dot(ctx2, wo_ref[l],
                       preferred_element_type=jnp.float32) + bo_ref[l]

        # Residual + LayerNorm 1
        h1 = x2 + attn
        mu1 = jnp.mean(h1, axis=-1, keepdims=True)
        var1 = jnp.mean((h1 - mu1) ** 2, axis=-1, keepdims=True)
        h1 = (h1 - mu1) * jax.lax.rsqrt(var1 + 1e-5) * g1_ref[l] + be1_ref[l]

        # Feed-forward (Linear -> ReLU -> Linear)
        f = jnp.dot(h1, w1_ref[l], preferred_element_type=jnp.float32) + b1_ref[l]
        f = jnp.maximum(f, 0.0)
        f = jnp.dot(f, w2_ref[l], preferred_element_type=jnp.float32) + b2_ref[l]

        # Residual + LayerNorm 2
        h2 = h1 + f
        mu2 = jnp.mean(h2, axis=-1, keepdims=True)
        var2 = jnp.mean((h2 - mu2) ** 2, axis=-1, keepdims=True)
        h2 = (h2 - mu2) * jax.lax.rsqrt(var2 + 1e-5) * g2_ref[l] + be2_ref[l]
        x3 = h2.reshape(Bh, S, D)

    # ---- last time step -> fc_out -> zero invalid rows ----
    x_last = x3[:, S - 1, :]                                      # (Bh, D)
    y = jnp.dot(x_last, fc_w_ref[...],
                preferred_element_type=jnp.float32) + fc_b_ref[...]
    y = y * valid_ref[...].reshape(Bh, 1)
    o_ref[...] = y.reshape(Bh, 1, D)


# ----------------------------------------------------------------------------
# Wrapper
# ----------------------------------------------------------------------------
def label_seq_transformer(paths, mask, params, *, num_heads):
    B, S, In = paths.shape
    D = params["emb_w"].shape[1]
    L = len(params["layers"])
    assert S <= params["pe"].shape[0], "positional encoding supports seq_len <= 9"

    # TODO(synk): PyTorch's dynamic boolean gather/scatter (paths[valid_rows] /
    # result[valid_rows] = ...) has no static-shape Pallas equivalent; we run
    # all rows (empty-mask rows attend to position 0) and zero their outputs.
    valid = jnp.any(mask, axis=1)                                   # (B,)
    mask_safe = jnp.where(valid[:, None], mask, jnp.arange(S)[None, :] == 0)
    key_bias = jnp.where(mask_safe, 0.0, -1e30).astype(jnp.float32).reshape(B, 1, S)
    valid_f = valid.astype(jnp.float32).reshape(B, 1, 1)
    paths_f = paths.astype(jnp.float32)
    pe_s = params["pe"][:S]                                         # (S, D)

    # Stack per-layer weights so the whole stack is a handful of arrays.
    def stack(name):
        return jnp.stack([lp[name] for lp in params["layers"]])
    wq, bq = stack("wq"), stack("bq")
    wk, bk = stack("wk"), stack("bk")
    wv, bv = stack("wv"), stack("bv")
    wo, bo = stack("wo"), stack("bo")
    g1, be1 = stack("g1"), stack("be1")
    w1, b1 = stack("w1"), stack("b1")
    w2, b2 = stack("w2"), stack("b2")
    g2, be2 = stack("g2"), stack("be2")

    # Split the batch over a small parallel grid so both v7x TensorCores are
    # used; harmless one extra (sequential) step on v5e/v6e.
    n_split = 2 if (B % 2 == 0 and B >= 2) else 1
    Bh = B // n_split

    def split_spec(full_shape):
        blk = (Bh,) + tuple(full_shape[1:])
        nd = len(full_shape)
        return pl.BlockSpec(blk, lambda i, _nd=nd: (i,) + (0,) * (_nd - 1))

    def whole_spec(arr):
        nd = arr.ndim
        return pl.BlockSpec(arr.shape, lambda i, _nd=nd: (0,) * _nd)

    kernel_fn = functools.partial(_fused_forward_kernel,
                                  num_heads=num_heads, num_layers=L)

    out3 = pl.pallas_call(
        kernel_fn,
        out_shape=jax.ShapeDtypeStruct((B, 1, D), jnp.float32),
        grid=(n_split,),
        in_specs=[split_spec((B, S, In)),        # paths
                  split_spec((B, 1, S)),         # key-pad bias
                  split_spec((B, 1, 1)),         # valid flags
                  whole_spec(pe_s),
                  whole_spec(params["emb_w"]), whole_spec(params["emb_b"]),
                  whole_spec(wq), whole_spec(bq),
                  whole_spec(wk), whole_spec(bk),
                  whole_spec(wv), whole_spec(bv),
                  whole_spec(wo), whole_spec(bo),
                  whole_spec(g1), whole_spec(be1),
                  whole_spec(w1), whole_spec(b1),
                  whole_spec(w2), whole_spec(b2),
                  whole_spec(g2), whole_spec(be2),
                  whole_spec(params["fc_w"]), whole_spec(params["fc_b"])],
        out_specs=split_spec((B, 1, D)),
        compiler_params=pltpu.CompilerParams(
            dimension_semantics=("parallel",),
            vmem_limit_bytes=32 * 1024 * 1024),
    )(paths_f, key_bias, valid_f, pe_s,
      params["emb_w"], params["emb_b"],
      wq, bq, wk, bk, wv, bv, wo, bo, g1, be1, w1, b1, w2, b2, g2, be2,
      params["fc_w"], params["fc_b"])

    return out3.reshape(B, D)


# ----------------------------------------------------------------------------
# Deterministic parameter init (shapes from the module __init__)
# ----------------------------------------------------------------------------
def init_params(key, input_dim, model_dim, num_layers, dim_ff=2048):
    keys = jax.random.split(key, 3 + num_layers)

    def lin(k, fan_in, fan_out):
        kw, kb = jax.random.split(k)
        lim = 1.0 / float(np.sqrt(fan_in))
        w = jax.random.uniform(kw, (fan_in, fan_out), jnp.float32, -lim, lim)
        b = jax.random.uniform(kb, (1, fan_out), jnp.float32, -lim, lim)
        return w, b

    emb_w, emb_b = lin(keys[0], input_dim, model_dim)
    # nn.Parameter(torch.zeros(1, 9, model_dim)) — same shape; small random
    # values so the positional-encoding add is actually exercised.
    pe = 0.02 * jax.random.normal(keys[1], (9, model_dim), jnp.float32)
    fc_w, fc_b = lin(keys[2], model_dim, model_dim)

    layers = []
    for i in range(num_layers):
        lk = jax.random.split(keys[3 + i], 6)
        wq, bq = lin(lk[0], model_dim, model_dim)
        wk, bk = lin(lk[1], model_dim, model_dim)
        wv, bv = lin(lk[2], model_dim, model_dim)
        wo, bo = lin(lk[3], model_dim, model_dim)
        w1, b1 = lin(lk[4], model_dim, dim_ff)
        w2, b2 = lin(lk[5], dim_ff, model_dim)
        layers.append(dict(
            wq=wq, bq=bq, wk=wk, bk=bk, wv=wv, bv=bv, wo=wo, bo=bo,
            g1=jnp.ones((1, model_dim), jnp.float32),
            be1=jnp.zeros((1, model_dim), jnp.float32),
            w1=w1, b1=b1, w2=w2, b2=b2,
            g2=jnp.ones((1, model_dim), jnp.float32),
            be2=jnp.zeros((1, model_dim), jnp.float32)))
    return dict(emb_w=emb_w, emb_b=emb_b, pe=pe, fc_w=fc_w, fc_b=fc_b,
                layers=layers)


# ----------------------------------------------------------------------------
# Pure-JAX reference (mirrors the PyTorch forward, eval-mode)
# ----------------------------------------------------------------------------
def reference(paths, mask, params, *, num_heads):
    B, S, _ = paths.shape
    D = params["emb_w"].shape[1]
    hd = D // num_heads
    valid = jnp.any(mask, axis=1)
    mask_safe = jnp.where(valid[:, None], mask, jnp.arange(S)[None, :] == 0)
    bias = jnp.where(mask_safe, 0.0, -1e30)[:, None, None, :]
    x = paths @ params["emb_w"] + params["emb_b"] + params["pe"][:S][None]
    for lp in params["layers"]:
        q = (x @ lp["wq"] + lp["bq"]).reshape(B, S, num_heads, hd).transpose(0, 2, 1, 3)
        k = (x @ lp["wk"] + lp["bk"]).reshape(B, S, num_heads, hd).transpose(0, 2, 1, 3)
        v = (x @ lp["wv"] + lp["bv"]).reshape(B, S, num_heads, hd).transpose(0, 2, 1, 3)
        s = jnp.einsum("bhqd,bhkd->bhqk", q, k) / np.sqrt(hd) + bias
        p = jax.nn.softmax(s, axis=-1)
        a = jnp.einsum("bhqk,bhkd->bhqd", p, v).transpose(0, 2, 1, 3).reshape(B, S, D)
        a = a @ lp["wo"] + lp["bo"]
        h1 = x + a
        h1 = (h1 - h1.mean(-1, keepdims=True)) / jnp.sqrt(
            h1.var(-1, keepdims=True) + 1e-5) * lp["g1"] + lp["be1"]
        f = jnp.maximum(h1 @ lp["w1"] + lp["b1"], 0.0) @ lp["w2"] + lp["b2"]
        h2 = h1 + f
        x = (h2 - h2.mean(-1, keepdims=True)) / jnp.sqrt(
            h2.var(-1, keepdims=True) + 1e-5) * lp["g2"] + lp["be2"]
    out = x[:, -1, :] @ params["fc_w"] + params["fc_b"]
    return out * valid[:, None].astype(jnp.float32)


# ----------------------------------------------------------------------------
if __name__ == "__main__":
    B, S, IN_DIM, MODEL_DIM, NUM_HEADS, NUM_LAYERS = 4, 8, 16, 32, 4, 2

    key = jax.random.PRNGKey(0)
    kp, kx = jax.random.split(key)
    params = init_params(kp, IN_DIM, MODEL_DIM, NUM_LAYERS)

    paths = jax.random.normal(kx, (B, S, IN_DIM), jnp.float32)
    lengths = jnp.array([5, 0, 8, 3])          # row 1 is fully padded (invalid)
    mask = jnp.arange(S)[None, :] < lengths[:, None]                 # (B, S) bool

    out = label_seq_transformer(paths, mask, params, num_heads=NUM_HEADS)
    out = jax.block_until_ready(out)

    ref = reference(paths, mask, params, num_heads=NUM_HEADS)
    np.testing.assert_allclose(np.asarray(out), np.asarray(ref),
                               atol=2e-4, rtol=2e-4)
    print("KERNEL_OK")
</pallas_src>

<mosaic_0001>
module attributes {stable_mosaic.version = 11 : i64} {
  func.func @_fused_forward_kernel(%arg0: i32, %arg1: memref<2x8x16xf32, #tpu.memory_space<vmem>>, %arg2: memref<2x1x8xf32, #tpu.memory_space<vmem>>, %arg3: memref<2x1x1xf32, #tpu.memory_space<vmem>>, %arg4: memref<8x32xf32, #tpu.memory_space<vmem>>, %arg5: memref<16x32xf32, #tpu.memory_space<vmem>>, %arg6: memref<1x32xf32, #tpu.memory_space<vmem>>, %arg7: memref<2x32x32xf32, #tpu.memory_space<vmem>>, %arg8: memref<2x1x32xf32, #tpu.memory_space<vmem>>, %arg9: memref<2x32x32xf32, #tpu.memory_space<vmem>>, %arg10: memref<2x1x32xf32, #tpu.memory_space<vmem>>, %arg11: memref<2x32x32xf32, #tpu.memory_space<vmem>>, %arg12: memref<2x1x32xf32, #tpu.memory_space<vmem>>, %arg13: memref<2x32x32xf32, #tpu.memory_space<vmem>>, %arg14: memref<2x1x32xf32, #tpu.memory_space<vmem>>, %arg15: memref<2x1x32xf32, #tpu.memory_space<vmem>>, %arg16: memref<2x1x32xf32, #tpu.memory_space<vmem>>, %arg17: memref<2x32x2048xf32, #tpu.memory_space<vmem>>, %arg18: memref<2x1x2048xf32, #tpu.memory_space<vmem>>, %arg19: memref<2x2048x32xf32, #tpu.memory_space<vmem>>, %arg20: memref<2x1x32xf32, #tpu.memory_space<vmem>>, %arg21: memref<2x1x32xf32, #tpu.memory_space<vmem>>, %arg22: memref<2x1x32xf32, #tpu.memory_space<vmem>>, %arg23: memref<32x32xf32, #tpu.memory_space<vmem>>, %arg24: memref<1x32xf32, #tpu.memory_space<vmem>>, %arg25: memref<2x1x32xf32, #tpu.memory_space<vmem>>) attributes {dimension_semantics = [#tpu.dimension_semantics<parallel>], iteration_bounds = array<i64: 2>, scalar_prefetch = 0 : i64, scratch_operands = 0 : i64, tpu.core_type = #tpu.core_type<tc>, window_params = [{transform_indices = @transform_0, window_bounds = array<i64: 2, 8, 16>}, {transform_indices = @transform_1, window_bounds = array<i64: 2, 1, 8>}, {transform_indices = @transform_2, window_bounds = array<i64: 2, 1, 1>}, {pipeline_mode = #tpu.pipeline_mode<synchronous>, transform_indices = @transform_3, window_bounds = array<i64: 8, 32>}, {pipeline_mode = #tpu.pipeline_mode<synchronous>, transform_indices = @transform_4, window_bounds = array<i64: 16, 32>}, {pipeline_mode = #tpu.pipeline_mode<synchronous>, transform_indices = @transform_5, window_bounds = array<i64: 1, 32>}, {pipeline_mode = #tpu.pipeline_mode<synchronous>, transform_indices = @transform_6, window_bounds = array<i64: 2, 32, 32>}, {pipeline_mode = #tpu.pipeline_mode<synchronous>, transform_indices = @transform_7, window_bounds = array<i64: 2, 1, 32>}, {pipeline_mode = #tpu.pipeline_mode<synchronous>, transform_indices = @transform_8, window_bounds = array<i64: 2, 32, 32>}, {pipeline_mode = #tpu.pipeline_mode<synchronous>, transform_indices = @transform_9, window_bounds = array<i64: 2, 1, 32>}, {pipeline_mode = #tpu.pipeline_mode<synchronous>, transform_indices = @transform_10, window_bounds = array<i64: 2, 32, 32>}, {pipeline_mode = #tpu.pipeline_mode<synchronous>, transform_indices = @transform_11, window_bounds = array<i64: 2, 1, 32>}, {pipeline_mode = #tpu.pipeline_mode<synchronous>, transform_indices = @transform_12, window_bounds = array<i64: 2, 32, 32>}, {pipeline_mode = #tpu.pipeline_mode<synchronous>, transform_indices = @transform_13, window_bounds = array<i64: 2, 1, 32>}, {pipeline_mode = #tpu.pipeline_mode<synchronous>, transform_indices = @transform_14, window_bounds = array<i64: 2, 1, 32>}, {pipeline_mode = #tpu.pipeline_mode<synchronous>, transform_indices = @transform_15, window_bounds = array<i64: 2, 1, 32>}, {pipeline_mode = #tpu.pipeline_mode<synchronous>, transform_indices = @transform_16, window_bounds = array<i64: 2, 32, 2048>}, {pipeline_mode = #tpu.pipeline_mode<synchronous>, transform_indices = @transform_17, window_bounds = array<i64: 2, 1, 2048>}, {pipeline_mode = #tpu.pipeline_mode<synchronous>, transform_indices = @transform_18, window_bounds = array<i64: 2, 2048, 32>}, {pipeline_mode = #tpu.pipeline_mode<synchronous>, transform_indices = @transform_19, window_bounds = array<i64: 2, 1, 32>}, {pipeline_mode = #tpu.pipeline_mode<synchronous>, transform_indices = @transform_20, window_bounds = array<i64: 2, 1, 32>}, {pipeline_mode = #tpu.pipeline_mode<synchronous>, transform_indices = @transform_21, window_bounds = array<i64: 2, 1, 32>}, {pipeline_mode = #tpu.pipeline_mode<synchronous>, transform_indices = @transform_22, window_bounds = array<i64: 32, 32>}, {pipeline_mode = #tpu.pipeline_mode<synchronous>, transform_indices = @transform_23, window_bounds = array<i64: 1, 32>}, {transform_indices = @transform_24, window_bounds = array<i64: 2, 1, 32>}]} {
    %c0 = arith.constant 0 : index
    %c0_0 = arith.constant 0 : index
    %c0_1 = arith.constant 0 : index
    %0 = vector.load %arg1[%c0, %c0_0, %c0_1] : memref<2x8x16xf32, #tpu.memory_space<vmem>>, vector<2x8x16xf32>
    %1 = vector.shape_cast %0 : vector<2x8x16xf32> to vector<16x16xf32>
    %c0_2 = arith.constant 0 : index
    %c0_3 = arith.constant 0 : index
    %2 = vector.load %arg5[%c0_2, %c0_3] : memref<16x32xf32, #tpu.memory_space<vmem>>, vector<16x32xf32>
    %cst = arith.constant dense<0.000000e+00> : vector<16x32xf32>
    %3 = tpu.matmul %1, %2, %cst {dimension_numbers = #tpu.dot_dimension_numbers<[1], [0], [0], [1], [0, 0, 1, 1], [], []>} : vector<16x16xf32>, vector<16x32xf32>, vector<16x32xf32> -> vector<16x32xf32>
    %c0_4 = arith.constant 0 : index
    %c0_5 = arith.constant 0 : index
    %4 = vector.load %arg6[%c0_4, %c0_5] : memref<1x32xf32, #tpu.memory_space<vmem>>, vector<1x32xf32>
    %5 = vector.broadcast %4 : vector<1x32xf32> to vector<16x32xf32>
    %6 = arith.addf %3, %5 : vector<16x32xf32>
    %7 = vector.shape_cast %6 : vector<16x32xf32> to vector<2x8x32xf32>
    %c0_6 = arith.constant 0 : index
    %c0_7 = arith.constant 0 : index
    %8 = vector.load %arg4[%c0_6, %c0_7] : memref<8x32xf32, #tpu.memory_space<vmem>>, vector<8x32xf32>
    %9 = vector.shape_cast %8 : vector<8x32xf32> to vector<1x8x32xf32>
    %10 = vector.broadcast %9 : vector<1x8x32xf32> to vector<2x8x32xf32>
    %11 = arith.addf %7, %10 : vector<2x8x32xf32>
    %c0_8 = arith.constant 0 : index
    %c0_9 = arith.constant 0 : index
    %c0_10 = arith.constant 0 : index
    %12 = vector.load %arg2[%c0_8, %c0_9, %c0_10] : memref<2x1x8xf32, #tpu.memory_space<vmem>>, vector<2x1x8xf32>
    %13 = vector.shape_cast %12 : vector<2x1x8xf32> to vector<2x1x8xf32>
    %14 = vector.broadcast %13 : vector<2x1x8xf32> to vector<2x8x8xf32>
    %15 = vector.shape_cast %11 : vector<2x8x32xf32> to vector<16x32xf32>
    %c0_11 = arith.constant 0 : index
    %c0_12 = arith.constant 0 : index
    %c0_13 = arith.constant 0 : index
    %16 = vector.load %arg7[%c0_11, %c0_12, %c0_13] : memref<2x32x32xf32, #tpu.memory_space<vmem>>, vector<1x32x32xf32>
    %17 = vector.shape_cast %16 : vector<1x32x32xf32> to vector<32x32xf32>
    %cst_14 = arith.constant dense<0.000000e+00> : vector<16x32xf32>
    %18 = tpu.matmul %15, %17, %cst_14 {dimension_numbers = #tpu.dot_dimension_numbers<[1], [0], [0], [1], [0, 0, 1, 1], [], []>} : vector<16x32xf32>, vector<32x32xf32>, vector<16x32xf32> -> vector<16x32xf32>
    %c0_15 = arith.constant 0 : index
    %c0_16 = arith.constant 0 : index
    %c0_17 = arith.constant 0 : index
    %19 = vector.load %arg8[%c0_15, %c0_16, %c0_17] : memref<2x1x32xf32, #tpu.memory_space<vmem>>, vector<1x1x32xf32>
    %20 = vector.shape_cast %19 : vector<1x1x32xf32> to vector<1x32xf32>
    %21 = vector.broadcast %20 : vector<1x32xf32> to vector<16x32xf32>
    %22 = arith.addf %18, %21 : vector<16x32xf32>
    %c0_18 = arith.constant 0 : index
    %c0_19 = arith.constant 0 : index
    %c0_20 = arith.constant 0 : index
    %23 = vector.load %arg9[%c0_18, %c0_19, %c0_20] : memref<2x32x32xf32, #tpu.memory_space<vmem>>, vector<1x32x32xf32>
    %24 = vector.shape_cast %23 : vector<1x32x32xf32> to vector<32x32xf32>
    %cst_21 = arith.constant dense<0.000000e+00> : vector<16x32xf32>
    %25 = tpu.matmul %15, %24, %cst_21 {dimension_numbers = #tpu.dot_dimension_numbers<[1], [0], [0], [1], [0, 0, 1, 1], [], []>} : vector<16x32xf32>, vector<32x32xf32>, vector<16x32xf32> -> vector<16x32xf32>
    %c0_22 = arith.constant 0 : index
    %c0_23 = arith.constant 0 : index
    %c0_24 = arith.constant 0 : index
    %26 = vector.load %arg10[%c0_22, %c0_23, %c0_24] : memref<2x1x32xf32, #tpu.memory_space<vmem>>, vector<1x1x32xf32>
    %27 = vector.shape_cast %26 : vector<1x1x32xf32> to vector<1x32xf32>
    %28 = vector.broadcast %27 : vector<1x32xf32> to vector<16x32xf32>
    %29 = arith.addf %25, %28 : vector<16x32xf32>
    %c0_25 = arith.constant 0 : index
    %c0_26 = arith.constant 0 : index
    %c0_27 = arith.constant 0 : index
    %30 = vector.load %arg11[%c0_25, %c0_26, %c0_27] : memref<2x32x32xf32, #tpu.memory_space<vmem>>, vector<1x32x32xf32>
    %31 = vector.shape_cast %30 : vector<1x32x32xf32> to vector<32x32xf32>
    %cst_28 = arith.constant dense<0.000000e+00> : vector<16x32xf32>
    %32 = tpu.matmul %15, %31, %cst_28 {dimension_numbers = #tpu.dot_dimension_numbers<[1], [0], [0], [1], [0, 0, 1, 1], [], []>} : vector<16x32xf32>, vector<32x32xf32>, vector<16x32xf32> -> vector<16x32xf32>
    %c0_29 = arith.constant 0 : index
    %c0_30 = arith.constant 0 : index
    %c0_31 = arith.constant 0 : index
    %33 = vector.load %arg12[%c0_29, %c0_30, %c0_31] : memref<2x1x32xf32, #tpu.memory_space<vmem>>, vector<1x1x32xf32>
    %34 = vector.shape_cast %33 : vector<1x1x32xf32> to vector<1x32xf32>
    %35 = vector.broadcast %34 : vector<1x32xf32> to vector<16x32xf32>
    %36 = arith.addf %32, %35 : vector<16x32xf32>
    %37 = vector.shape_cast %22 : vector<16x32xf32> to vector<2x8x32xf32>
    %38 = vector.shape_cast %29 : vector<16x32xf32> to vector<2x8x32xf32>
    %39 = vector.shape_cast %36 : vector<16x32xf32> to vector<2x8x32xf32>
    %40 = vector.extract_strided_slice %37 {offsets = [0, 0, 0], sizes = [2, 8, 8], strides = [1, 1, 1]} : vector<2x8x32xf32> to vector<2x8x8xf32>
    %41 = vector.extract_strided_slice %38 {offsets = [0, 0, 0], sizes = [2, 8, 8], strides = [1, 1, 1]} : vector<2x8x32xf32> to vector<2x8x8xf32>
    %42 = vector.extract_strided_slice %39 {offsets = [0, 0, 0], sizes = [2, 8, 8], strides = [1, 1, 1]} : vector<2x8x32xf32> to vector<2x8x8xf32>
    "tpu.trace_start"() <{level = 10 : i32, message = "bqd,bkd->bqk"}> : () -> ()
    %cst_32 = arith.constant dense<0.000000e+00> : vector<2x8x8xf32>
    %43 = tpu.matmul %40, %41, %cst_32 {dimension_numbers = #tpu.dot_dimension_numbers<[2], [2], [1], [1], [0, 0, 0, 1, 1, 1], [0], [0]>} : vector<2x8x8xf32>, vector<2x8x8xf32>, vector<2x8x8xf32> -> vector<2x8x8xf32>
    "tpu.trace_stop"() : () -> ()
    %cst_33 = arith.constant 0.353553385 : f32
    %44 = vector.broadcast %cst_33 : f32 to vector<2x8x8xf32>
    %45 = arith.mulf %43, %44 : vector<2x8x8xf32>
    %46 = arith.addf %45, %14 : vector<2x8x8xf32>
    %cst_34 = arith.constant dense<0xFF800000> : vector<2x8xf32>
    %47 = vector.multi_reduction <maximumf>, %46, %cst_34 [2] : vector<2x8x8xf32> to vector<2x8xf32>
    %48 = vector.shape_cast %47 : vector<2x8xf32> to vector<2x8x1xf32>
    %49 = vector.broadcast %48 : vector<2x8x1xf32> to vector<2x8x8xf32>
    %50 = arith.subf %46, %49 : vector<2x8x8xf32>
    %51 = math.exp %50 : vector<2x8x8xf32>
    %cst_35 = arith.constant dense<0.000000e+00> : vector<2x8xf32>
    %52 = vector.multi_reduction <add>, %51, %cst_35 [2] : vector<2x8x8xf32> to vector<2x8xf32>
    %53 = vector.shape_cast %52 : vector<2x8xf32> to vector<2x8x1xf32>
    %54 = vector.broadcast %53 : vector<2x8x1xf32> to vector<2x8x8xf32>
    %55 = arith.divf %51, %54 : vector<2x8x8xf32>
    "tpu.trace_start"() <{level = 10 : i32, message = "bqk,bkd->bqd"}> : () -> ()
    %cst_36 = arith.constant dense<0.000000e+00> : vector<2x8x8xf32>
    %56 = tpu.matmul %55, %42, %cst_36 {dimension_numbers = #tpu.dot_dimension_numbers<[2], [1], [1], [2], [0, 0, 0, 1, 1, 2], [0], [0]>} : vector<2x8x8xf32>, vector<2x8x8xf32>, vector<2x8x8xf32> -> vector<2x8x8xf32>
    "tpu.trace_stop"() : () -> ()
    %57 = vector.extract_strided_slice %37 {offsets = [0, 0, 8], sizes = [2, 8, 8], strides = [1, 1, 1]} : vector<2x8x32xf32> to vector<2x8x8xf32>
    %58 = vector.extract_strided_slice %38 {offsets = [0, 0, 8], sizes = [2, 8, 8], strides = [1, 1, 1]} : vector<2x8x32xf32> to vector<2x8x8xf32>
    %59 = vector.extract_strided_slice %39 {offsets = [0, 0, 8], sizes = [2, 8, 8], strides = [1, 1, 1]} : vector<2x8x32xf32> to vector<2x8x8xf32>
    "tpu.trace_start"() <{level = 10 : i32, message = "bqd,bkd->bqk"}> : () -> ()
    %cst_37 = arith.constant dense<0.000000e+00> : vector<2x8x8xf32>
    %60 = tpu.matmul %57, %58, %cst_37 {dimension_numbers = #tpu.dot_dimension_numbers<[2], [2], [1], [1], [0, 0, 0, 1, 1, 1], [0], [0]>} : vector<2x8x8xf32>, vector<2x8x8xf32>, vector<2x8x8xf32> -> vector<2x8x8xf32>
    "tpu.trace_stop"() : () -> ()
    %cst_38 = arith.constant 0.353553385 : f32
    %61 = vector.broadcast %cst_38 : f32 to vector<2x8x8xf32>
    %62 = arith.mulf %60, %61 : vector<2x8x8xf32>
    %63 = arith.addf %62, %14 : vector<2x8x8xf32>
    %cst_39 = arith.constant dense<0xFF800000> : vector<2x8xf32>
    %64 = vector.multi_reduction <maximumf>, %63, %cst_39 [2] : vector<2x8x8xf32> to vector<2x8xf32>
    %65 = vector.shape_cast %64 : vector<2x8xf32> to vector<2x8x1xf32>
    %66 = vector.broadcast %65 : vector<2x8x1xf32> to vector<2x8x8xf32>
    %67 = arith.subf %63, %66 : vector<2x8x8xf32>
    %68 = math.exp %67 : vector<2x8x8xf32>
    %cst_40 = arith.constant dense<0.000000e+00> : vector<2x8xf32>
    %69 = vector.multi_reduction <add>, %68, %cst_40 [2] : vector<2x8x8xf32> to vector<2x8xf32>
    %70 = vector.shape_cast %69 : vector<2x8xf32> to vector<2x8x1xf32>
    %71 = vector.broadcast %70 : vector<2x8x1xf32> to vector<2x8x8xf32>
    %72 = arith.divf %68, %71 : vector<2x8x8xf32>
    "tpu.trace_start"() <{level = 10 : i32, message = "bqk,bkd->bqd"}> : () -> ()
    %cst_41 = arith.constant dense<0.000000e+00> : vector<2x8x8xf32>
    %73 = tpu.matmul %72, %59, %cst_41 {dimension_numbers = #tpu.dot_dimension_numbers<[2], [1], [1], [2], [0, 0, 0, 1, 1, 2], [0], [0]>} : vector<2x8x8xf32>, vector<2x8x8xf32>, vector<2x8x8xf32> -> vector<2x8x8xf32>
    "tpu.trace_stop"() : () -> ()
    %74 = vector.extract_strided_slice %37 {offsets = [0, 0, 16], sizes = [2, 8, 8], strides = [1, 1, 1]} : vector<2x8x32xf32> to vector<2x8x8xf32>
    %75 = vector.extract_strided_slice %38 {offsets = [0, 0, 16], sizes = [2, 8, 8], strides = [1, 1, 1]} : vector<2x8x32xf32> to vector<2x8x8xf32>
    %76 = vector.extract_strided_slice %39 {offsets = [0, 0, 16], sizes = [2, 8, 8], strides = [1, 1, 1]} : vector<2x8x32xf32> to vector<2x8x8xf32>
    "tpu.trace_start"() <{level = 10 : i32, message = "bqd,bkd->bqk"}> : () -> ()
    %cst_42 = arith.constant dense<0.000000e+00> : vector<2x8x8xf32>
    %77 = tpu.matmul %74, %75, %cst_42 {dimension_numbers = #tpu.dot_dimension_numbers<[2], [2], [1], [1], [0, 0, 0, 1, 1, 1], [0], [0]>} : vector<2x8x8xf32>, vector<2x8x8xf32>, vector<2x8x8xf32> -> vector<2x8x8xf32>
    "tpu.trace_stop"() : () -> ()
    %cst_43 = arith.constant 0.353553385 : f32
    %78 = vector.broadcast %cst_43 : f32 to vector<2x8x8xf32>
    %79 = arith.mulf %77, %78 : vector<2x8x8xf32>
    %80 = arith.addf %79, %14 : vector<2x8x8xf32>
    %cst_44 = arith.constant dense<0xFF800000> : vector<2x8xf32>
    %81 = vector.multi_reduction <maximumf>, %80, %cst_44 [2] : vector<2x8x8xf32> to vector<2x8xf32>
    %82 = vector.shape_cast %81 : vector<2x8xf32> to vector<2x8x1xf32>
    %83 = vector.broadcast %82 : vector<2x8x1xf32> to vector<2x8x8xf32>
    %84 = arith.subf %80, %83 : vector<2x8x8xf32>
    %85 = math.exp %84 : vector<2x8x8xf32>
    %cst_45 = arith.constant dense<0.000000e+00> : vector<2x8xf32>
    %86 = vector.multi_reduction <add>, %85, %cst_45 [2] : vector<2x8x8xf32> to vector<2x8xf32>
    %87 = vector.shape_cast %86 : vector<2x8xf32> to vector<2x8x1xf32>
    %88 = vector.broadcast %87 : vector<2x8x1xf32> to vector<2x8x8xf32>
    %89 = arith.divf %85, %88 : vector<2x8x8xf32>
    "tpu.trace_start"() <{level = 10 : i32, message = "bqk,bkd->bqd"}> : () -> ()
    %cst_46 = arith.constant dense<0.000000e+00> : vector<2x8x8xf32>
    %90 = tpu.matmul %89, %76, %cst_46 {dimension_numbers = #tpu.dot_dimension_numbers<[2], [1], [1], [2], [0, 0, 0, 1, 1, 2], [0], [0]>} : vector<2x8x8xf32>, vector<2x8x8xf32>, vector<2x8x8xf32> -> vector<2x8x8xf32>
    "tpu.trace_stop"() : () -> ()
    %91 = vector.extract_strided_slice %37 {offsets = [0, 0, 24], sizes = [2, 8, 8], strides = [1, 1, 1]} : vector<2x8x32xf32> to vector<2x8x8xf32>
    %92 = vector.extract_strided_slice %38 {offsets = [0, 0, 24], sizes = [2, 8, 8], strides = [1, 1, 1]} : vector<2x8x32xf32> to vector<2x8x8xf32>
    %93 = vector.extract_strided_slice %39 {offsets = [0, 0, 24], sizes = [2, 8, 8], strides = [1, 1, 1]} : vector<2x8x32xf32> to vector<2x8x8xf32>
    "tpu.trace_start"() <{level = 10 : i32, message = "bqd,bkd->bqk"}> : () -> ()
    %cst_47 = arith.constant dense<0.000000e+00> : vector<2x8x8xf32>
    %94 = tpu.matmul %91, %92, %cst_47 {dimension_numbers = #tpu.dot_dimension_numbers<[2], [2], [1], [1], [0, 0, 0, 1, 1, 1], [0], [0]>} : vector<2x8x8xf32>, vector<2x8x8xf32>, vector<2x8x8xf32> -> vector<2x8x8xf32>
    "tpu.trace_stop"() : () -> ()
    %cst_48 = arith.constant 0.353553385 : f32
    %95 = vector.broadcast %cst_48 : f32 to vector<2x8x8xf32>
    %96 = arith.mulf %94, %95 : vector<2x8x8xf32>
    %97 = arith.addf %96, %14 : vector<2x8x8xf32>
    %cst_49 = arith.constant dense<0xFF800000> : vector<2x8xf32>
    %98 = vector.multi_reduction <maximumf>, %97, %cst_49 [2] : vector<2x8x8xf32> to vector<2x8xf32>
    %99 = vector.shape_cast %98 : vector<2x8xf32> to vector<2x8x1xf32>
    %100 = vector.broadcast %99 : vector<2x8x1xf32> to vector<2x8x8xf32>
    %101 = arith.subf %97, %100 : vector<2x8x8xf32>
    %102 = math.exp %101 : vector<2x8x8xf32>
    %cst_50 = arith.constant dense<0.000000e+00> : vector<2x8xf32>
    %103 = vector.multi_reduction <add>, %102, %cst_50 [2] : vector<2x8x8xf32> to vector<2x8xf32>
    %104 = vector.shape_cast %103 : vector<2x8xf32> to vector<2x8x1xf32>
    %105 = vector.broadcast %104 : vector<2x8x1xf32> to vector<2x8x8xf32>
    %106 = arith.divf %102, %105 : vector<2x8x8xf32>
    "tpu.trace_start"() <{level = 10 : i32, message = "bqk,bkd->bqd"}> : () -> ()
    %cst_51 = arith.constant dense<0.000000e+00> : vector<2x8x8xf32>
    %107 = tpu.matmul %106, %93, %cst_51 {dimension_numbers = #tpu.dot_dimension_numbers<[2], [1], [1], [2], [0, 0, 0, 1, 1, 2], [0], [0]>} : vector<2x8x8xf32>, vector<2x8x8xf32>, vector<2x8x8xf32> -> vector<2x8x8xf32>
    "tpu.trace_stop"() : () -> ()
    %108 = tpu.concatenate %56, %73, %90, %107 in 2 : vector<2x8x8xf32>, vector<2x8x8xf32>, vector<2x8x8xf32>, vector<2x8x8xf32> -> vector<2x8x32xf32>
    %109 = vector.shape_cast %108 : vector<2x8x32xf32> to vector<16x32xf32>
    %c0_52 = arith.constant 0 : index
    %c0_53 = arith.constant 0 : index
    %c0_54 = arith.constant 0 : index
    %110 = vector.load %arg13[%c0_52, %c0_53, %c0_54] : memref<2x32x32xf32, #tpu.memory_space<vmem>>, vector<1x32x32xf32>
    %111 = vector.shape_cast %110 : vector<1x32x32xf32> to vector<32x32xf32>
    %cst_55 = arith.constant dense<0.000000e+00> : vector<16x32xf32>
    %112 = tpu.matmul %109, %111, %cst_55 {dimension_numbers = #tpu.dot_dimension_numbers<[1], [0], [0], [1], [0, 0, 1, 1], [], []>} : vector<16x32xf32>, vector<32x32xf32>, vector<16x32xf32> -> vector<16x32xf32>
    %c0_56 = arith.constant 0 : index
    %c0_57 = arith.constant 0 : index
    %c0_58 = arith.constant 0 : index
    %113 = vector.load %arg14[%c0_56, %c0_57, %c0_58] : memref<2x1x32xf32, #tpu.memory_space<vmem>>, vector<1x1x32xf32>
    %114 = vector.shape_cast %113 : vector<1x1x32xf32> to vector<1x32xf32>
    %115 = vector.broadcast %114 : vector<1x32xf32> to vector<16x32xf32>
    %116 = arith.addf %112, %115 : vector<16x32xf32>
    %117 = arith.addf %15, %116 : vector<16x32xf32>
    %cst_59 = arith.constant dense<0.000000e+00> : vector<16xf32>
    %118 = vector.multi_reduction <add>, %117, %cst_59 [1] : vector<16x32xf32> to vector<16xf32>
    %119 = vector.shape_cast %118 : vector<16xf32> to vector<16x1xf32>
    %cst_60 = arith.constant 3.200000e+01 : f32
    %120 = vector.broadcast %cst_60 : f32 to vector<16x1xf32>
    %121 = arith.divf %119, %120 : vector<16x1xf32>
    %122 = vector.broadcast %121 : vector<16x1xf32> to vector<16x32xf32>
    %123 = arith.subf %117, %122 : vector<16x32xf32>
    %124 = arith.mulf %123, %123 : vector<16x32xf32>
    %cst_61 = arith.constant dense<0.000000e+00> : vector<16xf32>
    %125 = vector.multi_reduction <add>, %124, %cst_61 [1] : vector<16x32xf32> to vector<16xf32>
    %126 = vector.shape_cast %125 : vector<16xf32> to vector<16x1xf32>
    %cst_62 = arith.constant 3.200000e+01 : f32
    %127 = vector.broadcast %cst_62 : f32 to vector<16x1xf32>
    %128 = arith.divf %126, %127 : vector<16x1xf32>
    %129 = vector.broadcast %121 : vector<16x1xf32> to vector<16x32xf32>
    %130 = arith.subf %117, %129 : vector<16x32xf32>
    %cst_63 = arith.constant 9.99999974E-6 : f32
    %131 = vector.broadcast %cst_63 : f32 to vector<16x1xf32>
    %132 = arith.addf %128, %131 : vector<16x1xf32>
    %133 = math.rsqrt %132 : vector<16x1xf32>
    %134 = vector.broadcast %133 : vector<16x1xf32> to vector<16x32xf32>
    %135 = arith.mulf %130, %134 : vector<16x32xf32>
    %c0_64 = arith.constant 0 : index
    %c0_65 = arith.constant 0 : index
    %c0_66 = arith.constant 0 : index
    %136 = vector.load %arg15[%c0_64, %c0_65, %c0_66] : memref<2x1x32xf32, #tpu.memory_space<vmem>>, vector<1x1x32xf32>
    %137 = vector.shape_cast %136 : vector<1x1x32xf32> to vector<1x32xf32>
    %138 = vector.broadcast %137 : vector<1x32xf32> to vector<16x32xf32>
    %139 = arith.mulf %135, %138 : vector<16x32xf32>
    %c0_67 = arith.constant 0 : index
    %c0_68 = arith.constant 0 : index
    %c0_69 = arith.constant 0 : index
    %140 = vector.load %arg16[%c0_67, %c0_68, %c0_69] : memref<2x1x32xf32, #tpu.memory_space<vmem>>, vector<1x1x32xf32>
    %141 = vector.shape_cast %140 : vector<1x1x32xf32> to vector<1x32xf32>
    %142 = vector.broadcast %141 : vector<1x32xf32> to vector<16x32xf32>
    %143 = arith.addf %139, %142 : vector<16x32xf32>
    %c0_70 = arith.constant 0 : index
    %c0_71 = arith.constant 0 : index
    %c0_72 = arith.constant 0 : index
    %144 = vector.load %arg17[%c0_70, %c0_71, %c0_72] : memref<2x32x2048xf32, #tpu.memory_space<vmem>>, vector<1x32x2048xf32>
    %145 = vector.shape_cast %144 : vector<1x32x2048xf32> to vector<32x2048xf32>
    %cst_73 = arith.constant dense<0.000000e+00> : vector<16x2048xf32>
    %146 = tpu.matmul %143, %145, %cst_73 {dimension_numbers = #tpu.dot_dimension_numbers<[1], [0], [0], [1], [0, 0, 1, 1], [], []>} : vector<16x32xf32>, vector<32x2048xf32>, vector<16x2048xf32> -> vector<16x2048xf32>
    %c0_74 = arith.constant 0 : index
    %c0_75 = arith.constant 0 : index
    %c0_76 = arith.constant 0 : index
    %147 = vector.load %arg18[%c0_74, %c0_75, %c0_76] : memref<2x1x2048xf32, #tpu.memory_space<vmem>>, vector<1x1x2048xf32>
    %148 = vector.shape_cast %147 : vector<1x1x2048xf32> to vector<1x2048xf32>
    %149 = vector.broadcast %148 : vector<1x2048xf32> to vector<16x2048xf32>
    %150 = arith.addf %146, %149 : vector<16x2048xf32>
    %cst_77 = arith.constant 0.000000e+00 : f32
    %151 = vector.broadcast %cst_77 : f32 to vector<16x2048xf32>
    %152 = arith.maximumf %150, %151 : vector<16x2048xf32>
    %c0_78 = arith.constant 0 : index
    %c0_79 = arith.constant 0 : index
    %c0_80 = arith.constant 0 : index
    %153 = vector.load %arg19[%c0_78, %c0_79, %c0_80] : memref<2x2048x32xf32, #tpu.memory_space<vmem>>, vector<1x2048x32xf32>
    %154 = vector.shape_cast %153 : vector<1x2048x32xf32> to vector<2048x32xf32>
    %cst_81 = arith.constant dense<0.000000e+00> : vector<16x32xf32>
    %155 = tpu.matmul %152, %154, %cst_81 {dimension_numbers = #tpu.dot_dimension_numbers<[1], [0], [0], [1], [0, 0, 1, 1], [], []>} : vector<16x2048xf32>, vector<2048x32xf32>, vector<16x32xf32> -> vector<16x32xf32>
    %c0_82 = arith.constant 0 : index
    %c0_83 = arith.constant 0 : index
    %c0_84 = arith.constant 0 : index
    %156 = vector.load %arg20[%c0_82, %c0_83, %c0_84] : memref<2x1x32xf32, #tpu.memory_space<vmem>>, vector<1x1x32xf32>
    %157 = vector.shape_cast %156 : vector<1x1x32xf32> to vector<1x32xf32>
    %158 = vector.broadcast %157 : vector<1x32xf32> to vector<16x32xf32>
    %159 = arith.addf %155, %158 : vector<16x32xf32>
    %160 = arith.addf %143, %159 : vector<16x32xf32>
    %cst_85 = arith.constant dense<0.000000e+00> : vector<16xf32>
    %161 = vector.multi_reduction <add>, %160, %cst_85 [1] : vector<16x32xf32> to vector<16xf32>
    %162 = vector.shape_cast %161 : vector<16xf32> to vector<16x1xf32>
    %cst_86 = arith.constant 3.200000e+01 : f32
    %163 = vector.broadcast %cst_86 : f32 to vector<16x1xf32>
    %164 = arith.divf %162, %163 : vector<16x1xf32>
    %165 = vector.broadcast %164 : vector<16x1xf32> to vector<16x32xf32>
    %166 = arith.subf %160, %165 : vector<16x32xf32>
    %167 = arith.mulf %166, %166 : vector<16x32xf32>
    %cst_87 = arith.constant dense<0.000000e+00> : vector<16xf32>
    %168 = vector.multi_reduction <add>, %167, %cst_87 [1] : vector<16x32xf32> to vector<16xf32>
    %169 = vector.shape_cast %168 : vector<16xf32> to vector<16x1xf32>
    %cst_88 = arith.constant 3.200000e+01 : f32
    %170 = vector.broadcast %cst_88 : f32 to vector<16x1xf32>
    %171 = arith.divf %169, %170 : vector<16x1xf32>
    %172 = vector.broadcast %164 : vector<16x1xf32> to vector<16x32xf32>
    %173 = arith.subf %160, %172 : vector<16x32xf32>
    %cst_89 = arith.constant 9.99999974E-6 : f32
    %174 = vector.broadcast %cst_89 : f32 to vector<16x1xf32>
    %175 = arith.addf %171, %174 : vector<16x1xf32>
    %176 = math.rsqrt %175 : vector<16x1xf32>
    %177 = vector.broadcast %176 : vector<16x1xf32> to vector<16x32xf32>
    %178 = arith.mulf %173, %177 : vector<16x32xf32>
    %c0_90 = arith.constant 0 : index
    %c0_91 = arith.constant 0 : index
    %c0_92 = arith.constant 0 : index
    %179 = vector.load %arg21[%c0_90, %c0_91, %c0_92] : memref<2x1x32xf32, #tpu.memory_space<vmem>>, vector<1x1x32xf32>
    %180 = vector.shape_cast %179 : vector<1x1x32xf32> to vector<1x32xf32>
    %181 = vector.broadcast %180 : vector<1x32xf32> to vector<16x32xf32>
    %182 = arith.mulf %178, %181 : vector<16x32xf32>
    %c0_93 = arith.constant 0 : index
    %c0_94 = arith.constant 0 : index
    %c0_95 = arith.constant 0 : index
    %183 = vector.load %arg22[%c0_93, %c0_94, %c0_95] : memref<2x1x32xf32, #tpu.memory_space<vmem>>, vector<1x1x32xf32>
    %184 = vector.shape_cast %183 : vector<1x1x32xf32> to vector<1x32xf32>
    %185 = vector.broadcast %184 : vector<1x32xf32> to vector<16x32xf32>
    %186 = arith.addf %182, %185 : vector<16x32xf32>
    %187 = vector.shape_cast %186 : vector<16x32xf32> to vector<2x8x32xf32>
    %188 = vector.shape_cast %187 : vector<2x8x32xf32> to vector<16x32xf32>
    %c1 = arith.constant 1 : index
    %c0_96 = arith.constant 0 : index
    %c0_97 = arith.constant 0 : index
    %189 = vector.load %arg7[%c1, %c0_96, %c0_97] : memref<2x32x32xf32, #tpu.memory_space<vmem>>, vector<1x32x32xf32>
    %190 = vector.shape_cast %189 : vector<1x32x32xf32> to vector<32x32xf32>
    %cst_98 = arith.constant dense<0.000000e+00> : vector<16x32xf32>
    %191 = tpu.matmul %188, %190, %cst_98 {dimension_numbers = #tpu.dot_dimension_numbers<[1], [0], [0], [1], [0, 0, 1, 1], [], []>} : vector<16x32xf32>, vector<32x32xf32>, vector<16x32xf32> -> vector<16x32xf32>
    %c1_99 = arith.constant 1 : index
    %c0_100 = arith.constant 0 : index
    %c0_101 = arith.constant 0 : index
    %192 = vector.load %arg8[%c1_99, %c0_100, %c0_101] : memref<2x1x32xf32, #tpu.memory_space<vmem>>, vector<1x1x32xf32>
    %193 = vector.shape_cast %192 : vector<1x1x32xf32> to vector<1x32xf32>
    %194 = vector.broadcast %193 : vector<1x32xf32> to vector<16x32xf32>
    %195 = arith.addf %191, %194 : vector<16x32xf32>
    %c1_102 = arith.constant 1 : index
    %c0_103 = arith.constant 0 : index
    %c0_104 = arith.constant 0 : index
    %196 = vector.load %arg9[%c1_102, %c0_103, %c0_104] : memref<2x32x32xf32, #tpu.memory_space<vmem>>, vector<1x32x32xf32>
    %197 = vector.shape_cast %196 : vector<1x32x32xf32> to vector<32x32xf32>
    %cst_105 = arith.constant dense<0.000000e+00> : vector<16x32xf32>
    %198 = tpu.matmul %188, %197, %cst_105 {dimension_numbers = #tpu.dot_dimension_numbers<[1], [0], [0], [1], [0, 0, 1, 1], [], []>} : vector<16x32xf32>, vector<32x32xf32>, vector<16x32xf32> -> vector<16x32xf32>
    %c1_106 = arith.constant 1 : index
    %c0_107 = arith.constant 0 : index
    %c0_108 = arith.constant 0 : index
    %199 = vector.load %arg10[%c1_106, %c0_107, %c0_108] : memref<2x1x32xf32, #tpu.memory_space<vmem>>, vector<1x1x32xf32>
    %200 = vector.shape_cast %199 : vector<1x1x32xf32> to vector<1x32xf32>
    %201 = vector.broadcast %200 : vector<1x32xf32> to vector<16x32xf32>
    %202 = arith.addf %198, %201 : vector<16x32xf32>
    %c1_109 = arith.constant 1 : index
    %c0_110 = arith.constant 0 : index
    %c0_111 = arith.constant 0 : index
    %203 = vector.load %arg11[%c1_109, %c0_110, %c0_111] : memref<2x32x32xf32, #tpu.memory_space<vmem>>, vector<1x32x32xf32>
    %204 = vector.shape_cast %203 : vector<1x32x32xf32> to vector<32x32xf32>
    %cst_112 = arith.constant dense<0.000000e+00> : vector<16x32xf32>
    %205 = tpu.matmul %188, %204, %cst_112 {dimension_numbers = #tpu.dot_dimension_numbers<[1], [0], [0], [1], [0, 0, 1, 1], [], []>} : vector<16x32xf32>, vector<32x32xf32>, vector<16x32xf32> -> vector<16x32xf32>
    %c1_113 = arith.constant 1 : index
    %c0_114 = arith.constant 0 : index
    %c0_115 = arith.constant 0 : index
    %206 = vector.load %arg12[%c1_113, %c0_114, %c0_115] : memref<2x1x32xf32, #tpu.memory_space<vmem>>, vector<1x1x32xf32>
    %207 = vector.shape_cast %206 : vector<1x1x32xf32> to vector<1x32xf32>
    %208 = vector.broadcast %207 : vector<1x32xf32> to vector<16x32xf32>
    %209 = arith.addf %205, %208 : vector<16x32xf32>
    %210 = vector.shape_cast %195 : vector<16x32xf32> to vector<2x8x32xf32>
    %211 = vector.shape_cast %202 : vector<16x32xf32> to vector<2x8x32xf32>
    %212 = vector.shape_cast %209 : vector<16x32xf32> to vector<2x8x32xf32>
    %213 = vector.extract_strided_slice %210 {offsets = [0, 0, 0], sizes = [2, 8, 8], strides = [1, 1, 1]} : vector<2x8x32xf32> to vector<2x8x8xf32>
    %214 = vector.extract_strided_slice %211 {offsets = [0, 0, 0], sizes = [2, 8, 8], strides = [1, 1, 1]} : vector<2x8x32xf32> to vector<2x8x8xf32>
    %215 = vector.extract_strided_slice %212 {offsets = [0, 0, 0], sizes = [2, 8, 8], strides = [1, 1, 1]} : vector<2x8x32xf32> to vector<2x8x8xf32>
    "tpu.trace_start"() <{level = 10 : i32, message = "bqd,bkd->bqk"}> : () -> ()
    %cst_116 = arith.constant dense<0.000000e+00> : vector<2x8x8xf32>
    %216 = tpu.matmul %213, %214, %cst_116 {dimension_numbers = #tpu.dot_dimension_numbers<[2], [2], [1], [1], [0, 0, 0, 1, 1, 1], [0], [0]>} : vector<2x8x8xf32>, vector<2x8x8xf32>, vector<2x8x8xf32> -> vector<2x8x8xf32>
    "tpu.trace_stop"() : () -> ()
    %cst_117 = arith.constant 0.353553385 : f32
    %217 = vector.broadcast %cst_117 : f32 to vector<2x8x8xf32>
    %218 = arith.mulf %216, %217 : vector<2x8x8xf32>
    %219 = arith.addf %218, %14 : vector<2x8x8xf32>
    %cst_118 = arith.constant dense<0xFF800000> : vector<2x8xf32>
    %220 = vector.multi_reduction <maximumf>, %219, %cst_118 [2] : vector<2x8x8xf32> to vector<2x8xf32>
    %221 = vector.shape_cast %220 : vector<2x8xf32> to vector<2x8x1xf32>
    %222 = vector.broadcast %221 : vector<2x8x1xf32> to vector<2x8x8xf32>
    %223 = arith.subf %219, %222 : vector<2x8x8xf32>
    %224 = math.exp %223 : vector<2x8x8xf32>
    %cst_119 = arith.constant dense<0.000000e+00> : vector<2x8xf32>
    %225 = vector.multi_reduction <add>, %224, %cst_119 [2] : vector<2x8x8xf32> to vector<2x8xf32>
    %226 = vector.shape_cast %225 : vector<2x8xf32> to vector<2x8x1xf32>
    %227 = vector.broadcast %226 : vector<2x8x1xf32> to vector<2x8x8xf32>
    %228 = arith.divf %224, %227 : vector<2x8x8xf32>
    "tpu.trace_start"() <{level = 10 : i32, message = "bqk,bkd->bqd"}> : () -> ()
    %cst_120 = arith.constant dense<0.000000e+00> : vector<2x8x8xf32>
    %229 = tpu.matmul %228, %215, %cst_120 {dimension_numbers = #tpu.dot_dimension_numbers<[2], [1], [1], [2], [0, 0, 0, 1, 1, 2], [0], [0]>} : vector<2x8x8xf32>, vector<2x8x8xf32>, vector<2x8x8xf32> -> vector<2x8x8xf32>
    "tpu.trace_stop"() : () -> ()
    %230 = vector.extract_strided_slice %210 {offsets = [0, 0, 8], sizes = [2, 8, 8], strides = [1, 1, 1]} : vector<2x8x32xf32> to vector<2x8x8xf32>
    %231 = vector.extract_strided_slice %211 {offsets = [0, 0, 8], sizes = [2, 8, 8], strides = [1, 1, 1]} : vector<2x8x32xf32> to vector<2x8x8xf32>
    %232 = vector.extract_strided_slice %212 {offsets = [0, 0, 8], sizes = [2, 8, 8], strides = [1, 1, 1]} : vector<2x8x32xf32> to vector<2x8x8xf32>
    "tpu.trace_start"() <{level = 10 : i32, message = "bqd,bkd->bqk"}> : () -> ()
    %cst_121 = arith.constant dense<0.000000e+00> : vector<2x8x8xf32>
    %233 = tpu.matmul %230, %231, %cst_121 {dimension_numbers = #tpu.dot_dimension_numbers<[2], [2], [1], [1], [0, 0, 0, 1, 1, 1], [0], [0]>} : vector<2x8x8xf32>, vector<2x8x8xf32>, vector<2x8x8xf32> -> vector<2x8x8xf32>
    "tpu.trace_stop"() : () -> ()
    %cst_122 = arith.constant 0.353553385 : f32
    %234 = vector.broadcast %cst_122 : f32 to vector<2x8x8xf32>
    %235 = arith.mulf %233, %234 : vector<2x8x8xf32>
    %236 = arith.addf %235, %14 : vector<2x8x8xf32>
    %cst_123 = arith.constant dense<0xFF800000> : vector<2x8xf32>
    %237 = vector.multi_reduction <maximumf>, %236, %cst_123 [2] : vector<2x8x8xf32> to vector<2x8xf32>
    %238 = vector.shape_cast %237 : vector<2x8xf32> to vector<2x8x1xf32>
    %239 = vector.broadcast %238 : vector<2x8x1xf32> to vector<2x8x8xf32>
    %240 = arith.subf %236, %239 : vector<2x8x8xf32>
    %241 = math.exp %240 : vector<2x8x8xf32>
    %cst_124 = arith.constant dense<0.000000e+00> : vector<2x8xf32>
    %242 = vector.multi_reduction <add>, %241, %cst_124 [2] : vector<2x8x8xf32> to vector<2x8xf32>
    %243 = vector.shape_cast %242 : vector<2x8xf32> to vector<2x8x1xf32>
    %244 = vector.broadcast %243 : vector<2x8x1xf32> to vector<2x8x8xf32>
    %245 = arith.divf %241, %244 : vector<2x8x8xf32>
    "tpu.trace_start"() <{level = 10 : i32, message = "bqk,bkd->bqd"}> : () -> ()
    %cst_125 = arith.constant dense<0.000000e+00> : vector<2x8x8xf32>
    %246 = tpu.matmul %245, %232, %cst_125 {dimension_numbers = #tpu.dot_dimension_numbers<[2], [1], [1], [2], [0, 0, 0, 1, 1, 2], [0], [0]>} : vector<2x8x8xf32>, vector<2x8x8xf32>, vector<2x8x8xf32> -> vector<2x8x8xf32>
    "tpu.trace_stop"() : () -> ()
    %247 = vector.extract_strided_slice %210 {offsets = [0, 0, 16], sizes = [2, 8, 8], strides = [1, 1, 1]} : vector<2x8x32xf32> to vector<2x8x8xf32>
    %248 = vector.extract_strided_slice %211 {offsets = [0, 0, 16], sizes = [2, 8, 8], strides = [1, 1, 1]} : vector<2x8x32xf32> to vector<2x8x8xf32>
    %249 = vector.extract_strided_slice %212 {offsets = [0, 0, 16], sizes = [2, 8, 8], strides = [1, 1, 1]} : vector<2x8x32xf32> to vector<2x8x8xf32>
    "tpu.trace_start"() <{level = 10 : i32, message = "bqd,bkd->bqk"}> : () -> ()
    %cst_126 = arith.constant dense<0.000000e+00> : vector<2x8x8xf32>
    %250 = tpu.matmul %247, %248, %cst_126 {dimension_numbers = #tpu.dot_dimension_numbers<[2], [2], [1], [1], [0, 0, 0, 1, 1, 1], [0], [0]>} : vector<2x8x8xf32>, vector<2x8x8xf32>, vector<2x8x8xf32> -> vector<2x8x8xf32>
    "tpu.trace_stop"() : () -> ()
    %cst_127 = arith.constant 0.353553385 : f32
    %251 = vector.broadcast %cst_127 : f32 to vector<2x8x8xf32>
    %252 = arith.mulf %250, %251 : vector<2x8x8xf32>
    %253 = arith.addf %252, %14 : vector<2x8x8xf32>
    %cst_128 = arith.constant dense<0xFF800000> : vector<2x8xf32>
    %254 = vector.multi_reduction <maximumf>, %253, %cst_128 [2] : vector<2x8x8xf32> to vector<2x8xf32>
    %255 = vector.shape_cast %254 : vector<2x8xf32> to vector<2x8x1xf32>
    %256 = vector.broadcast %255 : vector<2x8x1xf32> to vector<2x8x8xf32>
    %257 = arith.subf %253, %256 : vector<2x8x8xf32>
    %258 = math.exp %257 : vector<2x8x8xf32>
    %cst_129 = arith.constant dense<0.000000e+00> : vector<2x8xf32>
    %259 = vector.multi_reduction <add>, %258, %cst_129 [2] : vector<2x8x8xf32> to vector<2x8xf32>
    %260 = vector.shape_cast %259 : vector<2x8xf32> to vector<2x8x1xf32>
    %261 = vector.broadcast %260 : vector<2x8x1xf32> to vector<2x8x8xf32>
    %262 = arith.divf %258, %261 : vector<2x8x8xf32>
    "tpu.trace_start"() <{level = 10 : i32, message = "bqk,bkd->bqd"}> : () -> ()
    %cst_130 = arith.constant dense<0.000000e+00> : vector<2x8x8xf32>
    %263 = tpu.matmul %262, %249, %cst_130 {dimension_numbers = #tpu.dot_dimension_numbers<[2], [1], [1], [2], [0, 0, 0, 1, 1, 2], [0], [0]>} : vector<2x8x8xf32>, vector<2x8x8xf32>, vector<2x8x8xf32> -> vector<2x8x8xf32>
    "tpu.trace_stop"() : () -> ()
    %264 = vector.extract_strided_slice %210 {offsets = [0, 0, 24], sizes = [2, 8, 8], strides = [1, 1, 1]} : vector<2x8x32xf32> to vector<2x8x8xf32>
    %265 = vector.extract_strided_slice %211 {offsets = [0, 0, 24], sizes = [2, 8, 8], strides = [1, 1, 1]} : vector<2x8x32xf32> to vector<2x8x8xf32>
    %266 = vector.extract_strided_slice %212 {offsets = [0, 0, 24], sizes = [2, 8, 8], strides = [1, 1, 1]} : vector<2x8x32xf32> to vector<2x8x8xf32>
    "tpu.trace_start"() <{level = 10 : i32, message = "bqd,bkd->bqk"}> : () -> ()
    %cst_131 = arith.constant dense<0.000000e+00> : vector<2x8x8xf32>
    %267 = tpu.matmul %264, %265, %cst_131 {dimension_numbers = #tpu.dot_dimension_numbers<[2], [2], [1], [1], [0, 0, 0, 1, 1, 1], [0], [0]>} : vector<2x8x8xf32>, vector<2x8x8xf32>, vector<2x8x8xf32> -> vector<2x8x8xf32>
    "tpu.trace_stop"() : () -> ()
    %cst_132 = arith.constant 0.353553385 : f32
    %268 = vector.broadcast %cst_132 : f32 to vector<2x8x8xf32>
    %269 = arith.mulf %267, %268 : vector<2x8x8xf32>
    %270 = arith.addf %269, %14 : vector<2x8x8xf32>
    %cst_133 = arith.constant dense<0xFF800000> : vector<2x8xf32>
    %271 = vector.multi_reduction <maximumf>, %270, %cst_133 [2] : vector<2x8x8xf32> to vector<2x8xf32>
    %272 = vector.shape_cast %271 : vector<2x8xf32> to vector<2x8x1xf32>
    %273 = vector.broadcast %272 : vector<2x8x1xf32> to vector<2x8x8xf32>
    %274 = arith.subf %270, %273 : vector<2x8x8xf32>
    %275 = math.exp %274 : vector<2x8x8xf32>
    %cst_134 = arith.constant dense<0.000000e+00> : vector<2x8xf32>
    %276 = vector.multi_reduction <add>, %275, %cst_134 [2] : vector<2x8x8xf32> to vector<2x8xf32>
    %277 = vector.shape_cast %276 : vector<2x8xf32> to vector<2x8x1xf32>
    %278 = vector.broadcast %277 : vector<2x8x1xf32> to vector<2x8x8xf32>
    %279 = arith.divf %275, %278 : vector<2x8x8xf32>
    "tpu.trace_start"() <{level = 10 : i32, message = "bqk,bkd->bqd"}> : () -> ()
    %cst_135 = arith.constant dense<0.000000e+00> : vector<2x8x8xf32>
    %280 = tpu.matmul %279, %266, %cst_135 {dimension_numbers = #tpu.dot_dimension_numbers<[2], [1], [1], [2], [0, 0, 0, 1, 1, 2], [0], [0]>} : vector<2x8x8xf32>, vector<2x8x8xf32>, vector<2x8x8xf32> -> vector<2x8x8xf32>
    "tpu.trace_stop"() : () -> ()
    %281 = tpu.concatenate %229, %246, %263, %280 in 2 : vector<2x8x8xf32>, vector<2x8x8xf32>, vector<2x8x8xf32>, vector<2x8x8xf32> -> vector<2x8x32xf32>
    %282 = vector.shape_cast %281 : vector<2x8x32xf32> to vector<16x32xf32>
    %c1_136 = arith.constant 1 : index
    %c0_137 = arith.constant 0 : index
    %c0_138 = arith.constant 0 : index
    %283 = vector.load %arg13[%c1_136, %c0_137, %c0_138] : memref<2x32x32xf32, #tpu.memory_space<vmem>>, vector<1x32x32xf32>
    %284 = vector.shape_cast %283 : vector<1x32x32xf32> to vector<32x32xf32>
    %cst_139 = arith.constant dense<0.000000e+00> : vector<16x32xf32>
    %285 = tpu.matmul %282, %284, %cst_139 {dimension_numbers = #tpu.dot_dimension_numbers<[1], [0], [0], [1], [0, 0, 1, 1], [], []>} : vector<16x32xf32>, vector<32x32xf32>, vector<16x32xf32> -> vector<16x32xf32>
    %c1_140 = arith.constant 1 : index
    %c0_141 = arith.constant 0 : index
    %c0_142 = arith.constant 0 : index
    %286 = vector.load %arg14[%c1_140, %c0_141, %c0_142] : memref<2x1x32xf32, #tpu.memory_space<vmem>>, vector<1x1x32xf32>
    %287 = vector.shape_cast %286 : vector<1x1x32xf32> to vector<1x32xf32>
    %288 = vector.broadcast %287 : vector<1x32xf32> to vector<16x32xf32>
    %289 = arith.addf %285, %288 : vector<16x32xf32>
    %290 = arith.addf %188, %289 : vector<16x32xf32>
    %cst_143 = arith.constant dense<0.000000e+00> : vector<16xf32>
    %291 = vector.multi_reduction <add>, %290, %cst_143 [1] : vector<16x32xf32> to vector<16xf32>
    %292 = vector.shape_cast %291 : vector<16xf32> to vector<16x1xf32>
    %cst_144 = arith.constant 3.200000e+01 : f32
    %293 = vector.broadcast %cst_144 : f32 to vector<16x1xf32>
    %294 = arith.divf %292, %293 : vector<16x1xf32>
    %295 = vector.broadcast %294 : vector<16x1xf32> to vector<16x32xf32>
    %296 = arith.subf %290, %295 : vector<16x32xf32>
    %297 = arith.mulf %296, %296 : vector<16x32xf32>
    %cst_145 = arith.constant dense<0.000000e+00> : vector<16xf32>
    %298 = vector.multi_reduction <add>, %297, %cst_145 [1] : vector<16x32xf32> to vector<16xf32>
    %299 = vector.shape_cast %298 : vector<16xf32> to vector<16x1xf32>
    %cst_146 = arith.constant 3.200000e+01 : f32
    %300 = vector.broadcast %cst_146 : f32 to vector<16x1xf32>
    %301 = arith.divf %299, %300 : vector<16x1xf32>
    %302 = vector.broadcast %294 : vector<16x1xf32> to vector<16x32xf32>
    %303 = arith.subf %290, %302 : vector<16x32xf32>
    %cst_147 = arith.constant 9.99999974E-6 : f32
    %304 = vector.broadcast %cst_147 : f32 to vector<16x1xf32>
    %305 = arith.addf %301, %304 : vector<16x1xf32>
    %306 = math.rsqrt %305 : vector<16x1xf32>
    %307 = vector.broadcast %306 : vector<16x1xf32> to vector<16x32xf32>
    %308 = arith.mulf %303, %307 : vector<16x32xf32>
    %c1_148 = arith.constant 1 : index
    %c0_149 = arith.constant 0 : index
    %c0_150 = arith.constant 0 : index
    %309 = vector.load %arg15[%c1_148, %c0_149, %c0_150] : memref<2x1x32xf32, #tpu.memory_space<vmem>>, vector<1x1x32xf32>
    %310 = vector.shape_cast %309 : vector<1x1x32xf32> to vector<1x32xf32>
    %311 = vector.broadcast %310 : vector<1x32xf32> to vector<16x32xf32>
    %312 = arith.mulf %308, %311 : vector<16x32xf32>
    %c1_151 = arith.constant 1 : index
    %c0_152 = arith.constant 0 : index
    %c0_153 = arith.constant 0 : index
    %313 = vector.load %arg16[%c1_151, %c0_152, %c0_153] : memref<2x1x32xf32, #tpu.memory_space<vmem>>, vector<1x1x32xf32>
    %314 = vector.shape_cast %313 : vector<1x1x32xf32> to vector<1x32xf32>
    %315 = vector.broadcast %314 : vector<1x32xf32> to vector<16x32xf32>
    %316 = arith.addf %312, %315 : vector<16x32xf32>
    %c1_154 = arith.constant 1 : index
    %c0_155 = arith.constant 0 : index
    %c0_156 = arith.constant 0 : index
    %317 = vector.load %arg17[%c1_154, %c0_155, %c0_156] : memref<2x32x2048xf32, #tpu.memory_space<vmem>>, vector<1x32x2048xf32>
    %318 = vector.shape_cast %317 : vector<1x32x2048xf32> to vector<32x2048xf32>
    %cst_157 = arith.constant dense<0.000000e+00> : vector<16x2048xf32>
    %319 = tpu.matmul %316, %318, %cst_157 {dimension_numbers = #tpu.dot_dimension_numbers<[1], [0], [0], [1], [0, 0, 1, 1], [], []>} : vector<16x32xf32>, vector<32x2048xf32>, vector<16x2048xf32> -> vector<16x2048xf32>
    %c1_158 = arith.constant 1 : index
    %c0_159 = arith.constant 0 : index
    %c0_160 = arith.constant 0 : index
    %320 = vector.load %arg18[%c1_158, %c0_159, %c0_160] : memref<2x1x2048xf32, #tpu.memory_space<vmem>>, vector<1x1x2048xf32>
    %321 = vector.shape_cast %320 : vector<1x1x2048xf32> to vector<1x2048xf32>
    %322 = vector.broadcast %321 : vector<1x2048xf32> to vector<16x2048xf32>
    %323 = arith.addf %319, %322 : vector<16x2048xf32>
    %cst_161 = arith.constant 0.000000e+00 : f32
    %324 = vector.broadcast %cst_161 : f32 to vector<16x2048xf32>
    %325 = arith.maximumf %323, %324 : vector<16x2048xf32>
    %c1_162 = arith.constant 1 : index
    %c0_163 = arith.constant 0 : index
    %c0_164 = arith.constant 0 : index
    %326 = vector.load %arg19[%c1_162, %c0_163, %c0_164] : memref<2x2048x32xf32, #tpu.memory_space<vmem>>, vector<1x2048x32xf32>
    %327 = vector.shape_cast %326 : vector<1x2048x32xf32> to vector<2048x32xf32>
    %cst_165 = arith.constant dense<0.000000e+00> : vector<16x32xf32>
    %328 = tpu.matmul %325, %327, %cst_165 {dimension_numbers = #tpu.dot_dimension_numbers<[1], [0], [0], [1], [0, 0, 1, 1], [], []>} : vector<16x2048xf32>, vector<2048x32xf32>, vector<16x32xf32> -> vector<16x32xf32>
    %c1_166 = arith.constant 1 : index
    %c0_167 = arith.constant 0 : index
    %c0_168 = arith.constant 0 : index
    %329 = vector.load %arg20[%c1_166, %c0_167, %c0_168] : memref<2x1x32xf32, #tpu.memory_space<vmem>>, vector<1x1x32xf32>
    %330 = vector.shape_cast %329 : vector<1x1x32xf32> to vector<1x32xf32>
    %331 = vector.broadcast %330 : vector<1x32xf32> to vector<16x32xf32>
    %332 = arith.addf %328, %331 : vector<16x32xf32>
    %333 = arith.addf %316, %332 : vector<16x32xf32>
    %cst_169 = arith.constant dense<0.000000e+00> : vector<16xf32>
    %334 = vector.multi_reduction <add>, %333, %cst_169 [1] : vector<16x32xf32> to vector<16xf32>
    %335 = vector.shape_cast %334 : vector<16xf32> to vector<16x1xf32>
    %cst_170 = arith.constant 3.200000e+01 : f32
    %336 = vector.broadcast %cst_170 : f32 to vector<16x1xf32>
    %337 = arith.divf %335, %336 : vector<16x1xf32>
    %338 = vector.broadcast %337 : vector<16x1xf32> to vector<16x32xf32>
    %339 = arith.subf %333, %338 : vector<16x32xf32>
    %340 = arith.mulf %339, %339 : vector<16x32xf32>
    %cst_171 = arith.constant dense<0.000000e+00> : vector<16xf32>
    %341 = vector.multi_reduction <add>, %340, %cst_171 [1] : vector<16x32xf32> to vector<16xf32>
    %342 = vector.shape_cast %341 : vector<16xf32> to vector<16x1xf32>
    %cst_172 = arith.constant 3.200000e+01 : f32
    %343 = vector.broadcast %cst_172 : f32 to vector<16x1xf32>
    %344 = arith.divf %342, %343 : vector<16x1xf32>
    %345 = vector.broadcast %337 : vector<16x1xf32> to vector<16x32xf32>
    %346 = arith.subf %333, %345 : vector<16x32xf32>
    %cst_173 = arith.constant 9.99999974E-6 : f32
    %347 = vector.broadcast %cst_173 : f32 to vector<16x1xf32>
    %348 = arith.addf %344, %347 : vector<16x1xf32>
    %349 = math.rsqrt %348 : vector<16x1xf32>
    %350 = vector.broadcast %349 : vector<16x1xf32> to vector<16x32xf32>
    %351 = arith.mulf %346, %350 : vector<16x32xf32>
    %c1_174 = arith.constant 1 : index
    %c0_175 = arith.constant 0 : index
    %c0_176 = arith.constant 0 : index
    %352 = vector.load %arg21[%c1_174, %c0_175, %c0_176] : memref<2x1x32xf32, #tpu.memory_space<vmem>>, vector<1x1x32xf32>
    %353 = vector.shape_cast %352 : vector<1x1x32xf32> to vector<1x32xf32>
    %354 = vector.broadcast %353 : vector<1x32xf32> to vector<16x32xf32>
    %355 = arith.mulf %351, %354 : vector<16x32xf32>
    %c1_177 = arith.constant 1 : index
    %c0_178 = arith.constant 0 : index
    %c0_179 = arith.constant 0 : index
    %356 = vector.load %arg22[%c1_177, %c0_178, %c0_179] : memref<2x1x32xf32, #tpu.memory_space<vmem>>, vector<1x1x32xf32>
    %357 = vector.shape_cast %356 : vector<1x1x32xf32> to vector<1x32xf32>
    %358 = vector.broadcast %357 : vector<1x32xf32> to vector<16x32xf32>
    %359 = arith.addf %355, %358 : vector<16x32xf32>
    %360 = vector.shape_cast %359 : vector<16x32xf32> to vector<2x8x32xf32>
    %361 = vector.extract_strided_slice %360 {offsets = [0, 7, 0], sizes = [2, 1, 32], strides = [1, 1, 1]} : vector<2x8x32xf32> to vector<2x1x32xf32>
    %362 = vector.shape_cast %361 : vector<2x1x32xf32> to vector<2x32xf32>
    %c0_180 = arith.constant 0 : index
    %c0_181 = arith.constant 0 : index
    %363 = vector.load %arg23[%c0_180, %c0_181] : memref<32x32xf32, #tpu.memory_space<vmem>>, vector<32x32xf32>
    %cst_182 = arith.constant dense<0.000000e+00> : vector<2x32xf32>
    %364 = tpu.matmul %362, %363, %cst_182 {dimension_numbers = #tpu.dot_dimension_numbers<[1], [0], [0], [1], [0, 0, 1, 1], [], []>} : vector<2x32xf32>, vector<32x32xf32>, vector<2x32xf32> -> vector<2x32xf32>
    %c0_183 = arith.constant 0 : index
    %c0_184 = arith.constant 0 : index
    %365 = vector.load %arg24[%c0_183, %c0_184] : memref<1x32xf32, #tpu.memory_space<vmem>>, vector<1x32xf32>
    %366 = vector.broadcast %365 : vector<1x32xf32> to vector<2x32xf32>
    %367 = arith.addf %364, %366 : vector<2x32xf32>
    %c0_185 = arith.constant 0 : index
    %c0_186 = arith.constant 0 : index
    %c0_187 = arith.constant 0 : index
    %368 = vector.load %arg3[%c0_185, %c0_186, %c0_187] : memref<2x1x1xf32, #tpu.memory_space<vmem>>, vector<2x1x1xf32>
    %369 = vector.shape_cast %368 : vector<2x1x1xf32> to vector<2x1xf32>
    %370 = vector.broadcast %369 : vector<2x1xf32> to vector<2x32xf32>
    %371 = arith.mulf %367, %370 : vector<2x32xf32>
    %372 = vector.shape_cast %371 : vector<2x32xf32> to vector<2x1x32xf32>
    %c0_188 = arith.constant 0 : index
    %c0_189 = arith.constant 0 : index
    %c0_190 = arith.constant 0 : index
    %373 = vector.load %arg25[%c0_188, %c0_189, %c0_190] : memref<2x1x32xf32, #tpu.memory_space<vmem>>, vector<2x1x32xf32>
    tpu.vector_store %arg25[%c0_188, %c0_189, %c0_190], %372 {strides = array<i32>} : memref<2x1x32xf32, #tpu.memory_space<vmem>>, vector<2x1x32xf32>,
    return
  }
  func.func @transform_0(%arg0: i32) -> (i32, i32, i32) {
    %c0_i32 = arith.constant 0 : i32
    %c0_i32_0 = arith.constant 0 : i32
    %c0_i32_1 = arith.constant 0 : i32
    return %arg0, %c0_i32, %c0_i32_0 : i32, i32, i32
  }
  func.func @transform_1(%arg0: i32) -> (i32, i32, i32) {
    %c0_i32 = arith.constant 0 : i32
    %c0_i32_0 = arith.constant 0 : i32
    %c0_i32_1 = arith.constant 0 : i32
    return %arg0, %c0_i32, %c0_i32_0 : i32, i32, i32
  }
  func.func @transform_2(%arg0: i32) -> (i32, i32, i32) {
    %c0_i32 = arith.constant 0 : i32
    %c0_i32_0 = arith.constant 0 : i32
    %c0_i32_1 = arith.constant 0 : i32
    return %arg0, %c0_i32, %c0_i32_0 : i32, i32, i32
  }
  func.func @transform_3(%arg0: i32) -> (i32, i32) {
    %c0_i32 = arith.constant 0 : i32
    %c0_i32_0 = arith.constant 0 : i32
    %c0_i32_1 = arith.constant 0 : i32
    return %c0_i32, %c0_i32_0 : i32, i32
  }
  func.func @transform_4(%arg0: i32) -> (i32, i32) {
    %c0_i32 = arith.constant 0 : i32
    %c0_i32_0 = arith.constant 0 : i32
    %c0_i32_1 = arith.constant 0 : i32
    return %c0_i32, %c0_i32_0 : i32, i32
  }
  func.func @transform_5(%arg0: i32) -> (i32, i32) {
    %c0_i32 = arith.constant 0 : i32
    %c0_i32_0 = arith.constant 0 : i32
    %c0_i32_1 = arith.constant 0 : i32
    return %c0_i32, %c0_i32_0 : i32, i32
  }
  func.func @transform_6(%arg0: i32) -> (i32, i32, i32) {
    %c0_i32 = arith.constant 0 : i32
    %c0_i32_0 = arith.constant 0 : i32
    %c0_i32_1 = arith.constant 0 : i32
    %c0_i32_2 = arith.constant 0 : i32
    return %c0_i32, %c0_i32_0, %c0_i32_1 : i32, i32, i32
  }
  func.func @transform_7(%arg0: i32) -> (i32, i32, i32) {
    %c0_i32 = arith.constant 0 : i32
    %c0_i32_0 = arith.constant 0 : i32
    %c0_i32_1 = arith.constant 0 : i32
    %c0_i32_2 = arith.constant 0 : i32
    return %c0_i32, %c0_i32_0, %c0_i32_1 : i32, i32, i32
  }
  func.func @transform_8(%arg0: i32) -> (i32, i32, i32) {
    %c0_i32 = arith.constant 0 : i32
    %c0_i32_0 = arith.constant 0 : i32
    %c0_i32_1 = arith.constant 0 : i32
    %c0_i32_2 = arith.constant 0 : i32
    return %c0_i32, %c0_i32_0, %c0_i32_1 : i32, i32, i32
  }
  func.func @transform_9(%arg0: i32) -> (i32, i32, i32) {
    %c0_i32 = arith.constant 0 : i32
    %c0_i32_0 = arith.constant 0 : i32
    %c0_i32_1 = arith.constant 0 : i32
    %c0_i32_2 = arith.constant 0 : i32
    return %c0_i32, %c0_i32_0, %c0_i32_1 : i32, i32, i32
  }
  func.func @transform_10(%arg0: i32) -> (i32, i32, i32) {
    %c0_i32 = arith.constant 0 : i32
    %c0_i32_0 = arith.constant 0 : i32
    %c0_i32_1 = arith.constant 0 : i32
    %c0_i32_2 = arith.constant 0 : i32
    return %c0_i32, %c0_i32_0, %c0_i32_1 : i32, i32, i32
  }
  func.func @transform_11(%arg0: i32) -> (i32, i32, i32) {
    %c0_i32 = arith.constant 0 : i32
    %c0_i32_0 = arith.constant 0 : i32
    %c0_i32_1 = arith.constant 0 : i32
    %c0_i32_2 = arith.constant 0 : i32
    return %c0_i32, %c0_i32_0, %c0_i32_1 : i32, i32, i32
  }
  func.func @transform_12(%arg0: i32) -> (i32, i32, i32) {
    %c0_i32 = arith.constant 0 : i32
    %c0_i32_0 = arith.constant 0 : i32
    %c0_i32_1 = arith.constant 0 : i32
    %c0_i32_2 = arith.constant 0 : i32
    return %c0_i32, %c0_i32_0, %c0_i32_1 : i32, i32, i32
  }
  func.func @transform_13(%arg0: i32) -> (i32, i32, i32) {
    %c0_i32 = arith.constant 0 : i32
    %c0_i32_0 = arith.constant 0 : i32
    %c0_i32_1 = arith.constant 0 : i32
    %c0_i32_2 = arith.constant 0 : i32
    return %c0_i32, %c0_i32_0, %c0_i32_1 : i32, i32, i32
  }
  func.func @transform_14(%arg0: i32) -> (i32, i32, i32) {
    %c0_i32 = arith.constant 0 : i32
    %c0_i32_0 = arith.constant 0 : i32
    %c0_i32_1 = arith.constant 0 : i32
    %c0_i32_2 = arith.constant 0 : i32
    return %c0_i32, %c0_i32_0, %c0_i32_1 : i32, i32, i32
  }
  func.func @transform_15(%arg0: i32) -> (i32, i32, i32) {
    %c0_i32 = arith.constant 0 : i32
    %c0_i32_0 = arith.constant 0 : i32
    %c0_i32_1 = arith.constant 0 : i32
    %c0_i32_2 = arith.constant 0 : i32
    return %c0_i32, %c0_i32_0, %c0_i32_1 : i32, i32, i32
  }
  func.func @transform_16(%arg0: i32) -> (i32, i32, i32) {
    %c0_i32 = arith.constant 0 : i32
    %c0_i32_0 = arith.constant 0 : i32
    %c0_i32_1 = arith.constant 0 : i32
    %c0_i32_2 = arith.constant 0 : i32
    return %c0_i32, %c0_i32_0, %c0_i32_1 : i32, i32, i32
  }
  func.func @transform_17(%arg0: i32) -> (i32, i32, i32) {
    %c0_i32 = arith.constant 0 : i32
    %c0_i32_0 = arith.constant 0 : i32
    %c0_i32_1 = arith.constant 0 : i32
    %c0_i32_2 = arith.constant 0 : i32
    return %c0_i32, %c0_i32_0, %c0_i32_1 : i32, i32, i32
  }
  func.func @transform_18(%arg0: i32) -> (i32, i32, i32) {
    %c0_i32 = arith.constant 0 : i32
    %c0_i32_0 = arith.constant 0 : i32
    %c0_i32_1 = arith.constant 0 : i32
    %c0_i32_2 = arith.constant 0 : i32
    return %c0_i32, %c0_i32_0, %c0_i32_1 : i32, i32, i32
  }
  func.func @transform_19(%arg0: i32) -> (i32, i32, i32) {
    %c0_i32 = arith.constant 0 : i32
    %c0_i32_0 = arith.constant 0 : i32
    %c0_i32_1 = arith.constant 0 : i32
    %c0_i32_2 = arith.constant 0 : i32
    return %c0_i32, %c0_i32_0, %c0_i32_1 : i32, i32, i32
  }
  func.func @transform_20(%arg0: i32) -> (i32, i32, i32) {
    %c0_i32 = arith.constant 0 : i32
    %c0_i32_0 = arith.constant 0 : i32
    %c0_i32_1 = arith.constant 0 : i32
    %c0_i32_2 = arith.constant 0 : i32
    return %c0_i32, %c0_i32_0, %c0_i32_1 : i32, i32, i32
  }
  func.func @transform_21(%arg0: i32) -> (i32, i32, i32) {
    %c0_i32 = arith.constant 0 : i32
    %c0_i32_0 = arith.constant 0 : i32
    %c0_i32_1 = arith.constant 0 : i32
    %c0_i32_2 = arith.constant 0 : i32
    return %c0_i32, %c0_i32_0, %c0_i32_1 : i32, i32, i32
  }
  func.func @transform_22(%arg0: i32) -> (i32, i32) {
    %c0_i32 = arith.constant 0 : i32
    %c0_i32_0 = arith.constant 0 : i32
    %c0_i32_1 = arith.constant 0 : i32
    return %c0_i32, %c0_i32_0 : i32, i32
  }
  func.func @transform_23(%arg0: i32) -> (i32, i32) {
    %c0_i32 = arith.constant 0 : i32
    %c0_i32_0 = arith.constant 0 : i32
    %c0_i32_1 = arith.constant 0 : i32
    return %c0_i32, %c0_i32_0 : i32, i32
  }
  func.func @transform_24(%arg0: i32) -> (i32, i32, i32) {
    %c0_i32 = arith.constant 0 : i32
    %c0_i32_0 = arith.constant 0 : i32
    %c0_i32_1 = arith.constant 0 : i32
    return %arg0, %c0_i32, %c0_i32_0 : i32, i32, i32
  }
}

</mosaic_0001>

<llo_original>
// kernel: tpu_custom_call.1
$region0: #{tpu_custom_call.1}
  #allocation0 [shape = 'u32[]', space=smem, size = 0x4, offset = 0x4, fixed_abs, tag = 'smem constant byte address 0x4 - core index']
  #allocation1 [shape = 'u32[144,128]{1,0:T(1,128)}', space=vmem, size = 0x12000, scoped, tag = 'internal scratch']
  %s0 = inlined_call_operand.vmem [shape: f32[4,8,16], index: 0, kind: input, shape index: {}]
  %s1 = inlined_call_operand.vmem [shape: f32[4,1,8], index: 1, kind: input, shape index: {}]
  %s2 = inlined_call_operand.vmem [shape: f32[4,1,1], index: 2, kind: input, shape index: {}]
  %s3 = inlined_call_operand.vmem [shape: f32[8,32], index: 3, kind: input, shape index: {}]
  %s4 = inlined_call_operand.vmem [shape: f32[16,32], index: 4, kind: input, shape index: {}]
  %s5 = inlined_call_operand.vmem [shape: f32[1,32], index: 5, kind: input, shape index: {}]
  %s6 = inlined_call_operand.vmem [shape: f32[2,32,32], index: 6, kind: input, shape index: {}]
  %s7 = inlined_call_operand.vmem [shape: f32[2,1,32], index: 7, kind: input, shape index: {}]
  %s8 = inlined_call_operand.vmem [shape: f32[2,32,32], index: 8, kind: input, shape index: {}]
  %s9 = inlined_call_operand.vmem [shape: f32[2,1,32], index: 9, kind: input, shape index: {}]
  %s10 = inlined_call_operand.vmem [shape: f32[2,32,32], index: 10, kind: input, shape index: {}]
  %s11 = inlined_call_operand.vmem [shape: f32[2,1,32], index: 11, kind: input, shape index: {}]
  %s12 = inlined_call_operand.vmem [shape: f32[2,32,32], index: 12, kind: input, shape index: {}]
  %s13 = inlined_call_operand.vmem [shape: f32[2,1,32], index: 13, kind: input, shape index: {}]
  %s14 = inlined_call_operand.vmem [shape: f32[2,1,32], index: 14, kind: input, shape index: {}]
  %s15 = inlined_call_operand.vmem [shape: f32[2,1,32], index: 15, kind: input, shape index: {}]
  %s16 = inlined_call_operand.vmem [shape: f32[2,32,2048], index: 16, kind: input, shape index: {}]
  %s17 = inlined_call_operand.vmem [shape: f32[2,1,2048], index: 17, kind: input, shape index: {}]
  %s18 = inlined_call_operand.vmem [shape: f32[2,2048,32], index: 18, kind: input, shape index: {}]
  %s19 = inlined_call_operand.vmem [shape: f32[2,1,32], index: 19, kind: input, shape index: {}]
  %s20 = inlined_call_operand.vmem [shape: f32[2,1,32], index: 20, kind: input, shape index: {}]
  %s21 = inlined_call_operand.vmem [shape: f32[2,1,32], index: 21, kind: input, shape index: {}]
  %s22 = inlined_call_operand.vmem [shape: f32[32,32], index: 22, kind: input, shape index: {}]
  %s23 = inlined_call_operand.vmem [shape: f32[1,32], index: 23, kind: input, shape index: {}]
  %s24 = inlined_call_operand.hbm [shape: f32[4,1,32], index: 24, kind: output, shape index: {}]
  %s25 = sld [smem:[#allocation0]]
  $region129: #{tpu_custom_call.1} parent=0
    _
  %s27 = ssub.s32 1, %s25
  %s28 = scalar_select 0, %s27, %s25
  $region1: #{tpu_custom_call.1} parent=0
    #allocation2 [shape = 'u8[2048]{0}', space=vmem, size = 0x800, scoped, tag = 'output window, operand 0']
    #allocation3 [shape = 's32[2]{0}', space=sflag, size = 0x8, scoped, tag = 'scoped memory for tpu_custom_call.1']
    %29 = vsyncpa [#allocation3], 0
    %s30 = scalar_lea.sflag [#allocation3], 1
    %31 = vsyncpa %s30, 0
    loop: start=0, step=1, limit=4
    $region2: #{tpu_custom_call.1} parent=1 // loop_pre_header
      _
    $region3: #{tpu_custom_call.1} parent=1 // loop_header
      %s33 = sphi 0, %s37
      %p34 = scmp.ge.s32.totalorder %s33, 4
      %s43 = sphi 0, %s45
      %s46 = sphi 0, %s43
      %s47 = sphi 0, %s46
      %s63 = sphi 0, %s47
      %s69 = sphi 0, %s71
      %s72 = sphi 0, %s69
      %s73 = sphi 0, %s72
      %s89 = sphi 0, %s73
      %s95 = sphi 0, %s97
      %s98 = sphi 0, %s95
      %s99 = sphi 0, %s98
      %s115 = sphi 0, %s99
      %s119 = sphi 0, %s119
      %s121 = sphi 0, %s119
      %s122 = sphi 0, %s121
      %s136 = sphi 0, %s122
      %s140 = sphi 0, %s140
      %s142 = sphi 0, %s140
      %s143 = sphi 0, %s142
      %s157 = sphi 0, %s143
      %s161 = sphi 0, %s161
      %s163 = sphi 0, %s161
      %s164 = sphi 0, %s163
      %s178 = sphi 0, %s164
      %s182 = sphi 0, %s182
      %s184 = sphi 0, %s182
      %s185 = sphi 0, %s184
      %s199 = sphi 0, %s185
      %s203 = sphi 0, %s203
      %s205 = sphi 0, %s203
      %s206 = sphi 0, %s205
      %s220 = sphi 0, %s206
      %s224 = sphi 0, %s224
      %s226 = sphi 0, %s224
      %s227 = sphi 0, %s226
      %s241 = sphi 0, %s227
      %s245 = sphi 0, %s245
      %s247 = sphi 0, %s245
      %s248 = sphi 0, %s247
      %s262 = sphi 0, %s248
      %s266 = sphi 0, %s266
      %s268 = sphi 0, %s266
      %s269 = sphi 0, %s268
      %s283 = sphi 0, %s269
      %s287 = sphi 0, %s287
      %s289 = sphi 0, %s287
      %s290 = sphi 0, %s289
      %s304 = sphi 0, %s290
      %s308 = sphi 0, %s308
      %s310 = sphi 0, %s308
      %s311 = sphi 0, %s310
      %s325 = sphi 0, %s311
      %s329 = sphi 0, %s329
      %s331 = sphi 0, %s329
      %s332 = sphi 0, %s331
      %s346 = sphi 0, %s332
      %s350 = sphi 0, %s350
      %s352 = sphi 0, %s350
      %s353 = sphi 0, %s352
      %s367 = sphi 0, %s353
      %s371 = sphi 0, %s371
      %s373 = sphi 0, %s371
      %s374 = sphi 0, %s373
      %s388 = sphi 0, %s374
      %s392 = sphi 0, %s392
      %s394 = sphi 0, %s392
      %s395 = sphi 0, %s394
      %s409 = sphi 0, %s395
      %s413 = sphi 0, %s413
      %s415 = sphi 0, %s413
      %s416 = sphi 0, %s415
      %s430 = sphi 0, %s416
      %s434 = sphi 0, %s434
      %s436 = sphi 0, %s434
      %s437 = sphi 0, %s436
      %s451 = sphi 0, %s437
      %s455 = sphi 0, %s455
      %s457 = sphi 0, %s455
      %s458 = sphi 0, %s457
      %s472 = sphi 0, %s458
      %s476 = sphi 0, %s476
      %s478 = sphi 0, %s476
      %s479 = sphi 0, %s478
      %s493 = sphi 0, %s479
      %s497 = sphi 0, %s497
      %s499 = sphi 0, %s497
      %s500 = sphi 0, %s499
      %s514 = sphi 0, %s500
      %s518 = sphi 0, %s518
      %s520 = sphi 0, %s518
      %s521 = sphi 0, %s520
      %s535 = sphi 0, %s521
      %s539 = sphi 0, %s539
      %s541 = sphi 0, %s539
      %s542 = sphi 0, %s541
      %s556 = sphi 0, %s542
      %s562 = sphi 0, %s564
      %s565 = sphi 0, %s562
      %s566 = sphi 0, %s565
      %s582 = sphi 0, %s566
    $region4: #{tpu_custom_call.1} parent=1 // loop_header_branch
      %36 = sbr.rel (%p34) target = $region8
    $region5: #{tpu_custom_call.1} parent=1 // loop_body
      %s38 = ssub.s32 %s33, 1
      %s39 = ssub.s32 %s33, 2
      %s40 = sadd.s32 %s33, 1
      %s41 = ssub.s32 %s33, %s40
      %p42 = scmp.eq.s32.totalorder %s41, 0
      %s44 = sadd.s32 %s43, 1
      %s45 = scalar_select %p42, %s43, %s44
      %p48 = pneg %p42
      %p49 = scmp.eq.s32.totalorder %s33, 1
      %p50 = por %p48, %p49
      %p51 = scmp.ne.s32.totalorder %s43, %s46
      %p52 = scmp.eq.s32.totalorder %s33, 0
      %p53 = por %p51, %p52
      %p54 = scmp.ne.s32.totalorder %s43, %s46
      %p55 = scmp.eq.s32.totalorder %s38, 1
      %p56 = por %p54, %p55
      %p57 = scmp.ne.s32.totalorder %s46, %s47
      %p58 = scmp.eq.s32.totalorder %s38, 0
      %p59 = por %p57, %p58
      %p60 = scmp.ne.s32.totalorder %s46, %s47
      %p61 = scmp.eq.s32.totalorder %s39, 1
      %p62 = por %p60, %p61
      %p64 = scmp.ne.s32.totalorder %s47, %s63
      %p65 = scmp.eq.s32.totalorder %s39, 0
      %p66 = por %p64, %p65
      %s67 = ssub.s32 %s33, %s40
      %p68 = scmp.eq.s32.totalorder %s67, 0
      %s70 = sadd.s32 %s69, 1
      %s71 = scalar_select %p68, %s69, %s70
      %p74 = pneg %p68
      %p75 = scmp.eq.s32.totalorder %s33, 1
      %p76 = por %p74, %p75
      %p77 = scmp.ne.s32.totalorder %s69, %s72
      %p78 = scmp.eq.s32.totalorder %s33, 0
      %p79 = por %p77, %p78
      %p80 = scmp.ne.s32.totalorder %s69, %s72
      %p81 = scmp.eq.s32.totalorder %s38, 1
      %p82 = por %p80, %p81
      %p83 = scmp.ne.s32.totalorder %s72, %s73
      %p84 = scmp.eq.s32.totalorder %s38, 0
      %p85 = por %p83, %p84
      %p86 = scmp.ne.s32.totalorder %s72, %s73
      %p87 = scmp.eq.s32.totalorder %s39, 1
      %p88 = por %p86, %p87
      %p90 = scmp.ne.s32.totalorder %s73, %s89
      %p91 = scmp.eq.s32.totalorder %s39, 0
      %p92 = por %p90, %p91
      %s93 = ssub.s32 %s33, %s40
      %p94 = scmp.eq.s32.totalorder %s93, 0
      %s96 = sadd.s32 %s95, 1
      %s97 = scalar_select %p94, %s95, %s96
      %p100 = pneg %p94
      %p101 = scmp.eq.s32.totalorder %s33, 1
      %p102 = por %p100, %p101
      %p103 = scmp.ne.s32.totalorder %s95, %s98
      %p104 = scmp.eq.s32.totalorder %s33, 0
      %p105 = por %p103, %p104
      %p106 = scmp.ne.s32.totalorder %s95, %s98
      %p107 = scmp.eq.s32.totalorder %s38, 1
      %p108 = por %p106, %p107
      %p109 = scmp.ne.s32.totalorder %s98, %s99
      %p110 = scmp.eq.s32.totalorder %s38, 0
      %p111 = por %p109, %p110
      %p112 = scmp.ne.s32.totalorder %s98, %s99
      %p113 = scmp.eq.s32.totalorder %s39, 1
      %p114 = por %p112, %p113
      %p116 = scmp.ne.s32.totalorder %s99, %s115
      %p117 = scmp.eq.s32.totalorder %s39, 0
      %p118 = por %p116, %p117
      %s120 = sadd.s32 %s119, 1
      %p123 = scmp.eq.s32.totalorder %s33, 1
      %p124 = scmp.ne.s32.totalorder %s119, %s121
      %p125 = scmp.eq.s32.totalorder %s33, 0
      %p126 = por %p124, %p125
      %p127 = scmp.ne.s32.totalorder %s119, %s121
      %p128 = scmp.eq.s32.totalorder %s38, 1
      %p129 = por %p127, %p128
      %p130 = scmp.ne.s32.totalorder %s121, %s122
      %p131 = scmp.eq.s32.totalorder %s38, 0
      %p132 = por %p130, %p131
      %p133 = scmp.ne.s32.totalorder %s121, %s122
      %p134 = scmp.eq.s32.totalorder %s39, 1
      %p135 = por %p133, %p134
      %p137 = scmp.ne.s32.totalorder %s122, %s136
      %p138 = scmp.eq.s32.totalorder %s39, 0
      %p139 = por %p137, %p138
      %s141 = sadd.s32 %s140, 1
      %p144 = scmp.eq.s32.totalorder %s33, 1
      %p145 = scmp.ne.s32.totalorder %s140, %s142
      %p146 = scmp.eq.s32.totalorder %s33, 0
      %p147 = por %p145, %p146
      %p148 = scmp.ne.s32.totalorder %s140, %s142
      %p149 = scmp.eq.s32.totalorder %s38, 1
      %p150 = por %p148, %p149
      %p151 = scmp.ne.s32.totalorder %s142, %s143
      %p152 = scmp.eq.s32.totalorder %s38, 0
      %p153 = por %p151, %p152
      %p154 = scmp.ne.s32.totalorder %s142, %s143
      %p155 = scmp.eq.s32.totalorder %s39, 1
      %p156 = por %p154, %p155
      %p158 = scmp.ne.s32.totalorder %s143, %s157
      %p159 = scmp.eq.s32.totalorder %s39, 0
      %p160 = por %p158, %p159
      %s162 = sadd.s32 %s161, 1
      %p165 = scmp.eq.s32.totalorder %s33, 1
      %p166 = scmp.ne.s32.totalorder %s161, %s163
      %p167 = scmp.eq.s32.totalorder %s33, 0
      %p168 = por %p166, %p167
      %p169 = scmp.ne.s32.totalorder %s161, %s163
      %p170 = scmp.eq.s32.totalorder %s38, 1
      %p171 = por %p169, %p170
      %p172 = scmp.ne.s32.totalorder %s163, %s164
      %p173 = scmp.eq.s32.totalorder %s38, 0
      %p174 = por %p172, %p173
      %p175 = scmp.ne.s32.totalorder %s163, %s164
      %p176 = scmp.eq.s32.totalorder %s39, 1
      %p177 = por %p175, %p176
      %p179 = scmp.ne.s32.totalorder %s164, %s178
      %p180 = scmp.eq.s32.totalorder %s39, 0
      %p181 = por %p179, %p180
      %s183 = sadd.s32 %s182, 1
      %p186 = scmp.eq.s32.totalorder %s33, 1
      %p187 = scmp.ne.s32.totalorder %s182, %s184
      %p188 = scmp.eq.s32.totalorder %s33, 0
      %p189 = por %p187, %p188
      %p190 = scmp.ne.s32.totalorder %s182, %s184
      %p191 = scmp.eq.s32.totalorder %s38, 1
      %p192 = por %p190, %p191
      %p193 = scmp.ne.s32.totalorder %s184, %s185
      %p194 = scmp.eq.s32.totalorder %s38, 0
      %p195 = por %p193, %p194
      %p196 = scmp.ne.s32.totalorder %s184, %s185
      %p197 = scmp.eq.s32.totalorder %s39, 1
      %p198 = por %p196, %p197
      %p200 = scmp.ne.s32.totalorder %s185, %s199
      %p201 = scmp.eq.s32.totalorder %s39, 0
      %p202 = por %p200, %p201
      %s204 = sadd.s32 %s203, 1
      %p207 = scmp.eq.s32.totalorder %s33, 1
      %p208 = scmp.ne.s32.totalorder %s203, %s205
      %p209 = scmp.eq.s32.totalorder %s33, 0
      %p210 = por %p208, %p209
      %p211 = scmp.ne.s32.totalorder %s203, %s205
      %p212 = scmp.eq.s32.totalorder %s38, 1
      %p213 = por %p211, %p212
      %p214 = scmp.ne.s32.totalorder %s205, %s206
      %p215 = scmp.eq.s32.totalorder %s38, 0
      %p216 = por %p214, %p215
      %p217 = scmp.ne.s32.totalorder %s205, %s206
      %p218 = scmp.eq.s32.totalorder %s39, 1
      %p219 = por %p217, %p218
      %p221 = scmp.ne.s32.totalorder %s206, %s220
      %p222 = scmp.eq.s32.totalorder %s39, 0
      %p223 = por %p221, %p222
      %s225 = sadd.s32 %s224, 1
      %p228 = scmp.eq.s32.totalorder %s33, 1
      %p229 = scmp.ne.s32.totalorder %s224, %s226
      %p230 = scmp.eq.s32.totalorder %s33, 0
      %p231 = por %p229, %p230
      %p232 = scmp.ne.s32.totalorder %s224, %s226
      %p233 = scmp.eq.s32.totalorder %s38, 1
      %p234 = por %p232, %p233
      %p235 = scmp.ne.s32.totalorder %s226, %s227
      %p236 = scmp.eq.s32.totalorder %s38, 0
      %p237 = por %p235, %p236
      %p238 = scmp.ne.s32.totalorder %s226, %s227
      %p239 = scmp.eq.s32.totalorder %s39, 1
      %p240 = por %p238, %p239
      %p242 = scmp.ne.s32.totalorder %s227, %s241
      %p243 = scmp.eq.s32.totalorder %s39, 0
      %p244 = por %p242, %p243
      %s246 = sadd.s32 %s245, 1
      %p249 = scmp.eq.s32.totalorder %s33, 1
      %p250 = scmp.ne.s32.totalorder %s245, %s247
      %p251 = scmp.eq.s32.totalorder %s33, 0
      %p252 = por %p250, %p251
      %p253 = scmp.ne.s32.totalorder %s245, %s247
      %p254 = scmp.eq.s32.totalorder %s38, 1
      %p255 = por %p253, %p254
      %p256 = scmp.ne.s32.totalorder %s247, %s248
      %p257 = scmp.eq.s32.totalorder %s38, 0
      %p258 = por %p256, %p257
      %p259 = scmp.ne.s32.totalorder %s247, %s248
      %p260 = scmp.eq.s32.totalorder %s39, 1
      %p261 = por %p259, %p260
      %p263 = scmp.ne.s32.totalorder %s248, %s262
      %p264 = scmp.eq.s32.totalorder %s39, 0
      %p265 = por %p263, %p264
      %s267 = sadd.s32 %s266, 1
      %p270 = scmp.eq.s32.totalorder %s33, 1
      %p271 = scmp.ne.s32.totalorder %s266, %s268
      %p272 = scmp.eq.s32.totalorder %s33, 0
      %p273 = por %p271, %p272
      %p274 = scmp.ne.s32.totalorder %s266, %s268
      %p275 = scmp.eq.s32.totalorder %s38, 1
      %p276 = por %p274, %p275
      %p277 = scmp.ne.s32.totalorder %s268, %s269
      %p278 = scmp.eq.s32.totalorder %s38, 0
      %p279 = por %p277, %p278
      %p280 = scmp.ne.s32.totalorder %s268, %s269
      %p281 = scmp.eq.s32.totalorder %s39, 1
      %p282 = por %p280, %p281
      %p284 = scmp.ne.s32.totalorder %s269, %s283
      %p285 = scmp.eq.s32.totalorder %s39, 0
      %p286 = por %p284, %p285
      %s288 = sadd.s32 %s287, 1
      %p291 = scmp.eq.s32.totalorder %s33, 1
      %p292 = scmp.ne.s32.totalorder %s287, %s289
      %p293 = scmp.eq.s32.totalorder %s33, 0
      %p294 = por %p292, %p293
      %p295 = scmp.ne.s32.totalorder %s287, %s289
      %p296 = scmp.eq.s32.totalorder %s38, 1
      %p297 = por %p295, %p296
      %p298 = scmp.ne.s32.totalorder %s289, %s290
      %p299 = scmp.eq.s32.totalorder %s38, 0
      %p300 = por %p298, %p299
      %p301 = scmp.ne.s32.totalorder %s289, %s290
      %p302 = scmp.eq.s32.totalorder %s39, 1
      %p303 = por %p301, %p302
      %p305 = scmp.ne.s32.totalorder %s290, %s304
      %p306 = scmp.eq.s32.totalorder %s39, 0
      %p307 = por %p305, %p306
      %s309 = sadd.s32 %s308, 1
      %p312 = scmp.eq.s32.totalorder %s33, 1
      %p313 = scmp.ne.s32.totalorder %s308, %s310
      %p314 = scmp.eq.s32.totalorder %s33, 0
      %p315 = por %p313, %p314
      %p316 = scmp.ne.s32.totalorder %s308, %s310
      %p317 = scmp.eq.s32.totalorder %s38, 1
      %p318 = por %p316, %p317
      %p319 = scmp.ne.s32.totalorder %s310, %s311
      %p320 = scmp.eq.s32.totalorder %s38, 0
      %p321 = por %p319, %p320
      %p322 = scmp.ne.s32.totalorder %s310, %s311
      %p323 = scmp.eq.s32.totalorder %s39, 1
      %p324 = por %p322, %p323
      %p326 = scmp.ne.s32.totalorder %s311, %s325
      %p327 = scmp.eq.s32.totalorder %s39, 0
      %p328 = por %p326, %p327
      %s330 = sadd.s32 %s329, 1
      %p333 = scmp.eq.s32.totalorder %s33, 1
      %p334 = scmp.ne.s32.totalorder %s329, %s331
      %p335 = scmp.eq.s32.totalorder %s33, 0
      %p336 = por %p334, %p335
      %p337 = scmp.ne.s32.totalorder %s329, %s331
      %p338 = scmp.eq.s32.totalorder %s38, 1
      %p339 = por %p337, %p338
      %p340 = scmp.ne.s32.totalorder %s331, %s332
      %p341 = scmp.eq.s32.totalorder %s38, 0
      %p342 = por %p340, %p341
      %p343 = scmp.ne.s32.totalorder %s331, %s332
      %p344 = scmp.eq.s32.totalorder %s39, 1
      %p345 = por %p343, %p344
      %p347 = scmp.ne.s32.totalorder %s332, %s346
      %p348 = scmp.eq.s32.totalorder %s39, 0
      %p349 = por %p347, %p348
      %s351 = sadd.s32 %s350, 1
      %p354 = scmp.eq.s32.totalorder %s33, 1
      %p355 = scmp.ne.s32.totalorder %s350, %s352
      %p356 = scmp.eq.s32.totalorder %s33, 0
      %p357 = por %p355, %p356
      %p358 = scmp.ne.s32.totalorder %s350, %s352
      %p359 = scmp.eq.s32.totalorder %s38, 1
      %p360 = por %p358, %p359
      %p361 = scmp.ne.s32.totalorder %s352, %s353
      %p362 = scmp.eq.s32.totalorder %s38, 0
      %p363 = por %p361, %p362
      %p364 = scmp.ne.s32.totalorder %s352, %s353
      %p365 = scmp.eq.s32.totalorder %s39, 1
      %p366 = por %p364, %p365
      %p368 = scmp.ne.s32.totalorder %s353, %s367
      %p369 = scmp.eq.s32.totalorder %s39, 0
      %p370 = por %p368, %p369
      %s372 = sadd.s32 %s371, 1
      %p375 = scmp.eq.s32.totalorder %s33, 1
      %p376 = scmp.ne.s32.totalorder %s371, %s373
      %p377 = scmp.eq.s32.totalorder %s33, 0
      %p378 = por %p376, %p377
      %p379 = scmp.ne.s32.totalorder %s371, %s373
      %p380 = scmp.eq.s32.totalorder %s38, 1
      %p381 = por %p379, %p380
      %p382 = scmp.ne.s32.totalorder %s373, %s374
      %p383 = scmp.eq.s32.totalorder %s38, 0
      %p384 = por %p382, %p383
      %p385 = scmp.ne.s32.totalorder %s373, %s374
      %p386 = scmp.eq.s32.totalorder %s39, 1
      %p387 = por %p385, %p386
      %p389 = scmp.ne.s32.totalorder %s374, %s388
      %p390 = scmp.eq.s32.totalorder %s39, 0
      %p391 = por %p389, %p390
      %s393 = sadd.s32 %s392, 1
      %p396 = scmp.eq.s32.totalorder %s33, 1
      %p397 = scmp.ne.s32.totalorder %s392, %s394
      %p398 = scmp.eq.s32.totalorder %s33, 0
      %p399 = por %p397, %p398
      %p400 = scmp.ne.s32.totalorder %s392, %s394
      %p401 = scmp.eq.s32.totalorder %s38, 1
      %p402 = por %p400, %p401
      %p403 = scmp.ne.s32.totalorder %s394, %s395
      %p404 = scmp.eq.s32.totalorder %s38, 0
      %p405 = por %p403, %p404
      %p406 = scmp.ne.s32.totalorder %s394, %s395
      %p407 = scmp.eq.s32.totalorder %s39, 1
      %p408 = por %p406, %p407
      %p410 = scmp.ne.s32.totalorder %s395, %s409
      %p411 = scmp.eq.s32.totalorder %s39, 0
      %p412 = por %p410, %p411
      %s414 = sadd.s32 %s413, 1
      %p417 = scmp.eq.s32.totalorder %s33, 1
      %p418 = scmp.ne.s32.totalorder %s413, %s415
      %p419 = scmp.eq.s32.totalorder %s33, 0
      %p420 = por %p418, %p419
      %p421 = scmp.ne.s32.totalorder %s413, %s415
      %p422 = scmp.eq.s32.totalorder %s38, 1
      %p423 = por %p421, %p422
      %p424 = scmp.ne.s32.totalorder %s415, %s416
      %p425 = scmp.eq.s32.totalorder %s38, 0
      %p426 = por %p424, %p425
      %p427 = scmp.ne.s32.totalorder %s415, %s416
      %p428 = scmp.eq.s32.totalorder %s39, 1
      %p429 = por %p427, %p428
      %p431 = scmp.ne.s32.totalorder %s416, %s430
      %p432 = scmp.eq.s32.totalorder %s39, 0
      %p433 = por %p431, %p432
      %s435 = sadd.s32 %s434, 1
      %p438 = scmp.eq.s32.totalorder %s33, 1
      %p439 = scmp.ne.s32.totalorder %s434, %s436
      %p440 = scmp.eq.s32.totalorder %s33, 0
      %p441 = por %p439, %p440
      %p442 = scmp.ne.s32.totalorder %s434, %s436
      %p443 = scmp.eq.s32.totalorder %s38, 1
      %p444 = por %p442, %p443
      %p445 = scmp.ne.s32.totalorder %s436, %s437
      %p446 = scmp.eq.s32.totalorder %s38, 0
      %p447 = por %p445, %p446
      %p448 = scmp.ne.s32.totalorder %s436, %s437
      %p449 = scmp.eq.s32.totalorder %s39, 1
      %p450 = por %p448, %p449
      %p452 = scmp.ne.s32.totalorder %s437, %s451
      %p453 = scmp.eq.s32.totalorder %s39, 0
      %p454 = por %p452, %p453
      %s456 = sadd.s32 %s455, 1
      %p459 = scmp.eq.s32.totalorder %s33, 1
      %p460 = scmp.ne.s32.totalorder %s455, %s457
      %p461 = scmp.eq.s32.totalorder %s33, 0
      %p462 = por %p460, %p461
      %p463 = scmp.ne.s32.totalorder %s455, %s457
      %p464 = scmp.eq.s32.totalorder %s38, 1
      %p465 = por %p463, %p464
      %p466 = scmp.ne.s32.totalorder %s457, %s458
      %p467 = scmp.eq.s32.totalorder %s38, 0
      %p468 = por %p466, %p467
      %p469 = scmp.ne.s32.totalorder %s457, %s458
      %p470 = scmp.eq.s32.totalorder %s39, 1
      %p471 = por %p469, %p470
      %p473 = scmp.ne.s32.totalorder %s458, %s472
      %p474 = scmp.eq.s32.totalorder %s39, 0
      %p475 = por %p473, %p474
      %s477 = sadd.s32 %s476, 1
      %p480 = scmp.eq.s32.totalorder %s33, 1
      %p481 = scmp.ne.s32.totalorder %s476, %s478
      %p482 = scmp.eq.s32.totalorder %s33, 0
      %p483 = por %p481, %p482
      %p484 = scmp.ne.s32.totalorder %s476, %s478
      %p485 = scmp.eq.s32.totalorder %s38, 1
      %p486 = por %p484, %p485
      %p487 = scmp.ne.s32.totalorder %s478, %s479
      %p488 = scmp.eq.s32.totalorder %s38, 0
      %p489 = por %p487, %p488
      %p490 = scmp.ne.s32.totalorder %s478, %s479
      %p491 = scmp.eq.s32.totalorder %s39, 1
      %p492 = por %p490, %p491
      %p494 = scmp.ne.s32.totalorder %s479, %s493
      %p495 = scmp.eq.s32.totalorder %s39, 0
      %p496 = por %p494, %p495
      %s498 = sadd.s32 %s497, 1
      %p501 = scmp.eq.s32.totalorder %s33, 1
      %p502 = scmp.ne.s32.totalorder %s497, %s499
      %p503 = scmp.eq.s32.totalorder %s33, 0
      %p504 = por %p502, %p503
      %p505 = scmp.ne.s32.totalorder %s497, %s499
      %p506 = scmp.eq.s32.totalorder %s38, 1
      %p507 = por %p505, %p506
      %p508 = scmp.ne.s32.totalorder %s499, %s500
      %p509 = scmp.eq.s32.totalorder %s38, 0
      %p510 = por %p508, %p509
      %p511 = scmp.ne.s32.totalorder %s499, %s500
      %p512 = scmp.eq.s32.totalorder %s39, 1
      %p513 = por %p511, %p512
      %p515 = scmp.ne.s32.totalorder %s500, %s514
      %p516 = scmp.eq.s32.totalorder %s39, 0
      %p517 = por %p515, %p516
      %s519 = sadd.s32 %s518, 1
      %p522 = scmp.eq.s32.totalorder %s33, 1
      %p523 = scmp.ne.s32.totalorder %s518, %s520
      %p524 = scmp.eq.s32.totalorder %s33, 0
      %p525 = por %p523, %p524
      %p526 = scmp.ne.s32.totalorder %s518, %s520
      %p527 = scmp.eq.s32.totalorder %s38, 1
      %p528 = por %p526, %p527
      %p529 = scmp.ne.s32.totalorder %s520, %s521
      %p530 = scmp.eq.s32.totalorder %s38, 0
      %p531 = por %p529, %p530
      %p532 = scmp.ne.s32.totalorder %s520, %s521
      %p533 = scmp.eq.s32.totalorder %s39, 1
      %p534 = por %p532, %p533
      %p536 = scmp.ne.s32.totalorder %s521, %s535
      %p537 = scmp.eq.s32.totalorder %s39, 0
      %p538 = por %p536, %p537
      %s540 = sadd.s32 %s539, 1
      %p543 = scmp.eq.s32.totalorder %s33, 1
      %p544 = scmp.ne.s32.totalorder %s539, %s541
      %p545 = scmp.eq.s32.totalorder %s33, 0
      %p546 = por %p544, %p545
      %p547 = scmp.ne.s32.totalorder %s539, %s541
      %p548 = scmp.eq.s32.totalorder %s38, 1
      %p549 = por %p547, %p548
      %p550 = scmp.ne.s32.totalorder %s541, %s542
      %p551 = scmp.eq.s32.totalorder %s38, 0
      %p552 = por %p550, %p551
      %p553 = scmp.ne.s32.totalorder %s541, %s542
      %p554 = scmp.eq.s32.totalorder %s39, 1
      %p555 = por %p553, %p554
      %p557 = scmp.ne.s32.totalorder %s542, %s556
      %p558 = scmp.eq.s32.totalorder %s39, 0
      %p559 = por %p557, %p558
      %s560 = ssub.s32 %s33, %s40
      %p561 = scmp.eq.s32.totalorder %s560, 0
      %s563 = sadd.s32 %s562, 1
      %s564 = scalar_select %p561, %s562, %s563
      %p567 = pneg %p561
      %p568 = scmp.eq.s32.totalorder %s33, 1
      %p569 = por %p567, %p568
      %p570 = scmp.ne.s32.totalorder %s562, %s565
      %p571 = scmp.eq.s32.totalorder %s33, 0
      %p572 = por %p570, %p571
      %p573 = scmp.ne.s32.totalorder %s562, %s565
      %p574 = scmp.eq.s32.totalorder %s38, 1
      %p575 = por %p573, %p574
      %p576 = scmp.ne.s32.totalorder %s565, %s566
      %p577 = scmp.eq.s32.totalorder %s38, 0
      %p578 = por %p576, %p577
      %p579 = scmp.ne.s32.totalorder %s565, %s566
      %p580 = scmp.eq.s32.totalorder %s39, 1
      %p581 = por %p579, %p580
      %p583 = scmp.ne.s32.totalorder %s566, %s582
      %p584 = scmp.eq.s32.totalorder %s39, 0
      %p585 = por %p583, %p584
      %p586 = scmp.le.s32.totalorder 1, %s33
      %p587 = scmp.lt.s32.totalorder %s33, 3
      %p588 = pnand %p586, %p587
      %p589 = pneg %p588
      // Predicated region
      $region9: #{tpu_custom_call.1} parent=5 // pred_check
        _
      $region10: #{tpu_custom_call.1} parent=5 // pred_check_branch
        %591 = sbr.rel (%p588) target = $region12
      $region11: #{tpu_custom_call.1} parent=5 // pred_region
        %s592 = ssub.s32 %s33, 1
        // Predicated region
        $region13: #{tpu_custom_call.1} parent=11 // pred_check
          %p593 = pneg %p132
        $region14: #{tpu_custom_call.1} parent=11 // pred_check_branch
          %595 = sbr.rel (%p593) target = $region16
        $region15: #{tpu_custom_call.1} parent=11 // pred_region
          _
        $region16: #{tpu_custom_call.1} parent=11 // pred_fallthru
          _
        // Predicated region
        $region17: #{tpu_custom_call.1} parent=11 // pred_check
          %p596 = pneg %p153
        $region18: #{tpu_custom_call.1} parent=11 // pred_check_branch
          %598 = sbr.rel (%p596) target = $region20
        $region19: #{tpu_custom_call.1} parent=11 // pred_region
          _
        $region20: #{tpu_custom_call.1} parent=11 // pred_fallthru
          _
        // Predicated region
        $region21: #{tpu_custom_call.1} parent=11 // pred_check
          %p599 = pneg %p174
        $region22: #{tpu_custom_call.1} parent=11 // pred_check_branch
          %601 = sbr.rel (%p599) target = $region24
        $region23: #{tpu_custom_call.1} parent=11 // pred_region
          _
        $region24: #{tpu_custom_call.1} parent=11 // pred_fallthru
          _
        // Predicated region
        $region25: #{tpu_custom_call.1} parent=11 // pred_check
          %p602 = pneg %p195
        $region26: #{tpu_custom_call.1} parent=11 // pred_check_branch
          %604 = sbr.rel (%p602) target = $region28
        $region27: #{tpu_custom_call.1} parent=11 // pred_region
          _
        $region28: #{tpu_custom_call.1} parent=11 // pred_fallthru
          _
        // Predicated region
        $region29: #{tpu_custom_call.1} parent=11 // pred_check
          %p605 = pneg %p216
        $region30: #{tpu_custom_call.1} parent=11 // pred_check_branch
          %607 = sbr.rel (%p605) target = $region32
        $region31: #{tpu_custom_call.1} parent=11 // pred_region
          _
        $region32: #{tpu_custom_call.1} parent=11 // pred_fallthru
          _
        // Predicated region
        $region33: #{tpu_custom_call.1} parent=11 // pred_check
          %p608 = pneg %p237
        $region34: #{tpu_custom_call.1} parent=11 // pred_check_branch
          %610 = sbr.rel (%p608) target = $region36
        $region35: #{tpu_custom_call.1} parent=11 // pred_region
          _
        $region36: #{tpu_custom_call.1} parent=11 // pred_fallthru
          _
        // Predicated region
        $region37: #{tpu_custom_call.1} parent=11 // pred_check
          %p611 = pneg %p258
        $region38: #{tpu_custom_call.1} parent=11 // pred_check_branch
          %613 = sbr.rel (%p611) target = $region40
        $region39: #{tpu_custom_call.1} parent=11 // pred_region
          _
        $region40: #{tpu_custom_call.1} parent=11 // pred_fallthru
          _
        // Predicated region
        $region41: #{tpu_custom_call.1} parent=11 // pred_check
          %p614 = pneg %p279
        $region42: #{tpu_custom_call.1} parent=11 // pred_check_branch
          %616 = sbr.rel (%p614) target = $region44
        $region43: #{tpu_custom_call.1} parent=11 // pred_region
          _
        $region44: #{tpu_custom_call.1} parent=11 // pred_fallthru
          _
        // Predicated region
        $region45: #{tpu_custom_call.1} parent=11 // pred_check
          %p617 = pneg %p300
        $region46: #{tpu_custom_call.1} parent=11 // pred_check_branch
          %619 = sbr.rel (%p617) target = $region48
        $region47: #{tpu_custom_call.1} parent=11 // pred_region
          _
        $region48: #{tpu_custom_call.1} parent=11 // pred_fallthru
          _
        // Predicated region
        $region49: #{tpu_custom_call.1} parent=11 // pred_check
          %p620 = pneg %p321
        $region50: #{tpu_custom_call.1} parent=11 // pred_check_branch
          %622 = sbr.rel (%p620) target = $region52
        $region51: #{tpu_custom_call.1} parent=11 // pred_region
          _
        $region52: #{tpu_custom_call.1} parent=11 // pred_fallthru
          _
        // Predicated region
        $region53: #{tpu_custom_call.1} parent=11 // pred_check
          %p623 = pneg %p342
        $region54: #{tpu_custom_call.1} parent=11 // pred_check_branch
          %625 = sbr.rel (%p623) target = $region56
        $region55: #{tpu_custom_call.1} parent=11 // pred_region
          _
        $region56: #{tpu_custom_call.1} parent=11 // pred_fallthru
          _
        // Predicated region
        $region57: #{tpu_custom_call.1} parent=11 // pred_check
          %p626 = pneg %p363
        $region58: #{tpu_custom_call.1} parent=11 // pred_check_branch
          %628 = sbr.rel (%p626) target = $region60
        $region59: #{tpu_custom_call.1} parent=11 // pred_region
          _
        $region60: #{tpu_custom_call.1} parent=11 // pred_fallthru
          _
        // Predicated region
        $region61: #{tpu_custom_call.1} parent=11 // pred_check
          %p629 = pneg %p384
        $region62: #{tpu_custom_call.1} parent=11 // pred_check_branch
          %631 = sbr.rel (%p629) target = $region64
        $region63: #{tpu_custom_call.1} parent=11 // pred_region
          _
        $region64: #{tpu_custom_call.1} parent=11 // pred_fallthru
          _
        // Predicated region
        $region65: #{tpu_custom_call.1} parent=11 // pred_check
          %p632 = pneg %p405
        $region66: #{tpu_custom_call.1} parent=11 // pred_check_branch
          %634 = sbr.rel (%p632) target = $region68
        $region67: #{tpu_custom_call.1} parent=11 // pred_region
          _
        $region68: #{tpu_custom_call.1} parent=11 // pred_fallthru
          _
        // Predicated region
        $region69: #{tpu_custom_call.1} parent=11 // pred_check
          %p635 = pneg %p426
        $region70: #{tpu_custom_call.1} parent=11 // pred_check_branch
          %637 = sbr.rel (%p635) target = $region72
        $region71: #{tpu_custom_call.1} parent=11 // pred_region
          _
        $region72: #{tpu_custom_call.1} parent=11 // pred_fallthru
          _
        // Predicated region
        $region73: #{tpu_custom_call.1} parent=11 // pred_check
          %p638 = pneg %p447
        $region74: #{tpu_custom_call.1} parent=11 // pred_check_branch
          %640 = sbr.rel (%p638) target = $region76
        $region75: #{tpu_custom_call.1} parent=11 // pred_region
          _
        $region76: #{tpu_custom_call.1} parent=11 // pred_fallthru
          _
        // Predicated region
        $region77: #{tpu_custom_call.1} parent=11 // pred_check
          %p641 = pneg %p468
        $region78: #{tpu_custom_call.1} parent=11 // pred_check_branch
          %643 = sbr.rel (%p641) target = $region80
        $region79: #{tpu_custom_call.1} parent=11 // pred_region
          _
        $region80: #{tpu_custom_call.1} parent=11 // pred_fallthru
          _
        // Predicated region
        $region81: #{tpu_custom_call.1} parent=11 // pred_check
          %p644 = pneg %p489
        $region82: #{tpu_custom_call.1} parent=11 // pred_check_branch
          %646 = sbr.rel (%p644) target = $region84
        $region83: #{tpu_custom_call.1} parent=11 // pred_region
          _
        $region84: #{tpu_custom_call.1} parent=11 // pred_fallthru
          _
        // Predicated region
        $region85: #{tpu_custom_call.1} parent=11 // pred_check
          %p647 = pneg %p510
        $region86: #{tpu_custom_call.1} parent=11 // pred_check_branch
          %649 = sbr.rel (%p647) target = $region88
        $region87: #{tpu_custom_call.1} parent=11 // pred_region
          _
        $region88: #{tpu_custom_call.1} parent=11 // pred_fallthru
          _
        // Predicated region
        $region89: #{tpu_custom_call.1} parent=11 // pred_check
          %p650 = pneg %p531
        $region90: #{tpu_custom_call.1} parent=11 // pred_check_branch
          %652 = sbr.rel (%p650) target = $region92
        $region91: #{tpu_custom_call.1} parent=11 // pred_region
          _
        $region92: #{tpu_custom_call.1} parent=11 // pred_fallthru
          _
        // Predicated region
        $region93: #{tpu_custom_call.1} parent=11 // pred_check
          %p653 = pneg %p552
        $region94: #{tpu_custom_call.1} parent=11 // pred_check_branch
          %655 = sbr.rel (%p653) target = $region96
        $region95: #{tpu_custom_call.1} parent=11 // pred_region
          _
        $region96: #{tpu_custom_call.1} parent=11 // pred_fallthru
          _
      $region12: #{tpu_custom_call.1} parent=5 // pred_fallthru
        _
      %p656 = scmp.lt.s32.totalorder %s33, 2
      // Predicated region
      $region97: #{tpu_custom_call.1} parent=5 // pred_check
        %p657 = pneg %p656
      $region98: #{tpu_custom_call.1} parent=5 // pred_check_branch
        %659 = sbr.rel (%p657) target = $region100
      $region99: #{tpu_custom_call.1} parent=5 // pred_region
        // Predicated region
        $region101: #{tpu_custom_call.1} parent=99 // pred_check
          %p660 = pneg %p53
        $region102: #{tpu_custom_call.1} parent=99 // pred_check_branch
          %662 = sbr.rel (%p660) target = $region104
        $region103: #{tpu_custom_call.1} parent=99 // pred_region
          %s663 = smul.u32 2, %s33
          %p664 = scmp.lt.s32.totalorder %s663, 3
          %s665 = scalar_select %p664, %s663, 3
          %s666 = smul.addr %s665, 8
          %s667 = scalar_lea.vmem %s0, %s666
          %s668 = smul.u32 2, %s33
        $region104: #{tpu_custom_call.1} parent=99 // pred_fallthru
          _
        // Predicated region
        $region105: #{tpu_custom_call.1} parent=99 // pred_check
          %p669 = pneg %p79
        $region106: #{tpu_custom_call.1} parent=99 // pred_check_branch
          %671 = sbr.rel (%p669) target = $region108
        $region107: #{tpu_custom_call.1} parent=99 // pred_region
          %s672 = smul.u32 2, %s33
          %p673 = scmp.lt.s32.totalorder %s672, 3
          %s674 = scalar_select %p673, %s672, 3
          %s675 = scalar_lea.vmem %s1, %s674
          %s676 = smul.u32 2, %s33
        $region108: #{tpu_custom_call.1} parent=99 // pred_fallthru
          _
        // Predicated region
        $region109: #{tpu_custom_call.1} parent=99 // pred_check
          %p677 = pneg %p105
        $region110: #{tpu_custom_call.1} parent=99 // pred_check_branch
          %679 = sbr.rel (%p677) target = $region112
        $region111: #{tpu_custom_call.1} parent=99 // pred_region
          %s680 = smul.u32 2, %s33
          %p681 = scmp.lt.s32.totalorder %s680, 3
          %s682 = scalar_select %p681, %s680, 3
          %s683 = scalar_lea.vmem %s2, %s682
          %s684 = smul.u32 2, %s33
        $region112: #{tpu_custom_call.1} parent=99 // pred_fallthru
          _
      $region100: #{tpu_custom_call.1} parent=5 // pred_fallthru
        _
      %p685 = scmp.le.s32.totalorder 1, %s33
      %p686 = scmp.lt.s32.totalorder %s33, 3
      %p687 = pnand %p685, %p686
      %p688 = pneg %p687
      // Predicated region
      $region113: #{tpu_custom_call.1} parent=5 // pred_check
        _
      $region114: #{tpu_custom_call.1} parent=5 // pred_check_branch
        %690 = sbr.rel (%p687) target = $region116
      $region115: #{tpu_custom_call.1} parent=5 // pred_region
        %s691 = ssub.s32 %s33, 1
        %s692 = smul.u32 2, %s38
        %p693 = scmp.lt.s32.totalorder %s692, 3
        %s694 = scalar_select %p693, %s692, 3
        %s695 = smul.addr %s694, 8
        %s696 = scalar_lea.vmem %s0, %s695
        %p697 = pneg %p59
        %p698 = pneg %p56
        %s699 = smul.u32 2, %s38
        %p700 = scmp.lt.s32.totalorder %s699, 3
        %s701 = scalar_select %p700, %s699, 3
        %s702 = scalar_lea.vmem %s1, %s701
        %p703 = pneg %p85
        %p704 = pneg %p82
        %s705 = smul.u32 2, %s38
        %p706 = scmp.lt.s32.totalorder %s705, 3
        %s707 = scalar_select %p706, %s705, 3
        %s708 = scalar_lea.vmem %s2, %s707
        %p709 = pneg %p111
        %p710 = pneg %p108
        %p711 = pneg %p132
        %p712 = pneg %p129
        %p713 = pneg %p153
        %p714 = pneg %p150
        %p715 = pneg %p174
        %p716 = pneg %p171
        %p717 = pneg %p195
        %p718 = pneg %p192
        %p719 = pneg %p216
        %p720 = pneg %p213
        %p721 = pneg %p237
        %p722 = pneg %p234
        %p723 = pneg %p258
        %p724 = pneg %p255
        %p725 = pneg %p279
        %p726 = pneg %p276
        %p727 = pneg %p300
        %p728 = pneg %p297
        %p729 = pneg %p321
        %p730 = pneg %p318
        %p731 = pneg %p342
        %p732 = pneg %p339
        %p733 = pneg %p363
        %p734 = pneg %p360
        %p735 = pneg %p384
        %p736 = pneg %p381
        %p737 = pneg %p405
        %p738 = pneg %p402
        %p739 = pneg %p426
        %p740 = pneg %p423
        %p741 = pneg %p447
        %p742 = pneg %p444
        %p743 = pneg %p468
        %p744 = pneg %p465
        %p745 = pneg %p489
        %p746 = pneg %p486
        %p747 = pneg %p510
        %p748 = pneg %p507
        %p749 = pneg %p531
        %p750 = pneg %p528
        %p751 = pneg %p552
        %p752 = pneg %p549
        %p753 = pneg %p578
        %p754 = pneg %p575
        %s755 = sand.u32 %s565, 1
        %s756 = scalar_lea.sflag [#allocation3], %s755
        %s757 = sand.u32 %s565, 1
        %s758 = smul.addr %s757, 2
        %s759 = scalar_lea.vmem [#allocation2], %s758
        %s760 = smul.u32 2, %s38
        %p761 = scmp.lt.s32.totalorder %s760, 3
        %s762 = scalar_select %p761, %s760, 3
        %s763 = smul.addr %s762, 8
        %s764 = scalar_lea.vmem %s0, %s763
        %s765 = smul.u32 2, %s38
        %s766 = smul.u32 2, %s38
        %p767 = scmp.lt.s32.totalorder %s766, 3
        %s768 = scalar_select %p767, %s766, 3
        %s769 = scalar_lea.vmem %s1, %s768
        %s770 = smul.u32 2, %s38
        %s771 = smul.u32 2, %s38
        %p772 = scmp.lt.s32.totalorder %s771, 3
        %s773 = scalar_select %p772, %s771, 3
        %s774 = scalar_lea.vmem %s2, %s773
        %s775 = smul.u32 2, %s38
        %s776 = smul.u32 2, %s38
        %v777 = vld [vmem:[%s764] sm:$0xff]
        %v778 = vld [vmem:[%s764 + $0x8] sm:$0xff]
        %v779 = vld [vmem:[%s4] sm:$0xff]
        %v780 = vld [vmem:[%s4 + $0x8] sm:$0xff]
        %v781 = vld [vmem:[%s5] sm:$0x1]
        %v783 = vlaneseq
        %v784 = vshrl.u32 %v783, 7
        %v785 = vsub.s32 0, %v784
        %v786 = vrot.slane %v781, %v785
        %vm788 = vcmask 130048
        %v790 = vsel %vm788, %v777, 0
        %v793 = vsel %vm788, %v778, 0
        %795 = vmatprep.subr.mxu0 0.0
        %796 = vmatpush1.msra.mxu0 %v779
        %797 = vmatprep.subr.mxu0 0.0
        %798 = vmatpush1.msra.mxu0 %v780
        %799 = vmatprep.subr.mxu0 0.0
        %800 = vmatpush1.msra.mxu0 0.0
        %801 = vmatprep.subr.mxu0 0.0
        %802 = vmatpush1.msra.mxu0 0.0
        %803 = vmatprep.subr.mxu0 0.0
        %804 = vmatpush1.msra.mxu0 0.0
        %805 = vmatprep.subr.mxu0 0.0
        %806 = vmatpush1.msra.mxu0 0.0
        %807 = vmatprep.subr.mxu0 0.0
        %808 = vmatpush1.msra.mxu0 0.0
        %809 = vmatprep.subr.mxu0 0.0
        %810 = vmatpush1.msra.mxu0 0.0
        %811 = vmatprep.subr.mxu0 0.0
        %812 = vmatpush1.msra.mxu0 0.0
        %813 = vmatprep.subr.mxu0 0.0
        %814 = vmatpush1.msra.mxu0 0.0
        %815 = vmatprep.subr.mxu0 0.0
        %816 = vmatpush1.msra.mxu0 0.0
        %817 = vmatprep.subr.mxu0 0.0
        %818 = vmatpush1.msra.mxu0 0.0
        %819 = vmatprep.subr.mxu0 0.0
        %820 = vmatpush1.msra.mxu0 0.0
        %821 = vmatprep.subr.mxu0 0.0
        %822 = vmatpush1.msra.mxu0 0.0
        %823 = vmatprep.subr.mxu0 0.0
        %824 = vmatpush1.msra.mxu0 0.0
        %825 = vmatprep.subr.mxu0 0.0
        %826 = vmatpush1.msra.mxu0 0.0
        %827 = vmatprep.subr.mxu0 0.0
        %828 = vmatpush1.msra.mxu0 0.0
        %829 = vmatprep.subr.mxu0 0.0
        %830 = vmatpush1.msra.mxu0 0.0
        %831 = vmatprep.subr.mxu0 0.0
        %832 = vmatpush1.msra.mxu0 0.0
        %833 = vmatprep.subr.mxu0 0.0
        %834 = vmatpush1.msra.mxu0 0.0
        %835 = vmatprep.subr.mxu0 0.0
        %836 = vmatpush1.msra.mxu0 0.0
        %837 = vmatprep.subr.mxu0 0.0
        %838 = vmatpush1.msra.mxu0 0.0
        %839 = vmatprep.subr.mxu0 0.0
        %840 = vmatpush1.msra.mxu0 0.0
        %841 = vmatprep.subr.mxu0 0.0
        %842 = vmatpush1.msra.mxu0 0.0
        %843 = vmatprep.subr.mxu0 0.0
        %844 = vmatpush1.msra.mxu0 0.0
        %845 = vmatprep.subr.mxu0 0.0
        %846 = vmatpush1.msra.mxu0 0.0
        %847 = vmatprep.subr.mxu0 0.0
        %848 = vmatpush1.msra.mxu0 0.0
        %849 = vmatprep.subr.mxu0 0.0
        %850 = vmatpush1.msra.mxu0 0.0
        %851 = vmatprep.subr.mxu0 0.0
        %852 = vmatpush1.msra.mxu0 0.0
        %853 = vmatprep.subr.mxu0 0.0
        %854 = vmatpush1.msra.mxu0 0.0
        %855 = vmatprep.subr.mxu0 0.0
        %856 = vmatpush1.msra.mxu0 0.0
        %857 = vmatprep.subr.mxu0 0.0
        %858 = vmatpush1.msra.mxu0 0.0
        %859 = vmatprep.mubr.f32.mxu0 0.0
        %860 = vmatmul.mubr.f32.gmra.mrb[0].mxu0 %v790
        %v861 = vpop.f32.mrb[0].mxu0
        %v862 = vadd.f32 %v786, %v861
        %v863 = vpop.f32.mrb[0].mxu0
        %864 = vmatprep.mubr.f32.mxu0 0.0
        %865 = vmatmul.mubr.f32.gmra.mrb[0].mxu0 %v793
        %v866 = vpop.f32.mrb[0].mxu0
        %v867 = vadd.f32 %v786, %v866
        %v868 = vpop.f32.mrb[0].mxu0
        %869 = vdwg.mxu0
        %v870 = vld [vmem:[%s3] sm:$0xff]
        %v871 = vadd.f32 %v862, %v870
        %v872 = vadd.f32 %v867, %v870
        %v873 = vld [vmem:[%s769] sm:$0x1]
        %v874 = vld [vmem:[%s769 + $0x1] sm:$0x1]
        %v877 = vlaneseq
        %v878 = vshrl.u32 %v877, 7
        %v879 = vsub.s32 0, %v878
        %v880 = vrot.slane %v873, %v879
        %v881 = vlaneseq
        %v882 = vshrl.u32 %v881, 7
        %v883 = vsub.s32 0, %v882
        %v884 = vrot.slane %v874, %v883
        %v887 = vld [vmem:[%s6] sm:$0xff]
        %v888 = vld [vmem:[%s6 + $0x8] sm:$0xff]
        %v889 = vld [vmem:[%s6 + $0x10] sm:$0xff]
        %v890 = vld [vmem:[%s6 + $0x18] sm:$0xff]
        %v891 = vld [vmem:[%s7] sm:$0x1]
        %v893 = vlaneseq
        %v894 = vshrl.u32 %v893, 7
        %v895 = vsub.s32 0, %v894
        %v896 = vrot.slane %v891, %v895
        %vm898 = vcmask 261120
        %v900 = vsel %vm898, %v871, 0
        %v903 = vsel %vm898, %v872, 0
        %905 = vmatprep.subr.mxu0 0.0
        %906 = vmatpush1.msra.mxu0 %v887
        %907 = vmatprep.subr.mxu0 0.0
        %908 = vmatpush1.msra.mxu0 %v888
        %909 = vmatprep.subr.mxu0 0.0
        %910 = vmatpush1.msra.mxu0 %v889
        %911 = vmatprep.subr.mxu0 0.0
        %912 = vmatpush1.msra.mxu0 %v890
        %913 = vmatprep.subr.mxu0 0.0
        %914 = vmatpush1.msra.mxu0 0.0
        %915 = vmatprep.subr.mxu0 0.0
        %916 = vmatpush1.msra.mxu0 0.0
        %917 = vmatprep.subr.mxu0 0.0
        %918 = vmatpush1.msra.mxu0 0.0
        %919 = vmatprep.subr.mxu0 0.0
        %920 = vmatpush1.msra.mxu0 0.0
        %921 = vmatprep.subr.mxu0 0.0
        %922 = vmatpush1.msra.mxu0 0.0
        %923 = vmatprep.subr.mxu0 0.0
        %924 = vmatpush1.msra.mxu0 0.0
        %925 = vmatprep.subr.mxu0 0.0
        %926 = vmatpush1.msra.mxu0 0.0
        %927 = vmatprep.subr.mxu0 0.0
        %928 = vmatpush1.msra.mxu0 0.0
        %929 = vmatprep.subr.mxu0 0.0
        %930 = vmatpush1.msra.mxu0 0.0
        %931 = vmatprep.subr.mxu0 0.0
        %932 = vmatpush1.msra.mxu0 0.0
        %933 = vmatprep.subr.mxu0 0.0
        %934 = vmatpush1.msra.mxu0 0.0
        %935 = vmatprep.subr.mxu0 0.0
        %936 = vmatpush1.msra.mxu0 0.0
        %937 = vmatprep.subr.mxu0 0.0
        %938 = vmatpush1.msra.mxu0 0.0
        %939 = vmatprep.subr.mxu0 0.0
        %940 = vmatpush1.msra.mxu0 0.0
        %941 = vmatprep.subr.mxu0 0.0
        %942 = vmatpush1.msra.mxu0 0.0
        %943 = vmatprep.subr.mxu0 0.0
        %944 = vmatpush1.msra.mxu0 0.0
        %945 = vmatprep.subr.mxu0 0.0
        %946 = vmatpush1.msra.mxu0 0.0
        %947 = vmatprep.subr.mxu0 0.0
        %948 = vmatpush1.msra.mxu0 0.0
        %949 = vmatprep.subr.mxu0 0.0
        %950 = vmatpush1.msra.mxu0 0.0
        %951 = vmatprep.subr.mxu0 0.0
        %952 = vmatpush1.msra.mxu0 0.0
        %953 = vmatprep.subr.mxu0 0.0
        %954 = vmatpush1.msra.mxu0 0.0
        %955 = vmatprep.subr.mxu0 0.0
        %956 = vmatpush1.msra.mxu0 0.0
        %957 = vmatprep.subr.mxu0 0.0
        %958 = vmatpush1.msra.mxu0 0.0
        %959 = vmatprep.subr.mxu0 0.0
        %960 = vmatpush1.msra.mxu0 0.0
        %961 = vmatprep.subr.mxu0 0.0
        %962 = vmatpush1.msra.mxu0 0.0
        %963 = vmatprep.subr.mxu0 0.0
        %964 = vmatpush1.msra.mxu0 0.0
        %965 = vmatprep.subr.mxu0 0.0
        %966 = vmatpush1.msra.mxu0 0.0
        %967 = vmatprep.subr.mxu0 0.0
        %968 = vmatpush1.msra.mxu0 0.0
        %969 = vmatprep.mubr.f32.mxu0 0.0
        %970 = vmatmul.mubr.f32.gmra.mrb[0].mxu0 %v900
        %v971 = vpop.f32.mrb[0].mxu0
        %v972 = vadd.f32 %v896, %v971
        %v973 = vpop.f32.mrb[0].mxu0
        %974 = vmatprep.mubr.f32.mxu0 0.0
        %975 = vmatmul.mubr.f32.gmra.mrb[0].mxu0 %v903
        %v976 = vpop.f32.mrb[0].mxu0
        %v977 = vadd.f32 %v896, %v976
        %v978 = vpop.f32.mrb[0].mxu0
        %979 = vdwg.mxu0
        %v980 = vld [vmem:[%s8] sm:$0xff]
        %v981 = vld [vmem:[%s8 + $0x8] sm:$0xff]
        %v982 = vld [vmem:[%s8 + $0x10] sm:$0xff]
        %v983 = vld [vmem:[%s8 + $0x18] sm:$0xff]
        %v984 = vld [vmem:[%s9] sm:$0x1]
        %v986 = vlaneseq
        %v987 = vshrl.u32 %v986, 7
        %v988 = vsub.s32 0, %v987
        %v989 = vrot.slane %v984, %v988
        %991 = vmatprep.subr.mxu0 0.0
        %992 = vmatpush1.msra.mxu0 %v980
        %993 = vmatprep.subr.mxu0 0.0
        %994 = vmatpush1.msra.mxu0 %v981
        %995 = vmatprep.subr.mxu0 0.0
        %996 = vmatpush1.msra.mxu0 %v982
        %997 = vmatprep.subr.mxu0 0.0
        %998 = vmatpush1.msra.mxu0 %v983
        %999 = vmatprep.subr.mxu0 0.0
        %1000 = vmatpush1.msra.mxu0 0.0
        %1001 = vmatprep.subr.mxu0 0.0
        %1002 = vmatpush1.msra.mxu0 0.0
        %1003 = vmatprep.subr.mxu0 0.0
        %1004 = vmatpush1.msra.mxu0 0.0
        %1005 = vmatprep.subr.mxu0 0.0
        %1006 = vmatpush1.msra.mxu0 0.0
        %1007 = vmatprep.subr.mxu0 0.0
        %1008 = vmatpush1.msra.mxu0 0.0
        %1009 = vmatprep.subr.mxu0 0.0
        %1010 = vmatpush1.msra.mxu0 0.0
        %1011 = vmatprep.subr.mxu0 0.0
        %1012 = vmatpush1.msra.mxu0 0.0
        %1013 = vmatprep.subr.mxu0 0.0
        %1014 = vmatpush1.msra.mxu0 0.0
        %1015 = vmatprep.subr.mxu0 0.0
        %1016 = vmatpush1.msra.mxu0 0.0
        %1017 = vmatprep.subr.mxu0 0.0
        %1018 = vmatpush1.msra.mxu0 0.0
        %1019 = vmatprep.subr.mxu0 0.0
        %1020 = vmatpush1.msra.mxu0 0.0
        %1021 = vmatprep.subr.mxu0 0.0
        %1022 = vmatpush1.msra.mxu0 0.0
        %1023 = vmatprep.subr.mxu0 0.0
        %1024 = vmatpush1.msra.mxu0 0.0
        %1025 = vmatprep.subr.mxu0 0.0
        %1026 = vmatpush1.msra.mxu0 0.0
        %1027 = vmatprep.subr.mxu0 0.0
        %1028 = vmatpush1.msra.mxu0 0.0
        %1029 = vmatprep.subr.mxu0 0.0
        %1030 = vmatpush1.msra.mxu0 0.0
        %1031 = vmatprep.subr.mxu0 0.0
        %1032 = vmatpush1.msra.mxu0 0.0
        %1033 = vmatprep.subr.mxu0 0.0
        %1034 = vmatpush1.msra.mxu0 0.0
        %1035 = vmatprep.subr.mxu0 0.0
        %1036 = vmatpush1.msra.mxu0 0.0
        %1037 = vmatprep.subr.mxu0 0.0
        %1038 = vmatpush1.msra.mxu0 0.0
        %1039 = vmatprep.subr.mxu0 0.0
        %1040 = vmatpush1.msra.mxu0 0.0
        %1041 = vmatprep.subr.mxu0 0.0
        %1042 = vmatpush1.msra.mxu0 0.0
        %1043 = vmatprep.subr.mxu0 0.0
        %1044 = vmatpush1.msra.mxu0 0.0
        %1045 = vmatprep.subr.mxu0 0.0
        %1046 = vmatpush1.msra.mxu0 0.0
        %1047 = vmatprep.subr.mxu0 0.0
        %1048 = vmatpush1.msra.mxu0 0.0
        %1049 = vmatprep.subr.mxu0 0.0
        %1050 = vmatpush1.msra.mxu0 0.0
        %1051 = vmatprep.subr.mxu0 0.0
        %1052 = vmatpush1.msra.mxu0 0.0
        %1053 = vmatprep.subr.mxu0 0.0
        %1054 = vmatpush1.msra.mxu0 0.0
        %1055 = vmatprep.mubr.f32.mxu0 0.0
        %1056 = vmatmul.mubr.f32.gmra.mrb[0].mxu0 %v900
        %v1057 = vpop.f32.mrb[0].mxu0
        %v1058 = vadd.f32 %v989, %v1057
        %v1059 = vpop.f32.mrb[0].mxu0
        %1060 = vmatprep.mubr.f32.mxu0 0.0
        %1061 = vmatmul.mubr.f32.gmra.mrb[0].mxu0 %v903
        %v1062 = vpop.f32.mrb[0].mxu0
        %v1063 = vadd.f32 %v989, %v1062
        %v1064 = vpop.f32.mrb[0].mxu0
        %1065 = vdwg.mxu0
        %v1066 = vld [vmem:[%s10] sm:$0xff]
        %v1067 = vld [vmem:[%s10 + $0x8] sm:$0xff]
        %v1068 = vld [vmem:[%s10 + $0x10] sm:$0xff]
        %v1069 = vld [vmem:[%s10 + $0x18] sm:$0xff]
        %v1070 = vld [vmem:[%s11] sm:$0x1]
        %v1072 = vlaneseq
        %v1073 = vshrl.u32 %v1072, 7
        %v1074 = vsub.s32 0, %v1073
        %v1075 = vrot.slane %v1070, %v1074
        %1077 = vmatprep.subr.mxu0 0.0
        %1078 = vmatpush1.msra.mxu0 %v1066
        %1079 = vmatprep.subr.mxu0 0.0
        %1080 = vmatpush1.msra.mxu0 %v1067
        %1081 = vmatprep.subr.mxu0 0.0
        %1082 = vmatpush1.msra.mxu0 %v1068
        %1083 = vmatprep.subr.mxu0 0.0
        %1084 = vmatpush1.msra.mxu0 %v1069
        %1085 = vmatprep.subr.mxu0 0.0
        %1086 = vmatpush1.msra.mxu0 0.0
        %1087 = vmatprep.subr.mxu0 0.0
        %1088 = vmatpush1.msra.mxu0 0.0
        %1089 = vmatprep.subr.mxu0 0.0
        %1090 = vmatpush1.msra.mxu0 0.0
        %1091 = vmatprep.subr.mxu0 0.0
        %1092 = vmatpush1.msra.mxu0 0.0
        %1093 = vmatprep.subr.mxu0 0.0
        %1094 = vmatpush1.msra.mxu0 0.0
        %1095 = vmatprep.subr.mxu0 0.0
        %1096 = vmatpush1.msra.mxu0 0.0
        %1097 = vmatprep.subr.mxu0 0.0
        %1098 = vmatpush1.msra.mxu0 0.0
        %1099 = vmatprep.subr.mxu0 0.0
        %1100 = vmatpush1.msra.mxu0 0.0
        %1101 = vmatprep.subr.mxu0 0.0
        %1102 = vmatpush1.msra.mxu0 0.0
        %1103 = vmatprep.subr.mxu0 0.0
        %1104 = vmatpush1.msra.mxu0 0.0
        %1105 = vmatprep.subr.mxu0 0.0
        %1106 = vmatpush1.msra.mxu0 0.0
        %1107 = vmatprep.subr.mxu0 0.0
        %1108 = vmatpush1.msra.mxu0 0.0
        %1109 = vmatprep.subr.mxu0 0.0
        %1110 = vmatpush1.msra.mxu0 0.0
        %1111 = vmatprep.subr.mxu0 0.0
        %1112 = vmatpush1.msra.mxu0 0.0
        %1113 = vmatprep.subr.mxu0 0.0
        %1114 = vmatpush1.msra.mxu0 0.0
        %1115 = vmatprep.subr.mxu0 0.0
        %1116 = vmatpush1.msra.mxu0 0.0
        %1117 = vmatprep.subr.mxu0 0.0
        %1118 = vmatpush1.msra.mxu0 0.0
        %1119 = vmatprep.subr.mxu0 0.0
        %1120 = vmatpush1.msra.mxu0 0.0
        %1121 = vmatprep.subr.mxu0 0.0
        %1122 = vmatpush1.msra.mxu0 0.0
        %1123 = vmatprep.subr.mxu0 0.0
        %1124 = vmatpush1.msra.mxu0 0.0
        %1125 = vmatprep.subr.mxu0 0.0
        %1126 = vmatpush1.msra.mxu0 0.0
        %1127 = vmatprep.subr.mxu0 0.0
        %1128 = vmatpush1.msra.mxu0 0.0
        %1129 = vmatprep.subr.mxu0 0.0
        %1130 = vmatpush1.msra.mxu0 0.0
        %1131 = vmatprep.subr.mxu0 0.0
        %1132 = vmatpush1.msra.mxu0 0.0
        %1133 = vmatprep.subr.mxu0 0.0
        %1134 = vmatpush1.msra.mxu0 0.0
        %1135 = vmatprep.subr.mxu0 0.0
        %1136 = vmatpush1.msra.mxu0 0.0
        %1137 = vmatprep.subr.mxu0 0.0
        %1138 = vmatpush1.msra.mxu0 0.0
        %1139 = vmatprep.subr.mxu0 0.0
        %1140 = vmatpush1.msra.mxu0 0.0
        %1141 = vmatprep.mubr.f32.mxu0 0.0
        %1142 = vmatmul.mubr.f32.gmra.mrb[0].mxu0 %v900
        %v1143 = vpop.f32.mrb[0].mxu0
        %v1144 = vadd.f32 %v1075, %v1143
        %v1145 = vpop.f32.mrb[0].mxu0
        %1146 = vmatprep.mubr.f32.mxu0 0.0
        %1147 = vmatmul.mubr.f32.gmra.mrb[0].mxu0 %v903
        %v1148 = vpop.f32.mrb[0].mxu0
        %v1149 = vadd.f32 %v1075, %v1148
        %v1150 = vpop.f32.mrb[0].mxu0
        %1151 = vdwg.mxu0
        %vm1152 = vcmask 64512
        %v1154 = vsel %vm1152, %v972, 0
        %v1157 = vsel %vm1152, %v1058, 0
        %1159 = vmatprep.subr.mxu0 0.0
        %1160 = vmatpush1.xpose.msra.mxu0 %v1157
        %1161 = vmatprep.subr.mxu0 0.0
        %1162 = vmatpush1.xpose.msra.mxu0 0.0
        %1163 = vmatprep.subr.mxu0 0.0
        %1164 = vmatpush1.xpose.msra.mxu0 0.0
        %1165 = vmatprep.subr.mxu0 0.0
        %1166 = vmatpush1.xpose.msra.mxu0 0.0
        %1167 = vmatprep.subr.mxu0 0.0
        %1168 = vmatpush1.xpose.msra.mxu0 0.0
        %1169 = vmatprep.subr.mxu0 0.0
        %1170 = vmatpush1.xpose.msra.mxu0 0.0
        %1171 = vmatprep.subr.mxu0 0.0
        %1172 = vmatpush1.xpose.msra.mxu0 0.0
        %1173 = vmatprep.subr.mxu0 0.0
        %1174 = vmatpush1.xpose.msra.mxu0 0.0
        %1175 = vmatprep.subr.mxu0 0.0
        %1176 = vmatpush1.xpose.msra.mxu0 0.0
        %1177 = vmatprep.subr.mxu0 0.0
        %1178 = vmatpush1.xpose.msra.mxu0 0.0
        %1179 = vmatprep.subr.mxu0 0.0
        %1180 = vmatpush1.xpose.msra.mxu0 0.0
        %1181 = vmatprep.subr.mxu0 0.0
        %1182 = vmatpush1.xpose.msra.mxu0 0.0
        %1183 = vmatprep.subr.mxu0 0.0
        %1184 = vmatpush1.xpose.msra.mxu0 0.0
        %1185 = vmatprep.subr.mxu0 0.0
        %1186 = vmatpush1.xpose.msra.mxu0 0.0
        %1187 = vmatprep.subr.mxu0 0.0
        %1188 = vmatpush1.xpose.msra.mxu0 0.0
        %1189 = vmatprep.subr.mxu0 0.0
        %1190 = vmatpush1.xpose.msra.mxu0 0.0
        %1191 = vmatprep.subr.mxu0 0.0
        %1192 = vmatpush1.xpose.msra.mxu0 0.0
        %1193 = vmatprep.subr.mxu0 0.0
        %1194 = vmatpush1.xpose.msra.mxu0 0.0
        %1195 = vmatprep.subr.mxu0 0.0
        %1196 = vmatpush1.xpose.msra.mxu0 0.0
        %1197 = vmatprep.subr.mxu0 0.0
        %1198 = vmatpush1.xpose.msra.mxu0 0.0
        %1199 = vmatprep.subr.mxu0 0.0
        %1200 = vmatpush1.xpose.msra.mxu0 0.0
        %1201 = vmatprep.subr.mxu0 0.0
        %1202 = vmatpush1.xpose.msra.mxu0 0.0
        %1203 = vmatprep.subr.mxu0 0.0
        %1204 = vmatpush1.xpose.msra.mxu0 0.0
        %1205 = vmatprep.subr.mxu0 0.0
        %1206 = vmatpush1.xpose.msra.mxu0 0.0
        %1207 = vmatprep.subr.mxu0 0.0
        %1208 = vmatpush1.xpose.msra.mxu0 0.0
        %1209 = vmatprep.subr.mxu0 0.0
        %1210 = vmatpush1.xpose.msra.mxu0 0.0
        %1211 = vmatprep.subr.mxu0 0.0
        %1212 = vmatpush1.xpose.msra.mxu0 0.0
        %1213 = vmatprep.subr.mxu0 0.0
        %1214 = vmatpush1.xpose.msra.mxu0 0.0
        %1215 = vmatprep.subr.mxu0 0.0
        %1216 = vmatpush1.xpose.msra.mxu0 0.0
        %1217 = vmatprep.subr.mxu0 0.0
        %1218 = vmatpush1.xpose.msra.mxu0 0.0
        %1219 = vmatprep.subr.mxu0 0.0
        %1220 = vmatpush1.xpose.msra.mxu0 0.0
        %1221 = vmatprep.subr.mxu0 0.0
        %1222 = vmatpush1.xpose.msra.mxu0 0.0
        %1223 = vmatprep.mubr.f32.mxu0 0.0
        %1224 = vmatmul.mubr.f32.gmra.mrb[0].mxu0 %v1154
        %v1225 = vpop.f32.mrb[0].mxu0
        %v1226 = vadd.f32 0.0, %v1225
        %v1227 = vpop.f32.mrb[0].mxu0
        %1228 = vdwg.mxu0
        %v1230 = vsel %vm1152, %v977, 0
        %v1233 = vsel %vm1152, %v1063, 0
        %1235 = vmatprep.subr.mxu0 0.0
        %1236 = vmatpush1.xpose.msra.mxu0 %v1233
        %1237 = vmatprep.subr.mxu0 0.0
        %1238 = vmatpush1.xpose.msra.mxu0 0.0
        %1239 = vmatprep.subr.mxu0 0.0
        %1240 = vmatpush1.xpose.msra.mxu0 0.0
        %1241 = vmatprep.subr.mxu0 0.0
        %1242 = vmatpush1.xpose.msra.mxu0 0.0
        %1243 = vmatprep.subr.mxu0 0.0
        %1244 = vmatpush1.xpose.msra.mxu0 0.0
        %1245 = vmatprep.subr.mxu0 0.0
        %1246 = vmatpush1.xpose.msra.mxu0 0.0
        %1247 = vmatprep.subr.mxu0 0.0
        %1248 = vmatpush1.xpose.msra.mxu0 0.0
        %1249 = vmatprep.subr.mxu0 0.0
        %1250 = vmatpush1.xpose.msra.mxu0 0.0
        %1251 = vmatprep.subr.mxu0 0.0
        %1252 = vmatpush1.xpose.msra.mxu0 0.0
        %1253 = vmatprep.subr.mxu0 0.0
        %1254 = vmatpush1.xpose.msra.mxu0 0.0
        %1255 = vmatprep.subr.mxu0 0.0
        %1256 = vmatpush1.xpose.msra.mxu0 0.0
        %1257 = vmatprep.subr.mxu0 0.0
        %1258 = vmatpush1.xpose.msra.mxu0 0.0
        %1259 = vmatprep.subr.mxu0 0.0
        %1260 = vmatpush1.xpose.msra.mxu0 0.0
        %1261 = vmatprep.subr.mxu0 0.0
        %1262 = vmatpush1.xpose.msra.mxu0 0.0
        %1263 = vmatprep.subr.mxu0 0.0
        %1264 = vmatpush1.xpose.msra.mxu0 0.0
        %1265 = vmatprep.subr.mxu0 0.0
        %1266 = vmatpush1.xpose.msra.mxu0 0.0
        %1267 = vmatprep.subr.mxu0 0.0
        %1268 = vmatpush1.xpose.msra.mxu0 0.0
        %1269 = vmatprep.subr.mxu0 0.0
        %1270 = vmatpush1.xpose.msra.mxu0 0.0
        %1271 = vmatprep.subr.mxu0 0.0
        %1272 = vmatpush1.xpose.msra.mxu0 0.0
        %1273 = vmatprep.subr.mxu0 0.0
        %1274 = vmatpush1.xpose.msra.mxu0 0.0
        %1275 = vmatprep.subr.mxu0 0.0
        %1276 = vmatpush1.xpose.msra.mxu0 0.0
        %1277 = vmatprep.subr.mxu0 0.0
        %1278 = vmatpush1.xpose.msra.mxu0 0.0
        %1279 = vmatprep.subr.mxu0 0.0
        %1280 = vmatpush1.xpose.msra.mxu0 0.0
        %1281 = vmatprep.subr.mxu0 0.0
        %1282 = vmatpush1.xpose.msra.mxu0 0.0
        %1283 = vmatprep.subr.mxu0 0.0
        %1284 = vmatpush1.xpose.msra.mxu0 0.0
        %1285 = vmatprep.subr.mxu0 0.0
        %1286 = vmatpush1.xpose.msra.mxu0 0.0
        %1287 = vmatprep.subr.mxu0 0.0
        %1288 = vmatpush1.xpose.msra.mxu0 0.0
        %1289 = vmatprep.subr.mxu0 0.0
        %1290 = vmatpush1.xpose.msra.mxu0 0.0
        %1291 = vmatprep.subr.mxu0 0.0
        %1292 = vmatpush1.xpose.msra.mxu0 0.0
        %1293 = vmatprep.subr.mxu0 0.0
        %1294 = vmatpush1.xpose.msra.mxu0 0.0
        %1295 = vmatprep.subr.mxu0 0.0
        %1296 = vmatpush1.xpose.msra.mxu0 0.0
        %1297 = vmatprep.subr.mxu0 0.0
        %1298 = vmatpush1.xpose.msra.mxu0 0.0
        %1299 = vmatprep.mubr.f32.mxu0 0.0
        %1300 = vmatmul.mubr.f32.gmra.mrb[0].mxu0 %v1230
        %v1301 = vpop.f32.mrb[0].mxu0
        %v1302 = vadd.f32 0.0, %v1301
        %v1303 = vpop.f32.mrb[0].mxu0
        %1304 = vdwg.mxu0
        %v1305 = vmul.f32 %v1226, 0.35355338
        %v1306 = vmul.f32 %v1302, 0.35355338
        %v1307 = vadd.f32 %v1305, %v880
        %v1308 = vadd.f32 %v1306, %v884
        %v1309 = vsel %vm1152, %v1307, -inf
        %1310 = vmax.xlane.f32.xlu0 %v1309
        %v1311 = vpop.xlane.xlu0 %1310
        %v1312 = vsel %vm1152, %v1308, -inf
        %1313 = vmax.xlane.f32.xlu0 %v1312
        %v1314 = vpop.xlane.xlu0 %1313
        %v1315 = vsub.f32 %v1307, %v1311
        %v1316 = vsub.f32 %v1308, %v1314
        %v1317 = vmul.f32 %v1315, 1.442695
        %v1318 = vpow.pop %v1317
        %v1319 = vmul.f32 %v1316, 1.442695
        %v1320 = vpow.pop %v1319
        %v1321 = vsel %vm1152, %v1318, 0.0
        %1322 = vadd.xlane.f32.xlu0 %v1321
        %v1323 = vpop.xlane.xlu0 %1322
        %v1324 = vsel %vm1152, %v1320, 0.0
        %1325 = vadd.xlane.f32.xlu0 %v1324
        %v1326 = vpop.xlane.xlu0 %1325
        %v1327 = vrcp.pop %v1323
        %v1328 = vmul.f32 %v1318, %v1327
        %v1329 = vrcp.pop %v1326
        %v1330 = vmul.f32 %v1320, %v1329
        %v1332 = vsel %vm1152, %v1328, 0
        %1334 = vmatprep.subr.mxu0 0.0
        %1335 = vmatpush1.msra.mxu0 %v1144
        %1336 = vmatprep.subr.mxu0 0.0
        %1337 = vmatpush1.msra.mxu0 0.0
        %1338 = vmatprep.subr.mxu0 0.0
        %1339 = vmatpush1.msra.mxu0 0.0
        %1340 = vmatprep.subr.mxu0 0.0
        %1341 = vmatpush1.msra.mxu0 0.0
        %1342 = vmatprep.subr.mxu0 0.0
        %1343 = vmatpush1.msra.mxu0 0.0
        %1344 = vmatprep.subr.mxu0 0.0
        %1345 = vmatpush1.msra.mxu0 0.0
        %1346 = vmatprep.subr.mxu0 0.0
        %1347 = vmatpush1.msra.mxu0 0.0
        %1348 = vmatprep.subr.mxu0 0.0
        %1349 = vmatpush1.msra.mxu0 0.0
        %1350 = vmatprep.subr.mxu0 0.0
        %1351 = vmatpush1.msra.mxu0 0.0
        %1352 = vmatprep.subr.mxu0 0.0
        %1353 = vmatpush1.msra.mxu0 0.0
        %1354 = vmatprep.subr.mxu0 0.0
        %1355 = vmatpush1.msra.mxu0 0.0
        %1356 = vmatprep.subr.mxu0 0.0
        %1357 = vmatpush1.msra.mxu0 0.0
        %1358 = vmatprep.subr.mxu0 0.0
        %1359 = vmatpush1.msra.mxu0 0.0
        %1360 = vmatprep.subr.mxu0 0.0
        %1361 = vmatpush1.msra.mxu0 0.0
        %1362 = vmatprep.subr.mxu0 0.0
        %1363 = vmatpush1.msra.mxu0 0.0
        %1364 = vmatprep.subr.mxu0 0.0
        %1365 = vmatpush1.msra.mxu0 0.0
        %1366 = vmatprep.subr.mxu0 0.0
        %1367 = vmatpush1.msra.mxu0 0.0
        %1368 = vmatprep.subr.mxu0 0.0
        %1369 = vmatpush1.msra.mxu0 0.0
        %1370 = vmatprep.subr.mxu0 0.0
        %1371 = vmatpush1.msra.mxu0 0.0
        %1372 = vmatprep.subr.mxu0 0.0
        %1373 = vmatpush1.msra.mxu0 0.0
        %1374 = vmatprep.subr.mxu0 0.0
        %1375 = vmatpush1.msra.mxu0 0.0
        %1376 = vmatprep.subr.mxu0 0.0
        %1377 = vmatpush1.msra.mxu0 0.0
        %1378 = vmatprep.subr.mxu0 0.0
        %1379 = vmatpush1.msra.mxu0 0.0
        %1380 = vmatprep.subr.mxu0 0.0
        %1381 = vmatpush1.msra.mxu0 0.0
        %1382 = vmatprep.subr.mxu0 0.0
        %1383 = vmatpush1.msra.mxu0 0.0
        %1384 = vmatprep.subr.mxu0 0.0
        %1385 = vmatpush1.msra.mxu0 0.0
        %1386 = vmatprep.subr.mxu0 0.0
        %1387 = vmatpush1.msra.mxu0 0.0
        %1388 = vmatprep.subr.mxu0 0.0
        %1389 = vmatpush1.msra.mxu0 0.0
        %1390 = vmatprep.subr.mxu0 0.0
        %1391 = vmatpush1.msra.mxu0 0.0
        %1392 = vmatprep.subr.mxu0 0.0
        %1393 = vmatpush1.msra.mxu0 0.0
        %1394 = vmatprep.subr.mxu0 0.0
        %1395 = vmatpush1.msra.mxu0 0.0
        %1396 = vmatprep.subr.mxu0 0.0
        %1397 = vmatpush1.msra.mxu0 0.0
        %1398 = vmatprep.mubr.f32.mxu0 0.0
        %1399 = vmatmul.mubr.f32.gmra.mrb[0].mxu0 %v1332
        %v1400 = vpop.f32.mrb[0].mxu0
        %v1401 = vadd.f32 0.0, %v1400
        %v1402 = vpop.f32.mrb[0].mxu0
        %1403 = vdwg.mxu0
        %v1405 = vsel %vm1152, %v1330, 0
        %1407 = vmatprep.subr.mxu0 0.0
        %1408 = vmatpush1.msra.mxu0 %v1149
        %1409 = vmatprep.subr.mxu0 0.0
        %1410 = vmatpush1.msra.mxu0 0.0
        %1411 = vmatprep.subr.mxu0 0.0
        %1412 = vmatpush1.msra.mxu0 0.0
        %1413 = vmatprep.subr.mxu0 0.0
        %1414 = vmatpush1.msra.mxu0 0.0
        %1415 = vmatprep.subr.mxu0 0.0
        %1416 = vmatpush1.msra.mxu0 0.0
        %1417 = vmatprep.subr.mxu0 0.0
        %1418 = vmatpush1.msra.mxu0 0.0
        %1419 = vmatprep.subr.mxu0 0.0
        %1420 = vmatpush1.msra.mxu0 0.0
        %1421 = vmatprep.subr.mxu0 0.0
        %1422 = vmatpush1.msra.mxu0 0.0
        %1423 = vmatprep.subr.mxu0 0.0
        %1424 = vmatpush1.msra.mxu0 0.0
        %1425 = vmatprep.subr.mxu0 0.0
        %1426 = vmatpush1.msra.mxu0 0.0
        %1427 = vmatprep.subr.mxu0 0.0
        %1428 = vmatpush1.msra.mxu0 0.0
        %1429 = vmatprep.subr.mxu0 0.0
        %1430 = vmatpush1.msra.mxu0 0.0
        %1431 = vmatprep.subr.mxu0 0.0
        %1432 = vmatpush1.msra.mxu0 0.0
        %1433 = vmatprep.subr.mxu0 0.0
        %1434 = vmatpush1.msra.mxu0 0.0
        %1435 = vmatprep.subr.mxu0 0.0
        %1436 = vmatpush1.msra.mxu0 0.0
        %1437 = vmatprep.subr.mxu0 0.0
        %1438 = vmatpush1.msra.mxu0 0.0
        %1439 = vmatprep.subr.mxu0 0.0
        %1440 = vmatpush1.msra.mxu0 0.0
        %1441 = vmatprep.subr.mxu0 0.0
        %1442 = vmatpush1.msra.mxu0 0.0
        %1443 = vmatprep.subr.mxu0 0.0
        %1444 = vmatpush1.msra.mxu0 0.0
        %1445 = vmatprep.subr.mxu0 0.0
        %1446 = vmatpush1.msra.mxu0 0.0
        %1447 = vmatprep.subr.mxu0 0.0
        %1448 = vmatpush1.msra.mxu0 0.0
        %1449 = vmatprep.subr.mxu0 0.0
        %1450 = vmatpush1.msra.mxu0 0.0
        %1451 = vmatprep.subr.mxu0 0.0
        %1452 = vmatpush1.msra.mxu0 0.0
        %1453 = vmatprep.subr.mxu0 0.0
        %1454 = vmatpush1.msra.mxu0 0.0
        %1455 = vmatprep.subr.mxu0 0.0
        %1456 = vmatpush1.msra.mxu0 0.0
        %1457 = vmatprep.subr.mxu0 0.0
        %1458 = vmatpush1.msra.mxu0 0.0
        %1459 = vmatprep.subr.mxu0 0.0
        %1460 = vmatpush1.msra.mxu0 0.0
        %1461 = vmatprep.subr.mxu0 0.0
        %1462 = vmatpush1.msra.mxu0 0.0
        %1463 = vmatprep.subr.mxu0 0.0
        %1464 = vmatpush1.msra.mxu0 0.0
        %1465 = vmatprep.subr.mxu0 0.0
        %1466 = vmatpush1.msra.mxu0 0.0
        %1467 = vmatprep.subr.mxu0 0.0
        %1468 = vmatpush1.msra.mxu0 0.0
        %1469 = vmatprep.subr.mxu0 0.0
        %1470 = vmatpush1.msra.mxu0 0.0
        %1471 = vmatprep.mubr.f32.mxu0 0.0
        %1472 = vmatmul.mubr.f32.gmra.mrb[0].mxu0 %v1405
        %v1473 = vpop.f32.mrb[0].mxu0
        %v1474 = vadd.f32 0.0, %v1473
        %v1475 = vpop.f32.mrb[0].mxu0
        %1476 = vdwg.mxu0
        %1477 = vrot.lane.b32.xlu0 %v972, 120
        %v1478 = vpop.permute.xlu0 %1477
        %1479 = vrot.lane.b32.xlu0 %v1058, 120
        %v1480 = vpop.permute.xlu0 %1479
        %v1481 = vsel %vm1152, %v1478, 0
        %v1483 = vsel %vm1152, %v1480, 0
        %1485 = vmatprep.subr.mxu0 0.0
        %1486 = vmatpush1.xpose.msra.mxu0 %v1483
        %1487 = vmatprep.subr.mxu0 0.0
        %1488 = vmatpush1.xpose.msra.mxu0 0.0
        %1489 = vmatprep.subr.mxu0 0.0
        %1490 = vmatpush1.xpose.msra.mxu0 0.0
        %1491 = vmatprep.subr.mxu0 0.0
        %1492 = vmatpush1.xpose.msra.mxu0 0.0
        %1493 = vmatprep.subr.mxu0 0.0
        %1494 = vmatpush1.xpose.msra.mxu0 0.0
        %1495 = vmatprep.subr.mxu0 0.0
        %1496 = vmatpush1.xpose.msra.mxu0 0.0
        %1497 = vmatprep.subr.mxu0 0.0
        %1498 = vmatpush1.xpose.msra.mxu0 0.0
        %1499 = vmatprep.subr.mxu0 0.0
        %1500 = vmatpush1.xpose.msra.mxu0 0.0
        %1501 = vmatprep.subr.mxu0 0.0
        %1502 = vmatpush1.xpose.msra.mxu0 0.0
        %1503 = vmatprep.subr.mxu0 0.0
        %1504 = vmatpush1.xpose.msra.mxu0 0.0
        %1505 = vmatprep.subr.mxu0 0.0
        %1506 = vmatpush1.xpose.msra.mxu0 0.0
        %1507 = vmatprep.subr.mxu0 0.0
        %1508 = vmatpush1.xpose.msra.mxu0 0.0
        %1509 = vmatprep.subr.mxu0 0.0
        %1510 = vmatpush1.xpose.msra.mxu0 0.0
        %1511 = vmatprep.subr.mxu0 0.0
        %1512 = vmatpush1.xpose.msra.mxu0 0.0
        %1513 = vmatprep.subr.mxu0 0.0
        %1514 = vmatpush1.xpose.msra.mxu0 0.0
        %1515 = vmatprep.subr.mxu0 0.0
        %1516 = vmatpush1.xpose.msra.mxu0 0.0
        %1517 = vmatprep.subr.mxu0 0.0
        %1518 = vmatpush1.xpose.msra.mxu0 0.0
        %1519 = vmatprep.subr.mxu0 0.0
        %1520 = vmatpush1.xpose.msra.mxu0 0.0
        %1521 = vmatprep.subr.mxu0 0.0
        %1522 = vmatpush1.xpose.msra.mxu0 0.0
        %1523 = vmatprep.subr.mxu0 0.0
        %1524 = vmatpush1.xpose.msra.mxu0 0.0
        %1525 = vmatprep.subr.mxu0 0.0
        %1526 = vmatpush1.xpose.msra.mxu0 0.0
        %1527 = vmatprep.subr.mxu0 0.0
        %1528 = vmatpush1.xpose.msra.mxu0 0.0
        %1529 = vmatprep.subr.mxu0 0.0
        %1530 = vmatpush1.xpose.msra.mxu0 0.0
        %1531 = vmatprep.subr.mxu0 0.0
        %1532 = vmatpush1.xpose.msra.mxu0 0.0
        %1533 = vmatprep.subr.mxu0 0.0
        %1534 = vmatpush1.xpose.msra.mxu0 0.0
        %1535 = vmatprep.subr.mxu0 0.0
        %1536 = vmatpush1.xpose.msra.mxu0 0.0
        %1537 = vmatprep.subr.mxu0 0.0
        %1538 = vmatpush1.xpose.msra.mxu0 0.0
        %1539 = vmatprep.subr.mxu0 0.0
        %1540 = vmatpush1.xpose.msra.mxu0 0.0
        %1541 = vmatprep.subr.mxu0 0.0
        %1542 = vmatpush1.xpose.msra.mxu0 0.0
        %1543 = vmatprep.subr.mxu0 0.0
        %1544 = vmatpush1.xpose.msra.mxu0 0.0
        %1545 = vmatprep.subr.mxu0 0.0
        %1546 = vmatpush1.xpose.msra.mxu0 0.0
        %1547 = vmatprep.subr.mxu0 0.0
        %1548 = vmatpush1.xpose.msra.mxu0 0.0
        %1549 = vmatprep.mubr.f32.mxu0 0.0
        %1550 = vmatmul.mubr.f32.gmra.mrb[0].mxu0 %v1481
        %v1551 = vpop.f32.mrb[0].mxu0
        %v1552 = vadd.f32 0.0, %v1551
        %v1553 = vpop.f32.mrb[0].mxu0
        %1554 = vdwg.mxu0
        %1555 = vrot.lane.b32.xlu0 %v977, 120
        %v1556 = vpop.permute.xlu0 %1555
        %1557 = vrot.lane.b32.xlu0 %v1063, 120
        %v1558 = vpop.permute.xlu0 %1557
        %v1559 = vsel %vm1152, %v1556, 0
        %v1561 = vsel %vm1152, %v1558, 0
        %1563 = vmatprep.subr.mxu0 0.0
        %1564 = vmatpush1.xpose.msra.mxu0 %v1561
        %1565 = vmatprep.subr.mxu0 0.0
        %1566 = vmatpush1.xpose.msra.mxu0 0.0
        %1567 = vmatprep.subr.mxu0 0.0
        %1568 = vmatpush1.xpose.msra.mxu0 0.0
        %1569 = vmatprep.subr.mxu0 0.0
        %1570 = vmatpush1.xpose.msra.mxu0 0.0
        %1571 = vmatprep.subr.mxu0 0.0
        %1572 = vmatpush1.xpose.msra.mxu0 0.0
        %1573 = vmatprep.subr.mxu0 0.0
        %1574 = vmatpush1.xpose.msra.mxu0 0.0
        %1575 = vmatprep.subr.mxu0 0.0
        %1576 = vmatpush1.xpose.msra.mxu0 0.0
        %1577 = vmatprep.subr.mxu0 0.0
        %1578 = vmatpush1.xpose.msra.mxu0 0.0
        %1579 = vmatprep.subr.mxu0 0.0
        %1580 = vmatpush1.xpose.msra.mxu0 0.0
        %1581 = vmatprep.subr.mxu0 0.0
        %1582 = vmatpush1.xpose.msra.mxu0 0.0
        %1583 = vmatprep.subr.mxu0 0.0
        %1584 = vmatpush1.xpose.msra.mxu0 0.0
        %1585 = vmatprep.subr.mxu0 0.0
        %1586 = vmatpush1.xpose.msra.mxu0 0.0
        %1587 = vmatprep.subr.mxu0 0.0
        %1588 = vmatpush1.xpose.msra.mxu0 0.0
        %1589 = vmatprep.subr.mxu0 0.0
        %1590 = vmatpush1.xpose.msra.mxu0 0.0
        %1591 = vmatprep.subr.mxu0 0.0
        %1592 = vmatpush1.xpose.msra.mxu0 0.0
        %1593 = vmatprep.subr.mxu0 0.0
        %1594 = vmatpush1.xpose.msra.mxu0 0.0
        %1595 = vmatprep.subr.mxu0 0.0
        %1596 = vmatpush1.xpose.msra.mxu0 0.0
        %1597 = vmatprep.subr.mxu0 0.0
        %1598 = vmatpush1.xpose.msra.mxu0 0.0
        %1599 = vmatprep.subr.mxu0 0.0
        %1600 = vmatpush1.xpose.msra.mxu0 0.0
        %1601 = vmatprep.subr.mxu0 0.0
        %1602 = vmatpush1.xpose.msra.mxu0 0.0
        %1603 = vmatprep.subr.mxu0 0.0
        %1604 = vmatpush1.xpose.msra.mxu0 0.0
        %1605 = vmatprep.subr.mxu0 0.0
        %1606 = vmatpush1.xpose.msra.mxu0 0.0
        %1607 = vmatprep.subr.mxu0 0.0
        %1608 = vmatpush1.xpose.msra.mxu0 0.0
        %1609 = vmatprep.subr.mxu0 0.0
        %1610 = vmatpush1.xpose.msra.mxu0 0.0
        %1611 = vmatprep.subr.mxu0 0.0
        %1612 = vmatpush1.xpose.msra.mxu0 0.0
        %1613 = vmatprep.subr.mxu0 0.0
        %1614 = vmatpush1.xpose.msra.mxu0 0.0
        %1615 = vmatprep.subr.mxu0 0.0
        %1616 = vmatpush1.xpose.msra.mxu0 0.0
        %1617 = vmatprep.subr.mxu0 0.0
        %1618 = vmatpush1.xpose.msra.mxu0 0.0
        %1619 = vmatprep.subr.mxu0 0.0
        %1620 = vmatpush1.xpose.msra.mxu0 0.0
        %1621 = vmatprep.subr.mxu0 0.0
        %1622 = vmatpush1.xpose.msra.mxu0 0.0
        %1623 = vmatprep.subr.mxu0 0.0
        %1624 = vmatpush1.xpose.msra.mxu0 0.0
        %1625 = vmatprep.subr.mxu0 0.0
        %1626 = vmatpush1.xpose.msra.mxu0 0.0
        %1627 = vmatprep.mubr.f32.mxu0 0.0
        %1628 = vmatmul.mubr.f32.gmra.mrb[0].mxu0 %v1559
        %v1629 = vpop.f32.mrb[0].mxu0
        %v1630 = vadd.f32 0.0, %v1629
        %v1631 = vpop.f32.mrb[0].mxu0
        %1632 = vdwg.mxu0
        %v1633 = vmul.f32 %v1552, 0.35355338
        %v1634 = vmul.f32 %v1630, 0.35355338
        %v1635 = vadd.f32 %v1633, %v880
        %v1636 = vadd.f32 %v1634, %v884
        %v1637 = vsel %vm1152, %v1635, -inf
        %1638 = vmax.xlane.f32.xlu0 %v1637
        %v1639 = vpop.xlane.xlu0 %1638
        %v1640 = vsel %vm1152, %v1636, -inf
        %1641 = vmax.xlane.f32.xlu0 %v1640
        %v1642 = vpop.xlane.xlu0 %1641
        %v1643 = vsub.f32 %v1635, %v1639
        %v1644 = vsub.f32 %v1636, %v1642
        %v1645 = vmul.f32 %v1643, 1.442695
        %v1646 = vpow.pop %v1645
        %v1647 = vmul.f32 %v1644, 1.442695
        %v1648 = vpow.pop %v1647
        %v1649 = vsel %vm1152, %v1646, 0.0
        %1650 = vadd.xlane.f32.xlu0 %v1649
        %v1651 = vpop.xlane.xlu0 %1650
        %v1652 = vsel %vm1152, %v1648, 0.0
        %1653 = vadd.xlane.f32.xlu0 %v1652
        %v1654 = vpop.xlane.xlu0 %1653
        %v1655 = vrcp.pop %v1651
        %v1656 = vmul.f32 %v1646, %v1655
        %v1657 = vrcp.pop %v1654
        %v1658 = vmul.f32 %v1648, %v1657
        %1660 = vrot.lane.b32.xlu0 %v1144, 120
        %v1661 = vpop.permute.xlu0 %1660
        %v1664 = vsel %vm1152, %v1656, 0
        %1666 = vmatprep.subr.mxu0 0.0
        %1667 = vmatpush1.msra.mxu0 %v1661
        %1668 = vmatprep.subr.mxu0 0.0
        %1669 = vmatpush1.msra.mxu0 0.0
        %1670 = vmatprep.subr.mxu0 0.0
        %1671 = vmatpush1.msra.mxu0 0.0
        %1672 = vmatprep.subr.mxu0 0.0
        %1673 = vmatpush1.msra.mxu0 0.0
        %1674 = vmatprep.subr.mxu0 0.0
        %1675 = vmatpush1.msra.mxu0 0.0
        %1676 = vmatprep.subr.mxu0 0.0
        %1677 = vmatpush1.msra.mxu0 0.0
        %1678 = vmatprep.subr.mxu0 0.0
        %1679 = vmatpush1.msra.mxu0 0.0
        %1680 = vmatprep.subr.mxu0 0.0
        %1681 = vmatpush1.msra.mxu0 0.0
        %1682 = vmatprep.subr.mxu0 0.0
        %1683 = vmatpush1.msra.mxu0 0.0
        %1684 = vmatprep.subr.mxu0 0.0
        %1685 = vmatpush1.msra.mxu0 0.0
        %1686 = vmatprep.subr.mxu0 0.0
        %1687 = vmatpush1.msra.mxu0 0.0
        %1688 = vmatprep.subr.mxu0 0.0
        %1689 = vmatpush1.msra.mxu0 0.0
        %1690 = vmatprep.subr.mxu0 0.0
        %1691 = vmatpush1.msra.mxu0 0.0
        %1692 = vmatprep.subr.mxu0 0.0
        %1693 = vmatpush1.msra.mxu0 0.0
        %1694 = vmatprep.subr.mxu0 0.0
        %1695 = vmatpush1.msra.mxu0 0.0
        %1696 = vmatprep.subr.mxu0 0.0
        %1697 = vmatpush1.msra.mxu0 0.0
        %1698 = vmatprep.subr.mxu0 0.0
        %1699 = vmatpush1.msra.mxu0 0.0
        %1700 = vmatprep.subr.mxu0 0.0
        %1701 = vmatpush1.msra.mxu0 0.0
        %1702 = vmatprep.subr.mxu0 0.0
        %1703 = vmatpush1.msra.mxu0 0.0
        %1704 = vmatprep.subr.mxu0 0.0
        %1705 = vmatpush1.msra.mxu0 0.0
        %1706 = vmatprep.subr.mxu0 0.0
        %1707 = vmatpush1.msra.mxu0 0.0
        %1708 = vmatprep.subr.mxu0 0.0
        %1709 = vmatpush1.msra.mxu0 0.0
        %1710 = vmatprep.subr.mxu0 0.0
        %1711 = vmatpush1.msra.mxu0 0.0
        %1712 = vmatprep.subr.mxu0 0.0
        %1713 = vmatpush1.msra.mxu0 0.0
        %1714 = vmatprep.subr.mxu0 0.0
        %1715 = vmatpush1.msra.mxu0 0.0
        %1716 = vmatprep.subr.mxu0 0.0
        %1717 = vmatpush1.msra.mxu0 0.0
        %1718 = vmatprep.subr.mxu0 0.0
        %1719 = vmatpush1.msra.mxu0 0.0
        %1720 = vmatprep.subr.mxu0 0.0
        %1721 = vmatpush1.msra.mxu0 0.0
        %1722 = vmatprep.subr.mxu0 0.0
        %1723 = vmatpush1.msra.mxu0 0.0
        %1724 = vmatprep.subr.mxu0 0.0
        %1725 = vmatpush1.msra.mxu0 0.0
        %1726 = vmatprep.subr.mxu0 0.0
        %1727 = vmatpush1.msra.mxu0 0.0
        %1728 = vmatprep.subr.mxu0 0.0
        %1729 = vmatpush1.msra.mxu0 0.0
        %1730 = vmatprep.mubr.f32.mxu0 0.0
        %1731 = vmatmul.mubr.f32.gmra.mrb[0].mxu0 %v1664
        %v1732 = vpop.f32.mrb[0].mxu0
        %v1733 = vadd.f32 0.0, %v1732
        %v1734 = vpop.f32.mrb[0].mxu0
        %1735 = vdwg.mxu0
        %1737 = vrot.lane.b32.xlu0 %v1149, 120
        %v1738 = vpop.permute.xlu0 %1737
        %v1741 = vsel %vm1152, %v1658, 0
        %1743 = vmatprep.subr.mxu0 0.0
        %1744 = vmatpush1.msra.mxu0 %v1738
        %1745 = vmatprep.subr.mxu0 0.0
        %1746 = vmatpush1.msra.mxu0 0.0
        %1747 = vmatprep.subr.mxu0 0.0
        %1748 = vmatpush1.msra.mxu0 0.0
        %1749 = vmatprep.subr.mxu0 0.0
        %1750 = vmatpush1.msra.mxu0 0.0
        %1751 = vmatprep.subr.mxu0 0.0
        %1752 = vmatpush1.msra.mxu0 0.0
        %1753 = vmatprep.subr.mxu0 0.0
        %1754 = vmatpush1.msra.mxu0 0.0
        %1755 = vmatprep.subr.mxu0 0.0
        %1756 = vmatpush1.msra.mxu0 0.0
        %1757 = vmatprep.subr.mxu0 0.0
        %1758 = vmatpush1.msra.mxu0 0.0
        %1759 = vmatprep.subr.mxu0 0.0
        %1760 = vmatpush1.msra.mxu0 0.0
        %1761 = vmatprep.subr.mxu0 0.0
        %1762 = vmatpush1.msra.mxu0 0.0
        %1763 = vmatprep.subr.mxu0 0.0
        %1764 = vmatpush1.msra.mxu0 0.0
        %1765 = vmatprep.subr.mxu0 0.0
        %1766 = vmatpush1.msra.mxu0 0.0
        %1767 = vmatprep.subr.mxu0 0.0
        %1768 = vmatpush1.msra.mxu0 0.0
        %1769 = vmatprep.subr.mxu0 0.0
        %1770 = vmatpush1.msra.mxu0 0.0
        %1771 = vmatprep.subr.mxu0 0.0
        %1772 = vmatpush1.msra.mxu0 0.0
        %1773 = vmatprep.subr.mxu0 0.0
        %1774 = vmatpush1.msra.mxu0 0.0
        %1775 = vmatprep.subr.mxu0 0.0
        %1776 = vmatpush1.msra.mxu0 0.0
        %1777 = vmatprep.subr.mxu0 0.0
        %1778 = vmatpush1.msra.mxu0 0.0
        %1779 = vmatprep.subr.mxu0 0.0
        %1780 = vmatpush1.msra.mxu0 0.0
        %1781 = vmatprep.subr.mxu0 0.0
        %1782 = vmatpush1.msra.mxu0 0.0
        %1783 = vmatprep.subr.mxu0 0.0
        %1784 = vmatpush1.msra.mxu0 0.0
        %1785 = vmatprep.subr.mxu0 0.0
        %1786 = vmatpush1.msra.mxu0 0.0
        %1787 = vmatprep.subr.mxu0 0.0
        %1788 = vmatpush1.msra.mxu0 0.0
        %1789 = vmatprep.subr.mxu0 0.0
        %1790 = vmatpush1.msra.mxu0 0.0
        %1791 = vmatprep.subr.mxu0 0.0
        %1792 = vmatpush1.msra.mxu0 0.0
        %1793 = vmatprep.subr.mxu0 0.0
        %1794 = vmatpush1.msra.mxu0 0.0
        %1795 = vmatprep.subr.mxu0 0.0
        %1796 = vmatpush1.msra.mxu0 0.0
        %1797 = vmatprep.subr.mxu0 0.0
        %1798 = vmatpush1.msra.mxu0 0.0
        %1799 = vmatprep.subr.mxu0 0.0
        %1800 = vmatpush1.msra.mxu0 0.0
        %1801 = vmatprep.subr.mxu0 0.0
        %1802 = vmatpush1.msra.mxu0 0.0
        %1803 = vmatprep.subr.mxu0 0.0
        %1804 = vmatpush1.msra.mxu0 0.0
        %1805 = vmatprep.subr.mxu0 0.0
        %1806 = vmatpush1.msra.mxu0 0.0
        %1807 = vmatprep.mubr.f32.mxu0 0.0
        %1808 = vmatmul.mubr.f32.gmra.mrb[0].mxu0 %v1741
        %v1809 = vpop.f32.mrb[0].mxu0
        %v1810 = vadd.f32 0.0, %v1809
        %v1811 = vpop.f32.mrb[0].mxu0
        %1812 = vdwg.mxu0
        %1813 = vrot.lane.b32.xlu0 %v972, 112
        %v1814 = vpop.permute.xlu0 %1813
        %1815 = vrot.lane.b32.xlu0 %v1058, 112
        %v1816 = vpop.permute.xlu0 %1815
        %v1817 = vsel %vm1152, %v1814, 0
        %v1819 = vsel %vm1152, %v1816, 0
        %1821 = vmatprep.subr.mxu0 0.0
        %1822 = vmatpush1.xpose.msra.mxu0 %v1819
        %1823 = vmatprep.subr.mxu0 0.0
        %1824 = vmatpush1.xpose.msra.mxu0 0.0
        %1825 = vmatprep.subr.mxu0 0.0
        %1826 = vmatpush1.xpose.msra.mxu0 0.0
        %1827 = vmatprep.subr.mxu0 0.0
        %1828 = vmatpush1.xpose.msra.mxu0 0.0
        %1829 = vmatprep.subr.mxu0 0.0
        %1830 = vmatpush1.xpose.msra.mxu0 0.0
        %1831 = vmatprep.subr.mxu0 0.0
        %1832 = vmatpush1.xpose.msra.mxu0 0.0
        %1833 = vmatprep.subr.mxu0 0.0
        %1834 = vmatpush1.xpose.msra.mxu0 0.0
        %1835 = vmatprep.subr.mxu0 0.0
        %1836 = vmatpush1.xpose.msra.mxu0 0.0
        %1837 = vmatprep.subr.mxu0 0.0
        %1838 = vmatpush1.xpose.msra.mxu0 0.0
        %1839 = vmatprep.subr.mxu0 0.0
        %1840 = vmatpush1.xpose.msra.mxu0 0.0
        %1841 = vmatprep.subr.mxu0 0.0
        %1842 = vmatpush1.xpose.msra.mxu0 0.0
        %1843 = vmatprep.subr.mxu0 0.0
        %1844 = vmatpush1.xpose.msra.mxu0 0.0
        %1845 = vmatprep.subr.mxu0 0.0
        %1846 = vmatpush1.xpose.msra.mxu0 0.0
        %1847 = vmatprep.subr.mxu0 0.0
        %1848 = vmatpush1.xpose.msra.mxu0 0.0
        %1849 = vmatprep.subr.mxu0 0.0
        %1850 = vmatpush1.xpose.msra.mxu0 0.0
        %1851 = vmatprep.subr.mxu0 0.0
        %1852 = vmatpush1.xpose.msra.mxu0 0.0
        %1853 = vmatprep.subr.mxu0 0.0
        %1854 = vmatpush1.xpose.msra.mxu0 0.0
        %1855 = vmatprep.subr.mxu0 0.0
        %1856 = vmatpush1.xpose.msra.mxu0 0.0
        %1857 = vmatprep.subr.mxu0 0.0
        %1858 = vmatpush1.xpose.msra.mxu0 0.0
        %1859 = vmatprep.subr.mxu0 0.0
        %1860 = vmatpush1.xpose.msra.mxu0 0.0
        %1861 = vmatprep.subr.mxu0 0.0
        %1862 = vmatpush1.xpose.msra.mxu0 0.0
        %1863 = vmatprep.subr.mxu0 0.0
        %1864 = vmatpush1.xpose.msra.mxu0 0.0
        %1865 = vmatprep.subr.mxu0 0.0
        %1866 = vmatpush1.xpose.msra.mxu0 0.0
        %1867 = vmatprep.subr.mxu0 0.0
        %1868 = vmatpush1.xpose.msra.mxu0 0.0
        %1869 = vmatprep.subr.mxu0 0.0
        %1870 = vmatpush1.xpose.msra.mxu0 0.0
        %1871 = vmatprep.subr.mxu0 0.0
        %1872 = vmatpush1.xpose.msra.mxu0 0.0
        %1873 = vmatprep.subr.mxu0 0.0
        %1874 = vmatpush1.xpose.msra.mxu0 0.0
        %1875 = vmatprep.subr.mxu0 0.0
        %1876 = vmatpush1.xpose.msra.mxu0 0.0
        %1877 = vmatprep.subr.mxu0 0.0
        %1878 = vmatpush1.xpose.msra.mxu0 0.0
        %1879 = vmatprep.subr.mxu0 0.0
        %1880 = vmatpush1.xpose.msra.mxu0 0.0
        %1881 = vmatprep.subr.mxu0 0.0
        %1882 = vmatpush1.xpose.msra.mxu0 0.0
        %1883 = vmatprep.subr.mxu0 0.0
        %1884 = vmatpush1.xpose.msra.mxu0 0.0
        %1885 = vmatprep.mubr.f32.mxu0 0.0
        %1886 = vmatmul.mubr.f32.gmra.mrb[0].mxu0 %v1817
        %v1887 = vpop.f32.mrb[0].mxu0
        %v1888 = vadd.f32 0.0, %v1887
        %v1889 = vpop.f32.mrb[0].mxu0
        %1890 = vdwg.mxu0
        %1891 = vrot.lane.b32.xlu0 %v977, 112
        %v1892 = vpop.permute.xlu0 %1891
        %1893 = vrot.lane.b32.xlu0 %v1063, 112
        %v1894 = vpop.permute.xlu0 %1893
        %v1895 = vsel %vm1152, %v1892, 0
        %v1897 = vsel %vm1152, %v1894, 0
        %1899 = vmatprep.subr.mxu0 0.0
        %1900 = vmatpush1.xpose.msra.mxu0 %v1897
        %1901 = vmatprep.subr.mxu0 0.0
        %1902 = vmatpush1.xpose.msra.mxu0 0.0
        %1903 = vmatprep.subr.mxu0 0.0
        %1904 = vmatpush1.xpose.msra.mxu0 0.0
        %1905 = vmatprep.subr.mxu0 0.0
        %1906 = vmatpush1.xpose.msra.mxu0 0.0
        %1907 = vmatprep.subr.mxu0 0.0
        %1908 = vmatpush1.xpose.msra.mxu0 0.0
        %1909 = vmatprep.subr.mxu0 0.0
        %1910 = vmatpush1.xpose.msra.mxu0 0.0
        %1911 = vmatprep.subr.mxu0 0.0
        %1912 = vmatpush1.xpose.msra.mxu0 0.0
        %1913 = vmatprep.subr.mxu0 0.0
        %1914 = vmatpush1.xpose.msra.mxu0 0.0
        %1915 = vmatprep.subr.mxu0 0.0
        %1916 = vmatpush1.xpose.msra.mxu0 0.0
        %1917 = vmatprep.subr.mxu0 0.0
        %1918 = vmatpush1.xpose.msra.mxu0 0.0
        %1919 = vmatprep.subr.mxu0 0.0
        %1920 = vmatpush1.xpose.msra.mxu0 0.0
        %1921 = vmatprep.subr.mxu0 0.0
        %1922 = vmatpush1.xpose.msra.mxu0 0.0
        %1923 = vmatprep.subr.mxu0 0.0
        %1924 = vmatpush1.xpose.msra.mxu0 0.0
        %1925 = vmatprep.subr.mxu0 0.0
        %1926 = vmatpush1.xpose.msra.mxu0 0.0
        %1927 = vmatprep.subr.mxu0 0.0
        %1928 = vmatpush1.xpose.msra.mxu0 0.0
        %1929 = vmatprep.subr.mxu0 0.0
        %1930 = vmatpush1.xpose.msra.mxu0 0.0
        %1931 = vmatprep.subr.mxu0 0.0
        %1932 = vmatpush1.xpose.msra.mxu0 0.0
        %1933 = vmatprep.subr.mxu0 0.0
        %1934 = vmatpush1.xpose.msra.mxu0 0.0
        %1935 = vmatprep.subr.mxu0 0.0
        %1936 = vmatpush1.xpose.msra.mxu0 0.0
        %1937 = vmatprep.subr.mxu0 0.0
        %1938 = vmatpush1.xpose.msra.mxu0 0.0
        %1939 = vmatprep.subr.mxu0 0.0
        %1940 = vmatpush1.xpose.msra.mxu0 0.0
        %1941 = vmatprep.subr.mxu0 0.0
        %1942 = vmatpush1.xpose.msra.mxu0 0.0
        %1943 = vmatprep.subr.mxu0 0.0
        %1944 = vmatpush1.xpose.msra.mxu0 0.0
        %1945 = vmatprep.subr.mxu0 0.0
        %1946 = vmatpush1.xpose.msra.mxu0 0.0
        %1947 = vmatprep.subr.mxu0 0.0
        %1948 = vmatpush1.xpose.msra.mxu0 0.0
        %1949 = vmatprep.subr.mxu0 0.0
        %1950 = vmatpush1.xpose.msra.mxu0 0.0
        %1951 = vmatprep.subr.mxu0 0.0
        %1952 = vmatpush1.xpose.msra.mxu0 0.0
        %1953 = vmatprep.subr.mxu0 0.0
        %1954 = vmatpush1.xpose.msra.mxu0 0.0
        %1955 = vmatprep.subr.mxu0 0.0
        %1956 = vmatpush1.xpose.msra.mxu0 0.0
        %1957 = vmatprep.subr.mxu0 0.0
        %1958 = vmatpush1.xpose.msra.mxu0 0.0
        %1959 = vmatprep.subr.mxu0 0.0
        %1960 = vmatpush1.xpose.msra.mxu0 0.0
        %1961 = vmatprep.subr.mxu0 0.0
        %1962 = vmatpush1.xpose.msra.mxu0 0.0
        %1963 = vmatprep.mubr.f32.mxu0 0.0
        %1964 = vmatmul.mubr.f32.gmra.mrb[0].mxu0 %v1895
        %v1965 = vpop.f32.mrb[0].mxu0
        %v1966 = vadd.f32 0.0, %v1965
        %v1967 = vpop.f32.mrb[0].mxu0
        %1968 = vdwg.mxu0
        %v1969 = vmul.f32 %v1888, 0.35355338
        %v1970 = vmul.f32 %v1966, 0.35355338
        %v1971 = vadd.f32 %v1969, %v880
        %v1972 = vadd.f32 %v1970, %v884
        %v1973 = vsel %vm1152, %v1971, -inf
        %1974 = vmax.xlane.f32.xlu0 %v1973
        %v1975 = vpop.xlane.xlu0 %1974
        %v1976 = vsel %vm1152, %v1972, -inf
        %1977 = vmax.xlane.f32.xlu0 %v1976
        %v1978 = vpop.xlane.xlu0 %1977
        %v1979 = vsub.f32 %v1971, %v1975
        %v1980 = vsub.f32 %v1972, %v1978
        %v1981 = vmul.f32 %v1979, 1.442695
        %v1982 = vpow.pop %v1981
        %v1983 = vmul.f32 %v1980, 1.442695
        %v1984 = vpow.pop %v1983
        %v1985 = vsel %vm1152, %v1982, 0.0
        %1986 = vadd.xlane.f32.xlu0 %v1985
        %v1987 = vpop.xlane.xlu0 %1986
        %v1988 = vsel %vm1152, %v1984, 0.0
        %1989 = vadd.xlane.f32.xlu0 %v1988
        %v1990 = vpop.xlane.xlu0 %1989
        %v1991 = vrcp.pop %v1987
        %v1992 = vmul.f32 %v1982, %v1991
        %v1993 = vrcp.pop %v1990
        %v1994 = vmul.f32 %v1984, %v1993
        %1995 = vrot.lane.b32.xlu0 %v1144, 112
        %v1996 = vpop.permute.xlu0 %1995
        %v1999 = vsel %vm1152, %v1992, 0
        %2001 = vmatprep.subr.mxu0 0.0
        %2002 = vmatpush1.msra.mxu0 %v1996
        %2003 = vmatprep.subr.mxu0 0.0
        %2004 = vmatpush1.msra.mxu0 0.0
        %2005 = vmatprep.subr.mxu0 0.0
        %2006 = vmatpush1.msra.mxu0 0.0
        %2007 = vmatprep.subr.mxu0 0.0
        %2008 = vmatpush1.msra.mxu0 0.0
        %2009 = vmatprep.subr.mxu0 0.0
        %2010 = vmatpush1.msra.mxu0 0.0
        %2011 = vmatprep.subr.mxu0 0.0
        %2012 = vmatpush1.msra.mxu0 0.0
        %2013 = vmatprep.subr.mxu0 0.0
        %2014 = vmatpush1.msra.mxu0 0.0
        %2015 = vmatprep.subr.mxu0 0.0
        %2016 = vmatpush1.msra.mxu0 0.0
        %2017 = vmatprep.subr.mxu0 0.0
        %2018 = vmatpush1.msra.mxu0 0.0
        %2019 = vmatprep.subr.mxu0 0.0
        %2020 = vmatpush1.msra.mxu0 0.0
        %2021 = vmatprep.subr.mxu0 0.0
        %2022 = vmatpush1.msra.mxu0 0.0
        %2023 = vmatprep.subr.mxu0 0.0
        %2024 = vmatpush1.msra.mxu0 0.0
        %2025 = vmatprep.subr.mxu0 0.0
        %2026 = vmatpush1.msra.mxu0 0.0
        %2027 = vmatprep.subr.mxu0 0.0
        %2028 = vmatpush1.msra.mxu0 0.0
        %2029 = vmatprep.subr.mxu0 0.0
        %2030 = vmatpush1.msra.mxu0 0.0
        %2031 = vmatprep.subr.mxu0 0.0
        %2032 = vmatpush1.msra.mxu0 0.0
        %2033 = vmatprep.subr.mxu0 0.0
        %2034 = vmatpush1.msra.mxu0 0.0
        %2035 = vmatprep.subr.mxu0 0.0
        %2036 = vmatpush1.msra.mxu0 0.0
        %2037 = vmatprep.subr.mxu0 0.0
        %2038 = vmatpush1.msra.mxu0 0.0
        %2039 = vmatprep.subr.mxu0 0.0
        %2040 = vmatpush1.msra.mxu0 0.0
        %2041 = vmatprep.subr.mxu0 0.0
        %2042 = vmatpush1.msra.mxu0 0.0
        %2043 = vmatprep.subr.mxu0 0.0
        %2044 = vmatpush1.msra.mxu0 0.0
        %2045 = vmatprep.subr.mxu0 0.0
        %2046 = vmatpush1.msra.mxu0 0.0
        %2047 = vmatprep.subr.mxu0 0.0
        %2048 = vmatpush1.msra.mxu0 0.0
        %2049 = vmatprep.subr.mxu0 0.0
        %2050 = vmatpush1.msra.mxu0 0.0
        %2051 = vmatprep.subr.mxu0 0.0
        %2052 = vmatpush1.msra.mxu0 0.0
        %2053 = vmatprep.subr.mxu0 0.0
        %2054 = vmatpush1.msra.mxu0 0.0
        %2055 = vmatprep.subr.mxu0 0.0
        %2056 = vmatpush1.msra.mxu0 0.0
        %2057 = vmatprep.subr.mxu0 0.0
        %2058 = vmatpush1.msra.mxu0 0.0
        %2059 = vmatprep.subr.mxu0 0.0
        %2060 = vmatpush1.msra.mxu0 0.0
        %2061 = vmatprep.subr.mxu0 0.0
        %2062 = vmatpush1.msra.mxu0 0.0
        %2063 = vmatprep.subr.mxu0 0.0
        %2064 = vmatpush1.msra.mxu0 0.0
        %2065 = vmatprep.mubr.f32.mxu0 0.0
        %2066 = vmatmul.mubr.f32.gmra.mrb[0].mxu0 %v1999
        %v2067 = vpop.f32.mrb[0].mxu0
        %v2068 = vadd.f32 0.0, %v2067
        %v2069 = vpop.f32.mrb[0].mxu0
        %2070 = vdwg.mxu0
        %2071 = vrot.lane.b32.xlu0 %v1149, 112
        %v2072 = vpop.permute.xlu0 %2071
        %v2075 = vsel %vm1152, %v1994, 0
        %2077 = vmatprep.subr.mxu0 0.0
        %2078 = vmatpush1.msra.mxu0 %v2072
        %2079 = vmatprep.subr.mxu0 0.0
        %2080 = vmatpush1.msra.mxu0 0.0
        %2081 = vmatprep.subr.mxu0 0.0
        %2082 = vmatpush1.msra.mxu0 0.0
        %2083 = vmatprep.subr.mxu0 0.0
        %2084 = vmatpush1.msra.mxu0 0.0
        %2085 = vmatprep.subr.mxu0 0.0
        %2086 = vmatpush1.msra.mxu0 0.0
        %2087 = vmatprep.subr.mxu0 0.0
        %2088 = vmatpush1.msra.mxu0 0.0
        %2089 = vmatprep.subr.mxu0 0.0
        %2090 = vmatpush1.msra.mxu0 0.0
        %2091 = vmatprep.subr.mxu0 0.0
        %2092 = vmatpush1.msra.mxu0 0.0
        %2093 = vmatprep.subr.mxu0 0.0
        %2094 = vmatpush1.msra.mxu0 0.0
        %2095 = vmatprep.subr.mxu0 0.0
        %2096 = vmatpush1.msra.mxu0 0.0
        %2097 = vmatprep.subr.mxu0 0.0
        %2098 = vmatpush1.msra.mxu0 0.0
        %2099 = vmatprep.subr.mxu0 0.0
        %2100 = vmatpush1.msra.mxu0 0.0
        %2101 = vmatprep.subr.mxu0 0.0
        %2102 = vmatpush1.msra.mxu0 0.0
        %2103 = vmatprep.subr.mxu0 0.0
        %2104 = vmatpush1.msra.mxu0 0.0
        %2105 = vmatprep.subr.mxu0 0.0
        %2106 = vmatpush1.msra.mxu0 0.0
        %2107 = vmatprep.subr.mxu0 0.0
        %2108 = vmatpush1.msra.mxu0 0.0
        %2109 = vmatprep.subr.mxu0 0.0
        %2110 = vmatpush1.msra.mxu0 0.0
        %2111 = vmatprep.subr.mxu0 0.0
        %2112 = vmatpush1.msra.mxu0 0.0
        %2113 = vmatprep.subr.mxu0 0.0
        %2114 = vmatpush1.msra.mxu0 0.0
        %2115 = vmatprep.subr.mxu0 0.0
        %2116 = vmatpush1.msra.mxu0 0.0
        %2117 = vmatprep.subr.mxu0 0.0
        %2118 = vmatpush1.msra.mxu0 0.0
        %2119 = vmatprep.subr.mxu0 0.0
        %2120 = vmatpush1.msra.mxu0 0.0
        %2121 = vmatprep.subr.mxu0 0.0
        %2122 = vmatpush1.msra.mxu0 0.0
        %2123 = vmatprep.subr.mxu0 0.0
        %2124 = vmatpush1.msra.mxu0 0.0
        %2125 = vmatprep.subr.mxu0 0.0
        %2126 = vmatpush1.msra.mxu0 0.0
        %2127 = vmatprep.subr.mxu0 0.0
        %2128 = vmatpush1.msra.mxu0 0.0
        %2129 = vmatprep.subr.mxu0 0.0
        %2130 = vmatpush1.msra.mxu0 0.0
        %2131 = vmatprep.subr.mxu0 0.0
        %2132 = vmatpush1.msra.mxu0 0.0
        %2133 = vmatprep.subr.mxu0 0.0
        %2134 = vmatpush1.msra.mxu0 0.0
        %2135 = vmatprep.subr.mxu0 0.0
        %2136 = vmatpush1.msra.mxu0 0.0
        %2137 = vmatprep.subr.mxu0 0.0
        %2138 = vmatpush1.msra.mxu0 0.0
        %2139 = vmatprep.subr.mxu0 0.0
        %2140 = vmatpush1.msra.mxu0 0.0
        %2141 = vmatprep.mubr.f32.mxu0 0.0
        %2142 = vmatmul.mubr.f32.gmra.mrb[0].mxu0 %v2075
        %v2143 = vpop.f32.mrb[0].mxu0
        %v2144 = vadd.f32 0.0, %v2143
        %v2145 = vpop.f32.mrb[0].mxu0
        %2146 = vdwg.mxu0
        %2147 = vrot.lane.b32.xlu0 %v972, 104
        %v2148 = vpop.permute.xlu0 %2147
        %2149 = vrot.lane.b32.xlu0 %v1058, 104
        %v2150 = vpop.permute.xlu0 %2149
        %v2151 = vsel %vm1152, %v2148, 0
        %v2153 = vsel %vm1152, %v2150, 0
        %2155 = vmatprep.subr.mxu0 0.0
        %2156 = vmatpush1.xpose.msra.mxu0 %v2153
        %2157 = vmatprep.subr.mxu0 0.0
        %2158 = vmatpush1.xpose.msra.mxu0 0.0
        %2159 = vmatprep.subr.mxu0 0.0
        %2160 = vmatpush1.xpose.msra.mxu0 0.0
        %2161 = vmatprep.subr.mxu0 0.0
        %2162 = vmatpush1.xpose.msra.mxu0 0.0
        %2163 = vmatprep.subr.mxu0 0.0
        %2164 = vmatpush1.xpose.msra.mxu0 0.0
        %2165 = vmatprep.subr.mxu0 0.0
        %2166 = vmatpush1.xpose.msra.mxu0 0.0
        %2167 = vmatprep.subr.mxu0 0.0
        %2168 = vmatpush1.xpose.msra.mxu0 0.0
        %2169 = vmatprep.subr.mxu0 0.0
        %2170 = vmatpush1.xpose.msra.mxu0 0.0
        %2171 = vmatprep.subr.mxu0 0.0
        %2172 = vmatpush1.xpose.msra.mxu0 0.0
        %2173 = vmatprep.subr.mxu0 0.0
        %2174 = vmatpush1.xpose.msra.mxu0 0.0
        %2175 = vmatprep.subr.mxu0 0.0
        %2176 = vmatpush1.xpose.msra.mxu0 0.0
        %2177 = vmatprep.subr.mxu0 0.0
        %2178 = vmatpush1.xpose.msra.mxu0 0.0
        %2179 = vmatprep.subr.mxu0 0.0
        %2180 = vmatpush1.xpose.msra.mxu0 0.0
        %2181 = vmatprep.subr.mxu0 0.0
        %2182 = vmatpush1.xpose.msra.mxu0 0.0
        %2183 = vmatprep.subr.mxu0 0.0
        %2184 = vmatpush1.xpose.msra.mxu0 0.0
        %2185 = vmatprep.subr.mxu0 0.0
        %2186 = vmatpush1.xpose.msra.mxu0 0.0
        %2187 = vmatprep.subr.mxu0 0.0
        %2188 = vmatpush1.xpose.msra.mxu0 0.0
        %2189 = vmatprep.subr.mxu0 0.0
        %2190 = vmatpush1.xpose.msra.mxu0 0.0
        %2191 = vmatprep.subr.mxu0 0.0
        %2192 = vmatpush1.xpose.msra.mxu0 0.0
        %2193 = vmatprep.subr.mxu0 0.0
        %2194 = vmatpush1.xpose.msra.mxu0 0.0
        %2195 = vmatprep.subr.mxu0 0.0
        %2196 = vmatpush1.xpose.msra.mxu0 0.0
        %2197 = vmatprep.subr.mxu0 0.0
        %2198 = vmatpush1.xpose.msra.mxu0 0.0
        %2199 = vmatprep.subr.mxu0 0.0
        %2200 = vmatpush1.xpose.msra.mxu0 0.0
        %2201 = vmatprep.subr.mxu0 0.0
        %2202 = vmatpush1.xpose.msra.mxu0 0.0
        %2203 = vmatprep.subr.mxu0 0.0
        %2204 = vmatpush1.xpose.msra.mxu0 0.0
        %2205 = vmatprep.subr.mxu0 0.0
        %2206 = vmatpush1.xpose.msra.mxu0 0.0
        %2207 = vmatprep.subr.mxu0 0.0
        %2208 = vmatpush1.xpose.msra.mxu0 0.0
        %2209 = vmatprep.subr.mxu0 0.0
        %2210 = vmatpush1.xpose.msra.mxu0 0.0
        %2211 = vmatprep.subr.mxu0 0.0
        %2212 = vmatpush1.xpose.msra.mxu0 0.0
        %2213 = vmatprep.subr.mxu0 0.0
        %2214 = vmatpush1.xpose.msra.mxu0 0.0
        %2215 = vmatprep.subr.mxu0 0.0
        %2216 = vmatpush1.xpose.msra.mxu0 0.0
        %2217 = vmatprep.subr.mxu0 0.0
        %2218 = vmatpush1.xpose.msra.mxu0 0.0
        %2219 = vmatprep.mubr.f32.mxu0 0.0
        %2220 = vmatmul.mubr.f32.gmra.mrb[0].mxu0 %v2151
        %v2221 = vpop.f32.mrb[0].mxu0
        %v2222 = vadd.f32 0.0, %v2221
        %v2223 = vpop.f32.mrb[0].mxu0
        %2224 = vdwg.mxu0
        %2225 = vrot.lane.b32.xlu0 %v977, 104
        %v2226 = vpop.permute.xlu0 %2225
        %2227 = vrot.lane.b32.xlu0 %v1063, 104
        %v2228 = vpop.permute.xlu0 %2227
        %v2229 = vsel %vm1152, %v2226, 0
        %v2231 = vsel %vm1152, %v2228, 0
        %2233 = vmatprep.subr.mxu0 0.0
        %2234 = vmatpush1.xpose.msra.mxu0 %v2231
        %2235 = vmatprep.subr.mxu0 0.0
        %2236 = vmatpush1.xpose.msra.mxu0 0.0
        %2237 = vmatprep.subr.mxu0 0.0
        %2238 = vmatpush1.xpose.msra.mxu0 0.0
        %2239 = vmatprep.subr.mxu0 0.0
        %2240 = vmatpush1.xpose.msra.mxu0 0.0
        %2241 = vmatprep.subr.mxu0 0.0
        %2242 = vmatpush1.xpose.msra.mxu0 0.0
        %2243 = vmatprep.subr.mxu0 0.0
        %2244 = vmatpush1.xpose.msra.mxu0 0.0
        %2245 = vmatprep.subr.mxu0 0.0
        %2246 = vmatpush1.xpose.msra.mxu0 0.0
        %2247 = vmatprep.subr.mxu0 0.0
        %2248 = vmatpush1.xpose.msra.mxu0 0.0
        %2249 = vmatprep.subr.mxu0 0.0
        %2250 = vmatpush1.xpose.msra.mxu0 0.0
        %2251 = vmatprep.subr.mxu0 0.0
        %2252 = vmatpush1.xpose.msra.mxu0 0.0
        %2253 = vmatprep.subr.mxu0 0.0
        %2254 = vmatpush1.xpose.msra.mxu0 0.0
        %2255 = vmatprep.subr.mxu0 0.0
        %2256 = vmatpush1.xpose.msra.mxu0 0.0
        %2257 = vmatprep.subr.mxu0 0.0
        %2258 = vmatpush1.xpose.msra.mxu0 0.0
        %2259 = vmatprep.subr.mxu0 0.0
        %2260 = vmatpush1.xpose.msra.mxu0 0.0
        %2261 = vmatprep.subr.mxu0 0.0
        %2262 = vmatpush1.xpose.msra.mxu0 0.0
        %2263 = vmatprep.subr.mxu0 0.0
        %2264 = vmatpush1.xpose.msra.mxu0 0.0
        %2265 = vmatprep.subr.mxu0 0.0
        %2266 = vmatpush1.xpose.msra.mxu0 0.0
        %2267 = vmatprep.subr.mxu0 0.0
        %2268 = vmatpush1.xpose.msra.mxu0 0.0
        %2269 = vmatprep.subr.mxu0 0.0
        %2270 = vmatpush1.xpose.msra.mxu0 0.0
        %2271 = vmatprep.subr.mxu0 0.0
        %2272 = vmatpush1.xpose.msra.mxu0 0.0
        %2273 = vmatprep.subr.mxu0 0.0
        %2274 = vmatpush1.xpose.msra.mxu0 0.0
        %2275 = vmatprep.subr.mxu0 0.0
        %2276 = vmatpush1.xpose.msra.mxu0 0.0
        %2277 = vmatprep.subr.mxu0 0.0
        %2278 = vmatpush1.xpose.msra.mxu0 0.0
        %2279 = vmatprep.subr.mxu0 0.0
        %2280 = vmatpush1.xpose.msra.mxu0 0.0
        %2281 = vmatprep.subr.mxu0 0.0
        %2282 = vmatpush1.xpose.msra.mxu0 0.0
        %2283 = vmatprep.subr.mxu0 0.0
        %2284 = vmatpush1.xpose.msra.mxu0 0.0
        %2285 = vmatprep.subr.mxu0 0.0
        %2286 = vmatpush1.xpose.msra.mxu0 0.0
        %2287 = vmatprep.subr.mxu0 0.0
        %2288 = vmatpush1.xpose.msra.mxu0 0.0
        %2289 = vmatprep.subr.mxu0 0.0
        %2290 = vmatpush1.xpose.msra.mxu0 0.0
        %2291 = vmatprep.subr.mxu0 0.0
        %2292 = vmatpush1.xpose.msra.mxu0 0.0
        %2293 = vmatprep.subr.mxu0 0.0
        %2294 = vmatpush1.xpose.msra.mxu0 0.0
        %2295 = vmatprep.subr.mxu0 0.0
        %2296 = vmatpush1.xpose.msra.mxu0 0.0
        %2297 = vmatprep.mubr.f32.mxu0 0.0
        %2298 = vmatmul.mubr.f32.gmra.mrb[0].mxu0 %v2229
        %v2299 = vpop.f32.mrb[0].mxu0
        %v2300 = vadd.f32 0.0, %v2299
        %v2301 = vpop.f32.mrb[0].mxu0
        %2302 = vdwg.mxu0
        %v2303 = vmul.f32 %v2222, 0.35355338
        %v2304 = vmul.f32 %v2300, 0.35355338
        %v2305 = vadd.f32 %v2303, %v880
        %v2306 = vadd.f32 %v2304, %v884
        %v2307 = vsel %vm1152, %v2305, -inf
        %2308 = vmax.xlane.f32.xlu0 %v2307
        %v2309 = vpop.xlane.xlu0 %2308
        %v2310 = vsel %vm1152, %v2306, -inf
        %2311 = vmax.xlane.f32.xlu0 %v2310
        %v2312 = vpop.xlane.xlu0 %2311
        %v2313 = vsub.f32 %v2305, %v2309
        %v2314 = vsub.f32 %v2306, %v2312
        %v2315 = vmul.f32 %v2313, 1.442695
        %v2316 = vpow.pop %v2315
        %v2317 = vmul.f32 %v2314, 1.442695
        %v2318 = vpow.pop %v2317
        %v2319 = vsel %vm1152, %v2316, 0.0
        %2320 = vadd.xlane.f32.xlu0 %v2319
        %v2321 = vpop.xlane.xlu0 %2320
        %v2322 = vsel %vm1152, %v2318, 0.0
        %2323 = vadd.xlane.f32.xlu0 %v2322
        %v2324 = vpop.xlane.xlu0 %2323
        %v2325 = vrcp.pop %v2321
        %v2326 = vmul.f32 %v2316, %v2325
        %v2327 = vrcp.pop %v2324
        %v2328 = vmul.f32 %v2318, %v2327
        %2329 = vrot.lane.b32.xlu0 %v1144, 104
        %v2330 = vpop.permute.xlu0 %2329
        %v2333 = vsel %vm1152, %v2326, 0
        %2335 = vmatprep.subr.mxu0 0.0
        %2336 = vmatpush1.msra.mxu0 %v2330
        %2337 = vmatprep.subr.mxu0 0.0
        %2338 = vmatpush1.msra.mxu0 0.0
        %2339 = vmatprep.subr.mxu0 0.0
        %2340 = vmatpush1.msra.mxu0 0.0
        %2341 = vmatprep.subr.mxu0 0.0
        %2342 = vmatpush1.msra.mxu0 0.0
        %2343 = vmatprep.subr.mxu0 0.0
        %2344 = vmatpush1.msra.mxu0 0.0
        %2345 = vmatprep.subr.mxu0 0.0
        %2346 = vmatpush1.msra.mxu0 0.0
        %2347 = vmatprep.subr.mxu0 0.0
        %2348 = vmatpush1.msra.mxu0 0.0
        %2349 = vmatprep.subr.mxu0 0.0
        %2350 = vmatpush1.msra.mxu0 0.0
        %2351 = vmatprep.subr.mxu0 0.0
        %2352 = vmatpush1.msra.mxu0 0.0
        %2353 = vmatprep.subr.mxu0 0.0
        %2354 = vmatpush1.msra.mxu0 0.0
        %2355 = vmatprep.subr.mxu0 0.0
        %2356 = vmatpush1.msra.mxu0 0.0
        %2357 = vmatprep.subr.mxu0 0.0
        %2358 = vmatpush1.msra.mxu0 0.0
        %2359 = vmatprep.subr.mxu0 0.0
        %2360 = vmatpush1.msra.mxu0 0.0
        %2361 = vmatprep.subr.mxu0 0.0
        %2362 = vmatpush1.msra.mxu0 0.0
        %2363 = vmatprep.subr.mxu0 0.0
        %2364 = vmatpush1.msra.mxu0 0.0
        %2365 = vmatprep.subr.mxu0 0.0
        %2366 = vmatpush1.msra.mxu0 0.0
        %2367 = vmatprep.subr.mxu0 0.0
        %2368 = vmatpush1.msra.mxu0 0.0
        %2369 = vmatprep.subr.mxu0 0.0
        %2370 = vmatpush1.msra.mxu0 0.0
        %2371 = vmatprep.subr.mxu0 0.0
        %2372 = vmatpush1.msra.mxu0 0.0
        %2373 = vmatprep.subr.mxu0 0.0
        %2374 = vmatpush1.msra.mxu0 0.0
        %2375 = vmatprep.subr.mxu0 0.0
        %2376 = vmatpush1.msra.mxu0 0.0
        %2377 = vmatprep.subr.mxu0 0.0
        %2378 = vmatpush1.msra.mxu0 0.0
        %2379 = vmatprep.subr.mxu0 0.0
        %2380 = vmatpush1.msra.mxu0 0.0
        %2381 = vmatprep.subr.mxu0 0.0
        %2382 = vmatpush1.msra.mxu0 0.0
        %2383 = vmatprep.subr.mxu0 0.0
        %2384 = vmatpush1.msra.mxu0 0.0
        %2385 = vmatprep.subr.mxu0 0.0
        %2386 = vmatpush1.msra.mxu0 0.0
        %2387 = vmatprep.subr.mxu0 0.0
        %2388 = vmatpush1.msra.mxu0 0.0
        %2389 = vmatprep.subr.mxu0 0.0
        %2390 = vmatpush1.msra.mxu0 0.0
        %2391 = vmatprep.subr.mxu0 0.0
        %2392 = vmatpush1.msra.mxu0 0.0
        %2393 = vmatprep.subr.mxu0 0.0
        %2394 = vmatpush1.msra.mxu0 0.0
        %2395 = vmatprep.subr.mxu0 0.0
        %2396 = vmatpush1.msra.mxu0 0.0
        %2397 = vmatprep.subr.mxu0 0.0
        %2398 = vmatpush1.msra.mxu0 0.0
        %2399 = vmatprep.mubr.f32.mxu0 0.0
        %2400 = vmatmul.mubr.f32.gmra.mrb[0].mxu0 %v2333
        %v2401 = vpop.f32.mrb[0].mxu0
        %v2402 = vadd.f32 0.0, %v2401
        %v2403 = vpop.f32.mrb[0].mxu0
        %2404 = vdwg.mxu0
        %2405 = vrot.lane.b32.xlu0 %v1149, 104
        %v2406 = vpop.permute.xlu0 %2405
        %v2409 = vsel %vm1152, %v2328, 0
        %2411 = vmatprep.subr.mxu0 0.0
        %2412 = vmatpush1.msra.mxu0 %v2406
        %2413 = vmatprep.subr.mxu0 0.0
        %2414 = vmatpush1.msra.mxu0 0.0
        %2415 = vmatprep.subr.mxu0 0.0
        %2416 = vmatpush1.msra.mxu0 0.0
        %2417 = vmatprep.subr.mxu0 0.0
        %2418 = vmatpush1.msra.mxu0 0.0
        %2419 = vmatprep.subr.mxu0 0.0
        %2420 = vmatpush1.msra.mxu0 0.0
        %2421 = vmatprep.subr.mxu0 0.0
        %2422 = vmatpush1.msra.mxu0 0.0
        %2423 = vmatprep.subr.mxu0 0.0
        %2424 = vmatpush1.msra.mxu0 0.0
        %2425 = vmatprep.subr.mxu0 0.0
        %2426 = vmatpush1.msra.mxu0 0.0
        %2427 = vmatprep.subr.mxu0 0.0
        %2428 = vmatpush1.msra.mxu0 0.0
        %2429 = vmatprep.subr.mxu0 0.0
        %2430 = vmatpush1.msra.mxu0 0.0
        %2431 = vmatprep.subr.mxu0 0.0
        %2432 = vmatpush1.msra.mxu0 0.0
        %2433 = vmatprep.subr.mxu0 0.0
        %2434 = vmatpush1.msra.mxu0 0.0
        %2435 = vmatprep.subr.mxu0 0.0
        %2436 = vmatpush1.msra.mxu0 0.0
        %2437 = vmatprep.subr.mxu0 0.0
        %2438 = vmatpush1.msra.mxu0 0.0
        %2439 = vmatprep.subr.mxu0 0.0
        %2440 = vmatpush1.msra.mxu0 0.0
        %2441 = vmatprep.subr.mxu0 0.0
        %2442 = vmatpush1.msra.mxu0 0.0
        %2443 = vmatprep.subr.mxu0 0.0
        %2444 = vmatpush1.msra.mxu0 0.0
        %2445 = vmatprep.subr.mxu0 0.0
        %2446 = vmatpush1.msra.mxu0 0.0
        %2447 = vmatprep.subr.mxu0 0.0
        %2448 = vmatpush1.msra.mxu0 0.0
        %2449 = vmatprep.subr.mxu0 0.0
        %2450 = vmatpush1.msra.mxu0 0.0
        %2451 = vmatprep.subr.mxu0 0.0
        %2452 = vmatpush1.msra.mxu0 0.0
        %2453 = vmatprep.subr.mxu0 0.0
        %2454 = vmatpush1.msra.mxu0 0.0
        %2455 = vmatprep.subr.mxu0 0.0
        %2456 = vmatpush1.msra.mxu0 0.0
        %2457 = vmatprep.subr.mxu0 0.0
        %2458 = vmatpush1.msra.mxu0 0.0
        %2459 = vmatprep.subr.mxu0 0.0
        %2460 = vmatpush1.msra.mxu0 0.0
        %2461 = vmatprep.subr.mxu0 0.0
        %2462 = vmatpush1.msra.mxu0 0.0
        %2463 = vmatprep.subr.mxu0 0.0
        %2464 = vmatpush1.msra.mxu0 0.0
        %2465 = vmatprep.subr.mxu0 0.0
        %2466 = vmatpush1.msra.mxu0 0.0
        %2467 = vmatprep.subr.mxu0 0.0
        %2468 = vmatpush1.msra.mxu0 0.0
        %2469 = vmatprep.subr.mxu0 0.0
        %2470 = vmatpush1.msra.mxu0 0.0
        %2471 = vmatprep.subr.mxu0 0.0
        %2472 = vmatpush1.msra.mxu0 0.0
        %2473 = vmatprep.subr.mxu0 0.0
        %2474 = vmatpush1.msra.mxu0 0.0
        %2475 = vmatprep.mubr.f32.mxu0 0.0
        %2476 = vmatmul.mubr.f32.gmra.mrb[0].mxu0 %v2409
        %v2477 = vpop.f32.mrb[0].mxu0
        %v2478 = vadd.f32 0.0, %v2477
        %v2479 = vpop.f32.mrb[0].mxu0
        %2480 = vdwg.mxu0
        %2483 = vrot.lane.b32.xlu0 %v1733, 8
        %v2484 = vpop.permute.xlu0 %2483
        %2485 = vrot.lane.b32.xlu0 %v1810, 8
        %v2486 = vpop.permute.xlu0 %2485
        %2491 = vrot.lane.b32.xlu0 %v2068, 16
        %v2492 = vpop.permute.xlu0 %2491
        %2493 = vrot.lane.b32.xlu0 %v2144, 16
        %v2494 = vpop.permute.xlu0 %2493
        %2499 = vrot.lane.b32.xlu0 %v2402, 24
        %v2500 = vpop.permute.xlu0 %2499
        %2501 = vrot.lane.b32.xlu0 %v2478, 24
        %v2502 = vpop.permute.xlu0 %2501
        %v2505 = vsel %vm1152, %v1401, %v2484
        %v2506 = vsel %vm1152, %v1474, %v2486
        %v2507 = vsel %vm788, %v2505, %v2492
        %v2508 = vsel %vm788, %v2506, %v2494
        %vm2509 = vcmask 195584
        %v2510 = vsel %vm2509, %v2507, %v2500
        %v2511 = vsel %vm2509, %v2508, %v2502
        %v2512 = vld [vmem:[%s12] sm:$0xff]
        %v2513 = vld [vmem:[%s12 + $0x8] sm:$0xff]
        %v2514 = vld [vmem:[%s12 + $0x10] sm:$0xff]
        %v2515 = vld [vmem:[%s12 + $0x18] sm:$0xff]
        %v2516 = vld [vmem:[%s13] sm:$0x1]
        %v2518 = vlaneseq
        %v2519 = vshrl.u32 %v2518, 7
        %v2520 = vsub.s32 0, %v2519
        %v2521 = vrot.slane %v2516, %v2520
        %v2524 = vsel %vm898, %v2510, 0
        %v2527 = vsel %vm898, %v2511, 0
        %2529 = vmatprep.subr.mxu0 0.0
        %2530 = vmatpush1.msra.mxu0 %v2512
        %2531 = vmatprep.subr.mxu0 0.0
        %2532 = vmatpush1.msra.mxu0 %v2513
        %2533 = vmatprep.subr.mxu0 0.0
        %2534 = vmatpush1.msra.mxu0 %v2514
        %2535 = vmatprep.subr.mxu0 0.0
        %2536 = vmatpush1.msra.mxu0 %v2515
        %2537 = vmatprep.subr.mxu0 0.0
        %2538 = vmatpush1.msra.mxu0 0.0
        %2539 = vmatprep.subr.mxu0 0.0
        %2540 = vmatpush1.msra.mxu0 0.0
        %2541 = vmatprep.subr.mxu0 0.0
        %2542 = vmatpush1.msra.mxu0 0.0
        %2543 = vmatprep.subr.mxu0 0.0
        %2544 = vmatpush1.msra.mxu0 0.0
        %2545 = vmatprep.subr.mxu0 0.0
        %2546 = vmatpush1.msra.mxu0 0.0
        %2547 = vmatprep.subr.mxu0 0.0
        %2548 = vmatpush1.msra.mxu0 0.0
        %2549 = vmatprep.subr.mxu0 0.0
        %2550 = vmatpush1.msra.mxu0 0.0
        %2551 = vmatprep.subr.mxu0 0.0
        %2552 = vmatpush1.msra.mxu0 0.0
        %2553 = vmatprep.subr.mxu0 0.0
        %2554 = vmatpush1.msra.mxu0 0.0
        %2555 = vmatprep.subr.mxu0 0.0
        %2556 = vmatpush1.msra.mxu0 0.0
        %2557 = vmatprep.subr.mxu0 0.0
        %2558 = vmatpush1.msra.mxu0 0.0
        %2559 = vmatprep.subr.mxu0 0.0
        %2560 = vmatpush1.msra.mxu0 0.0
        %2561 = vmatprep.subr.mxu0 0.0
        %2562 = vmatpush1.msra.mxu0 0.0
        %2563 = vmatprep.subr.mxu0 0.0
        %2564 = vmatpush1.msra.mxu0 0.0
        %2565 = vmatprep.subr.mxu0 0.0
        %2566 = vmatpush1.msra.mxu0 0.0
        %2567 = vmatprep.subr.mxu0 0.0
        %2568 = vmatpush1.msra.mxu0 0.0
        %2569 = vmatprep.subr.mxu0 0.0
        %2570 = vmatpush1.msra.mxu0 0.0
        %2571 = vmatprep.subr.mxu0 0.0
        %2572 = vmatpush1.msra.mxu0 0.0
        %2573 = vmatprep.subr.mxu0 0.0
        %2574 = vmatpush1.msra.mxu0 0.0
        %2575 = vmatprep.subr.mxu0 0.0
        %2576 = vmatpush1.msra.mxu0 0.0
        %2577 = vmatprep.subr.mxu0 0.0
        %2578 = vmatpush1.msra.mxu0 0.0
        %2579 = vmatprep.subr.mxu0 0.0
        %2580 = vmatpush1.msra.mxu0 0.0
        %2581 = vmatprep.subr.mxu0 0.0
        %2582 = vmatpush1.msra.mxu0 0.0
        %2583 = vmatprep.subr.mxu0 0.0
        %2584 = vmatpush1.msra.mxu0 0.0
        %2585 = vmatprep.subr.mxu0 0.0
        %2586 = vmatpush1.msra.mxu0 0.0
        %2587 = vmatprep.subr.mxu0 0.0
        %2588 = vmatpush1.msra.mxu0 0.0
        %2589 = vmatprep.subr.mxu0 0.0
        %2590 = vmatpush1.msra.mxu0 0.0
        %2591 = vmatprep.subr.mxu0 0.0
        %2592 = vmatpush1.msra.mxu0 0.0
        %2593 = vmatprep.mubr.f32.mxu0 0.0
        %2594 = vmatmul.mubr.f32.gmra.mrb[0].mxu0 %v2524
        %v2595 = vpop.f32.mrb[0].mxu0
        %v2596 = vadd.f32 %v2521, %v2595
        %v2597 = vpop.f32.mrb[0].mxu0
        %2598 = vmatprep.mubr.f32.mxu0 0.0
        %2599 = vmatmul.mubr.f32.gmra.mrb[0].mxu0 %v2527
        %v2600 = vpop.f32.mrb[0].mxu0
        %v2601 = vadd.f32 %v2521, %v2600
        %v2602 = vpop.f32.mrb[0].mxu0
        %2603 = vdwg.mxu0
        %v2604 = vadd.f32 %v871, %v2596
        %v2605 = vadd.f32 %v872, %v2601
        %v2606 = vsel %vm898, %v2604, 0.0
        %2607 = vadd.xlane.f32.xlu0 %v2606
        %v2608 = vpop.xlane.xlu0 %2607
        %v2609 = vsel %vm898, %v2605, 0.0
        %2610 = vadd.xlane.f32.xlu0 %v2609
        %v2611 = vpop.xlane.xlu0 %2610
        %v2612 = vrcp.pop 32.0
        %v2613 = vmul.f32 %v2608, %v2612
        %v2614 = vmul.f32 %v2611, %v2612
        %v2615 = vsub.f32 %v2604, %v2613
        %v2616 = vsub.f32 %v2605, %v2614
        %v2617 = vmul.f32 %v2615, %v2615
        %v2618 = vmul.f32 %v2616, %v2616
        %v2619 = vsel %vm898, %v2617, 0.0
        %2620 = vadd.xlane.f32.xlu0 %v2619
        %v2621 = vpop.xlane.xlu0 %2620
        %v2622 = vsel %vm898, %v2618, 0.0
        %2623 = vadd.xlane.f32.xlu0 %v2622
        %v2624 = vpop.xlane.xlu0 %2623
        %v2625 = vmul.f32 %v2621, %v2612
        %v2626 = vmul.f32 %v2624, %v2612
        %v2627 = vadd.f32 %v2625, 1e-05
        %v2628 = vadd.f32 %v2626, 1e-05
        %v2629 = vrsqrt.pop %v2627
        %v2630 = vrsqrt.pop %v2628
        %v2631 = vmul.f32 %v2615, %v2629
        %v2632 = vmul.f32 %v2616, %v2630
        %v2633 = vld [vmem:[%s14] sm:$0x1]
        %v2635 = vlaneseq
        %v2636 = vshrl.u32 %v2635, 7
        %v2637 = vsub.s32 0, %v2636
        %v2638 = vrot.slane %v2633, %v2637
        %v2640 = vmul.f32 %v2631, %v2638
        %v2641 = vmul.f32 %v2632, %v2638
        %v2642 = vld [vmem:[%s15] sm:$0x1]
        %v2644 = vlaneseq
        %v2645 = vshrl.u32 %v2644, 7
        %v2646 = vsub.s32 0, %v2645
        %v2647 = vrot.slane %v2642, %v2646
        %v2649 = vadd.f32 %v2640, %v2647
        %v2650 = vadd.f32 %v2641, %v2647
        %v2651 = vld [vmem:[%s16] sm:$0xff]
        %v2652 = vld [vmem:[%s16 + $0x8] sm:$0xff]
        %v2653 = vld [vmem:[%s16 + $0x10] sm:$0xff]
        %v2654 = vld [vmem:[%s16 + $0x18] sm:$0xff]
        %v2655 = vld [vmem:[%s16 + $0x20] sm:$0xff]
        %v2656 = vld [vmem:[%s16 + $0x28] sm:$0xff]
        %v2657 = vld [vmem:[%s16 + $0x30] sm:$0xff]
        %v2658 = vld [vmem:[%s16 + $0x38] sm:$0xff]
        %v2659 = vld [vmem:[%s16 + $0x40] sm:$0xff]
        %v2660 = vld [vmem:[%s16 + $0x48] sm:$0xff]
        %v2661 = vld [vmem:[%s16 + $0x50] sm:$0xff]
        %v2662 = vld [vmem:[%s16 + $0x58] sm:$0xff]
        %v2663 = vld [vmem:[%s16 + $0x60] sm:$0xff]
        %v2664 = vld [vmem:[%s16 + $0x68] sm:$0xff]
        %v2665 = vld [vmem:[%s16 + $0x70] sm:$0xff]
        %v2666 = vld [vmem:[%s16 + $0x78] sm:$0xff]
        %v2667 = vld [vmem:[%s16 + $0x80] sm:$0xff]
        %v2668 = vld [vmem:[%s16 + $0x88] sm:$0xff]
        %v2669 = vld [vmem:[%s16 + $0x90] sm:$0xff]
        %v2670 = vld [vmem:[%s16 + $0x98] sm:$0xff]
        %v2671 = vld [vmem:[%s16 + $0xa0] sm:$0xff]
        %v2672 = vld [vmem:[%s16 + $0xa8] sm:$0xff]
        %v2673 = vld [vmem:[%s16 + $0xb0] sm:$0xff]
        %v2674 = vld [vmem:[%s16 + $0xb8] sm:$0xff]
        %v2675 = vld [vmem:[%s16 + $0xc0] sm:$0xff]
        %v2676 = vld [vmem:[%s16 + $0xc8] sm:$0xff]
        %v2677 = vld [vmem:[%s16 + $0xd0] sm:$0xff]
        %v2678 = vld [vmem:[%s16 + $0xd8] sm:$0xff]
        %v2679 = vld [vmem:[%s16 + $0xe0] sm:$0xff]
        %v2680 = vld [vmem:[%s16 + $0xe8] sm:$0xff]
        %v2681 = vld [vmem:[%s16 + $0xf0] sm:$0xff]
        %v2682 = vld [vmem:[%s16 + $0xf8] sm:$0xff]
        %v2683 = vld [vmem:[%s16 + $0x100] sm:$0xff]
        %v2684 = vld [vmem:[%s16 + $0x108] sm:$0xff]
        %v2685 = vld [vmem:[%s16 + $0x110] sm:$0xff]
        %v2686 = vld [vmem:[%s16 + $0x118] sm:$0xff]
        %v2687 = vld [vmem:[%s16 + $0x120] sm:$0xff]
        %v2688 = vld [vmem:[%s16 + $0x128] sm:$0xff]
        %v2689 = vld [vmem:[%s16 + $0x130] sm:$0xff]
        %v2690 = vld [vmem:[%s16 + $0x138] sm:$0xff]
        %v2691 = vld [vmem:[%s16 + $0x140] sm:$0xff]
        %v2692 = vld [vmem:[%s16 + $0x148] sm:$0xff]
        %v2693 = vld [vmem:[%s16 + $0x150] sm:$0xff]
        %v2694 = vld [vmem:[%s16 + $0x158] sm:$0xff]
        %v2695 = vld [vmem:[%s16 + $0x160] sm:$0xff]
        %v2696 = vld [vmem:[%s16 + $0x168] sm:$0xff]
        %v2697 = vld [vmem:[%s16 + $0x170] sm:$0xff]
        %v2698 = vld [vmem:[%s16 + $0x178] sm:$0xff]
        %v2699 = vld [vmem:[%s16 + $0x180] sm:$0xff]
        %v2700 = vld [vmem:[%s16 + $0x188] sm:$0xff]
        %v2701 = vld [vmem:[%s16 + $0x190] sm:$0xff]
        %v2702 = vld [vmem:[%s16 + $0x198] sm:$0xff]
        %v2703 = vld [vmem:[%s16 + $0x1a0] sm:$0xff]
        %v2704 = vld [vmem:[%s16 + $0x1a8] sm:$0xff]
        %v2705 = vld [vmem:[%s16 + $0x1b0] sm:$0xff]
        %v2706 = vld [vmem:[%s16 + $0x1b8] sm:$0xff]
        %v2707 = vld [vmem:[%s16 + $0x1c0] sm:$0xff]
        %v2708 = vld [vmem:[%s16 + $0x1c8] sm:$0xff]
        %v2709 = vld [vmem:[%s16 + $0x1d0] sm:$0xff]
        %v2710 = vld [vmem:[%s16 + $0x1d8] sm:$0xff]
        %v2711 = vld [vmem:[%s16 + $0x1e0] sm:$0xff]
        %v2712 = vld [vmem:[%s16 + $0x1e8] sm:$0xff]
        %v2713 = vld [vmem:[%s16 + $0x1f0] sm:$0xff]
        %v2714 = vld [vmem:[%s16 + $0x1f8] sm:$0xff]
        %v2715 = vld [vmem:[%s17] sm:$0xff]
        %v2716 = vld [vmem:[%s17 + $0x8] sm:$0xff]
        %v2719 = vlaneseq
        %v2720 = vshrl.u32 %v2719, 7
        %v2721 = vsub.s32 0, %v2720
        %v2722 = vrot.slane %v2715, %v2721
        %v2723 = vlaneseq
        %v2724 = vshrl.u32 %v2723, 7
        %v2725 = vsub.s32 1, %v2724
        %v2726 = vrot.slane %v2715, %v2725
        %v2727 = vlaneseq
        %v2728 = vshrl.u32 %v2727, 7
        %v2729 = vsub.s32 2, %v2728
        %v2730 = vrot.slane %v2715, %v2729
        %v2731 = vlaneseq
        %v2732 = vshrl.u32 %v2731, 7
        %v2733 = vsub.s32 3, %v2732
        %v2734 = vrot.slane %v2715, %v2733
        %v2735 = vlaneseq
        %v2736 = vshrl.u32 %v2735, 7
        %v2737 = vsub.s32 4, %v2736
        %v2738 = vrot.slane %v2715, %v2737
        %v2739 = vlaneseq
        %v2740 = vshrl.u32 %v2739, 7
        %v2741 = vsub.s32 5, %v2740
        %v2742 = vrot.slane %v2715, %v2741
        %v2743 = vlaneseq
        %v2744 = vshrl.u32 %v2743, 7
        %v2745 = vsub.s32 6, %v2744
        %v2746 = vrot.slane %v2715, %v2745
        %v2747 = vlaneseq
        %v2748 = vshrl.u32 %v2747, 7
        %v2749 = vsub.s32 7, %v2748
        %v2750 = vrot.slane %v2715, %v2749
        %v2751 = vlaneseq
        %v2752 = vshrl.u32 %v2751, 7
        %v2753 = vsub.s32 0, %v2752
        %v2754 = vrot.slane %v2716, %v2753
        %v2755 = vlaneseq
        %v2756 = vshrl.u32 %v2755, 7
        %v2757 = vsub.s32 1, %v2756
        %v2758 = vrot.slane %v2716, %v2757
        %v2759 = vlaneseq
        %v2760 = vshrl.u32 %v2759, 7
        %v2761 = vsub.s32 2, %v2760
        %v2762 = vrot.slane %v2716, %v2761
        %v2763 = vlaneseq
        %v2764 = vshrl.u32 %v2763, 7
        %v2765 = vsub.s32 3, %v2764
        %v2766 = vrot.slane %v2716, %v2765
        %v2767 = vlaneseq
        %v2768 = vshrl.u32 %v2767, 7
        %v2769 = vsub.s32 4, %v2768
        %v2770 = vrot.slane %v2716, %v2769
        %v2771 = vlaneseq
        %v2772 = vshrl.u32 %v2771, 7
        %v2773 = vsub.s32 5, %v2772
        %v2774 = vrot.slane %v2716, %v2773
        %v2775 = vlaneseq
        %v2776 = vshrl.u32 %v2775, 7
        %v2777 = vsub.s32 6, %v2776
        %v2778 = vrot.slane %v2716, %v2777
        %v2779 = vlaneseq
        %v2780 = vshrl.u32 %v2779, 7
        %v2781 = vsub.s32 7, %v2780
        %v2782 = vrot.slane %v2716, %v2781
        %v2800 = vsel %vm898, %v2649, 0
        %v2803 = vsel %vm898, %v2650, 0
        %2805 = vmatprep.subr.mxu0 %v2652
        %2806 = vmatpush1.msra.mxu0 %v2651
        %2807 = vmatprep.subr.mxu0 %v2668
        %2808 = vmatpush1.msra.mxu0 %v2667
        %2809 = vmatprep.subr.mxu0 %v2684
        %2810 = vmatpush1.msra.mxu0 %v2683
        %2811 = vmatprep.subr.mxu0 %v2700
        %2812 = vmatpush1.msra.mxu0 %v2699
        %2813 = vmatprep.subr.mxu0 0.0
        %2814 = vmatpush1.msra.mxu0 0.0
        %2815 = vmatprep.subr.mxu0 0.0
        %2816 = vmatpush1.msra.mxu0 0.0
        %2817 = vmatprep.subr.mxu0 0.0
        %2818 = vmatpush1.msra.mxu0 0.0
        %2819 = vmatprep.subr.mxu0 0.0
        %2820 = vmatpush1.msra.mxu0 0.0
        %2821 = vmatprep.subr.mxu0 0.0
        %2822 = vmatpush1.msra.mxu0 0.0
        %2823 = vmatprep.subr.mxu0 0.0
        %2824 = vmatpush1.msra.mxu0 0.0
        %2825 = vmatprep.subr.mxu0 0.0
        %2826 = vmatpush1.msra.mxu0 0.0
        %2827 = vmatprep.subr.mxu0 0.0
        %2828 = vmatpush1.msra.mxu0 0.0
        %2829 = vmatprep.subr.mxu0 0.0
        %2830 = vmatpush1.msra.mxu0 0.0
        %2831 = vmatprep.subr.mxu0 0.0
        %2832 = vmatpush1.msra.mxu0 0.0
        %2833 = vmatprep.subr.mxu0 0.0
        %2834 = vmatpush1.msra.mxu0 0.0
        %2835 = vmatprep.subr.mxu0 0.0
        %2836 = vmatpush1.msra.mxu0 0.0
        %2837 = vmatprep.subr.mxu0 0.0
        %2838 = vmatpush1.msra.mxu0 0.0
        %2839 = vmatprep.subr.mxu0 0.0
        %2840 = vmatpush1.msra.mxu0 0.0
        %2841 = vmatprep.subr.mxu0 0.0
        %2842 = vmatpush1.msra.mxu0 0.0
        %2843 = vmatprep.subr.mxu0 0.0
        %2844 = vmatpush1.msra.mxu0 0.0
        %2845 = vmatprep.subr.mxu0 0.0
        %2846 = vmatpush1.msra.mxu0 0.0
        %2847 = vmatprep.subr.mxu0 0.0
        %2848 = vmatpush1.msra.mxu0 0.0
        %2849 = vmatprep.subr.mxu0 0.0
        %2850 = vmatpush1.msra.mxu0 0.0
        %2851 = vmatprep.subr.mxu0 0.0
        %2852 = vmatpush1.msra.mxu0 0.0
        %2853 = vmatprep.subr.mxu0 0.0
        %2854 = vmatpush1.msra.mxu0 0.0
        %2855 = vmatprep.subr.mxu0 0.0
        %2856 = vmatpush1.msra.mxu0 0.0
        %2857 = vmatprep.subr.mxu0 0.0
        %2858 = vmatpush1.msra.mxu0 0.0
        %2859 = vmatprep.subr.mxu0 0.0
        %2860 = vmatpush1.msra.mxu0 0.0
        %2861 = vmatprep.subr.mxu0 0.0
        %2862 = vmatpush1.msra.mxu0 0.0
        %2863 = vmatprep.subr.mxu0 0.0
        %2864 = vmatpush1.msra.mxu0 0.0
        %2865 = vmatprep.subr.mxu0 0.0
        %2866 = vmatpush1.msra.mxu0 0.0
        %2867 = vmatprep.subr.mxu0 0.0
        %2868 = vmatpush1.msra.mxu0 0.0
        %2869 = vmatprep.mubr.f32.mxu0 0.0
        %2870 = vmatmul.mubr.f32.gmra.mrb[0].mxu0 %v2800
        %v2871 = vpop.f32.mrb[0].mxu0
        %v2872 = vadd.f32 %v2722, %v2871
        %v2873 = vpop.f32.mrb[0].mxu0
        %v2874 = vadd.f32 %v2726, %v2873
        %2875 = vmatprep.mubr.f32.mxu0 0.0
        %2876 = vmatmul.mubr.f32.gmra.mrb[0].mxu0 %v2803
        %v2877 = vpop.f32.mrb[0].mxu0
        %v2878 = vadd.f32 %v2722, %v2877
        %v2879 = vpop.f32.mrb[0].mxu0
        %v2880 = vadd.f32 %v2726, %v2879
        %2881 = vdwg.mxu0
        %2882 = vmatprep.subr.mxu0 %v2654
        %2883 = vmatpush1.msra.mxu0 %v2653
        %2884 = vmatprep.subr.mxu0 %v2670
        %2885 = vmatpush1.msra.mxu0 %v2669
        %2886 = vmatprep.subr.mxu0 %v2686
        %2887 = vmatpush1.msra.mxu0 %v2685
        %2888 = vmatprep.subr.mxu0 %v2702
        %2889 = vmatpush1.msra.mxu0 %v2701
        %2890 = vmatprep.subr.mxu0 0.0
        %2891 = vmatpush1.msra.mxu0 0.0
        %2892 = vmatprep.subr.mxu0 0.0
        %2893 = vmatpush1.msra.mxu0 0.0
        %2894 = vmatprep.subr.mxu0 0.0
        %2895 = vmatpush1.msra.mxu0 0.0
        %2896 = vmatprep.subr.mxu0 0.0
        %2897 = vmatpush1.msra.mxu0 0.0
        %2898 = vmatprep.subr.mxu0 0.0
        %2899 = vmatpush1.msra.mxu0 0.0
        %2900 = vmatprep.subr.mxu0 0.0
        %2901 = vmatpush1.msra.mxu0 0.0
        %2902 = vmatprep.subr.mxu0 0.0
        %2903 = vmatpush1.msra.mxu0 0.0
        %2904 = vmatprep.subr.mxu0 0.0
        %2905 = vmatpush1.msra.mxu0 0.0
        %2906 = vmatprep.subr.mxu0 0.0
        %2907 = vmatpush1.msra.mxu0 0.0
        %2908 = vmatprep.subr.mxu0 0.0
        %2909 = vmatpush1.msra.mxu0 0.0
        %2910 = vmatprep.subr.mxu0 0.0
        %2911 = vmatpush1.msra.mxu0 0.0
        %2912 = vmatprep.subr.mxu0 0.0
        %2913 = vmatpush1.msra.mxu0 0.0
        %2914 = vmatprep.subr.mxu0 0.0
        %2915 = vmatpush1.msra.mxu0 0.0
        %2916 = vmatprep.subr.mxu0 0.0
        %2917 = vmatpush1.msra.mxu0 0.0
        %2918 = vmatprep.subr.mxu0 0.0
        %2919 = vmatpush1.msra.mxu0 0.0
        %2920 = vmatprep.subr.mxu0 0.0
        %2921 = vmatpush1.msra.mxu0 0.0
        %2922 = vmatprep.subr.mxu0 0.0
        %2923 = vmatpush1.msra.mxu0 0.0
        %2924 = vmatprep.subr.mxu0 0.0
        %2925 = vmatpush1.msra.mxu0 0.0
        %2926 = vmatprep.subr.mxu0 0.0
        %2927 = vmatpush1.msra.mxu0 0.0
        %2928 = vmatprep.subr.mxu0 0.0
        %2929 = vmatpush1.msra.mxu0 0.0
        %2930 = vmatprep.subr.mxu0 0.0
        %2931 = vmatpush1.msra.mxu0 0.0
        %2932 = vmatprep.subr.mxu0 0.0
        %2933 = vmatpush1.msra.mxu0 0.0
        %2934 = vmatprep.subr.mxu0 0.0
        %2935 = vmatpush1.msra.mxu0 0.0
        %2936 = vmatprep.subr.mxu0 0.0
        %2937 = vmatpush1.msra.mxu0 0.0
        %2938 = vmatprep.subr.mxu0 0.0
        %2939 = vmatpush1.msra.mxu0 0.0
        %2940 = vmatprep.subr.mxu0 0.0
        %2941 = vmatpush1.msra.mxu0 0.0
        %2942 = vmatprep.subr.mxu0 0.0
        %2943 = vmatpush1.msra.mxu0 0.0
        %2944 = vmatprep.subr.mxu0 0.0
        %2945 = vmatpush1.msra.mxu0 0.0
        %2946 = vmatprep.mubr.f32.mxu0 0.0
        %2947 = vmatmul.mubr.f32.gmra.mrb[0].mxu0 %v2800
        %v2948 = vpop.f32.mrb[0].mxu0
        %v2949 = vadd.f32 %v2730, %v2948
        %v2950 = vpop.f32.mrb[0].mxu0
        %v2951 = vadd.f32 %v2734, %v2950
        %2952 = vmatprep.mubr.f32.mxu0 0.0
        %2953 = vmatmul.mubr.f32.gmra.mrb[0].mxu0 %v2803
        %v2954 = vpop.f32.mrb[0].mxu0
        %v2955 = vadd.f32 %v2730, %v2954
        %v2956 = vpop.f32.mrb[0].mxu0
        %v2957 = vadd.f32 %v2734, %v2956
        %2958 = vdwg.mxu0
        %2959 = vmatprep.subr.mxu0 %v2656
        %2960 = vmatpush1.msra.mxu0 %v2655
        %2961 = vmatprep.subr.mxu0 %v2672
        %2962 = vmatpush1.msra.mxu0 %v2671
        %2963 = vmatprep.subr.mxu0 %v2688
        %2964 = vmatpush1.msra.mxu0 %v2687
        %2965 = vmatprep.subr.mxu0 %v2704
        %2966 = vmatpush1.msra.mxu0 %v2703
        %2967 = vmatprep.subr.mxu0 0.0
        %2968 = vmatpush1.msra.mxu0 0.0
        %2969 = vmatprep.subr.mxu0 0.0
        %2970 = vmatpush1.msra.mxu0 0.0
        %2971 = vmatprep.subr.mxu0 0.0
        %2972 = vmatpush1.msra.mxu0 0.0
        %2973 = vmatprep.subr.mxu0 0.0
        %2974 = vmatpush1.msra.mxu0 0.0
        %2975 = vmatprep.subr.mxu0 0.0
        %2976 = vmatpush1.msra.mxu0 0.0
        %2977 = vmatprep.subr.mxu0 0.0
        %2978 = vmatpush1.msra.mxu0 0.0
        %2979 = vmatprep.subr.mxu0 0.0
        %2980 = vmatpush1.msra.mxu0 0.0
        %2981 = vmatprep.subr.mxu0 0.0
        %2982 = vmatpush1.msra.mxu0 0.0
        %2983 = vmatprep.subr.mxu0 0.0
        %2984 = vmatpush1.msra.mxu0 0.0
        %2985 = vmatprep.subr.mxu0 0.0
        %2986 = vmatpush1.msra.mxu0 0.0
        %2987 = vmatprep.subr.mxu0 0.0
        %2988 = vmatpush1.msra.mxu0 0.0
        %2989 = vmatprep.subr.mxu0 0.0
        %2990 = vmatpush1.msra.mxu0 0.0
        %2991 = vmatprep.subr.mxu0 0.0
        %2992 = vmatpush1.msra.mxu0 0.0
        %2993 = vmatprep.subr.mxu0 0.0
        %2994 = vmatpush1.msra.mxu0 0.0
        %2995 = vmatprep.subr.mxu0 0.0
        %2996 = vmatpush1.msra.mxu0 0.0
        %2997 = vmatprep.subr.mxu0 0.0
        %2998 = vmatpush1.msra.mxu0 0.0
        %2999 = vmatprep.subr.mxu0 0.0
        %3000 = vmatpush1.msra.mxu0 0.0
        %3001 = vmatprep.subr.mxu0 0.0
        %3002 = vmatpush1.msra.mxu0 0.0
        %3003 = vmatprep.subr.mxu0 0.0
        %3004 = vmatpush1.msra.mxu0 0.0
        %3005 = vmatprep.subr.mxu0 0.0
        %3006 = vmatpush1.msra.mxu0 0.0
        %3007 = vmatprep.subr.mxu0 0.0
        %3008 = vmatpush1.msra.mxu0 0.0
        %3009 = vmatprep.subr.mxu0 0.0
        %3010 = vmatpush1.msra.mxu0 0.0
        %3011 = vmatprep.subr.mxu0 0.0
        %3012 = vmatpush1.msra.mxu0 0.0
        %3013 = vmatprep.subr.mxu0 0.0
        %3014 = vmatpush1.msra.mxu0 0.0
        %3015 = vmatprep.subr.mxu0 0.0
        %3016 = vmatpush1.msra.mxu0 0.0
        %3017 = vmatprep.subr.mxu0 0.0
        %3018 = vmatpush1.msra.mxu0 0.0
        %3019 = vmatprep.subr.mxu0 0.0
        %3020 = vmatpush1.msra.mxu0 0.0
        %3021 = vmatprep.subr.mxu0 0.0
        %3022 = vmatpush1.msra.mxu0 0.0
        %3023 = vmatprep.mubr.f32.mxu0 0.0
        %3024 = vmatmul.mubr.f32.gmra.mrb[0].mxu0 %v2800
        %v3025 = vpop.f32.mrb[0].mxu0
        %v3026 = vadd.f32 %v2738, %v3025
        %v3027 = vpop.f32.mrb[0].mxu0
        %v3028 = vadd.f32 %v2742, %v3027
        %3029 = vmatprep.mubr.f32.mxu0 0.0
        %3030 = vmatmul.mubr.f32.gmra.mrb[0].mxu0 %v2803
        %v3031 = vpop.f32.mrb[0].mxu0
        %v3032 = vadd.f32 %v2738, %v3031
        %v3033 = vpop.f32.mrb[0].mxu0
        %v3034 = vadd.f32 %v2742, %v3033
        %3035 = vdwg.mxu0
        %3036 = vmatprep.subr.mxu0 %v2658
        %3037 = vmatpush1.msra.mxu0 %v2657
        %3038 = vmatprep.subr.mxu0 %v2674
        %3039 = vmatpush1.msra.mxu0 %v2673
        %3040 = vmatprep.subr.mxu0 %v2690
        %3041 = vmatpush1.msra.mxu0 %v2689
        %3042 = vmatprep.subr.mxu0 %v2706
        %3043 = vmatpush1.msra.mxu0 %v2705
        %3044 = vmatprep.subr.mxu0 0.0
        %3045 = vmatpush1.msra.mxu0 0.0
        %3046 = vmatprep.subr.mxu0 0.0
        %3047 = vmatpush1.msra.mxu0 0.0
        %3048 = vmatprep.subr.mxu0 0.0
        %3049 = vmatpush1.msra.mxu0 0.0
        %3050 = vmatprep.subr.mxu0 0.0
        %3051 = vmatpush1.msra.mxu0 0.0
        %3052 = vmatprep.subr.mxu0 0.0
        %3053 = vmatpush1.msra.mxu0 0.0
        %3054 = vmatprep.subr.mxu0 0.0
        %3055 = vmatpush1.msra.mxu0 0.0
        %3056 = vmatprep.subr.mxu0 0.0
        %3057 = vmatpush1.msra.mxu0 0.0
        %3058 = vmatprep.subr.mxu0 0.0
        %3059 = vmatpush1.msra.mxu0 0.0
        %3060 = vmatprep.subr.mxu0 0.0
        %3061 = vmatpush1.msra.mxu0 0.0
        %3062 = vmatprep.subr.mxu0 0.0
        %3063 = vmatpush1.msra.mxu0 0.0
        %3064 = vmatprep.subr.mxu0 0.0
        %3065 = vmatpush1.msra.mxu0 0.0
        %3066 = vmatprep.subr.mxu0 0.0
        %3067 = vmatpush1.msra.mxu0 0.0
        %3068 = vmatprep.subr.mxu0 0.0
        %3069 = vmatpush1.msra.mxu0 0.0
        %3070 = vmatprep.subr.mxu0 0.0
        %3071 = vmatpush1.msra.mxu0 0.0
        %3072 = vmatprep.subr.mxu0 0.0
        %3073 = vmatpush1.msra.mxu0 0.0
        %3074 = vmatprep.subr.mxu0 0.0
        %3075 = vmatpush1.msra.mxu0 0.0
        %3076 = vmatprep.subr.mxu0 0.0
        %3077 = vmatpush1.msra.mxu0 0.0
        %3078 = vmatprep.subr.mxu0 0.0
        %3079 = vmatpush1.msra.mxu0 0.0
        %3080 = vmatprep.subr.mxu0 0.0
        %3081 = vmatpush1.msra.mxu0 0.0
        %3082 = vmatprep.subr.mxu0 0.0
        %3083 = vmatpush1.msra.mxu0 0.0
        %3084 = vmatprep.subr.mxu0 0.0
        %3085 = vmatpush1.msra.mxu0 0.0
        %3086 = vmatprep.subr.mxu0 0.0
        %3087 = vmatpush1.msra.mxu0 0.0
        %3088 = vmatprep.subr.mxu0 0.0
        %3089 = vmatpush1.msra.mxu0 0.0
        %3090 = vmatprep.subr.mxu0 0.0
        %3091 = vmatpush1.msra.mxu0 0.0
        %3092 = vmatprep.subr.mxu0 0.0
        %3093 = vmatpush1.msra.mxu0 0.0
        %3094 = vmatprep.subr.mxu0 0.0
        %3095 = vmatpush1.msra.mxu0 0.0
        %3096 = vmatprep.subr.mxu0 0.0
        %3097 = vmatpush1.msra.mxu0 0.0
        %3098 = vmatprep.subr.mxu0 0.0
        %3099 = vmatpush1.msra.mxu0 0.0
        %3100 = vmatprep.mubr.f32.mxu0 0.0
        %3101 = vmatmul.mubr.f32.gmra.mrb[0].mxu0 %v2800
        %v3102 = vpop.f32.mrb[0].mxu0
        %v3103 = vadd.f32 %v2746, %v3102
        %v3104 = vpop.f32.mrb[0].mxu0
        %v3105 = vadd.f32 %v2750, %v3104
        %3106 = vmatprep.mubr.f32.mxu0 0.0
        %3107 = vmatmul.mubr.f32.gmra.mrb[0].mxu0 %v2803
        %v3108 = vpop.f32.mrb[0].mxu0
        %v3109 = vadd.f32 %v2746, %v3108
        %v3110 = vpop.f32.mrb[0].mxu0
        %v3111 = vadd.f32 %v2750, %v3110
        %3112 = vdwg.mxu0
        %3113 = vmatprep.subr.mxu0 %v2660
        %3114 = vmatpush1.msra.mxu0 %v2659
        %3115 = vmatprep.subr.mxu0 %v2676
        %3116 = vmatpush1.msra.mxu0 %v2675
        %3117 = vmatprep.subr.mxu0 %v2692
        %3118 = vmatpush1.msra.mxu0 %v2691
        %3119 = vmatprep.subr.mxu0 %v2708
        %3120 = vmatpush1.msra.mxu0 %v2707
        %3121 = vmatprep.subr.mxu0 0.0
        %3122 = vmatpush1.msra.mxu0 0.0
        %3123 = vmatprep.subr.mxu0 0.0
        %3124 = vmatpush1.msra.mxu0 0.0
        %3125 = vmatprep.subr.mxu0 0.0
        %3126 = vmatpush1.msra.mxu0 0.0
        %3127 = vmatprep.subr.mxu0 0.0
        %3128 = vmatpush1.msra.mxu0 0.0
        %3129 = vmatprep.subr.mxu0 0.0
        %3130 = vmatpush1.msra.mxu0 0.0
        %3131 = vmatprep.subr.mxu0 0.0
        %3132 = vmatpush1.msra.mxu0 0.0
        %3133 = vmatprep.subr.mxu0 0.0
        %3134 = vmatpush1.msra.mxu0 0.0
        %3135 = vmatprep.subr.mxu0 0.0
        %3136 = vmatpush1.msra.mxu0 0.0
        %3137 = vmatprep.subr.mxu0 0.0
        %3138 = vmatpush1.msra.mxu0 0.0
        %3139 = vmatprep.subr.mxu0 0.0
        %3140 = vmatpush1.msra.mxu0 0.0
        %3141 = vmatprep.subr.mxu0 0.0
        %3142 = vmatpush1.msra.mxu0 0.0
        %3143 = vmatprep.subr.mxu0 0.0
        %3144 = vmatpush1.msra.mxu0 0.0
        %3145 = vmatprep.subr.mxu0 0.0
        %3146 = vmatpush1.msra.mxu0 0.0
        %3147 = vmatprep.subr.mxu0 0.0
        %3148 = vmatpush1.msra.mxu0 0.0
        %3149 = vmatprep.subr.mxu0 0.0
        %3150 = vmatpush1.msra.mxu0 0.0
        %3151 = vmatprep.subr.mxu0 0.0
        %3152 = vmatpush1.msra.mxu0 0.0
        %3153 = vmatprep.subr.mxu0 0.0
        %3154 = vmatpush1.msra.mxu0 0.0
        %3155 = vmatprep.subr.mxu0 0.0
        %3156 = vmatpush1.msra.mxu0 0.0
        %3157 = vmatprep.subr.mxu0 0.0
        %3158 = vmatpush1.msra.mxu0 0.0
        %3159 = vmatprep.subr.mxu0 0.0
        %3160 = vmatpush1.msra.mxu0 0.0
        %3161 = vmatprep.subr.mxu0 0.0
        %3162 = vmatpush1.msra.mxu0 0.0
        %3163 = vmatprep.subr.mxu0 0.0
        %3164 = vmatpush1.msra.mxu0 0.0
        %3165 = vmatprep.subr.mxu0 0.0
        %3166 = vmatpush1.msra.mxu0 0.0
        %3167 = vmatprep.subr.mxu0 0.0
        %3168 = vmatpush1.msra.mxu0 0.0
        %3169 = vmatprep.subr.mxu0 0.0
        %3170 = vmatpush1.msra.mxu0 0.0
        %3171 = vmatprep.subr.mxu0 0.0
        %3172 = vmatpush1.msra.mxu0 0.0
        %3173 = vmatprep.subr.mxu0 0.0
        %3174 = vmatpush1.msra.mxu0 0.0
        %3175 = vmatprep.subr.mxu0 0.0
        %3176 = vmatpush1.msra.mxu0 0.0
        %3177 = vmatprep.mubr.f32.mxu0 0.0
        %3178 = vmatmul.mubr.f32.gmra.mrb[0].mxu0 %v2800
        %v3179 = vpop.f32.mrb[0].mxu0
        %v3180 = vadd.f32 %v2754, %v3179
        %v3181 = vpop.f32.mrb[0].mxu0
        %v3182 = vadd.f32 %v2758, %v3181
        %3183 = vmatprep.mubr.f32.mxu0 0.0
        %3184 = vmatmul.mubr.f32.gmra.mrb[0].mxu0 %v2803
        %v3185 = vpop.f32.mrb[0].mxu0
        %v3186 = vadd.f32 %v2754, %v3185
        %v3187 = vpop.f32.mrb[0].mxu0
        %v3188 = vadd.f32 %v2758, %v3187
        %3189 = vdwg.mxu0
        %3190 = vmatprep.subr.mxu0 %v2662
        %3191 = vmatpush1.msra.mxu0 %v2661
        %3192 = vmatprep.subr.mxu0 %v2678
        %3193 = vmatpush1.msra.mxu0 %v2677
        %3194 = vmatprep.subr.mxu0 %v2694
        %3195 = vmatpush1.msra.mxu0 %v2693
        %3196 = vmatprep.subr.mxu0 %v2710
        %3197 = vmatpush1.msra.mxu0 %v2709
        %3198 = vmatprep.subr.mxu0 0.0
        %3199 = vmatpush1.msra.mxu0 0.0
        %3200 = vmatprep.subr.mxu0 0.0
        %3201 = vmatpush1.msra.mxu0 0.0
        %3202 = vmatprep.subr.mxu0 0.0
        %3203 = vmatpush1.msra.mxu0 0.0
        %3204 = vmatprep.subr.mxu0 0.0
        %3205 = vmatpush1.msra.mxu0 0.0
        %3206 = vmatprep.subr.mxu0 0.0
        %3207 = vmatpush1.msra.mxu0 0.0
        %3208 = vmatprep.subr.mxu0 0.0
        %3209 = vmatpush1.msra.mxu0 0.0
        %3210 = vmatprep.subr.mxu0 0.0
        %3211 = vmatpush1.msra.mxu0 0.0
        %3212 = vmatprep.subr.mxu0 0.0
        %3213 = vmatpush1.msra.mxu0 0.0
        %3214 = vmatprep.subr.mxu0 0.0
        %3215 = vmatpush1.msra.mxu0 0.0
        %3216 = vmatprep.subr.mxu0 0.0
        %3217 = vmatpush1.msra.mxu0 0.0
        %3218 = vmatprep.subr.mxu0 0.0
        %3219 = vmatpush1.msra.mxu0 0.0
        %3220 = vmatprep.subr.mxu0 0.0
        %3221 = vmatpush1.msra.mxu0 0.0
        %3222 = vmatprep.subr.mxu0 0.0
        %3223 = vmatpush1.msra.mxu0 0.0
        %3224 = vmatprep.subr.mxu0 0.0
        %3225 = vmatpush1.msra.mxu0 0.0
        %3226 = vmatprep.subr.mxu0 0.0
        %3227 = vmatpush1.msra.mxu0 0.0
        %3228 = vmatprep.subr.mxu0 0.0
        %3229 = vmatpush1.msra.mxu0 0.0
        %3230 = vmatprep.subr.mxu0 0.0
        %3231 = vmatpush1.msra.mxu0 0.0
        %3232 = vmatprep.subr.mxu0 0.0
        %3233 = vmatpush1.msra.mxu0 0.0
        %3234 = vmatprep.subr.mxu0 0.0
        %3235 = vmatpush1.msra.mxu0 0.0
        %3236 = vmatprep.subr.mxu0 0.0
        %3237 = vmatpush1.msra.mxu0 0.0
        %3238 = vmatprep.subr.mxu0 0.0
        %3239 = vmatpush1.msra.mxu0 0.0
        %3240 = vmatprep.subr.mxu0 0.0
        %3241 = vmatpush1.msra.mxu0 0.0
        %3242 = vmatprep.subr.mxu0 0.0
        %3243 = vmatpush1.msra.mxu0 0.0
        %3244 = vmatprep.subr.mxu0 0.0
        %3245 = vmatpush1.msra.mxu0 0.0
        %3246 = vmatprep.subr.mxu0 0.0
        %3247 = vmatpush1.msra.mxu0 0.0
        %3248 = vmatprep.subr.mxu0 0.0
        %3249 = vmatpush1.msra.mxu0 0.0
        %3250 = vmatprep.subr.mxu0 0.0
        %3251 = vmatpush1.msra.mxu0 0.0
        %3252 = vmatprep.subr.mxu0 0.0
        %3253 = vmatpush1.msra.mxu0 0.0
        %3254 = vmatprep.mubr.f32.mxu0 0.0
        %3255 = vmatmul.mubr.f32.gmra.mrb[0].mxu0 %v2800
        %v3256 = vpop.f32.mrb[0].mxu0
        %v3257 = vadd.f32 %v2762, %v3256
        %v3258 = vpop.f32.mrb[0].mxu0
        %v3259 = vadd.f32 %v2766, %v3258
        %3260 = vmatprep.mubr.f32.mxu0 0.0
        %3261 = vmatmul.mubr.f32.gmra.mrb[0].mxu0 %v2803
        %v3262 = vpop.f32.mrb[0].mxu0
        %v3263 = vadd.f32 %v2762, %v3262
        %v3264 = vpop.f32.mrb[0].mxu0
        %v3265 = vadd.f32 %v2766, %v3264
        %3266 = vdwg.mxu0
        %3267 = vmatprep.subr.mxu0 %v2664
        %3268 = vmatpush1.msra.mxu0 %v2663
        %3269 = vmatprep.subr.mxu0 %v2680
        %3270 = vmatpush1.msra.mxu0 %v2679
        %3271 = vmatprep.subr.mxu0 %v2696
        %3272 = vmatpush1.msra.mxu0 %v2695
        %3273 = vmatprep.subr.mxu0 %v2712
        %3274 = vmatpush1.msra.mxu0 %v2711
        %3275 = vmatprep.subr.mxu0 0.0
        %3276 = vmatpush1.msra.mxu0 0.0
        %3277 = vmatprep.subr.mxu0 0.0
        %3278 = vmatpush1.msra.mxu0 0.0
        %3279 = vmatprep.subr.mxu0 0.0
        %3280 = vmatpush1.msra.mxu0 0.0
        %3281 = vmatprep.subr.mxu0 0.0
        %3282 = vmatpush1.msra.mxu0 0.0
        %3283 = vmatprep.subr.mxu0 0.0
        %3284 = vmatpush1.msra.mxu0 0.0
        %3285 = vmatprep.subr.mxu0 0.0
        %3286 = vmatpush1.msra.mxu0 0.0
        %3287 = vmatprep.subr.mxu0 0.0
        %3288 = vmatpush1.msra.mxu0 0.0
        %3289 = vmatprep.subr.mxu0 0.0
        %3290 = vmatpush1.msra.mxu0 0.0
        %3291 = vmatprep.subr.mxu0 0.0
        %3292 = vmatpush1.msra.mxu0 0.0
        %3293 = vmatprep.subr.mxu0 0.0
        %3294 = vmatpush1.msra.mxu0 0.0
        %3295 = vmatprep.subr.mxu0 0.0
        %3296 = vmatpush1.msra.mxu0 0.0
        %3297 = vmatprep.subr.mxu0 0.0
        %3298 = vmatpush1.msra.mxu0 0.0
        %3299 = vmatprep.subr.mxu0 0.0
        %3300 = vmatpush1.msra.mxu0 0.0
        %3301 = vmatprep.subr.mxu0 0.0
        %3302 = vmatpush1.msra.mxu0 0.0
        %3303 = vmatprep.subr.mxu0 0.0
        %3304 = vmatpush1.msra.mxu0 0.0
        %3305 = vmatprep.subr.mxu0 0.0
        %3306 = vmatpush1.msra.mxu0 0.0
        %3307 = vmatprep.subr.mxu0 0.0
        %3308 = vmatpush1.msra.mxu0 0.0
        %3309 = vmatprep.subr.mxu0 0.0
        %3310 = vmatpush1.msra.mxu0 0.0
        %3311 = vmatprep.subr.mxu0 0.0
        %3312 = vmatpush1.msra.mxu0 0.0
        %3313 = vmatprep.subr.mxu0 0.0
        %3314 = vmatpush1.msra.mxu0 0.0
        %3315 = vmatprep.subr.mxu0 0.0
        %3316 = vmatpush1.msra.mxu0 0.0
        %3317 = vmatprep.subr.mxu0 0.0
        %3318 = vmatpush1.msra.mxu0 0.0
        %3319 = vmatprep.subr.mxu0 0.0
        %3320 = vmatpush1.msra.mxu0 0.0
        %3321 = vmatprep.subr.mxu0 0.0
        %3322 = vmatpush1.msra.mxu0 0.0
        %3323 = vmatprep.subr.mxu0 0.0
        %3324 = vmatpush1.msra.mxu0 0.0
        %3325 = vmatprep.subr.mxu0 0.0
        %3326 = vmatpush1.msra.mxu0 0.0
        %3327 = vmatprep.subr.mxu0 0.0
        %3328 = vmatpush1.msra.mxu0 0.0
        %3329 = vmatprep.subr.mxu0 0.0
        %3330 = vmatpush1.msra.mxu0 0.0
        %3331 = vmatprep.mubr.f32.mxu0 0.0
        %3332 = vmatmul.mubr.f32.gmra.mrb[0].mxu0 %v2800
        %v3333 = vpop.f32.mrb[0].mxu0
        %v3334 = vadd.f32 %v2770, %v3333
        %v3335 = vpop.f32.mrb[0].mxu0
        %v3336 = vadd.f32 %v2774, %v3335
        %3337 = vmatprep.mubr.f32.mxu0 0.0
        %3338 = vmatmul.mubr.f32.gmra.mrb[0].mxu0 %v2803
        %v3339 = vpop.f32.mrb[0].mxu0
        %v3340 = vadd.f32 %v2770, %v3339
        %v3341 = vpop.f32.mrb[0].mxu0
        %v3342 = vadd.f32 %v2774, %v3341
        %3343 = vdwg.mxu0
        %3344 = vmatprep.subr.mxu0 %v2666
        %3345 = vmatpush1.msra.mxu0 %v2665
        %3346 = vmatprep.subr.mxu0 %v2682
        %3347 = vmatpush1.msra.mxu0 %v2681
        %3348 = vmatprep.subr.mxu0 %v2698
        %3349 = vmatpush1.msra.mxu0 %v2697
        %3350 = vmatprep.subr.mxu0 %v2714
        %3351 = vmatpush1.msra.mxu0 %v2713
        %3352 = vmatprep.subr.mxu0 0.0
        %3353 = vmatpush1.msra.mxu0 0.0
        %3354 = vmatprep.subr.mxu0 0.0
        %3355 = vmatpush1.msra.mxu0 0.0
        %3356 = vmatprep.subr.mxu0 0.0
        %3357 = vmatpush1.msra.mxu0 0.0
        %3358 = vmatprep.subr.mxu0 0.0
        %3359 = vmatpush1.msra.mxu0 0.0
        %3360 = vmatprep.subr.mxu0 0.0
        %3361 = vmatpush1.msra.mxu0 0.0
        %3362 = vmatprep.subr.mxu0 0.0
        %3363 = vmatpush1.msra.mxu0 0.0
        %3364 = vmatprep.subr.mxu0 0.0
        %3365 = vmatpush1.msra.mxu0 0.0
        %3366 = vmatprep.subr.mxu0 0.0
        %3367 = vmatpush1.msra.mxu0 0.0
        %3368 = vmatprep.subr.mxu0 0.0
        %3369 = vmatpush1.msra.mxu0 0.0
        %3370 = vmatprep.subr.mxu0 0.0
        %3371 = vmatpush1.msra.mxu0 0.0
        %3372 = vmatprep.subr.mxu0 0.0
        %3373 = vmatpush1.msra.mxu0 0.0
        %3374 = vmatprep.subr.mxu0 0.0
        %3375 = vmatpush1.msra.mxu0 0.0
        %3376 = vmatprep.subr.mxu0 0.0
        %3377 = vmatpush1.msra.mxu0 0.0
        %3378 = vmatprep.subr.mxu0 0.0
        %3379 = vmatpush1.msra.mxu0 0.0
        %3380 = vmatprep.subr.mxu0 0.0
        %3381 = vmatpush1.msra.mxu0 0.0
        %3382 = vmatprep.subr.mxu0 0.0
        %3383 = vmatpush1.msra.mxu0 0.0
        %3384 = vmatprep.subr.mxu0 0.0
        %3385 = vmatpush1.msra.mxu0 0.0
        %3386 = vmatprep.subr.mxu0 0.0
        %3387 = vmatpush1.msra.mxu0 0.0
        %3388 = vmatprep.subr.mxu0 0.0
        %3389 = vmatpush1.msra.mxu0 0.0
        %3390 = vmatprep.subr.mxu0 0.0
        %3391 = vmatpush1.msra.mxu0 0.0
        %3392 = vmatprep.subr.mxu0 0.0
        %3393 = vmatpush1.msra.mxu0 0.0
        %3394 = vmatprep.subr.mxu0 0.0
        %3395 = vmatpush1.msra.mxu0 0.0
        %3396 = vmatprep.subr.mxu0 0.0
        %3397 = vmatpush1.msra.mxu0 0.0
        %3398 = vmatprep.subr.mxu0 0.0
        %3399 = vmatpush1.msra.mxu0 0.0
        %3400 = vmatprep.subr.mxu0 0.0
        %3401 = vmatpush1.msra.mxu0 0.0
        %3402 = vmatprep.subr.mxu0 0.0
        %3403 = vmatpush1.msra.mxu0 0.0
        %3404 = vmatprep.subr.mxu0 0.0
        %3405 = vmatpush1.msra.mxu0 0.0
        %3406 = vmatprep.subr.mxu0 0.0
        %3407 = vmatpush1.msra.mxu0 0.0
        %3408 = vmatprep.mubr.f32.mxu0 0.0
        %3409 = vmatmul.mubr.f32.gmra.mrb[0].mxu0 %v2800
        %v3410 = vpop.f32.mrb[0].mxu0
        %v3411 = vadd.f32 %v2778, %v3410
        %v3412 = vpop.f32.mrb[0].mxu0
        %v3413 = vadd.f32 %v2782, %v3412
        %3414 = vmatprep.mubr.f32.mxu0 0.0
        %3415 = vmatmul.mubr.f32.gmra.mrb[0].mxu0 %v2803
        %v3416 = vpop.f32.mrb[0].mxu0
        %v3417 = vadd.f32 %v2778, %v3416
        %v3418 = vpop.f32.mrb[0].mxu0
        %v3419 = vadd.f32 %v2782, %v3418
        %3420 = vdwg.mxu0
        %v3421 = vmax.f32 %v2872, 0.0
        %v3422 = vmax.f32 %v2874, 0.0
        %v3423 = vmax.f32 %v2949, 0.0
        %v3424 = vmax.f32 %v2951, 0.0
        %v3425 = vmax.f32 %v3026, 0.0
        %v3426 = vmax.f32 %v3028, 0.0
        %v3427 = vmax.f32 %v3103, 0.0
        %v3428 = vmax.f32 %v3105, 0.0
        %v3429 = vmax.f32 %v3180, 0.0
        %v3430 = vmax.f32 %v3182, 0.0
        %v3431 = vmax.f32 %v3257, 0.0
        %v3432 = vmax.f32 %v3259, 0.0
        %v3433 = vmax.f32 %v3334, 0.0
        %v3434 = vmax.f32 %v3336, 0.0
        %v3435 = vmax.f32 %v3411, 0.0
        %v3436 = vmax.f32 %v3413, 0.0
        %v3437 = vmax.f32 %v2878, 0.0
        %v3438 = vmax.f32 %v2880, 0.0
        %v3439 = vmax.f32 %v2955, 0.0
        %v3440 = vmax.f32 %v2957, 0.0
        %v3441 = vmax.f32 %v3032, 0.0
        %v3442 = vmax.f32 %v3034, 0.0
        %v3443 = vmax.f32 %v3109, 0.0
        %v3444 = vmax.f32 %v3111, 0.0
        %v3445 = vmax.f32 %v3186, 0.0
        %v3446 = vmax.f32 %v3188, 0.0
        %v3447 = vmax.f32 %v3263, 0.0
        %v3448 = vmax.f32 %v3265, 0.0
        %v3449 = vmax.f32 %v3340, 0.0
        %v3450 = vmax.f32 %v3342, 0.0
        %v3451 = vmax.f32 %v3417, 0.0
        %v3452 = vmax.f32 %v3419, 0.0
        %v3453 = vld [vmem:[%s18] sm:$0xff]
        %v3454 = vld [vmem:[%s18 + $0x8] sm:$0xff]
        %v3455 = vld [vmem:[%s18 + $0x10] sm:$0xff]
        %v3456 = vld [vmem:[%s18 + $0x18] sm:$0xff]
        %v3457 = vld [vmem:[%s18 + $0x20] sm:$0xff]
        %v3458 = vld [vmem:[%s18 + $0x28] sm:$0xff]
        %v3459 = vld [vmem:[%s18 + $0x30] sm:$0xff]
        %v3460 = vld [vmem:[%s18 + $0x38] sm:$0xff]
        %v3461 = vld [vmem:[%s18 + $0x40] sm:$0xff]
        %v3462 = vld [vmem:[%s18 + $0x48] sm:$0xff]
        %v3463 = vld [vmem:[%s18 + $0x50] sm:$0xff]
        %v3464 = vld [vmem:[%s18 + $0x58] sm:$0xff]
        %v3465 = vld [vmem:[%s18 + $0x60] sm:$0xff]
        %v3466 = vld [vmem:[%s18 + $0x68] sm:$0xff]
        %v3467 = vld [vmem:[%s18 + $0x70] sm:$0xff]
        %v3468 = vld [vmem:[%s18 + $0x78] sm:$0xff]
        %v3469 = vld [vmem:[%s18 + $0x80] sm:$0xff]
        %v3470 = vld [vmem:[%s18 + $0x88] sm:$0xff]
        %v3471 = vld [vmem:[%s18 + $0x90] sm:$0xff]
        %v3472 = vld [vmem:[%s18 + $0x98] sm:$0xff]
        %v3473 = vld [vmem:[%s18 + $0xa0] sm:$0xff]
        %v3474 = vld [vmem:[%s18 + $0xa8] sm:$0xff]
        %v3475 = vld [vmem:[%s18 + $0xb0] sm:$0xff]
        %v3476 = vld [vmem:[%s18 + $0xb8] sm:$0xff]
        %v3477 = vld [vmem:[%s18 + $0xc0] sm:$0xff]
        %v3478 = vld [vmem:[%s18 + $0xc8] sm:$0xff]
        %v3479 = vld [vmem:[%s18 + $0xd0] sm:$0xff]
        %v3480 = vld [vmem:[%s18 + $0xd8] sm:$0xff]
        %v3481 = vld [vmem:[%s18 + $0xe0] sm:$0xff]
        %v3482 = vld [vmem:[%s18 + $0xe8] sm:$0xff]
        %v3483 = vld [vmem:[%s18 + $0xf0] sm:$0xff]
        %v3484 = vld [vmem:[%s18 + $0xf8] sm:$0xff]
        %v3485 = vld [vmem:[%s18 + $0x100] sm:$0xff]
        %v3486 = vld [vmem:[%s18 + $0x108] sm:$0xff]
        %v3487 = vld [vmem:[%s18 + $0x110] sm:$0xff]
        %v3488 = vld [vmem:[%s18 + $0x118] sm:$0xff]
        %v3489 = vld [vmem:[%s18 + $0x120] sm:$0xff]
        %v3490 = vld [vmem:[%s18 + $0x128] sm:$0xff]
        %v3491 = vld [vmem:[%s18 + $0x130] sm:$0xff]
        %v3492 = vld [vmem:[%s18 + $0x138] sm:$0xff]
        %v3493 = vld [vmem:[%s18 + $0x140] sm:$0xff]
        %v3494 = vld [vmem:[%s18 + $0x148] sm:$0xff]
        %v3495 = vld [vmem:[%s18 + $0x150] sm:$0xff]
        %v3496 = vld [vmem:[%s18 + $0x158] sm:$0xff]
        %v3497 = vld [vmem:[%s18 + $0x160] sm:$0xff]
        %v3498 = vld [vmem:[%s18 + $0x168] sm:$0xff]
        %v3499 = vld [vmem:[%s18 + $0x170] sm:$0xff]
        %v3500 = vld [vmem:[%s18 + $0x178] sm:$0xff]
        %v3501 = vld [vmem:[%s18 + $0x180] sm:$0xff]
        %v3502 = vld [vmem:[%s18 + $0x188] sm:$0xff]
        %v3503 = vld [vmem:[%s18 + $0x190] sm:$0xff]
        %v3504 = vld [vmem:[%s18 + $0x198] sm:$0xff]
        %v3505 = vld [vmem:[%s18 + $0x1a0] sm:$0xff]
        %v3506 = vld [vmem:[%s18 + $0x1a8] sm:$0xff]
        %v3507 = vld [vmem:[%s18 + $0x1b0] sm:$0xff]
        %v3508 = vld [vmem:[%s18 + $0x1b8] sm:$0xff]
        %v3509 = vld [vmem:[%s18 + $0x1c0] sm:$0xff]
        %v3510 = vld [vmem:[%s18 + $0x1c8] sm:$0xff]
        %v3511 = vld [vmem:[%s18 + $0x1d0] sm:$0xff]
        %v3512 = vld [vmem:[%s18 + $0x1d8] sm:$0xff]
        %v3513 = vld [vmem:[%s18 + $0x1e0] sm:$0xff]
        %v3514 = vld [vmem:[%s18 + $0x1e8] sm:$0xff]
        %v3515 = vld [vmem:[%s18 + $0x1f0] sm:$0xff]
        %v3516 = vld [vmem:[%s18 + $0x1f8] sm:$0xff]
        %v3517 = vld [vmem:[%s18 + $0x200] sm:$0xff]
        %v3518 = vld [vmem:[%s18 + $0x208] sm:$0xff]
        %v3519 = vld [vmem:[%s18 + $0x210] sm:$0xff]
        %v3520 = vld [vmem:[%s18 + $0x218] sm:$0xff]
        %v3521 = vld [vmem:[%s18 + $0x220] sm:$0xff]
        %v3522 = vld [vmem:[%s18 + $0x228] sm:$0xff]
        %v3523 = vld [vmem:[%s18 + $0x230] sm:$0xff]
        %v3524 = vld [vmem:[%s18 + $0x238] sm:$0xff]
        %v3525 = vld [vmem:[%s18 + $0x240] sm:$0xff]
        %v3526 = vld [vmem:[%s18 + $0x248] sm:$0xff]
        %v3527 = vld [vmem:[%s18 + $0x250] sm:$0xff]
        %v3528 = vld [vmem:[%s18 + $0x258] sm:$0xff]
        %v3529 = vld [vmem:[%s18 + $0x260] sm:$0xff]
        %v3530 = vld [vmem:[%s18 + $0x268] sm:$0xff]
        %v3531 = vld [vmem:[%s18 + $0x270] sm:$0xff]
        %v3532 = vld [vmem:[%s18 + $0x278] sm:$0xff]
        %v3533 = vld [vmem:[%s18 + $0x280] sm:$0xff]
        %v3534 = vld [vmem:[%s18 + $0x288] sm:$0xff]
        %v3535 = vld [vmem:[%s18 + $0x290] sm:$0xff]
        %v3536 = vld [vmem:[%s18 + $0x298] sm:$0xff]
        %v3537 = vld [vmem:[%s18 + $0x2a0] sm:$0xff]
        %v3538 = vld [vmem:[%s18 + $0x2a8] sm:$0xff]
        %v3539 = vld [vmem:[%s18 + $0x2b0] sm:$0xff]
        %v3540 = vld [vmem:[%s18 + $0x2b8] sm:$0xff]
        %v3541 = vld [vmem:[%s18 + $0x2c0] sm:$0xff]
        %v3542 = vld [vmem:[%s18 + $0x2c8] sm:$0xff]
        %v3543 = vld [vmem:[%s18 + $0x2d0] sm:$0xff]
        %v3544 = vld [vmem:[%s18 + $0x2d8] sm:$0xff]
        %v3545 = vld [vmem:[%s18 + $0x2e0] sm:$0xff]
        %v3546 = vld [vmem:[%s18 + $0x2e8] sm:$0xff]
        %v3547 = vld [vmem:[%s18 + $0x2f0] sm:$0xff]
        %v3548 = vld [vmem:[%s18 + $0x2f8] sm:$0xff]
        %v3549 = vld [vmem:[%s18 + $0x300] sm:$0xff]
        %v3550 = vld [vmem:[%s18 + $0x308] sm:$0xff]
        %v3551 = vld [vmem:[%s18 + $0x310] sm:$0xff]
        %v3552 = vld [vmem:[%s18 + $0x318] sm:$0xff]
        %v3553 = vld [vmem:[%s18 + $0x320] sm:$0xff]
        %v3554 = vld [vmem:[%s18 + $0x328] sm:$0xff]
        %v3555 = vld [vmem:[%s18 + $0x330] sm:$0xff]
        %v3556 = vld [vmem:[%s18 + $0x338] sm:$0xff]
        %v3557 = vld [vmem:[%s18 + $0x340] sm:$0xff]
        %v3558 = vld [vmem:[%s18 + $0x348] sm:$0xff]
        %v3559 = vld [vmem:[%s18 + $0x350] sm:$0xff]
        %v3560 = vld [vmem:[%s18 + $0x358] sm:$0xff]
        %v3561 = vld [vmem:[%s18 + $0x360] sm:$0xff]
        %v3562 = vld [vmem:[%s18 + $0x368] sm:$0xff]
        %v3563 = vld [vmem:[%s18 + $0x370] sm:$0xff]
        %v3564 = vld [vmem:[%s18 + $0x378] sm:$0xff]
        %v3565 = vld [vmem:[%s18 + $0x380] sm:$0xff]
        %v3566 = vld [vmem:[%s18 + $0x388] sm:$0xff]
        %v3567 = vld [vmem:[%s18 + $0x390] sm:$0xff]
        %v3568 = vld [vmem:[%s18 + $0x398] sm:$0xff]
        %v3569 = vld [vmem:[%s18 + $0x3a0] sm:$0xff]
        %v3570 = vld [vmem:[%s18 + $0x3a8] sm:$0xff]
        %v3571 = vld [vmem:[%s18 + $0x3b0] sm:$0xff]
        %v3572 = vld [vmem:[%s18 + $0x3b8] sm:$0xff]
        %v3573 = vld [vmem:[%s18 + $0x3c0] sm:$0xff]
        %v3574 = vld [vmem:[%s18 + $0x3c8] sm:$0xff]
        %v3575 = vld [vmem:[%s18 + $0x3d0] sm:$0xff]
        %v3576 = vld [vmem:[%s18 + $0x3d8] sm:$0xff]
        %v3577 = vld [vmem:[%s18 + $0x3e0] sm:$0xff]
        %v3578 = vld [vmem:[%s18 + $0x3e8] sm:$0xff]
        %v3579 = vld [vmem:[%s18 + $0x3f0] sm:$0xff]
        %v3580 = vld [vmem:[%s18 + $0x3f8] sm:$0xff]
        %v3581 = vld [vmem:[%s18 + $0x400] sm:$0xff]
        %v3582 = vld [vmem:[%s18 + $0x408] sm:$0xff]
        %v3583 = vld [vmem:[%s18 + $0x410] sm:$0xff]
        %v3584 = vld [vmem:[%s18 + $0x418] sm:$0xff]
        %v3585 = vld [vmem:[%s18 + $0x420] sm:$0xff]
        %v3586 = vld [vmem:[%s18 + $0x428] sm:$0xff]
        %v3587 = vld [vmem:[%s18 + $0x430] sm:$0xff]
        %v3588 = vld [vmem:[%s18 + $0x438] sm:$0xff]
        %v3589 = vld [vmem:[%s18 + $0x440] sm:$0xff]
        %v3590 = vld [vmem:[%s18 + $0x448] sm:$0xff]
        %v3591 = vld [vmem:[%s18 + $0x450] sm:$0xff]
        %v3592 = vld [vmem:[%s18 + $0x458] sm:$0xff]
        %v3593 = vld [vmem:[%s18 + $0x460] sm:$0xff]
        %v3594 = vld [vmem:[%s18 + $0x468] sm:$0xff]
        %v3595 = vld [vmem:[%s18 + $0x470] sm:$0xff]
        %v3596 = vld [vmem:[%s18 + $0x478] sm:$0xff]
        %v3597 = vld [vmem:[%s18 + $0x480] sm:$0xff]
        %v3598 = vld [vmem:[%s18 + $0x488] sm:$0xff]
        %v3599 = vld [vmem:[%s18 + $0x490] sm:$0xff]
        %v3600 = vld [vmem:[%s18 + $0x498] sm:$0xff]
        %v3601 = vld [vmem:[%s18 + $0x4a0] sm:$0xff]
        %v3602 = vld [vmem:[%s18 + $0x4a8] sm:$0xff]
        %v3603 = vld [vmem:[%s18 + $0x4b0] sm:$0xff]
        %v3604 = vld [vmem:[%s18 + $0x4b8] sm:$0xff]
        %v3605 = vld [vmem:[%s18 + $0x4c0] sm:$0xff]
        %v3606 = vld [vmem:[%s18 + $0x4c8] sm:$0xff]
        %v3607 = vld [vmem:[%s18 + $0x4d0] sm:$0xff]
        %v3608 = vld [vmem:[%s18 + $0x4d8] sm:$0xff]
        %v3609 = vld [vmem:[%s18 + $0x4e0] sm:$0xff]
        %v3610 = vld [vmem:[%s18 + $0x4e8] sm:$0xff]
        %v3611 = vld [vmem:[%s18 + $0x4f0] sm:$0xff]
        %v3612 = vld [vmem:[%s18 + $0x4f8] sm:$0xff]
        %v3613 = vld [vmem:[%s18 + $0x500] sm:$0xff]
        %v3614 = vld [vmem:[%s18 + $0x508] sm:$0xff]
        %v3615 = vld [vmem:[%s18 + $0x510] sm:$0xff]
        %v3616 = vld [vmem:[%s18 + $0x518] sm:$0xff]
        %v3617 = vld [vmem:[%s18 + $0x520] sm:$0xff]
        %v3618 = vld [vmem:[%s18 + $0x528] sm:$0xff]
        %v3619 = vld [vmem:[%s18 + $0x530] sm:$0xff]
        %v3620 = vld [vmem:[%s18 + $0x538] sm:$0xff]
        %v3621 = vld [vmem:[%s18 + $0x540] sm:$0xff]
        %v3622 = vld [vmem:[%s18 + $0x548] sm:$0xff]
        %v3623 = vld [vmem:[%s18 + $0x550] sm:$0xff]
        %v3624 = vld [vmem:[%s18 + $0x558] sm:$0xff]
        %v3625 = vld [vmem:[%s18 + $0x560] sm:$0xff]
        %v3626 = vld [vmem:[%s18 + $0x568] sm:$0xff]
        %v3627 = vld [vmem:[%s18 + $0x570] sm:$0xff]
        %v3628 = vld [vmem:[%s18 + $0x578] sm:$0xff]
        %v3629 = vld [vmem:[%s18 + $0x580] sm:$0xff]
        %v3630 = vld [vmem:[%s18 + $0x588] sm:$0xff]
        %v3631 = vld [vmem:[%s18 + $0x590] sm:$0xff]
        %v3632 = vld [vmem:[%s18 + $0x598] sm:$0xff]
        %v3633 = vld [vmem:[%s18 + $0x5a0] sm:$0xff]
        %v3634 = vld [vmem:[%s18 + $0x5a8] sm:$0xff]
        %v3635 = vld [vmem:[%s18 + $0x5b0] sm:$0xff]
        %v3636 = vld [vmem:[%s18 + $0x5b8] sm:$0xff]
        %v3637 = vld [vmem:[%s18 + $0x5c0] sm:$0xff]
        %v3638 = vld [vmem:[%s18 + $0x5c8] sm:$0xff]
        %v3639 = vld [vmem:[%s18 + $0x5d0] sm:$0xff]
        %v3640 = vld [vmem:[%s18 + $0x5d8] sm:$0xff]
        %v3641 = vld [vmem:[%s18 + $0x5e0] sm:$0xff]
        %v3642 = vld [vmem:[%s18 + $0x5e8] sm:$0xff]
        %v3643 = vld [vmem:[%s18 + $0x5f0] sm:$0xff]
        %v3644 = vld [vmem:[%s18 + $0x5f8] sm:$0xff]
        %v3645 = vld [vmem:[%s18 + $0x600] sm:$0xff]
        %v3646 = vld [vmem:[%s18 + $0x608] sm:$0xff]
        %v3647 = vld [vmem:[%s18 + $0x610] sm:$0xff]
        %v3648 = vld [vmem:[%s18 + $0x618] sm:$0xff]
        %v3649 = vld [vmem:[%s18 + $0x620] sm:$0xff]
        %v3650 = vld [vmem:[%s18 + $0x628] sm:$0xff]
        %v3651 = vld [vmem:[%s18 + $0x630] sm:$0xff]
        %v3652 = vld [vmem:[%s18 + $0x638] sm:$0xff]
        %v3653 = vld [vmem:[%s18 + $0x640] sm:$0xff]
        %v3654 = vld [vmem:[%s18 + $0x648] sm:$0xff]
        %v3655 = vld [vmem:[%s18 + $0x650] sm:$0xff]
        %v3656 = vld [vmem:[%s18 + $0x658] sm:$0xff]
        %v3657 = vld [vmem:[%s18 + $0x660] sm:$0xff]
        %v3658 = vld [vmem:[%s18 + $0x668] sm:$0xff]
        %v3659 = vld [vmem:[%s18 + $0x670] sm:$0xff]
        %v3660 = vld [vmem:[%s18 + $0x678] sm:$0xff]
        %v3661 = vld [vmem:[%s18 + $0x680] sm:$0xff]
        %v3662 = vld [vmem:[%s18 + $0x688] sm:$0xff]
        %v3663 = vld [vmem:[%s18 + $0x690] sm:$0xff]
        %v3664 = vld [vmem:[%s18 + $0x698] sm:$0xff]
        %v3665 = vld [vmem:[%s18 + $0x6a0] sm:$0xff]
        %v3666 = vld [vmem:[%s18 + $0x6a8] sm:$0xff]
        %v3667 = vld [vmem:[%s18 + $0x6b0] sm:$0xff]
        %v3668 = vld [vmem:[%s18 + $0x6b8] sm:$0xff]
        %v3669 = vld [vmem:[%s18 + $0x6c0] sm:$0xff]
        %v3670 = vld [vmem:[%s18 + $0x6c8] sm:$0xff]
        %v3671 = vld [vmem:[%s18 + $0x6d0] sm:$0xff]
        %v3672 = vld [vmem:[%s18 + $0x6d8] sm:$0xff]
        %v3673 = vld [vmem:[%s18 + $0x6e0] sm:$0xff]
        %v3674 = vld [vmem:[%s18 + $0x6e8] sm:$0xff]
        %v3675 = vld [vmem:[%s18 + $0x6f0] sm:$0xff]
        %v3676 = vld [vmem:[%s18 + $0x6f8] sm:$0xff]
        %v3677 = vld [vmem:[%s18 + $0x700] sm:$0xff]
        %v3678 = vld [vmem:[%s18 + $0x708] sm:$0xff]
        %v3679 = vld [vmem:[%s18 + $0x710] sm:$0xff]
        %v3680 = vld [vmem:[%s18 + $0x718] sm:$0xff]
        %v3681 = vld [vmem:[%s18 + $0x720] sm:$0xff]
        %v3682 = vld [vmem:[%s18 + $0x728] sm:$0xff]
        %v3683 = vld [vmem:[%s18 + $0x730] sm:$0xff]
        %v3684 = vld [vmem:[%s18 + $0x738] sm:$0xff]
        %v3685 = vld [vmem:[%s18 + $0x740] sm:$0xff]
        %v3686 = vld [vmem:[%s18 + $0x748] sm:$0xff]
        %v3687 = vld [vmem:[%s18 + $0x750] sm:$0xff]
        %v3688 = vld [vmem:[%s18 + $0x758] sm:$0xff]
        %v3689 = vld [vmem:[%s18 + $0x760] sm:$0xff]
        %v3690 = vld [vmem:[%s18 + $0x768] sm:$0xff]
        %v3691 = vld [vmem:[%s18 + $0x770] sm:$0xff]
        %v3692 = vld [vmem:[%s18 + $0x778] sm:$0xff]
        %v3693 = vld [vmem:[%s18 + $0x780] sm:$0xff]
        %v3694 = vld [vmem:[%s18 + $0x788] sm:$0xff]
        %v3695 = vld [vmem:[%s18 + $0x790] sm:$0xff]
        %v3696 = vld [vmem:[%s18 + $0x798] sm:$0xff]
        %v3697 = vld [vmem:[%s18 + $0x7a0] sm:$0xff]
        %v3698 = vld [vmem:[%s18 + $0x7a8] sm:$0xff]
        %v3699 = vld [vmem:[%s18 + $0x7b0] sm:$0xff]
        %v3700 = vld [vmem:[%s18 + $0x7b8] sm:$0xff]
        %v3701 = vld [vmem:[%s18 + $0x7c0] sm:$0xff]
        %v3702 = vld [vmem:[%s18 + $0x7c8] sm:$0xff]
        %v3703 = vld [vmem:[%s18 + $0x7d0] sm:$0xff]
        %v3704 = vld [vmem:[%s18 + $0x7d8] sm:$0xff]
        %v3705 = vld [vmem:[%s18 + $0x7e0] sm:$0xff]
        %v3706 = vld [vmem:[%s18 + $0x7e8] sm:$0xff]
        %v3707 = vld [vmem:[%s18 + $0x7f0] sm:$0xff]
        %v3708 = vld [vmem:[%s18 + $0x7f8] sm:$0xff]
        %v3709 = vld [vmem:[%s19] sm:$0x1]
        %v3711 = vlaneseq
        %v3712 = vshrl.u32 %v3711, 7
        %v3713 = vsub.s32 0, %v3712
        %v3714 = vrot.slane %v3709, %v3713
        %3716 = vmatprep.subr.mxu0 0.0
        %3717 = vmatpush1.msra.mxu0 %v3453
        %3718 = vmatprep.subr.mxu0 0.0
        %3719 = vmatpush1.msra.mxu0 %v3454
        %3720 = vmatprep.subr.mxu0 0.0
        %3721 = vmatpush1.msra.mxu0 %v3455
        %3722 = vmatprep.subr.mxu0 0.0
        %3723 = vmatpush1.msra.mxu0 %v3456
        %3724 = vmatprep.subr.mxu0 0.0
        %3725 = vmatpush1.msra.mxu0 %v3457
        %3726 = vmatprep.subr.mxu0 0.0
        %3727 = vmatpush1.msra.mxu0 %v3458
        %3728 = vmatprep.subr.mxu0 0.0
        %3729 = vmatpush1.msra.mxu0 %v3459
        %3730 = vmatprep.subr.mxu0 0.0
        %3731 = vmatpush1.msra.mxu0 %v3460
        %3732 = vmatprep.subr.mxu0 0.0
        %3733 = vmatpush1.msra.mxu0 %v3461
        %3734 = vmatprep.subr.mxu0 0.0
        %3735 = vmatpush1.msra.mxu0 %v3462
        %3736 = vmatprep.subr.mxu0 0.0
        %3737 = vmatpush1.msra.mxu0 %v3463
        %3738 = vmatprep.subr.mxu0 0.0
        %3739 = vmatpush1.msra.mxu0 %v3464
        %3740 = vmatprep.subr.mxu0 0.0
        %3741 = vmatpush1.msra.mxu0 %v3465
        %3742 = vmatprep.subr.mxu0 0.0
        %3743 = vmatpush1.msra.mxu0 %v3466
        %3744 = vmatprep.subr.mxu0 0.0
        %3745 = vmatpush1.msra.mxu0 %v3467
        %3746 = vmatprep.subr.mxu0 0.0
        %3747 = vmatpush1.msra.mxu0 %v3468
        %3748 = vmatprep.subr.mxu0 0.0
        %3749 = vmatpush1.msra.mxu0 %v3469
        %3750 = vmatprep.subr.mxu0 0.0
        %3751 = vmatpush1.msra.mxu0 %v3470
        %3752 = vmatprep.subr.mxu0 0.0
        %3753 = vmatpush1.msra.mxu0 %v3471
        %3754 = vmatprep.subr.mxu0 0.0
        %3755 = vmatpush1.msra.mxu0 %v3472
        %3756 = vmatprep.subr.mxu0 0.0
        %3757 = vmatpush1.msra.mxu0 %v3473
        %3758 = vmatprep.subr.mxu0 0.0
        %3759 = vmatpush1.msra.mxu0 %v3474
        %3760 = vmatprep.subr.mxu0 0.0
        %3761 = vmatpush1.msra.mxu0 %v3475
        %3762 = vmatprep.subr.mxu0 0.0
        %3763 = vmatpush1.msra.mxu0 %v3476
        %3764 = vmatprep.subr.mxu0 0.0
        %3765 = vmatpush1.msra.mxu0 %v3477
        %3766 = vmatprep.subr.mxu0 0.0
        %3767 = vmatpush1.msra.mxu0 %v3478
        %3768 = vmatprep.subr.mxu0 0.0
        %3769 = vmatpush1.msra.mxu0 %v3479
        %3770 = vmatprep.subr.mxu0 0.0
        %3771 = vmatpush1.msra.mxu0 %v3480
        %3772 = vmatprep.subr.mxu0 0.0
        %3773 = vmatpush1.msra.mxu0 %v3481
        %3774 = vmatprep.subr.mxu0 0.0
        %3775 = vmatpush1.msra.mxu0 %v3482
        %3776 = vmatprep.subr.mxu0 0.0
        %3777 = vmatpush1.msra.mxu0 %v3483
        %3778 = vmatprep.subr.mxu0 0.0
        %3779 = vmatpush1.msra.mxu0 %v3484
        %3780 = vmatprep.mubr.f32.mxu0 %v3422
        %3781 = vmatmul.mubr.f32.gmra.mrb[0].mxu0 %v3421
        %v3782 = vpop.f32.mrb[0].mxu0
        %v3783 = vadd.f32 %v3714, %v3782
        %v3784 = vpop.f32.mrb[0].mxu0
        %3785 = vmatprep.mubr.f32.mxu0 %v3438
        %3786 = vmatmul.mubr.f32.gmra.mrb[0].mxu0 %v3437
        %v3787 = vpop.f32.mrb[0].mxu0
        %v3788 = vadd.f32 %v3714, %v3787
        %v3789 = vpop.f32.mrb[0].mxu0
        %3790 = vdwg.mxu0
        %3791 = vmatprep.subr.mxu0 0.0
        %3792 = vmatpush1.msra.mxu0 %v3485
        %3793 = vmatprep.subr.mxu0 0.0
        %3794 = vmatpush1.msra.mxu0 %v3486
        %3795 = vmatprep.subr.mxu0 0.0
        %3796 = vmatpush1.msra.mxu0 %v3487
        %3797 = vmatprep.subr.mxu0 0.0
        %3798 = vmatpush1.msra.mxu0 %v3488
        %3799 = vmatprep.subr.mxu0 0.0
        %3800 = vmatpush1.msra.mxu0 %v3489
        %3801 = vmatprep.subr.mxu0 0.0
        %3802 = vmatpush1.msra.mxu0 %v3490
        %3803 = vmatprep.subr.mxu0 0.0
        %3804 = vmatpush1.msra.mxu0 %v3491
        %3805 = vmatprep.subr.mxu0 0.0
        %3806 = vmatpush1.msra.mxu0 %v3492
        %3807 = vmatprep.subr.mxu0 0.0
        %3808 = vmatpush1.msra.mxu0 %v3493
        %3809 = vmatprep.subr.mxu0 0.0
        %3810 = vmatpush1.msra.mxu0 %v3494
        %3811 = vmatprep.subr.mxu0 0.0
        %3812 = vmatpush1.msra.mxu0 %v3495
        %3813 = vmatprep.subr.mxu0 0.0
        %3814 = vmatpush1.msra.mxu0 %v3496
        %3815 = vmatprep.subr.mxu0 0.0
        %3816 = vmatpush1.msra.mxu0 %v3497
        %3817 = vmatprep.subr.mxu0 0.0
        %3818 = vmatpush1.msra.mxu0 %v3498
        %3819 = vmatprep.subr.mxu0 0.0
        %3820 = vmatpush1.msra.mxu0 %v3499
        %3821 = vmatprep.subr.mxu0 0.0
        %3822 = vmatpush1.msra.mxu0 %v3500
        %3823 = vmatprep.subr.mxu0 0.0
        %3824 = vmatpush1.msra.mxu0 %v3501
        %3825 = vmatprep.subr.mxu0 0.0
        %3826 = vmatpush1.msra.mxu0 %v3502
        %3827 = vmatprep.subr.mxu0 0.0
        %3828 = vmatpush1.msra.mxu0 %v3503
        %3829 = vmatprep.subr.mxu0 0.0
        %3830 = vmatpush1.msra.mxu0 %v3504
        %3831 = vmatprep.subr.mxu0 0.0
        %3832 = vmatpush1.msra.mxu0 %v3505
        %3833 = vmatprep.subr.mxu0 0.0
        %3834 = vmatpush1.msra.mxu0 %v3506
        %3835 = vmatprep.subr.mxu0 0.0
        %3836 = vmatpush1.msra.mxu0 %v3507
        %3837 = vmatprep.subr.mxu0 0.0
        %3838 = vmatpush1.msra.mxu0 %v3508
        %3839 = vmatprep.subr.mxu0 0.0
        %3840 = vmatpush1.msra.mxu0 %v3509
        %3841 = vmatprep.subr.mxu0 0.0
        %3842 = vmatpush1.msra.mxu0 %v3510
        %3843 = vmatprep.subr.mxu0 0.0
        %3844 = vmatpush1.msra.mxu0 %v3511
        %3845 = vmatprep.subr.mxu0 0.0
        %3846 = vmatpush1.msra.mxu0 %v3512
        %3847 = vmatprep.subr.mxu0 0.0
        %3848 = vmatpush1.msra.mxu0 %v3513
        %3849 = vmatprep.subr.mxu0 0.0
        %3850 = vmatpush1.msra.mxu0 %v3514
        %3851 = vmatprep.subr.mxu0 0.0
        %3852 = vmatpush1.msra.mxu0 %v3515
        %3853 = vmatprep.subr.mxu0 0.0
        %3854 = vmatpush1.msra.mxu0 %v3516
        %3855 = vmatprep.mubr.f32.mxu0 %v3424
        %3856 = vmatmul.mubr.f32.gmra.mrb[0].mxu0 %v3423
        %v3857 = vpop.f32.mrb[0].mxu0
        %v3858 = vadd.f32 %v3783, %v3857
        %v3859 = vpop.f32.mrb[0].mxu0
        %3860 = vmatprep.mubr.f32.mxu0 %v3440
        %3861 = vmatmul.mubr.f32.gmra.mrb[0].mxu0 %v3439
        %v3862 = vpop.f32.mrb[0].mxu0
        %v3863 = vadd.f32 %v3788, %v3862
        %v3864 = vpop.f32.mrb[0].mxu0
        %3865 = vdwg.mxu0
        %3866 = vmatprep.subr.mxu0 0.0
        %3867 = vmatpush1.msra.mxu0 %v3517
        %3868 = vmatprep.subr.mxu0 0.0
        %3869 = vmatpush1.msra.mxu0 %v3518
        %3870 = vmatprep.subr.mxu0 0.0
        %3871 = vmatpush1.msra.mxu0 %v3519
        %3872 = vmatprep.subr.mxu0 0.0
        %3873 = vmatpush1.msra.mxu0 %v3520
        %3874 = vmatprep.subr.mxu0 0.0
        %3875 = vmatpush1.msra.mxu0 %v3521
        %3876 = vmatprep.subr.mxu0 0.0
        %3877 = vmatpush1.msra.mxu0 %v3522
        %3878 = vmatprep.subr.mxu0 0.0
        %3879 = vmatpush1.msra.mxu0 %v3523
        %3880 = vmatprep.subr.mxu0 0.0
        %3881 = vmatpush1.msra.mxu0 %v3524
        %3882 = vmatprep.subr.mxu0 0.0
        %3883 = vmatpush1.msra.mxu0 %v3525
        %3884 = vmatprep.subr.mxu0 0.0
        %3885 = vmatpush1.msra.mxu0 %v3526
        %3886 = vmatprep.subr.mxu0 0.0
        %3887 = vmatpush1.msra.mxu0 %v3527
        %3888 = vmatprep.subr.mxu0 0.0
        %3889 = vmatpush1.msra.mxu0 %v3528
        %3890 = vmatprep.subr.mxu0 0.0
        %3891 = vmatpush1.msra.mxu0 %v3529
        %3892 = vmatprep.subr.mxu0 0.0
        %3893 = vmatpush1.msra.mxu0 %v3530
        %3894 = vmatprep.subr.mxu0 0.0
        %3895 = vmatpush1.msra.mxu0 %v3531
        %3896 = vmatprep.subr.mxu0 0.0
        %3897 = vmatpush1.msra.mxu0 %v3532
        %3898 = vmatprep.subr.mxu0 0.0
        %3899 = vmatpush1.msra.mxu0 %v3533
        %3900 = vmatprep.subr.mxu0 0.0
        %3901 = vmatpush1.msra.mxu0 %v3534
        %3902 = vmatprep.subr.mxu0 0.0
        %3903 = vmatpush1.msra.mxu0 %v3535
        %3904 = vmatprep.subr.mxu0 0.0
        %3905 = vmatpush1.msra.mxu0 %v3536
        %3906 = vmatprep.subr.mxu0 0.0
        %3907 = vmatpush1.msra.mxu0 %v3537
        %3908 = vmatprep.subr.mxu0 0.0
        %3909 = vmatpush1.msra.mxu0 %v3538
        %3910 = vmatprep.subr.mxu0 0.0
        %3911 = vmatpush1.msra.mxu0 %v3539
        %3912 = vmatprep.subr.mxu0 0.0
        %3913 = vmatpush1.msra.mxu0 %v3540
        %3914 = vmatprep.subr.mxu0 0.0
        %3915 = vmatpush1.msra.mxu0 %v3541
        %3916 = vmatprep.subr.mxu0 0.0
        %3917 = vmatpush1.msra.mxu0 %v3542
        %3918 = vmatprep.subr.mxu0 0.0
        %3919 = vmatpush1.msra.mxu0 %v3543
        %3920 = vmatprep.subr.mxu0 0.0
        %3921 = vmatpush1.msra.mxu0 %v3544
        %3922 = vmatprep.subr.mxu0 0.0
        %3923 = vmatpush1.msra.mxu0 %v3545
        %3924 = vmatprep.subr.mxu0 0.0
        %3925 = vmatpush1.msra.mxu0 %v3546
        %3926 = vmatprep.subr.mxu0 0.0
        %3927 = vmatpush1.msra.mxu0 %v3547
        %3928 = vmatprep.subr.mxu0 0.0
        %3929 = vmatpush1.msra.mxu0 %v3548
        %3930 = vmatprep.mubr.f32.mxu0 %v3426
        %3931 = vmatmul.mubr.f32.gmra.mrb[0].mxu0 %v3425
        %v3932 = vpop.f32.mrb[0].mxu0
        %v3933 = vadd.f32 %v3858, %v3932
        %v3934 = vpop.f32.mrb[0].mxu0
        %3935 = vmatprep.mubr.f32.mxu0 %v3442
        %3936 = vmatmul.mubr.f32.gmra.mrb[0].mxu0 %v3441
        %v3937 = vpop.f32.mrb[0].mxu0
        %v3938 = vadd.f32 %v3863, %v3937
        %v3939 = vpop.f32.mrb[0].mxu0
        %3940 = vdwg.mxu0
        %3941 = vmatprep.subr.mxu0 0.0
        %3942 = vmatpush1.msra.mxu0 %v3549
        %3943 = vmatprep.subr.mxu0 0.0
        %3944 = vmatpush1.msra.mxu0 %v3550
        %3945 = vmatprep.subr.mxu0 0.0
        %3946 = vmatpush1.msra.mxu0 %v3551
        %3947 = vmatprep.subr.mxu0 0.0
        %3948 = vmatpush1.msra.mxu0 %v3552
        %3949 = vmatprep.subr.mxu0 0.0
        %3950 = vmatpush1.msra.mxu0 %v3553
        %3951 = vmatprep.subr.mxu0 0.0
        %3952 = vmatpush1.msra.mxu0 %v3554
        %3953 = vmatprep.subr.mxu0 0.0
        %3954 = vmatpush1.msra.mxu0 %v3555
        %3955 = vmatprep.subr.mxu0 0.0
        %3956 = vmatpush1.msra.mxu0 %v3556
        %3957 = vmatprep.subr.mxu0 0.0
        %3958 = vmatpush1.msra.mxu0 %v3557
        %3959 = vmatprep.subr.mxu0 0.0
        %3960 = vmatpush1.msra.mxu0 %v3558
        %3961 = vmatprep.subr.mxu0 0.0
        %3962 = vmatpush1.msra.mxu0 %v3559
        %3963 = vmatprep.subr.mxu0 0.0
        %3964 = vmatpush1.msra.mxu0 %v3560
        %3965 = vmatprep.subr.mxu0 0.0
        %3966 = vmatpush1.msra.mxu0 %v3561
        %3967 = vmatprep.subr.mxu0 0.0
        %3968 = vmatpush1.msra.mxu0 %v3562
        %3969 = vmatprep.subr.mxu0 0.0
        %3970 = vmatpush1.msra.mxu0 %v3563
        %3971 = vmatprep.subr.mxu0 0.0
        %3972 = vmatpush1.msra.mxu0 %v3564
        %3973 = vmatprep.subr.mxu0 0.0
        %3974 = vmatpush1.msra.mxu0 %v3565
        %3975 = vmatprep.subr.mxu0 0.0
        %3976 = vmatpush1.msra.mxu0 %v3566
        %3977 = vmatprep.subr.mxu0 0.0
        %3978 = vmatpush1.msra.mxu0 %v3567
        %3979 = vmatprep.subr.mxu0 0.0
        %3980 = vmatpush1.msra.mxu0 %v3568
        %3981 = vmatprep.subr.mxu0 0.0
        %3982 = vmatpush1.msra.mxu0 %v3569
        %3983 = vmatprep.subr.mxu0 0.0
        %3984 = vmatpush1.msra.mxu0 %v3570
        %3985 = vmatprep.subr.mxu0 0.0
        %3986 = vmatpush1.msra.mxu0 %v3571
        %3987 = vmatprep.subr.mxu0 0.0
        %3988 = vmatpush1.msra.mxu0 %v3572
        %3989 = vmatprep.subr.mxu0 0.0
        %3990 = vmatpush1.msra.mxu0 %v3573
        %3991 = vmatprep.subr.mxu0 0.0
        %3992 = vmatpush1.msra.mxu0 %v3574
        %3993 = vmatprep.subr.mxu0 0.0
        %3994 = vmatpush1.msra.mxu0 %v3575
        %3995 = vmatprep.subr.mxu0 0.0
        %3996 = vmatpush1.msra.mxu0 %v3576
        %3997 = vmatprep.subr.mxu0 0.0
        %3998 = vmatpush1.msra.mxu0 %v3577
        %3999 = vmatprep.subr.mxu0 0.0
        %4000 = vmatpush1.msra.mxu0 %v3578
        %4001 = vmatprep.subr.mxu0 0.0
        %4002 = vmatpush1.msra.mxu0 %v3579
        %4003 = vmatprep.subr.mxu0 0.0
        %4004 = vmatpush1.msra.mxu0 %v3580
        %4005 = vmatprep.mubr.f32.mxu0 %v3428
        %4006 = vmatmul.mubr.f32.gmra.mrb[0].mxu0 %v3427
        %v4007 = vpop.f32.mrb[0].mxu0
        %v4008 = vadd.f32 %v3933, %v4007
        %v4009 = vpop.f32.mrb[0].mxu0
        %4010 = vmatprep.mubr.f32.mxu0 %v3444
        %4011 = vmatmul.mubr.f32.gmra.mrb[0].mxu0 %v3443
        %v4012 = vpop.f32.mrb[0].mxu0
        %v4013 = vadd.f32 %v3938, %v4012
        %v4014 = vpop.f32.mrb[0].mxu0
        %4015 = vdwg.mxu0
        %4016 = vmatprep.subr.mxu0 0.0
        %4017 = vmatpush1.msra.mxu0 %v3581
        %4018 = vmatprep.subr.mxu0 0.0
        %4019 = vmatpush1.msra.mxu0 %v3582
        %4020 = vmatprep.subr.mxu0 0.0
        %4021 = vmatpush1.msra.mxu0 %v3583
        %4022 = vmatprep.subr.mxu0 0.0
        %4023 = vmatpush1.msra.mxu0 %v3584
        %4024 = vmatprep.subr.mxu0 0.0
        %4025 = vmatpush1.msra.mxu0 %v3585
        %4026 = vmatprep.subr.mxu0 0.0
        %4027 = vmatpush1.msra.mxu0 %v3586
        %4028 = vmatprep.subr.mxu0 0.0
        %4029 = vmatpush1.msra.mxu0 %v3587
        %4030 = vmatprep.subr.mxu0 0.0
        %4031 = vmatpush1.msra.mxu0 %v3588
        %4032 = vmatprep.subr.mxu0 0.0
        %4033 = vmatpush1.msra.mxu0 %v3589
        %4034 = vmatprep.subr.mxu0 0.0
        %4035 = vmatpush1.msra.mxu0 %v3590
        %4036 = vmatprep.subr.mxu0 0.0
        %4037 = vmatpush1.msra.mxu0 %v3591
        %4038 = vmatprep.subr.mxu0 0.0
        %4039 = vmatpush1.msra.mxu0 %v3592
        %4040 = vmatprep.subr.mxu0 0.0
        %4041 = vmatpush1.msra.mxu0 %v3593
        %4042 = vmatprep.subr.mxu0 0.0
        %4043 = vmatpush1.msra.mxu0 %v3594
        %4044 = vmatprep.subr.mxu0 0.0
        %4045 = vmatpush1.msra.mxu0 %v3595
        %4046 = vmatprep.subr.mxu0 0.0
        %4047 = vmatpush1.msra.mxu0 %v3596
        %4048 = vmatprep.subr.mxu0 0.0
        %4049 = vmatpush1.msra.mxu0 %v3597
        %4050 = vmatprep.subr.mxu0 0.0
        %4051 = vmatpush1.msra.mxu0 %v3598
        %4052 = vmatprep.subr.mxu0 0.0
        %4053 = vmatpush1.msra.mxu0 %v3599
        %4054 = vmatprep.subr.mxu0 0.0
        %4055 = vmatpush1.msra.mxu0 %v3600
        %4056 = vmatprep.subr.mxu0 0.0
        %4057 = vmatpush1.msra.mxu0 %v3601
        %4058 = vmatprep.subr.mxu0 0.0
        %4059 = vmatpush1.msra.mxu0 %v3602
        %4060 = vmatprep.subr.mxu0 0.0
        %4061 = vmatpush1.msra.mxu0 %v3603
        %4062 = vmatprep.subr.mxu0 0.0
        %4063 = vmatpush1.msra.mxu0 %v3604
        %4064 = vmatprep.subr.mxu0 0.0
        %4065 = vmatpush1.msra.mxu0 %v3605
        %4066 = vmatprep.subr.mxu0 0.0
        %4067 = vmatpush1.msra.mxu0 %v3606
        %4068 = vmatprep.subr.mxu0 0.0
        %4069 = vmatpush1.msra.mxu0 %v3607
        %4070 = vmatprep.subr.mxu0 0.0
        %4071 = vmatpush1.msra.mxu0 %v3608
        %4072 = vmatprep.subr.mxu0 0.0
        %4073 = vmatpush1.msra.mxu0 %v3609
        %4074 = vmatprep.subr.mxu0 0.0
        %4075 = vmatpush1.msra.mxu0 %v3610
        %4076 = vmatprep.subr.mxu0 0.0
        %4077 = vmatpush1.msra.mxu0 %v3611
        %4078 = vmatprep.subr.mxu0 0.0
        %4079 = vmatpush1.msra.mxu0 %v3612
        %4080 = vmatprep.mubr.f32.mxu0 %v3430
        %4081 = vmatmul.mubr.f32.gmra.mrb[0].mxu0 %v3429
        %v4082 = vpop.f32.mrb[0].mxu0
        %v4083 = vadd.f32 %v4008, %v4082
        %v4084 = vpop.f32.mrb[0].mxu0
        %4085 = vmatprep.mubr.f32.mxu0 %v3446
        %4086 = vmatmul.mubr.f32.gmra.mrb[0].mxu0 %v3445
        %v4087 = vpop.f32.mrb[0].mxu0
        %v4088 = vadd.f32 %v4013, %v4087
        %v4089 = vpop.f32.mrb[0].mxu0
        %4090 = vdwg.mxu0
        %4091 = vmatprep.subr.mxu0 0.0
        %4092 = vmatpush1.msra.mxu0 %v3613
        %4093 = vmatprep.subr.mxu0 0.0
        %4094 = vmatpush1.msra.mxu0 %v3614
        %4095 = vmatprep.subr.mxu0 0.0
        %4096 = vmatpush1.msra.mxu0 %v3615
        %4097 = vmatprep.subr.mxu0 0.0
        %4098 = vmatpush1.msra.mxu0 %v3616
        %4099 = vmatprep.subr.mxu0 0.0
        %4100 = vmatpush1.msra.mxu0 %v3617
        %4101 = vmatprep.subr.mxu0 0.0
        %4102 = vmatpush1.msra.mxu0 %v3618
        %4103 = vmatprep.subr.mxu0 0.0
        %4104 = vmatpush1.msra.mxu0 %v3619
        %4105 = vmatprep.subr.mxu0 0.0
        %4106 = vmatpush1.msra.mxu0 %v3620
        %4107 = vmatprep.subr.mxu0 0.0
        %4108 = vmatpush1.msra.mxu0 %v3621
        %4109 = vmatprep.subr.mxu0 0.0
        %4110 = vmatpush1.msra.mxu0 %v3622
        %4111 = vmatprep.subr.mxu0 0.0
        %4112 = vmatpush1.msra.mxu0 %v3623
        %4113 = vmatprep.subr.mxu0 0.0
        %4114 = vmatpush1.msra.mxu0 %v3624
        %4115 = vmatprep.subr.mxu0 0.0
        %4116 = vmatpush1.msra.mxu0 %v3625
        %4117 = vmatprep.subr.mxu0 0.0
        %4118 = vmatpush1.msra.mxu0 %v3626
        %4119 = vmatprep.subr.mxu0 0.0
        %4120 = vmatpush1.msra.mxu0 %v3627
        %4121 = vmatprep.subr.mxu0 0.0
        %4122 = vmatpush1.msra.mxu0 %v3628
        %4123 = vmatprep.subr.mxu0 0.0
        %4124 = vmatpush1.msra.mxu0 %v3629
        %4125 = vmatprep.subr.mxu0 0.0
        %4126 = vmatpush1.msra.mxu0 %v3630
        %4127 = vmatprep.subr.mxu0 0.0
        %4128 = vmatpush1.msra.mxu0 %v3631
        %4129 = vmatprep.subr.mxu0 0.0
        %4130 = vmatpush1.msra.mxu0 %v3632
        %4131 = vmatprep.subr.mxu0 0.0
        %4132 = vmatpush1.msra.mxu0 %v3633
        %4133 = vmatprep.subr.mxu0 0.0
        %4134 = vmatpush1.msra.mxu0 %v3634
        %4135 = vmatprep.subr.mxu0 0.0
        %4136 = vmatpush1.msra.mxu0 %v3635
        %4137 = vmatprep.subr.mxu0 0.0
        %4138 = vmatpush1.msra.mxu0 %v3636
        %4139 = vmatprep.subr.mxu0 0.0
        %4140 = vmatpush1.msra.mxu0 %v3637
        %4141 = vmatprep.subr.mxu0 0.0
        %4142 = vmatpush1.msra.mxu0 %v3638
        %4143 = vmatprep.subr.mxu0 0.0
        %4144 = vmatpush1.msra.mxu0 %v3639
        %4145 = vmatprep.subr.mxu0 0.0
        %4146 = vmatpush1.msra.mxu0 %v3640
        %4147 = vmatprep.subr.mxu0 0.0
        %4148 = vmatpush1.msra.mxu0 %v3641
        %4149 = vmatprep.subr.mxu0 0.0
        %4150 = vmatpush1.msra.mxu0 %v3642
        %4151 = vmatprep.subr.mxu0 0.0
        %4152 = vmatpush1.msra.mxu0 %v3643
        %4153 = vmatprep.subr.mxu0 0.0
        %4154 = vmatpush1.msra.mxu0 %v3644
        %4155 = vmatprep.mubr.f32.mxu0 %v3432
        %4156 = vmatmul.mubr.f32.gmra.mrb[0].mxu0 %v3431
        %v4157 = vpop.f32.mrb[0].mxu0
        %v4158 = vadd.f32 %v4083, %v4157
        %v4159 = vpop.f32.mrb[0].mxu0
        %4160 = vmatprep.mubr.f32.mxu0 %v3448
        %4161 = vmatmul.mubr.f32.gmra.mrb[0].mxu0 %v3447
        %v4162 = vpop.f32.mrb[0].mxu0
        %v4163 = vadd.f32 %v4088, %v4162
        %v4164 = vpop.f32.mrb[0].mxu0
        %4165 = vdwg.mxu0
        %4166 = vmatprep.subr.mxu0 0.0
        %4167 = vmatpush1.msra.mxu0 %v3645
        %4168 = vmatprep.subr.mxu0 0.0
        %4169 = vmatpush1.msra.mxu0 %v3646
        %4170 = vmatprep.subr.mxu0 0.0
        %4171 = vmatpush1.msra.mxu0 %v3647
        %4172 = vmatprep.subr.mxu0 0.0
        %4173 = vmatpush1.msra.mxu0 %v3648
        %4174 = vmatprep.subr.mxu0 0.0
        %4175 = vmatpush1.msra.mxu0 %v3649
        %4176 = vmatprep.subr.mxu0 0.0
        %4177 = vmatpush1.msra.mxu0 %v3650
        %4178 = vmatprep.subr.mxu0 0.0
        %4179 = vmatpush1.msra.mxu0 %v3651
        %4180 = vmatprep.subr.mxu0 0.0
        %4181 = vmatpush1.msra.mxu0 %v3652
        %4182 = vmatprep.subr.mxu0 0.0
        %4183 = vmatpush1.msra.mxu0 %v3653
        %4184 = vmatprep.subr.mxu0 0.0
        %4185 = vmatpush1.msra.mxu0 %v3654
        %4186 = vmatprep.subr.mxu0 0.0
        %4187 = vmatpush1.msra.mxu0 %v3655
        %4188 = vmatprep.subr.mxu0 0.0
        %4189 = vmatpush1.msra.mxu0 %v3656
        %4190 = vmatprep.subr.mxu0 0.0
        %4191 = vmatpush1.msra.mxu0 %v3657
        %4192 = vmatprep.subr.mxu0 0.0
        %4193 = vmatpush1.msra.mxu0 %v3658
        %4194 = vmatprep.subr.mxu0 0.0
        %4195 = vmatpush1.msra.mxu0 %v3659
        %4196 = vmatprep.subr.mxu0 0.0
        %4197 = vmatpush1.msra.mxu0 %v3660
        %4198 = vmatprep.subr.mxu0 0.0
        %4199 = vmatpush1.msra.mxu0 %v3661
        %4200 = vmatprep.subr.mxu0 0.0
        %4201 = vmatpush1.msra.mxu0 %v3662
        %4202 = vmatprep.subr.mxu0 0.0
        %4203 = vmatpush1.msra.mxu0 %v3663
        %4204 = vmatprep.subr.mxu0 0.0
        %4205 = vmatpush1.msra.mxu0 %v3664
        %4206 = vmatprep.subr.mxu0 0.0
        %4207 = vmatpush1.msra.mxu0 %v3665
        %4208 = vmatprep.subr.mxu0 0.0
        %4209 = vmatpush1.msra.mxu0 %v3666
        %4210 = vmatprep.subr.mxu0 0.0
        %4211 = vmatpush1.msra.mxu0 %v3667
        %4212 = vmatprep.subr.mxu0 0.0
        %4213 = vmatpush1.msra.mxu0 %v3668
        %4214 = vmatprep.subr.mxu0 0.0
        %4215 = vmatpush1.msra.mxu0 %v3669
        %4216 = vmatprep.subr.mxu0 0.0
        %4217 = vmatpush1.msra.mxu0 %v3670
        %4218 = vmatprep.subr.mxu0 0.0
        %4219 = vmatpush1.msra.mxu0 %v3671
        %4220 = vmatprep.subr.mxu0 0.0
        %4221 = vmatpush1.msra.mxu0 %v3672
        %4222 = vmatprep.subr.mxu0 0.0
        %4223 = vmatpush1.msra.mxu0 %v3673
        %4224 = vmatprep.subr.mxu0 0.0
        %4225 = vmatpush1.msra.mxu0 %v3674
        %4226 = vmatprep.subr.mxu0 0.0
        %4227 = vmatpush1.msra.mxu0 %v3675
        %4228 = vmatprep.subr.mxu0 0.0
        %4229 = vmatpush1.msra.mxu0 %v3676
        %4230 = vmatprep.mubr.f32.mxu0 %v3434
        %4231 = vmatmul.mubr.f32.gmra.mrb[0].mxu0 %v3433
        %v4232 = vpop.f32.mrb[0].mxu0
        %v4233 = vadd.f32 %v4158, %v4232
        %v4234 = vpop.f32.mrb[0].mxu0
        %4235 = vmatprep.mubr.f32.mxu0 %v3450
        %4236 = vmatmul.mubr.f32.gmra.mrb[0].mxu0 %v3449
        %v4237 = vpop.f32.mrb[0].mxu0
        %v4238 = vadd.f32 %v4163, %v4237
        %v4239 = vpop.f32.mrb[0].mxu0
        %4240 = vdwg.mxu0
        %4241 = vmatprep.subr.mxu0 0.0
        %4242 = vmatpush1.msra.mxu0 %v3677
        %4243 = vmatprep.subr.mxu0 0.0
        %4244 = vmatpush1.msra.mxu0 %v3678
        %4245 = vmatprep.subr.mxu0 0.0
        %4246 = vmatpush1.msra.mxu0 %v3679
        %4247 = vmatprep.subr.mxu0 0.0
        %4248 = vmatpush1.msra.mxu0 %v3680
        %4249 = vmatprep.subr.mxu0 0.0
        %4250 = vmatpush1.msra.mxu0 %v3681
        %4251 = vmatprep.subr.mxu0 0.0
        %4252 = vmatpush1.msra.mxu0 %v3682
        %4253 = vmatprep.subr.mxu0 0.0
        %4254 = vmatpush1.msra.mxu0 %v3683
        %4255 = vmatprep.subr.mxu0 0.0
        %4256 = vmatpush1.msra.mxu0 %v3684
        %4257 = vmatprep.subr.mxu0 0.0
        %4258 = vmatpush1.msra.mxu0 %v3685
        %4259 = vmatprep.subr.mxu0 0.0
        %4260 = vmatpush1.msra.mxu0 %v3686
        %4261 = vmatprep.subr.mxu0 0.0
        %4262 = vmatpush1.msra.mxu0 %v3687
        %4263 = vmatprep.subr.mxu0 0.0
        %4264 = vmatpush1.msra.mxu0 %v3688
        %4265 = vmatprep.subr.mxu0 0.0
        %4266 = vmatpush1.msra.mxu0 %v3689
        %4267 = vmatprep.subr.mxu0 0.0
        %4268 = vmatpush1.msra.mxu0 %v3690
        %4269 = vmatprep.subr.mxu0 0.0
        %4270 = vmatpush1.msra.mxu0 %v3691
        %4271 = vmatprep.subr.mxu0 0.0
        %4272 = vmatpush1.msra.mxu0 %v3692
        %4273 = vmatprep.subr.mxu0 0.0
        %4274 = vmatpush1.msra.mxu0 %v3693
        %4275 = vmatprep.subr.mxu0 0.0
        %4276 = vmatpush1.msra.mxu0 %v3694
        %4277 = vmatprep.subr.mxu0 0.0
        %4278 = vmatpush1.msra.mxu0 %v3695
        %4279 = vmatprep.subr.mxu0 0.0
        %4280 = vmatpush1.msra.mxu0 %v3696
        %4281 = vmatprep.subr.mxu0 0.0
        %4282 = vmatpush1.msra.mxu0 %v3697
        %4283 = vmatprep.subr.mxu0 0.0
        %4284 = vmatpush1.msra.mxu0 %v3698
        %4285 = vmatprep.subr.mxu0 0.0
        %4286 = vmatpush1.msra.mxu0 %v3699
        %4287 = vmatprep.subr.mxu0 0.0
        %4288 = vmatpush1.msra.mxu0 %v3700
        %4289 = vmatprep.subr.mxu0 0.0
        %4290 = vmatpush1.msra.mxu0 %v3701
        %4291 = vmatprep.subr.mxu0 0.0
        %4292 = vmatpush1.msra.mxu0 %v3702
        %4293 = vmatprep.subr.mxu0 0.0
        %4294 = vmatpush1.msra.mxu0 %v3703
        %4295 = vmatprep.subr.mxu0 0.0
        %4296 = vmatpush1.msra.mxu0 %v3704
        %4297 = vmatprep.subr.mxu0 0.0
        %4298 = vmatpush1.msra.mxu0 %v3705
        %4299 = vmatprep.subr.mxu0 0.0
        %4300 = vmatpush1.msra.mxu0 %v3706
        %4301 = vmatprep.subr.mxu0 0.0
        %4302 = vmatpush1.msra.mxu0 %v3707
        %4303 = vmatprep.subr.mxu0 0.0
        %4304 = vmatpush1.msra.mxu0 %v3708
        %4305 = vmatprep.mubr.f32.mxu0 %v3436
        %4306 = vmatmul.mubr.f32.gmra.mrb[0].mxu0 %v3435
        %v4307 = vpop.f32.mrb[0].mxu0
        %v4308 = vadd.f32 %v4233, %v4307
        %v4309 = vpop.f32.mrb[0].mxu0
        %4310 = vmatprep.mubr.f32.mxu0 %v3452
        %4311 = vmatmul.mubr.f32.gmra.mrb[0].mxu0 %v3451
        %v4312 = vpop.f32.mrb[0].mxu0
        %v4313 = vadd.f32 %v4238, %v4312
        %v4314 = vpop.f32.mrb[0].mxu0
        %4315 = vdwg.mxu0
        %v4316 = vadd.f32 %v2649, %v4308
        %v4317 = vadd.f32 %v2650, %v4313
        %v4318 = vsel %vm898, %v4316, 0.0
        %4319 = vadd.xlane.f32.xlu0 %v4318
        %v4320 = vpop.xlane.xlu0 %4319
        %v4321 = vsel %vm898, %v4317, 0.0
        %4322 = vadd.xlane.f32.xlu0 %v4321
        %v4323 = vpop.xlane.xlu0 %4322
        %v4324 = vmul.f32 %v4320, %v2612
        %v4325 = vmul.f32 %v4323, %v2612
        %v4326 = vsub.f32 %v4316, %v4324
        %v4327 = vsub.f32 %v4317, %v4325
        %v4328 = vmul.f32 %v4326, %v4326
        %v4329 = vmul.f32 %v4327, %v4327
        %v4330 = vsel %vm898, %v4328, 0.0
        %4331 = vadd.xlane.f32.xlu0 %v4330
        %v4332 = vpop.xlane.xlu0 %4331
        %v4333 = vsel %vm898, %v4329, 0.0
        %4334 = vadd.xlane.f32.xlu0 %v4333
        %v4335 = vpop.xlane.xlu0 %4334
        %v4336 = vmul.f32 %v4332, %v2612
        %v4337 = vmul.f32 %v4335, %v2612
        %v4338 = vadd.f32 %v4336, 1e-05
        %v4339 = vadd.f32 %v4337, 1e-05
        %v4340 = vrsqrt.pop %v4338
        %v4341 = vrsqrt.pop %v4339
        %v4342 = vmul.f32 %v4326, %v4340
        %v4343 = vmul.f32 %v4327, %v4341
        %v4344 = vld [vmem:[%s20] sm:$0x1]
        %v4346 = vlaneseq
        %v4347 = vshrl.u32 %v4346, 7
        %v4348 = vsub.s32 0, %v4347
        %v4349 = vrot.slane %v4344, %v4348
        %v4351 = vmul.f32 %v4342, %v4349
        %v4352 = vmul.f32 %v4343, %v4349
        %v4353 = vld [vmem:[%s21] sm:$0x1]
        %v4355 = vlaneseq
        %v4356 = vshrl.u32 %v4355, 7
        %v4357 = vsub.s32 0, %v4356
        %v4358 = vrot.slane %v4353, %v4357
        %v4360 = vadd.f32 %v4351, %v4358
        %v4361 = vadd.f32 %v4352, %v4358
        %s4362 = scalar_lea.vmem %s6, 32
        %v4363 = vld [vmem:[%s4362] sm:$0xff]
        %v4364 = vld [vmem:[%s4362 + $0x8] sm:$0xff]
        %v4365 = vld [vmem:[%s4362 + $0x10] sm:$0xff]
        %v4366 = vld [vmem:[%s4362 + $0x18] sm:$0xff]
        %s4367 = scalar_lea.vmem %s7, 1
        %v4368 = vld [vmem:[%s4367] sm:$0x1]
        %v4370 = vlaneseq
        %v4371 = vshrl.u32 %v4370, 7
        %v4372 = vsub.s32 0, %v4371
        %v4373 = vrot.slane %v4368, %v4372
        %v4376 = vsel %vm898, %v4360, 0
        %v4379 = vsel %vm898, %v4361, 0
        %4381 = vmatprep.subr.mxu0 0.0
        %4382 = vmatpush1.msra.mxu0 %v4363
        %4383 = vmatprep.subr.mxu0 0.0
        %4384 = vmatpush1.msra.mxu0 %v4364
        %4385 = vmatprep.subr.mxu0 0.0
        %4386 = vmatpush1.msra.mxu0 %v4365
        %4387 = vmatprep.subr.mxu0 0.0
        %4388 = vmatpush1.msra.mxu0 %v4366
        %4389 = vmatprep.subr.mxu0 0.0
        %4390 = vmatpush1.msra.mxu0 0.0
        %4391 = vmatprep.subr.mxu0 0.0
        %4392 = vmatpush1.msra.mxu0 0.0
        %4393 = vmatprep.subr.mxu0 0.0
        %4394 = vmatpush1.msra.mxu0 0.0
        %4395 = vmatprep.subr.mxu0 0.0
        %4396 = vmatpush1.msra.mxu0 0.0
        %4397 = vmatprep.subr.mxu0 0.0
        %4398 = vmatpush1.msra.mxu0 0.0
        %4399 = vmatprep.subr.mxu0 0.0
        %4400 = vmatpush1.msra.mxu0 0.0
        %4401 = vmatprep.subr.mxu0 0.0
        %4402 = vmatpush1.msra.mxu0 0.0
        %4403 = vmatprep.subr.mxu0 0.0
        %4404 = vmatpush1.msra.mxu0 0.0
        %4405 = vmatprep.subr.mxu0 0.0
        %4406 = vmatpush1.msra.mxu0 0.0
        %4407 = vmatprep.subr.mxu0 0.0
        %4408 = vmatpush1.msra.mxu0 0.0
        %4409 = vmatprep.subr.mxu0 0.0
        %4410 = vmatpush1.msra.mxu0 0.0
        %4411 = vmatprep.subr.mxu0 0.0
        %4412 = vmatpush1.msra.mxu0 0.0
        %4413 = vmatprep.subr.mxu0 0.0
        %4414 = vmatpush1.msra.mxu0 0.0
        %4415 = vmatprep.subr.mxu0 0.0
        %4416 = vmatpush1.msra.mxu0 0.0
        %4417 = vmatprep.subr.mxu0 0.0
        %4418 = vmatpush1.msra.mxu0 0.0
        %4419 = vmatprep.subr.mxu0 0.0
        %4420 = vmatpush1.msra.mxu0 0.0
        %4421 = vmatprep.subr.mxu0 0.0
        %4422 = vmatpush1.msra.mxu0 0.0
        %4423 = vmatprep.subr.mxu0 0.0
        %4424 = vmatpush1.msra.mxu0 0.0
        %4425 = vmatprep.subr.mxu0 0.0
        %4426 = vmatpush1.msra.mxu0 0.0
        %4427 = vmatprep.subr.mxu0 0.0
        %4428 = vmatpush1.msra.mxu0 0.0
        %4429 = vmatprep.subr.mxu0 0.0
        %4430 = vmatpush1.msra.mxu0 0.0
        %4431 = vmatprep.subr.mxu0 0.0
        %4432 = vmatpush1.msra.mxu0 0.0
        %4433 = vmatprep.subr.mxu0 0.0
        %4434 = vmatpush1.msra.mxu0 0.0
        %4435 = vmatprep.subr.mxu0 0.0
        %4436 = vmatpush1.msra.mxu0 0.0
        %4437 = vmatprep.subr.mxu0 0.0
        %4438 = vmatpush1.msra.mxu0 0.0
        %4439 = vmatprep.subr.mxu0 0.0
        %4440 = vmatpush1.msra.mxu0 0.0
        %4441 = vmatprep.subr.mxu0 0.0
        %4442 = vmatpush1.msra.mxu0 0.0
        %4443 = vmatprep.subr.mxu0 0.0
        %4444 = vmatpush1.msra.mxu0 0.0
        %4445 = vmatprep.mubr.f32.mxu0 0.0
        %4446 = vmatmul.mubr.f32.gmra.mrb[0].mxu0 %v4376
        %v4447 = vpop.f32.mrb[0].mxu0
        %v4448 = vadd.f32 %v4373, %v4447
        %v4449 = vpop.f32.mrb[0].mxu0
        %4450 = vmatprep.mubr.f32.mxu0 0.0
        %4451 = vmatmul.mubr.f32.gmra.mrb[0].mxu0 %v4379
        %v4452 = vpop.f32.mrb[0].mxu0
        %v4453 = vadd.f32 %v4373, %v4452
        %v4454 = vpop.f32.mrb[0].mxu0
        %4455 = vdwg.mxu0
        %s4456 = scalar_lea.vmem %s8, 32
        %v4457 = vld [vmem:[%s4456] sm:$0xff]
        %v4458 = vld [vmem:[%s4456 + $0x8] sm:$0xff]
        %v4459 = vld [vmem:[%s4456 + $0x10] sm:$0xff]
        %v4460 = vld [vmem:[%s4456 + $0x18] sm:$0xff]
        %s4461 = scalar_lea.vmem %s9, 1
        %v4462 = vld [vmem:[%s4461] sm:$0x1]
        %v4464 = vlaneseq
        %v4465 = vshrl.u32 %v4464, 7
        %v4466 = vsub.s32 0, %v4465
        %v4467 = vrot.slane %v4462, %v4466
        %4469 = vmatprep.subr.mxu0 0.0
        %4470 = vmatpush1.msra.mxu0 %v4457
        %4471 = vmatprep.subr.mxu0 0.0
        %4472 = vmatpush1.msra.mxu0 %v4458
        %4473 = vmatprep.subr.mxu0 0.0
        %4474 = vmatpush1.msra.mxu0 %v4459
        %4475 = vmatprep.subr.mxu0 0.0
        %4476 = vmatpush1.msra.mxu0 %v4460
        %4477 = vmatprep.subr.mxu0 0.0
        %4478 = vmatpush1.msra.mxu0 0.0
        %4479 = vmatprep.subr.mxu0 0.0
        %4480 = vmatpush1.msra.mxu0 0.0
        %4481 = vmatprep.subr.mxu0 0.0
        %4482 = vmatpush1.msra.mxu0 0.0
        %4483 = vmatprep.subr.mxu0 0.0
        %4484 = vmatpush1.msra.mxu0 0.0
        %4485 = vmatprep.subr.mxu0 0.0
        %4486 = vmatpush1.msra.mxu0 0.0
        %4487 = vmatprep.subr.mxu0 0.0
        %4488 = vmatpush1.msra.mxu0 0.0
        %4489 = vmatprep.subr.mxu0 0.0
        %4490 = vmatpush1.msra.mxu0 0.0
        %4491 = vmatprep.subr.mxu0 0.0
        %4492 = vmatpush1.msra.mxu0 0.0
        %4493 = vmatprep.subr.mxu0 0.0
        %4494 = vmatpush1.msra.mxu0 0.0
        %4495 = vmatprep.subr.mxu0 0.0
        %4496 = vmatpush1.msra.mxu0 0.0
        %4497 = vmatprep.subr.mxu0 0.0
        %4498 = vmatpush1.msra.mxu0 0.0
        %4499 = vmatprep.subr.mxu0 0.0
        %4500 = vmatpush1.msra.mxu0 0.0
        %4501 = vmatprep.subr.mxu0 0.0
        %4502 = vmatpush1.msra.mxu0 0.0
        %4503 = vmatprep.subr.mxu0 0.0
        %4504 = vmatpush1.msra.mxu0 0.0
        %4505 = vmatprep.subr.mxu0 0.0
        %4506 = vmatpush1.msra.mxu0 0.0
        %4507 = vmatprep.subr.mxu0 0.0
        %4508 = vmatpush1.msra.mxu0 0.0
        %4509 = vmatprep.subr.mxu0 0.0
        %4510 = vmatpush1.msra.mxu0 0.0
        %4511 = vmatprep.subr.mxu0 0.0
        %4512 = vmatpush1.msra.mxu0 0.0
        %4513 = vmatprep.subr.mxu0 0.0
        %4514 = vmatpush1.msra.mxu0 0.0
        %4515 = vmatprep.subr.mxu0 0.0
        %4516 = vmatpush1.msra.mxu0 0.0
        %4517 = vmatprep.subr.mxu0 0.0
        %4518 = vmatpush1.msra.mxu0 0.0
        %4519 = vmatprep.subr.mxu0 0.0
        %4520 = vmatpush1.msra.mxu0 0.0
        %4521 = vmatprep.subr.mxu0 0.0
        %4522 = vmatpush1.msra.mxu0 0.0
        %4523 = vmatprep.subr.mxu0 0.0
        %4524 = vmatpush1.msra.mxu0 0.0
        %4525 = vmatprep.subr.mxu0 0.0
        %4526 = vmatpush1.msra.mxu0 0.0
        %4527 = vmatprep.subr.mxu0 0.0
        %4528 = vmatpush1.msra.mxu0 0.0
        %4529 = vmatprep.subr.mxu0 0.0
        %4530 = vmatpush1.msra.mxu0 0.0
        %4531 = vmatprep.subr.mxu0 0.0
        %4532 = vmatpush1.msra.mxu0 0.0
        %4533 = vmatprep.mubr.f32.mxu0 0.0
        %4534 = vmatmul.mubr.f32.gmra.mrb[0].mxu0 %v4376
        %v4535 = vpop.f32.mrb[0].mxu0
        %v4536 = vadd.f32 %v4467, %v4535
        %v4537 = vpop.f32.mrb[0].mxu0
        %4538 = vmatprep.mubr.f32.mxu0 0.0
        %4539 = vmatmul.mubr.f32.gmra.mrb[0].mxu0 %v4379
        %v4540 = vpop.f32.mrb[0].mxu0
        %v4541 = vadd.f32 %v4467, %v4540
        %v4542 = vpop.f32.mrb[0].mxu0
        %4543 = vdwg.mxu0
        %s4544 = scalar_lea.vmem %s10, 32
        %v4545 = vld [vmem:[%s4544] sm:$0xff]
        %v4546 = vld [vmem:[%s4544 + $0x8] sm:$0xff]
        %v4547 = vld [vmem:[%s4544 + $0x10] sm:$0xff]
        %v4548 = vld [vmem:[%s4544 + $0x18] sm:$0xff]
        %s4549 = scalar_lea.vmem %s11, 1
        %v4550 = vld [vmem:[%s4549] sm:$0x1]
        %v4552 = vlaneseq
        %v4553 = vshrl.u32 %v4552, 7
        %v4554 = vsub.s32 0, %v4553
        %v4555 = vrot.slane %v4550, %v4554
        %4557 = vmatprep.subr.mxu0 0.0
        %4558 = vmatpush1.msra.mxu0 %v4545
        %4559 = vmatprep.subr.mxu0 0.0
        %4560 = vmatpush1.msra.mxu0 %v4546
        %4561 = vmatprep.subr.mxu0 0.0
        %4562 = vmatpush1.msra.mxu0 %v4547
        %4563 = vmatprep.subr.mxu0 0.0
        %4564 = vmatpush1.msra.mxu0 %v4548
        %4565 = vmatprep.subr.mxu0 0.0
        %4566 = vmatpush1.msra.mxu0 0.0
        %4567 = vmatprep.subr.mxu0 0.0
        %4568 = vmatpush1.msra.mxu0 0.0
        %4569 = vmatprep.subr.mxu0 0.0
        %4570 = vmatpush1.msra.mxu0 0.0
        %4571 = vmatprep.subr.mxu0 0.0
        %4572 = vmatpush1.msra.mxu0 0.0
        %4573 = vmatprep.subr.mxu0 0.0
        %4574 = vmatpush1.msra.mxu0 0.0
        %4575 = vmatprep.subr.mxu0 0.0
        %4576 = vmatpush1.msra.mxu0 0.0
        %4577 = vmatprep.subr.mxu0 0.0
        %4578 = vmatpush1.msra.mxu0 0.0
        %4579 = vmatprep.subr.mxu0 0.0
        %4580 = vmatpush1.msra.mxu0 0.0
        %4581 = vmatprep.subr.mxu0 0.0
        %4582 = vmatpush1.msra.mxu0 0.0
        %4583 = vmatprep.subr.mxu0 0.0
        %4584 = vmatpush1.msra.mxu0 0.0
        %4585 = vmatprep.subr.mxu0 0.0
        %4586 = vmatpush1.msra.mxu0 0.0
        %4587 = vmatprep.subr.mxu0 0.0
        %4588 = vmatpush1.msra.mxu0 0.0
        %4589 = vmatprep.subr.mxu0 0.0
        %4590 = vmatpush1.msra.mxu0 0.0
        %4591 = vmatprep.subr.mxu0 0.0
        %4592 = vmatpush1.msra.mxu0 0.0
        %4593 = vmatprep.subr.mxu0 0.0
        %4594 = vmatpush1.msra.mxu0 0.0
        %4595 = vmatprep.subr.mxu0 0.0
        %4596 = vmatpush1.msra.mxu0 0.0
        %4597 = vmatprep.subr.mxu0 0.0
        %4598 = vmatpush1.msra.mxu0 0.0
        %4599 = vmatprep.subr.mxu0 0.0
        %4600 = vmatpush1.msra.mxu0 0.0
        %4601 = vmatprep.subr.mxu0 0.0
        %4602 = vmatpush1.msra.mxu0 0.0
        %4603 = vmatprep.subr.mxu0 0.0
        %4604 = vmatpush1.msra.mxu0 0.0
        %4605 = vmatprep.subr.mxu0 0.0
        %4606 = vmatpush1.msra.mxu0 0.0
        %4607 = vmatprep.subr.mxu0 0.0
        %4608 = vmatpush1.msra.mxu0 0.0
        %4609 = vmatprep.subr.mxu0 0.0
        %4610 = vmatpush1.msra.mxu0 0.0
        %4611 = vmatprep.subr.mxu0 0.0
        %4612 = vmatpush1.msra.mxu0 0.0
        %4613 = vmatprep.subr.mxu0 0.0
        %4614 = vmatpush1.msra.mxu0 0.0
        %4615 = vmatprep.subr.mxu0 0.0
        %4616 = vmatpush1.msra.mxu0 0.0
        %4617 = vmatprep.subr.mxu0 0.0
        %4618 = vmatpush1.msra.mxu0 0.0
        %4619 = vmatprep.subr.mxu0 0.0
        %4620 = vmatpush1.msra.mxu0 0.0
        %4621 = vmatprep.mubr.f32.mxu0 0.0
        %4622 = vmatmul.mubr.f32.gmra.mrb[0].mxu0 %v4376
        %v4623 = vpop.f32.mrb[0].mxu0
        %v4624 = vadd.f32 %v4555, %v4623
        %v4625 = vpop.f32.mrb[0].mxu0
        %4626 = vmatprep.mubr.f32.mxu0 0.0
        %4627 = vmatmul.mubr.f32.gmra.mrb[0].mxu0 %v4379
        %v4628 = vpop.f32.mrb[0].mxu0
        %v4629 = vadd.f32 %v4555, %v4628
        %v4630 = vpop.f32.mrb[0].mxu0
        %4631 = vdwg.mxu0
        %v4633 = vsel %vm1152, %v4448, 0
        %v4636 = vsel %vm1152, %v4536, 0
        %4638 = vmatprep.subr.mxu0 0.0
        %4639 = vmatpush1.xpose.msra.mxu0 %v4636
        %4640 = vmatprep.subr.mxu0 0.0
        %4641 = vmatpush1.xpose.msra.mxu0 0.0
        %4642 = vmatprep.subr.mxu0 0.0
        %4643 = vmatpush1.xpose.msra.mxu0 0.0
        %4644 = vmatprep.subr.mxu0 0.0
        %4645 = vmatpush1.xpose.msra.mxu0 0.0
        %4646 = vmatprep.subr.mxu0 0.0
        %4647 = vmatpush1.xpose.msra.mxu0 0.0
        %4648 = vmatprep.subr.mxu0 0.0
        %4649 = vmatpush1.xpose.msra.mxu0 0.0
        %4650 = vmatprep.subr.mxu0 0.0
        %4651 = vmatpush1.xpose.msra.mxu0 0.0
        %4652 = vmatprep.subr.mxu0 0.0
        %4653 = vmatpush1.xpose.msra.mxu0 0.0
        %4654 = vmatprep.subr.mxu0 0.0
        %4655 = vmatpush1.xpose.msra.mxu0 0.0
        %4656 = vmatprep.subr.mxu0 0.0
        %4657 = vmatpush1.xpose.msra.mxu0 0.0
        %4658 = vmatprep.subr.mxu0 0.0
        %4659 = vmatpush1.xpose.msra.mxu0 0.0
        %4660 = vmatprep.subr.mxu0 0.0
        %4661 = vmatpush1.xpose.msra.mxu0 0.0
        %4662 = vmatprep.subr.mxu0 0.0
        %4663 = vmatpush1.xpose.msra.mxu0 0.0
        %4664 = vmatprep.subr.mxu0 0.0
        %4665 = vmatpush1.xpose.msra.mxu0 0.0
        %4666 = vmatprep.subr.mxu0 0.0
        %4667 = vmatpush1.xpose.msra.mxu0 0.0
        %4668 = vmatprep.subr.mxu0 0.0
        %4669 = vmatpush1.xpose.msra.mxu0 0.0
        %4670 = vmatprep.subr.mxu0 0.0
        %4671 = vmatpush1.xpose.msra.mxu0 0.0
        %4672 = vmatprep.subr.mxu0 0.0
        %4673 = vmatpush1.xpose.msra.mxu0 0.0
        %4674 = vmatprep.subr.mxu0 0.0
        %4675 = vmatpush1.xpose.msra.mxu0 0.0
        %4676 = vmatprep.subr.mxu0 0.0
        %4677 = vmatpush1.xpose.msra.mxu0 0.0
        %4678 = vmatprep.subr.mxu0 0.0
        %4679 = vmatpush1.xpose.msra.mxu0 0.0
        %4680 = vmatprep.subr.mxu0 0.0
        %4681 = vmatpush1.xpose.msra.mxu0 0.0
        %4682 = vmatprep.subr.mxu0 0.0
        %4683 = vmatpush1.xpose.msra.mxu0 0.0
        %4684 = vmatprep.subr.mxu0 0.0
        %4685 = vmatpush1.xpose.msra.mxu0 0.0
        %4686 = vmatprep.subr.mxu0 0.0
        %4687 = vmatpush1.xpose.msra.mxu0 0.0
        %4688 = vmatprep.subr.mxu0 0.0
        %4689 = vmatpush1.xpose.msra.mxu0 0.0
        %4690 = vmatprep.subr.mxu0 0.0
        %4691 = vmatpush1.xpose.msra.mxu0 0.0
        %4692 = vmatprep.subr.mxu0 0.0
        %4693 = vmatpush1.xpose.msra.mxu0 0.0
        %4694 = vmatprep.subr.mxu0 0.0
        %4695 = vmatpush1.xpose.msra.mxu0 0.0
        %4696 = vmatprep.subr.mxu0 0.0
        %4697 = vmatpush1.xpose.msra.mxu0 0.0
        %4698 = vmatprep.subr.mxu0 0.0
        %4699 = vmatpush1.xpose.msra.mxu0 0.0
        %4700 = vmatprep.subr.mxu0 0.0
        %4701 = vmatpush1.xpose.msra.mxu0 0.0
        %4702 = vmatprep.mubr.f32.mxu0 0.0
        %4703 = vmatmul.mubr.f32.gmra.mrb[0].mxu0 %v4633
        %v4704 = vpop.f32.mrb[0].mxu0
        %v4705 = vadd.f32 0.0, %v4704
        %v4706 = vpop.f32.mrb[0].mxu0
        %4707 = vdwg.mxu0
        %v4709 = vsel %vm1152, %v4453, 0
        %v4712 = vsel %vm1152, %v4541, 0
        %4714 = vmatprep.subr.mxu0 0.0
        %4715 = vmatpush1.xpose.msra.mxu0 %v4712
        %4716 = vmatprep.subr.mxu0 0.0
        %4717 = vmatpush1.xpose.msra.mxu0 0.0
        %4718 = vmatprep.subr.mxu0 0.0
        %4719 = vmatpush1.xpose.msra.mxu0 0.0
        %4720 = vmatprep.subr.mxu0 0.0
        %4721 = vmatpush1.xpose.msra.mxu0 0.0
        %4722 = vmatprep.subr.mxu0 0.0
        %4723 = vmatpush1.xpose.msra.mxu0 0.0
        %4724 = vmatprep.subr.mxu0 0.0
        %4725 = vmatpush1.xpose.msra.mxu0 0.0
        %4726 = vmatprep.subr.mxu0 0.0
        %4727 = vmatpush1.xpose.msra.mxu0 0.0
        %4728 = vmatprep.subr.mxu0 0.0
        %4729 = vmatpush1.xpose.msra.mxu0 0.0
        %4730 = vmatprep.subr.mxu0 0.0
        %4731 = vmatpush1.xpose.msra.mxu0 0.0
        %4732 = vmatprep.subr.mxu0 0.0
        %4733 = vmatpush1.xpose.msra.mxu0 0.0
        %4734 = vmatprep.subr.mxu0 0.0
        %4735 = vmatpush1.xpose.msra.mxu0 0.0
        %4736 = vmatprep.subr.mxu0 0.0
        %4737 = vmatpush1.xpose.msra.mxu0 0.0
        %4738 = vmatprep.subr.mxu0 0.0
        %4739 = vmatpush1.xpose.msra.mxu0 0.0
        %4740 = vmatprep.subr.mxu0 0.0
        %4741 = vmatpush1.xpose.msra.mxu0 0.0
        %4742 = vmatprep.subr.mxu0 0.0
        %4743 = vmatpush1.xpose.msra.mxu0 0.0
        %4744 = vmatprep.subr.mxu0 0.0
        %4745 = vmatpush1.xpose.msra.mxu0 0.0
        %4746 = vmatprep.subr.mxu0 0.0
        %4747 = vmatpush1.xpose.msra.mxu0 0.0
        %4748 = vmatprep.subr.mxu0 0.0
        %4749 = vmatpush1.xpose.msra.mxu0 0.0
        %4750 = vmatprep.subr.mxu0 0.0
        %4751 = vmatpush1.xpose.msra.mxu0 0.0
        %4752 = vmatprep.subr.mxu0 0.0
        %4753 = vmatpush1.xpose.msra.mxu0 0.0
        %4754 = vmatprep.subr.mxu0 0.0
        %4755 = vmatpush1.xpose.msra.mxu0 0.0
        %4756 = vmatprep.subr.mxu0 0.0
        %4757 = vmatpush1.xpose.msra.mxu0 0.0
        %4758 = vmatprep.subr.mxu0 0.0
        %4759 = vmatpush1.xpose.msra.mxu0 0.0
        %4760 = vmatprep.subr.mxu0 0.0
        %4761 = vmatpush1.xpose.msra.mxu0 0.0
        %4762 = vmatprep.subr.mxu0 0.0
        %4763 = vmatpush1.xpose.msra.mxu0 0.0
        %4764 = vmatprep.subr.mxu0 0.0
        %4765 = vmatpush1.xpose.msra.mxu0 0.0
        %4766 = vmatprep.subr.mxu0 0.0
        %4767 = vmatpush1.xpose.msra.mxu0 0.0
        %4768 = vmatprep.subr.mxu0 0.0
        %4769 = vmatpush1.xpose.msra.mxu0 0.0
        %4770 = vmatprep.subr.mxu0 0.0
        %4771 = vmatpush1.xpose.msra.mxu0 0.0
        %4772 = vmatprep.subr.mxu0 0.0
        %4773 = vmatpush1.xpose.msra.mxu0 0.0
        %4774 = vmatprep.subr.mxu0 0.0
        %4775 = vmatpush1.xpose.msra.mxu0 0.0
        %4776 = vmatprep.subr.mxu0 0.0
        %4777 = vmatpush1.xpose.msra.mxu0 0.0
        %4778 = vmatprep.mubr.f32.mxu0 0.0
        %4779 = vmatmul.mubr.f32.gmra.mrb[0].mxu0 %v4709
        %v4780 = vpop.f32.mrb[0].mxu0
        %v4781 = vadd.f32 0.0, %v4780
        %v4782 = vpop.f32.mrb[0].mxu0
        %4783 = vdwg.mxu0
        %v4784 = vmul.f32 %v4705, 0.35355338
        %v4785 = vmul.f32 %v4781, 0.35355338
        %v4786 = vadd.f32 %v4784, %v880
        %v4787 = vadd.f32 %v4785, %v884
        %v4788 = vsel %vm1152, %v4786, -inf
        %4789 = vmax.xlane.f32.xlu0 %v4788
        %v4790 = vpop.xlane.xlu0 %4789
        %v4791 = vsel %vm1152, %v4787, -inf
        %4792 = vmax.xlane.f32.xlu0 %v4791
        %v4793 = vpop.xlane.xlu0 %4792
        %v4794 = vsub.f32 %v4786, %v4790
        %v4795 = vsub.f32 %v4787, %v4793
        %v4796 = vmul.f32 %v4794, 1.442695
        %v4797 = vpow.pop %v4796
        %v4798 = vmul.f32 %v4795, 1.442695
        %v4799 = vpow.pop %v4798
        %v4800 = vsel %vm1152, %v4797, 0.0
        %4801 = vadd.xlane.f32.xlu0 %v4800
        %v4802 = vpop.xlane.xlu0 %4801
        %v4803 = vsel %vm1152, %v4799, 0.0
        %4804 = vadd.xlane.f32.xlu0 %v4803
        %v4805 = vpop.xlane.xlu0 %4804
        %v4806 = vrcp.pop %v4802
        %v4807 = vmul.f32 %v4797, %v4806
        %v4808 = vrcp.pop %v4805
        %v4809 = vmul.f32 %v4799, %v4808
        %v4811 = vsel %vm1152, %v4807, 0
        %4813 = vmatprep.subr.mxu0 0.0
        %4814 = vmatpush1.msra.mxu0 %v4624
        %4815 = vmatprep.subr.mxu0 0.0
        %4816 = vmatpush1.msra.mxu0 0.0
        %4817 = vmatprep.subr.mxu0 0.0
        %4818 = vmatpush1.msra.mxu0 0.0
        %4819 = vmatprep.subr.mxu0 0.0
        %4820 = vmatpush1.msra.mxu0 0.0
        %4821 = vmatprep.subr.mxu0 0.0
        %4822 = vmatpush1.msra.mxu0 0.0
        %4823 = vmatprep.subr.mxu0 0.0
        %4824 = vmatpush1.msra.mxu0 0.0
        %4825 = vmatprep.subr.mxu0 0.0
        %4826 = vmatpush1.msra.mxu0 0.0
        %4827 = vmatprep.subr.mxu0 0.0
        %4828 = vmatpush1.msra.mxu0 0.0
        %4829 = vmatprep.subr.mxu0 0.0
        %4830 = vmatpush1.msra.mxu0 0.0
        %4831 = vmatprep.subr.mxu0 0.0
        %4832 = vmatpush1.msra.mxu0 0.0
        %4833 = vmatprep.subr.mxu0 0.0
        %4834 = vmatpush1.msra.mxu0 0.0
        %4835 = vmatprep.subr.mxu0 0.0
        %4836 = vmatpush1.msra.mxu0 0.0
        %4837 = vmatprep.subr.mxu0 0.0
        %4838 = vmatpush1.msra.mxu0 0.0
        %4839 = vmatprep.subr.mxu0 0.0
        %4840 = vmatpush1.msra.mxu0 0.0
        %4841 = vmatprep.subr.mxu0 0.0
        %4842 = vmatpush1.msra.mxu0 0.0
        %4843 = vmatprep.subr.mxu0 0.0
        %4844 = vmatpush1.msra.mxu0 0.0
        %4845 = vmatprep.subr.mxu0 0.0
        %4846 = vmatpush1.msra.mxu0 0.0
        %4847 = vmatprep.subr.mxu0 0.0
        %4848 = vmatpush1.msra.mxu0 0.0
        %4849 = vmatprep.subr.mxu0 0.0
        %4850 = vmatpush1.msra.mxu0 0.0
        %4851 = vmatprep.subr.mxu0 0.0
        %4852 = vmatpush1.msra.mxu0 0.0
        %4853 = vmatprep.subr.mxu0 0.0
        %4854 = vmatpush1.msra.mxu0 0.0
        %4855 = vmatprep.subr.mxu0 0.0
        %4856 = vmatpush1.msra.mxu0 0.0
        %4857 = vmatprep.subr.mxu0 0.0
        %4858 = vmatpush1.msra.mxu0 0.0
        %4859 = vmatprep.subr.mxu0 0.0
        %4860 = vmatpush1.msra.mxu0 0.0
        %4861 = vmatprep.subr.mxu0 0.0
        %4862 = vmatpush1.msra.mxu0 0.0
        %4863 = vmatprep.subr.mxu0 0.0
        %4864 = vmatpush1.msra.mxu0 0.0
        %4865 = vmatprep.subr.mxu0 0.0
        %4866 = vmatpush1.msra.mxu0 0.0
        %4867 = vmatprep.subr.mxu0 0.0
        %4868 = vmatpush1.msra.mxu0 0.0
        %4869 = vmatprep.subr.mxu0 0.0
        %4870 = vmatpush1.msra.mxu0 0.0
        %4871 = vmatprep.subr.mxu0 0.0
        %4872 = vmatpush1.msra.mxu0 0.0
        %4873 = vmatprep.subr.mxu0 0.0
        %4874 = vmatpush1.msra.mxu0 0.0
        %4875 = vmatprep.subr.mxu0 0.0
        %4876 = vmatpush1.msra.mxu0 0.0
        %4877 = vmatprep.mubr.f32.mxu0 0.0
        %4878 = vmatmul.mubr.f32.gmra.mrb[0].mxu0 %v4811
        %v4879 = vpop.f32.mrb[0].mxu0
        %v4880 = vadd.f32 0.0, %v4879
        %v4881 = vpop.f32.mrb[0].mxu0
        %4882 = vdwg.mxu0
        %v4884 = vsel %vm1152, %v4809, 0
        %4886 = vmatprep.subr.mxu0 0.0
        %4887 = vmatpush1.msra.mxu0 %v4629
        %4888 = vmatprep.subr.mxu0 0.0
        %4889 = vmatpush1.msra.mxu0 0.0
        %4890 = vmatprep.subr.mxu0 0.0
        %4891 = vmatpush1.msra.mxu0 0.0
        %4892 = vmatprep.subr.mxu0 0.0
        %4893 = vmatpush1.msra.mxu0 0.0
        %4894 = vmatprep.subr.mxu0 0.0
        %4895 = vmatpush1.msra.mxu0 0.0
        %4896 = vmatprep.subr.mxu0 0.0
        %4897 = vmatpush1.msra.mxu0 0.0
        %4898 = vmatprep.subr.mxu0 0.0
        %4899 = vmatpush1.msra.mxu0 0.0
        %4900 = vmatprep.subr.mxu0 0.0
        %4901 = vmatpush1.msra.mxu0 0.0
        %4902 = vmatprep.subr.mxu0 0.0
        %4903 = vmatpush1.msra.mxu0 0.0
        %4904 = vmatprep.subr.mxu0 0.0
        %4905 = vmatpush1.msra.mxu0 0.0
        %4906 = vmatprep.subr.mxu0 0.0
        %4907 = vmatpush1.msra.mxu0 0.0
        %4908 = vmatprep.subr.mxu0 0.0
        %4909 = vmatpush1.msra.mxu0 0.0
        %4910 = vmatprep.subr.mxu0 0.0
        %4911 = vmatpush1.msra.mxu0 0.0
        %4912 = vmatprep.subr.mxu0 0.0
        %4913 = vmatpush1.msra.mxu0 0.0
        %4914 = vmatprep.subr.mxu0 0.0
        %4915 = vmatpush1.msra.mxu0 0.0
        %4916 = vmatprep.subr.mxu0 0.0
        %4917 = vmatpush1.msra.mxu0 0.0
        %4918 = vmatprep.subr.mxu0 0.0
        %4919 = vmatpush1.msra.mxu0 0.0
        %4920 = vmatprep.subr.mxu0 0.0
        %4921 = vmatpush1.msra.mxu0 0.0
        %4922 = vmatprep.subr.mxu0 0.0
        %4923 = vmatpush1.msra.mxu0 0.0
        %4924 = vmatprep.subr.mxu0 0.0
        %4925 = vmatpush1.msra.mxu0 0.0
        %4926 = vmatprep.subr.mxu0 0.0
        %4927 = vmatpush1.msra.mxu0 0.0
        %4928 = vmatprep.subr.mxu0 0.0
        %4929 = vmatpush1.msra.mxu0 0.0
        %4930 = vmatprep.subr.mxu0 0.0
        %4931 = vmatpush1.msra.mxu0 0.0
        %4932 = vmatprep.subr.mxu0 0.0
        %4933 = vmatpush1.msra.mxu0 0.0
        %4934 = vmatprep.subr.mxu0 0.0
        %4935 = vmatpush1.msra.mxu0 0.0
        %4936 = vmatprep.subr.mxu0 0.0
        %4937 = vmatpush1.msra.mxu0 0.0
        %4938 = vmatprep.subr.mxu0 0.0
        %4939 = vmatpush1.msra.mxu0 0.0
        %4940 = vmatprep.subr.mxu0 0.0
        %4941 = vmatpush1.msra.mxu0 0.0
        %4942 = vmatprep.subr.mxu0 0.0
        %4943 = vmatpush1.msra.mxu0 0.0
        %4944 = vmatprep.subr.mxu0 0.0
        %4945 = vmatpush1.msra.mxu0 0.0
        %4946 = vmatprep.subr.mxu0 0.0
        %4947 = vmatpush1.msra.mxu0 0.0
        %4948 = vmatprep.subr.mxu0 0.0
        %4949 = vmatpush1.msra.mxu0 0.0
        %4950 = vmatprep.mubr.f32.mxu0 0.0
        %4951 = vmatmul.mubr.f32.gmra.mrb[0].mxu0 %v4884
        %v4952 = vpop.f32.mrb[0].mxu0
        %v4953 = vadd.f32 0.0, %v4952
        %v4954 = vpop.f32.mrb[0].mxu0
        %4955 = vdwg.mxu0
        %4956 = vrot.lane.b32.xlu0 %v4448, 120
        %v4957 = vpop.permute.xlu0 %4956
        %4958 = vrot.lane.b32.xlu0 %v4536, 120
        %v4959 = vpop.permute.xlu0 %4958
        %v4960 = vsel %vm1152, %v4957, 0
        %v4962 = vsel %vm1152, %v4959, 0
        %4964 = vmatprep.subr.mxu0 0.0
        %4965 = vmatpush1.xpose.msra.mxu0 %v4962
        %4966 = vmatprep.subr.mxu0 0.0
        %4967 = vmatpush1.xpose.msra.mxu0 0.0
        %4968 = vmatprep.subr.mxu0 0.0
        %4969 = vmatpush1.xpose.msra.mxu0 0.0
        %4970 = vmatprep.subr.mxu0 0.0
        %4971 = vmatpush1.xpose.msra.mxu0 0.0
        %4972 = vmatprep.subr.mxu0 0.0
        %4973 = vmatpush1.xpose.msra.mxu0 0.0
        %4974 = vmatprep.subr.mxu0 0.0
        %4975 = vmatpush1.xpose.msra.mxu0 0.0
        %4976 = vmatprep.subr.mxu0 0.0
        %4977 = vmatpush1.xpose.msra.mxu0 0.0
        %4978 = vmatprep.subr.mxu0 0.0
        %4979 = vmatpush1.xpose.msra.mxu0 0.0
        %4980 = vmatprep.subr.mxu0 0.0
        %4981 = vmatpush1.xpose.msra.mxu0 0.0
        %4982 = vmatprep.subr.mxu0 0.0
        %4983 = vmatpush1.xpose.msra.mxu0 0.0
        %4984 = vmatprep.subr.mxu0 0.0
        %4985 = vmatpush1.xpose.msra.mxu0 0.0
        %4986 = vmatprep.subr.mxu0 0.0
        %4987 = vmatpush1.xpose.msra.mxu0 0.0
        %4988 = vmatprep.subr.mxu0 0.0
        %4989 = vmatpush1.xpose.msra.mxu0 0.0
        %4990 = vmatprep.subr.mxu0 0.0
        %4991 = vmatpush1.xpose.msra.mxu0 0.0
        %4992 = vmatprep.subr.mxu0 0.0
        %4993 = vmatpush1.xpose.msra.mxu0 0.0
        %4994 = vmatprep.subr.mxu0 0.0
        %4995 = vmatpush1.xpose.msra.mxu0 0.0
        %4996 = vmatprep.subr.mxu0 0.0
        %4997 = vmatpush1.xpose.msra.mxu0 0.0
        %4998 = vmatprep.subr.mxu0 0.0
        %4999 = vmatpush1.xpose.msra.mxu0 0.0
        %5000 = vmatprep.subr.mxu0 0.0
        %5001 = vmatpush1.xpose.msra.mxu0 0.0
        %5002 = vmatprep.subr.mxu0 0.0
        %5003 = vmatpush1.xpose.msra.mxu0 0.0
        %5004 = vmatprep.subr.mxu0 0.0
        %5005 = vmatpush1.xpose.msra.mxu0 0.0
        %5006 = vmatprep.subr.mxu0 0.0
        %5007 = vmatpush1.xpose.msra.mxu0 0.0
        %5008 = vmatprep.subr.mxu0 0.0
        %5009 = vmatpush1.xpose.msra.mxu0 0.0
        %5010 = vmatprep.subr.mxu0 0.0
        %5011 = vmatpush1.xpose.msra.mxu0 0.0
        %5012 = vmatprep.subr.mxu0 0.0
        %5013 = vmatpush1.xpose.msra.mxu0 0.0
        %5014 = vmatprep.subr.mxu0 0.0
        %5015 = vmatpush1.xpose.msra.mxu0 0.0
        %5016 = vmatprep.subr.mxu0 0.0
        %5017 = vmatpush1.xpose.msra.mxu0 0.0
        %5018 = vmatprep.subr.mxu0 0.0
        %5019 = vmatpush1.xpose.msra.mxu0 0.0
        %5020 = vmatprep.subr.mxu0 0.0
        %5021 = vmatpush1.xpose.msra.mxu0 0.0
        %5022 = vmatprep.subr.mxu0 0.0
        %5023 = vmatpush1.xpose.msra.mxu0 0.0
        %5024 = vmatprep.subr.mxu0 0.0
        %5025 = vmatpush1.xpose.msra.mxu0 0.0
        %5026 = vmatprep.subr.mxu0 0.0
        %5027 = vmatpush1.xpose.msra.mxu0 0.0
        %5028 = vmatprep.mubr.f32.mxu0 0.0
        %5029 = vmatmul.mubr.f32.gmra.mrb[0].mxu0 %v4960
        %v5030 = vpop.f32.mrb[0].mxu0
        %v5031 = vadd.f32 0.0, %v5030
        %v5032 = vpop.f32.mrb[0].mxu0
        %5033 = vdwg.mxu0
        %5034 = vrot.lane.b32.xlu0 %v4453, 120
        %v5035 = vpop.permute.xlu0 %5034
        %5036 = vrot.lane.b32.xlu0 %v4541, 120
        %v5037 = vpop.permute.xlu0 %5036
        %v5038 = vsel %vm1152, %v5035, 0
        %v5040 = vsel %vm1152, %v5037, 0
        %5042 = vmatprep.subr.mxu0 0.0
        %5043 = vmatpush1.xpose.msra.mxu0 %v5040
        %5044 = vmatprep.subr.mxu0 0.0
        %5045 = vmatpush1.xpose.msra.mxu0 0.0
        %5046 = vmatprep.subr.mxu0 0.0
        %5047 = vmatpush1.xpose.msra.mxu0 0.0
        %5048 = vmatprep.subr.mxu0 0.0
        %5049 = vmatpush1.xpose.msra.mxu0 0.0
        %5050 = vmatprep.subr.mxu0 0.0
        %5051 = vmatpush1.xpose.msra.mxu0 0.0
        %5052 = vmatprep.subr.mxu0 0.0
        %5053 = vmatpush1.xpose.msra.mxu0 0.0
        %5054 = vmatprep.subr.mxu0 0.0
        %5055 = vmatpush1.xpose.msra.mxu0 0.0
        %5056 = vmatprep.subr.mxu0 0.0
        %5057 = vmatpush1.xpose.msra.mxu0 0.0
        %5058 = vmatprep.subr.mxu0 0.0
        %5059 = vmatpush1.xpose.msra.mxu0 0.0
        %5060 = vmatprep.subr.mxu0 0.0
        %5061 = vmatpush1.xpose.msra.mxu0 0.0
        %5062 = vmatprep.subr.mxu0 0.0
        %5063 = vmatpush1.xpose.msra.mxu0 0.0
        %5064 = vmatprep.subr.mxu0 0.0
        %5065 = vmatpush1.xpose.msra.mxu0 0.0
        %5066 = vmatprep.subr.mxu0 0.0
        %5067 = vmatpush1.xpose.msra.mxu0 0.0
        %5068 = vmatprep.subr.mxu0 0.0
        %5069 = vmatpush1.xpose.msra.mxu0 0.0
        %5070 = vmatprep.subr.mxu0 0.0
        %5071 = vmatpush1.xpose.msra.mxu0 0.0
        %5072 = vmatprep.subr.mxu0 0.0
        %5073 = vmatpush1.xpose.msra.mxu0 0.0
        %5074 = vmatprep.subr.mxu0 0.0
        %5075 = vmatpush1.xpose.msra.mxu0 0.0
        %5076 = vmatprep.subr.mxu0 0.0
        %5077 = vmatpush1.xpose.msra.mxu0 0.0
        %5078 = vmatprep.subr.mxu0 0.0
        %5079 = vmatpush1.xpose.msra.mxu0 0.0
        %5080 = vmatprep.subr.mxu0 0.0
        %5081 = vmatpush1.xpose.msra.mxu0 0.0
        %5082 = vmatprep.subr.mxu0 0.0
        %5083 = vmatpush1.xpose.msra.mxu0 0.0
        %5084 = vmatprep.subr.mxu0 0.0
        %5085 = vmatpush1.xpose.msra.mxu0 0.0
        %5086 = vmatprep.subr.mxu0 0.0
        %5087 = vmatpush1.xpose.msra.mxu0 0.0
        %5088 = vmatprep.subr.mxu0 0.0
        %5089 = vmatpush1.xpose.msra.mxu0 0.0
        %5090 = vmatprep.subr.mxu0 0.0
        %5091 = vmatpush1.xpose.msra.mxu0 0.0
        %5092 = vmatprep.subr.mxu0 0.0
        %5093 = vmatpush1.xpose.msra.mxu0 0.0
        %5094 = vmatprep.subr.mxu0 0.0
        %5095 = vmatpush1.xpose.msra.mxu0 0.0
        %5096 = vmatprep.subr.mxu0 0.0
        %5097 = vmatpush1.xpose.msra.mxu0 0.0
        %5098 = vmatprep.subr.mxu0 0.0
        %5099 = vmatpush1.xpose.msra.mxu0 0.0
        %5100 = vmatprep.subr.mxu0 0.0
        %5101 = vmatpush1.xpose.msra.mxu0 0.0
        %5102 = vmatprep.subr.mxu0 0.0
        %5103 = vmatpush1.xpose.msra.mxu0 0.0
        %5104 = vmatprep.subr.mxu0 0.0
        %5105 = vmatpush1.xpose.msra.mxu0 0.0
        %5106 = vmatprep.mubr.f32.mxu0 0.0
        %5107 = vmatmul.mubr.f32.gmra.mrb[0].mxu0 %v5038
        %v5108 = vpop.f32.mrb[0].mxu0
        %v5109 = vadd.f32 0.0, %v5108
        %v5110 = vpop.f32.mrb[0].mxu0
        %5111 = vdwg.mxu0
        %v5112 = vmul.f32 %v5031, 0.35355338
        %v5113 = vmul.f32 %v5109, 0.35355338
        %v5114 = vadd.f32 %v5112, %v880
        %v5115 = vadd.f32 %v5113, %v884
        %v5116 = vsel %vm1152, %v5114, -inf
        %5117 = vmax.xlane.f32.xlu0 %v5116
        %v5118 = vpop.xlane.xlu0 %5117
        %v5119 = vsel %vm1152, %v5115, -inf
        %5120 = vmax.xlane.f32.xlu0 %v5119
        %v5121 = vpop.xlane.xlu0 %5120
        %v5122 = vsub.f32 %v5114, %v5118
        %v5123 = vsub.f32 %v5115, %v5121
        %v5124 = vmul.f32 %v5122, 1.442695
        %v5125 = vpow.pop %v5124
        %v5126 = vmul.f32 %v5123, 1.442695
        %v5127 = vpow.pop %v5126
        %v5128 = vsel %vm1152, %v5125, 0.0
        %5129 = vadd.xlane.f32.xlu0 %v5128
        %v5130 = vpop.xlane.xlu0 %5129
        %v5131 = vsel %vm1152, %v5127, 0.0
        %5132 = vadd.xlane.f32.xlu0 %v5131
        %v5133 = vpop.xlane.xlu0 %5132
        %v5134 = vrcp.pop %v5130
        %v5135 = vmul.f32 %v5125, %v5134
        %v5136 = vrcp.pop %v5133
        %v5137 = vmul.f32 %v5127, %v5136
        %5139 = vrot.lane.b32.xlu0 %v4624, 120
        %v5140 = vpop.permute.xlu0 %5139
        %v5143 = vsel %vm1152, %v5135, 0
        %5145 = vmatprep.subr.mxu0 0.0
        %5146 = vmatpush1.msra.mxu0 %v5140
        %5147 = vmatprep.subr.mxu0 0.0
        %5148 = vmatpush1.msra.mxu0 0.0
        %5149 = vmatprep.subr.mxu0 0.0
        %5150 = vmatpush1.msra.mxu0 0.0
        %5151 = vmatprep.subr.mxu0 0.0
        %5152 = vmatpush1.msra.mxu0 0.0
        %5153 = vmatprep.subr.mxu0 0.0
        %5154 = vmatpush1.msra.mxu0 0.0
        %5155 = vmatprep.subr.mxu0 0.0
        %5156 = vmatpush1.msra.mxu0 0.0
        %5157 = vmatprep.subr.mxu0 0.0
        %5158 = vmatpush1.msra.mxu0 0.0
        %5159 = vmatprep.subr.mxu0 0.0
        %5160 = vmatpush1.msra.mxu0 0.0
        %5161 = vmatprep.subr.mxu0 0.0
        %5162 = vmatpush1.msra.mxu0 0.0
        %5163 = vmatprep.subr.mxu0 0.0
        %5164 = vmatpush1.msra.mxu0 0.0
        %5165 = vmatprep.subr.mxu0 0.0
        %5166 = vmatpush1.msra.mxu0 0.0
        %5167 = vmatprep.subr.mxu0 0.0
        %5168 = vmatpush1.msra.mxu0 0.0
        %5169 = vmatprep.subr.mxu0 0.0
        %5170 = vmatpush1.msra.mxu0 0.0
        %5171 = vmatprep.subr.mxu0 0.0
        %5172 = vmatpush1.msra.mxu0 0.0
        %5173 = vmatprep.subr.mxu0 0.0
        %5174 = vmatpush1.msra.mxu0 0.0
        %5175 = vmatprep.subr.mxu0 0.0
        %5176 = vmatpush1.msra.mxu0 0.0
        %5177 = vmatprep.subr.mxu0 0.0
        %5178 = vmatpush1.msra.mxu0 0.0
        %5179 = vmatprep.subr.mxu0 0.0
        %5180 = vmatpush1.msra.mxu0 0.0
        %5181 = vmatprep.subr.mxu0 0.0
        %5182 = vmatpush1.msra.mxu0 0.0
        %5183 = vmatprep.subr.mxu0 0.0
        %5184 = vmatpush1.msra.mxu0 0.0
        %5185 = vmatprep.subr.mxu0 0.0
        %5186 = vmatpush1.msra.mxu0 0.0
        %5187 = vmatprep.subr.mxu0 0.0
        %5188 = vmatpush1.msra.mxu0 0.0
        %5189 = vmatprep.subr.mxu0 0.0
        %5190 = vmatpush1.msra.mxu0 0.0
        %5191 = vmatprep.subr.mxu0 0.0
        %5192 = vmatpush1.msra.mxu0 0.0
        %5193 = vmatprep.subr.mxu0 0.0
        %5194 = vmatpush1.msra.mxu0 0.0
        %5195 = vmatprep.subr.mxu0 0.0
        %5196 = vmatpush1.msra.mxu0 0.0
        %5197 = vmatprep.subr.mxu0 0.0
        %5198 = vmatpush1.msra.mxu0 0.0
        %5199 = vmatprep.subr.mxu0 0.0
        %5200 = vmatpush1.msra.mxu0 0.0
        %5201 = vmatprep.subr.mxu0 0.0
        %5202 = vmatpush1.msra.mxu0 0.0
        %5203 = vmatprep.subr.mxu0 0.0
        %5204 = vmatpush1.msra.mxu0 0.0
        %5205 = vmatprep.subr.mxu0 0.0
        %5206 = vmatpush1.msra.mxu0 0.0
        %5207 = vmatprep.subr.mxu0 0.0
        %5208 = vmatpush1.msra.mxu0 0.0
        %5209 = vmatprep.mubr.f32.mxu0 0.0
        %5210 = vmatmul.mubr.f32.gmra.mrb[0].mxu0 %v5143
        %v5211 = vpop.f32.mrb[0].mxu0
        %v5212 = vadd.f32 0.0, %v5211
        %v5213 = vpop.f32.mrb[0].mxu0
        %5214 = vdwg.mxu0
        %5216 = vrot.lane.b32.xlu0 %v4629, 120
        %v5217 = vpop.permute.xlu0 %5216
        %v5220 = vsel %vm1152, %v5137, 0
        %5222 = vmatprep.subr.mxu0 0.0
        %5223 = vmatpush1.msra.mxu0 %v5217
        %5224 = vmatprep.subr.mxu0 0.0
        %5225 = vmatpush1.msra.mxu0 0.0
        %5226 = vmatprep.subr.mxu0 0.0
        %5227 = vmatpush1.msra.mxu0 0.0
        %5228 = vmatprep.subr.mxu0 0.0
        %5229 = vmatpush1.msra.mxu0 0.0
        %5230 = vmatprep.subr.mxu0 0.0
        %5231 = vmatpush1.msra.mxu0 0.0
        %5232 = vmatprep.subr.mxu0 0.0
        %5233 = vmatpush1.msra.mxu0 0.0
        %5234 = vmatprep.subr.mxu0 0.0
        %5235 = vmatpush1.msra.mxu0 0.0
        %5236 = vmatprep.subr.mxu0 0.0
        %5237 = vmatpush1.msra.mxu0 0.0
        %5238 = vmatprep.subr.mxu0 0.0
        %5239 = vmatpush1.msra.mxu0 0.0
        %5240 = vmatprep.subr.mxu0 0.0
        %5241 = vmatpush1.msra.mxu0 0.0
        %5242 = vmatprep.subr.mxu0 0.0
        %5243 = vmatpush1.msra.mxu0 0.0
        %5244 = vmatprep.subr.mxu0 0.0
        %5245 = vmatpush1.msra.mxu0 0.0
        %5246 = vmatprep.subr.mxu0 0.0
        %5247 = vmatpush1.msra.mxu0 0.0
        %5248 = vmatprep.subr.mxu0 0.0
        %5249 = vmatpush1.msra.mxu0 0.0
        %5250 = vmatprep.subr.mxu0 0.0
        %5251 = vmatpush1.msra.mxu0 0.0
        %5252 = vmatprep.subr.mxu0 0.0
        %5253 = vmatpush1.msra.mxu0 0.0
        %5254 = vmatprep.subr.mxu0 0.0
        %5255 = vmatpush1.msra.mxu0 0.0
        %5256 = vmatprep.subr.mxu0 0.0
        %5257 = vmatpush1.msra.mxu0 0.0
        %5258 = vmatprep.subr.mxu0 0.0
        %5259 = vmatpush1.msra.mxu0 0.0
        %5260 = vmatprep.subr.mxu0 0.0
        %5261 = vmatpush1.msra.mxu0 0.0
        %5262 = vmatprep.subr.mxu0 0.0
        %5263 = vmatpush1.msra.mxu0 0.0
        %5264 = vmatprep.subr.mxu0 0.0
        %5265 = vmatpush1.msra.mxu0 0.0
        %5266 = vmatprep.subr.mxu0 0.0
        %5267 = vmatpush1.msra.mxu0 0.0
        %5268 = vmatprep.subr.mxu0 0.0
        %5269 = vmatpush1.msra.mxu0 0.0
        %5270 = vmatprep.subr.mxu0 0.0
        %5271 = vmatpush1.msra.mxu0 0.0
        %5272 = vmatprep.subr.mxu0 0.0
        %5273 = vmatpush1.msra.mxu0 0.0
        %5274 = vmatprep.subr.mxu0 0.0
        %5275 = vmatpush1.msra.mxu0 0.0
        %5276 = vmatprep.subr.mxu0 0.0
        %5277 = vmatpush1.msra.mxu0 0.0
        %5278 = vmatprep.subr.mxu0 0.0
        %5279 = vmatpush1.msra.mxu0 0.0
        %5280 = vmatprep.subr.mxu0 0.0
        %5281 = vmatpush1.msra.mxu0 0.0
        %5282 = vmatprep.subr.mxu0 0.0
        %5283 = vmatpush1.msra.mxu0 0.0
        %5284 = vmatprep.subr.mxu0 0.0
        %5285 = vmatpush1.msra.mxu0 0.0
        %5286 = vmatprep.mubr.f32.mxu0 0.0
        %5287 = vmatmul.mubr.f32.gmra.mrb[0].mxu0 %v5220
        %v5288 = vpop.f32.mrb[0].mxu0
        %v5289 = vadd.f32 0.0, %v5288
        %v5290 = vpop.f32.mrb[0].mxu0
        %5291 = vdwg.mxu0
        %5292 = vrot.lane.b32.xlu0 %v4448, 112
        %v5293 = vpop.permute.xlu0 %5292
        %5294 = vrot.lane.b32.xlu0 %v4536, 112
        %v5295 = vpop.permute.xlu0 %5294
        %v5296 = vsel %vm1152, %v5293, 0
        %v5298 = vsel %vm1152, %v5295, 0
        %5300 = vmatprep.subr.mxu0 0.0
        %5301 = vmatpush1.xpose.msra.mxu0 %v5298
        %5302 = vmatprep.subr.mxu0 0.0
        %5303 = vmatpush1.xpose.msra.mxu0 0.0
        %5304 = vmatprep.subr.mxu0 0.0
        %5305 = vmatpush1.xpose.msra.mxu0 0.0
        %5306 = vmatprep.subr.mxu0 0.0
        %5307 = vmatpush1.xpose.msra.mxu0 0.0
        %5308 = vmatprep.subr.mxu0 0.0
        %5309 = vmatpush1.xpose.msra.mxu0 0.0
        %5310 = vmatprep.subr.mxu0 0.0
        %5311 = vmatpush1.xpose.msra.mxu0 0.0
        %5312 = vmatprep.subr.mxu0 0.0
        %5313 = vmatpush1.xpose.msra.mxu0 0.0
        %5314 = vmatprep.subr.mxu0 0.0
        %5315 = vmatpush1.xpose.msra.mxu0 0.0
        %5316 = vmatprep.subr.mxu0 0.0
        %5317 = vmatpush1.xpose.msra.mxu0 0.0
        %5318 = vmatprep.subr.mxu0 0.0
        %5319 = vmatpush1.xpose.msra.mxu0 0.0
        %5320 = vmatprep.subr.mxu0 0.0
        %5321 = vmatpush1.xpose.msra.mxu0 0.0
        %5322 = vmatprep.subr.mxu0 0.0
        %5323 = vmatpush1.xpose.msra.mxu0 0.0
        %5324 = vmatprep.subr.mxu0 0.0
        %5325 = vmatpush1.xpose.msra.mxu0 0.0
        %5326 = vmatprep.subr.mxu0 0.0
        %5327 = vmatpush1.xpose.msra.mxu0 0.0
        %5328 = vmatprep.subr.mxu0 0.0
        %5329 = vmatpush1.xpose.msra.mxu0 0.0
        %5330 = vmatprep.subr.mxu0 0.0
        %5331 = vmatpush1.xpose.msra.mxu0 0.0
        %5332 = vmatprep.subr.mxu0 0.0
        %5333 = vmatpush1.xpose.msra.mxu0 0.0
        %5334 = vmatprep.subr.mxu0 0.0
        %5335 = vmatpush1.xpose.msra.mxu0 0.0
        %5336 = vmatprep.subr.mxu0 0.0
        %5337 = vmatpush1.xpose.msra.mxu0 0.0
        %5338 = vmatprep.subr.mxu0 0.0
        %5339 = vmatpush1.xpose.msra.mxu0 0.0
        %5340 = vmatprep.subr.mxu0 0.0
        %5341 = vmatpush1.xpose.msra.mxu0 0.0
        %5342 = vmatprep.subr.mxu0 0.0
        %5343 = vmatpush1.xpose.msra.mxu0 0.0
        %5344 = vmatprep.subr.mxu0 0.0
        %5345 = vmatpush1.xpose.msra.mxu0 0.0
        %5346 = vmatprep.subr.mxu0 0.0
        %5347 = vmatpush1.xpose.msra.mxu0 0.0
        %5348 = vmatprep.subr.mxu0 0.0
        %5349 = vmatpush1.xpose.msra.mxu0 0.0
        %5350 = vmatprep.subr.mxu0 0.0
        %5351 = vmatpush1.xpose.msra.mxu0 0.0
        %5352 = vmatprep.subr.mxu0 0.0
        %5353 = vmatpush1.xpose.msra.mxu0 0.0
        %5354 = vmatprep.subr.mxu0 0.0
        %5355 = vmatpush1.xpose.msra.mxu0 0.0
        %5356 = vmatprep.subr.mxu0 0.0
        %5357 = vmatpush1.xpose.msra.mxu0 0.0
        %5358 = vmatprep.subr.mxu0 0.0
        %5359 = vmatpush1.xpose.msra.mxu0 0.0
        %5360 = vmatprep.subr.mxu0 0.0
        %5361 = vmatpush1.xpose.msra.mxu0 0.0
        %5362 = vmatprep.subr.mxu0 0.0
        %5363 = vmatpush1.xpose.msra.mxu0 0.0
        %5364 = vmatprep.mubr.f32.mxu0 0.0
        %5365 = vmatmul.mubr.f32.gmra.mrb[0].mxu0 %v5296
        %v5366 = vpop.f32.mrb[0].mxu0
        %v5367 = vadd.f32 0.0, %v5366
        %v5368 = vpop.f32.mrb[0].mxu0
        %5369 = vdwg.mxu0
        %5370 = vrot.lane.b32.xlu0 %v4453, 112
        %v5371 = vpop.permute.xlu0 %5370
        %5372 = vrot.lane.b32.xlu0 %v4541, 112
        %v5373 = vpop.permute.xlu0 %5372
        %v5374 = vsel %vm1152, %v5371, 0
        %v5376 = vsel %vm1152, %v5373, 0
        %5378 = vmatprep.subr.mxu0 0.0
        %5379 = vmatpush1.xpose.msra.mxu0 %v5376
        %5380 = vmatprep.subr.mxu0 0.0
        %5381 = vmatpush1.xpose.msra.mxu0 0.0
        %5382 = vmatprep.subr.mxu0 0.0
        %5383 = vmatpush1.xpose.msra.mxu0 0.0
        %5384 = vmatprep.subr.mxu0 0.0
        %5385 = vmatpush1.xpose.msra.mxu0 0.0
        %5386 = vmatprep.subr.mxu0 0.0
        %5387 = vmatpush1.xpose.msra.mxu0 0.0
        %5388 = vmatprep.subr.mxu0 0.0
        %5389 = vmatpush1.xpose.msra.mxu0 0.0
        %5390 = vmatprep.subr.mxu0 0.0
        %5391 = vmatpush1.xpose.msra.mxu0 0.0
        %5392 = vmatprep.subr.mxu0 0.0
        %5393 = vmatpush1.xpose.msra.mxu0 0.0
        %5394 = vmatprep.subr.mxu0 0.0
        %5395 = vmatpush1.xpose.msra.mxu0 0.0
        %5396 = vmatprep.subr.mxu0 0.0
        %5397 = vmatpush1.xpose.msra.mxu0 0.0
        %5398 = vmatprep.subr.mxu0 0.0
        %5399 = vmatpush1.xpose.msra.mxu0 0.0
        %5400 = vmatprep.subr.mxu0 0.0
        %5401 = vmatpush1.xpose.msra.mxu0 0.0
        %5402 = vmatprep.subr.mxu0 0.0
        %5403 = vmatpush1.xpose.msra.mxu0 0.0
        %5404 = vmatprep.subr.mxu0 0.0
        %5405 = vmatpush1.xpose.msra.mxu0 0.0
        %5406 = vmatprep.subr.mxu0 0.0
        %5407 = vmatpush1.xpose.msra.mxu0 0.0
        %5408 = vmatprep.subr.mxu0 0.0
        %5409 = vmatpush1.xpose.msra.mxu0 0.0
        %5410 = vmatprep.subr.mxu0 0.0
        %5411 = vmatpush1.xpose.msra.mxu0 0.0
        %5412 = vmatprep.subr.mxu0 0.0
        %5413 = vmatpush1.xpose.msra.mxu0 0.0
        %5414 = vmatprep.subr.mxu0 0.0
        %5415 = vmatpush1.xpose.msra.mxu0 0.0
        %5416 = vmatprep.subr.mxu0 0.0
        %5417 = vmatpush1.xpose.msra.mxu0 0.0
        %5418 = vmatprep.subr.mxu0 0.0
        %5419 = vmatpush1.xpose.msra.mxu0 0.0
        %5420 = vmatprep.subr.mxu0 0.0
        %5421 = vmatpush1.xpose.msra.mxu0 0.0
        %5422 = vmatprep.subr.mxu0 0.0
        %5423 = vmatpush1.xpose.msra.mxu0 0.0
        %5424 = vmatprep.subr.mxu0 0.0
        %5425 = vmatpush1.xpose.msra.mxu0 0.0
        %5426 = vmatprep.subr.mxu0 0.0
        %5427 = vmatpush1.xpose.msra.mxu0 0.0
        %5428 = vmatprep.subr.mxu0 0.0
        %5429 = vmatpush1.xpose.msra.mxu0 0.0
        %5430 = vmatprep.subr.mxu0 0.0
        %5431 = vmatpush1.xpose.msra.mxu0 0.0
        %5432 = vmatprep.subr.mxu0 0.0
        %5433 = vmatpush1.xpose.msra.mxu0 0.0
        %5434 = vmatprep.subr.mxu0 0.0
        %5435 = vmatpush1.xpose.msra.mxu0 0.0
        %5436 = vmatprep.subr.mxu0 0.0
        %5437 = vmatpush1.xpose.msra.mxu0 0.0
        %5438 = vmatprep.subr.mxu0 0.0
        %5439 = vmatpush1.xpose.msra.mxu0 0.0
        %5440 = vmatprep.subr.mxu0 0.0
        %5441 = vmatpush1.xpose.msra.mxu0 0.0
        %5442 = vmatprep.mubr.f32.mxu0 0.0
        %5443 = vmatmul.mubr.f32.gmra.mrb[0].mxu0 %v5374
        %v5444 = vpop.f32.mrb[0].mxu0
        %v5445 = vadd.f32 0.0, %v5444
        %v5446 = vpop.f32.mrb[0].mxu0
        %5447 = vdwg.mxu0
        %v5448 = vmul.f32 %v5367, 0.35355338
        %v5449 = vmul.f32 %v5445, 0.35355338
        %v5450 = vadd.f32 %v5448, %v880
        %v5451 = vadd.f32 %v5449, %v884
        %v5452 = vsel %vm1152, %v5450, -inf
        %5453 = vmax.xlane.f32.xlu0 %v5452
        %v5454 = vpop.xlane.xlu0 %5453
        %v5455 = vsel %vm1152, %v5451, -inf
        %5456 = vmax.xlane.f32.xlu0 %v5455
        %v5457 = vpop.xlane.xlu0 %5456
        %v5458 = vsub.f32 %v5450, %v5454
        %v5459 = vsub.f32 %v5451, %v5457
        %v5460 = vmul.f32 %v5458, 1.442695
        %v5461 = vpow.pop %v5460
        %v5462 = vmul.f32 %v5459, 1.442695
        %v5463 = vpow.pop %v5462
        %v5464 = vsel %vm1152, %v5461, 0.0
        %5465 = vadd.xlane.f32.xlu0 %v5464
        %v5466 = vpop.xlane.xlu0 %5465
        %v5467 = vsel %vm1152, %v5463, 0.0
        %5468 = vadd.xlane.f32.xlu0 %v5467
        %v5469 = vpop.xlane.xlu0 %5468
        %v5470 = vrcp.pop %v5466
        %v5471 = vmul.f32 %v5461, %v5470
        %v5472 = vrcp.pop %v5469
        %v5473 = vmul.f32 %v5463, %v5472
        %5474 = vrot.lane.b32.xlu0 %v4624, 112
        %v5475 = vpop.permute.xlu0 %5474
        %v5478 = vsel %vm1152, %v5471, 0
        %5480 = vmatprep.subr.mxu0 0.0
        %5481 = vmatpush1.msra.mxu0 %v5475
        %5482 = vmatprep.subr.mxu0 0.0
        %5483 = vmatpush1.msra.mxu0 0.0
        %5484 = vmatprep.subr.mxu0 0.0
        %5485 = vmatpush1.msra.mxu0 0.0
        %5486 = vmatprep.subr.mxu0 0.0
        %5487 = vmatpush1.msra.mxu0 0.0
        %5488 = vmatprep.subr.mxu0 0.0
        %5489 = vmatpush1.msra.mxu0 0.0
        %5490 = vmatprep.subr.mxu0 0.0
        %5491 = vmatpush1.msra.mxu0 0.0
        %5492 = vmatprep.subr.mxu0 0.0
        %5493 = vmatpush1.msra.mxu0 0.0
        %5494 = vmatprep.subr.mxu0 0.0
        %5495 = vmatpush1.msra.mxu0 0.0
        %5496 = vmatprep.subr.mxu0 0.0
        %5497 = vmatpush1.msra.mxu0 0.0
        %5498 = vmatprep.subr.mxu0 0.0
        %5499 = vmatpush1.msra.mxu0 0.0
        %5500 = vmatprep.subr.mxu0 0.0
        %5501 = vmatpush1.msra.mxu0 0.0
        %5502 = vmatprep.subr.mxu0 0.0
        %5503 = vmatpush1.msra.mxu0 0.0
        %5504 = vmatprep.subr.mxu0 0.0
        %5505 = vmatpush1.msra.mxu0 0.0
        %5506 = vmatprep.subr.mxu0 0.0
        %5507 = vmatpush1.msra.mxu0 0.0
        %5508 = vmatprep.subr.mxu0 0.0
        %5509 = vmatpush1.msra.mxu0 0.0
        %5510 = vmatprep.subr.mxu0 0.0
        %5511 = vmatpush1.msra.mxu0 0.0
        %5512 = vmatprep.subr.mxu0 0.0
        %5513 = vmatpush1.msra.mxu0 0.0
        %5514 = vmatprep.subr.mxu0 0.0
        %5515 = vmatpush1.msra.mxu0 0.0
        %5516 = vmatprep.subr.mxu0 0.0
        %5517 = vmatpush1.msra.mxu0 0.0
        %5518 = vmatprep.subr.mxu0 0.0
        %5519 = vmatpush1.msra.mxu0 0.0
        %5520 = vmatprep.subr.mxu0 0.0
        %5521 = vmatpush1.msra.mxu0 0.0
        %5522 = vmatprep.subr.mxu0 0.0
        %5523 = vmatpush1.msra.mxu0 0.0
        %5524 = vmatprep.subr.mxu0 0.0
        %5525 = vmatpush1.msra.mxu0 0.0
        %5526 = vmatprep.subr.mxu0 0.0
        %5527 = vmatpush1.msra.mxu0 0.0
        %5528 = vmatprep.subr.mxu0 0.0
        %5529 = vmatpush1.msra.mxu0 0.0
        %5530 = vmatprep.subr.mxu0 0.0
        %5531 = vmatpush1.msra.mxu0 0.0
        %5532 = vmatprep.subr.mxu0 0.0
        %5533 = vmatpush1.msra.mxu0 0.0
        %5534 = vmatprep.subr.mxu0 0.0
        %5535 = vmatpush1.msra.mxu0 0.0
        %5536 = vmatprep.subr.mxu0 0.0
        %5537 = vmatpush1.msra.mxu0 0.0
        %5538 = vmatprep.subr.mxu0 0.0
        %5539 = vmatpush1.msra.mxu0 0.0
        %5540 = vmatprep.subr.mxu0 0.0
        %5541 = vmatpush1.msra.mxu0 0.0
        %5542 = vmatprep.subr.mxu0 0.0
        %5543 = vmatpush1.msra.mxu0 0.0
        %5544 = vmatprep.mubr.f32.mxu0 0.0
        %5545 = vmatmul.mubr.f32.gmra.mrb[0].mxu0 %v5478
        %v5546 = vpop.f32.mrb[0].mxu0
        %v5547 = vadd.f32 0.0, %v5546
        %v5548 = vpop.f32.mrb[0].mxu0
        %5549 = vdwg.mxu0
        %5550 = vrot.lane.b32.xlu0 %v4629, 112
        %v5551 = vpop.permute.xlu0 %5550
        %v5554 = vsel %vm1152, %v5473, 0
        %5556 = vmatprep.subr.mxu0 0.0
        %5557 = vmatpush1.msra.mxu0 %v5551
        %5558 = vmatprep.subr.mxu0 0.0
        %5559 = vmatpush1.msra.mxu0 0.0
        %5560 = vmatprep.subr.mxu0 0.0
        %5561 = vmatpush1.msra.mxu0 0.0
        %5562 = vmatprep.subr.mxu0 0.0
        %5563 = vmatpush1.msra.mxu0 0.0
        %5564 = vmatprep.subr.mxu0 0.0
        %5565 = vmatpush1.msra.mxu0 0.0
        %5566 = vmatprep.subr.mxu0 0.0
        %5567 = vmatpush1.msra.mxu0 0.0
        %5568 = vmatprep.subr.mxu0 0.0
        %5569 = vmatpush1.msra.mxu0 0.0
        %5570 = vmatprep.subr.mxu0 0.0
        %5571 = vmatpush1.msra.mxu0 0.0
        %5572 = vmatprep.subr.mxu0 0.0
        %5573 = vmatpush1.msra.mxu0 0.0
        %5574 = vmatprep.subr.mxu0 0.0
        %5575 = vmatpush1.msra.mxu0 0.0
        %5576 = vmatprep.subr.mxu0 0.0
        %5577 = vmatpush1.msra.mxu0 0.0
        %5578 = vmatprep.subr.mxu0 0.0
        %5579 = vmatpush1.msra.mxu0 0.0
        %5580 = vmatprep.subr.mxu0 0.0
        %5581 = vmatpush1.msra.mxu0 0.0
        %5582 = vmatprep.subr.mxu0 0.0
        %5583 = vmatpush1.msra.mxu0 0.0
        %5584 = vmatprep.subr.mxu0 0.0
        %5585 = vmatpush1.msra.mxu0 0.0
        %5586 = vmatprep.subr.mxu0 0.0
        %5587 = vmatpush1.msra.mxu0 0.0
        %5588 = vmatprep.subr.mxu0 0.0
        %5589 = vmatpush1.msra.mxu0 0.0
        %5590 = vmatprep.subr.mxu0 0.0
        %5591 = vmatpush1.msra.mxu0 0.0
        %5592 = vmatprep.subr.mxu0 0.0
        %5593 = vmatpush1.msra.mxu0 0.0
        %5594 = vmatprep.subr.mxu0 0.0
        %5595 = vmatpush1.msra.mxu0 0.0
        %5596 = vmatprep.subr.mxu0 0.0
        %5597 = vmatpush1.msra.mxu0 0.0
        %5598 = vmatprep.subr.mxu0 0.0
        %5599 = vmatpush1.msra.mxu0 0.0
        %5600 = vmatprep.subr.mxu0 0.0
        %5601 = vmatpush1.msra.mxu0 0.0
        %5602 = vmatprep.subr.mxu0 0.0
        %5603 = vmatpush1.msra.mxu0 0.0
        %5604 = vmatprep.subr.mxu0 0.0
        %5605 = vmatpush1.msra.mxu0 0.0
        %5606 = vmatprep.subr.mxu0 0.0
        %5607 = vmatpush1.msra.mxu0 0.0
        %5608 = vmatprep.subr.mxu0 0.0
        %5609 = vmatpush1.msra.mxu0 0.0
        %5610 = vmatprep.subr.mxu0 0.0
        %5611 = vmatpush1.msra.mxu0 0.0
        %5612 = vmatprep.subr.mxu0 0.0
        %5613 = vmatpush1.msra.mxu0 0.0
        %5614 = vmatprep.subr.mxu0 0.0
        %5615 = vmatpush1.msra.mxu0 0.0
        %5616 = vmatprep.subr.mxu0 0.0
        %5617 = vmatpush1.msra.mxu0 0.0
        %5618 = vmatprep.subr.mxu0 0.0
        %5619 = vmatpush1.msra.mxu0 0.0
        %5620 = vmatprep.mubr.f32.mxu0 0.0
        %5621 = vmatmul.mubr.f32.gmra.mrb[0].mxu0 %v5554
        %v5622 = vpop.f32.mrb[0].mxu0
        %v5623 = vadd.f32 0.0, %v5622
        %v5624 = vpop.f32.mrb[0].mxu0
        %5625 = vdwg.mxu0
        %5626 = vrot.lane.b32.xlu0 %v4448, 104
        %v5627 = vpop.permute.xlu0 %5626
        %5628 = vrot.lane.b32.xlu0 %v4536, 104
        %v5629 = vpop.permute.xlu0 %5628
        %v5630 = vsel %vm1152, %v5627, 0
        %v5632 = vsel %vm1152, %v5629, 0
        %5634 = vmatprep.subr.mxu0 0.0
        %5635 = vmatpush1.xpose.msra.mxu0 %v5632
        %5636 = vmatprep.subr.mxu0 0.0
        %5637 = vmatpush1.xpose.msra.mxu0 0.0
        %5638 = vmatprep.subr.mxu0 0.0
        %5639 = vmatpush1.xpose.msra.mxu0 0.0
        %5640 = vmatprep.subr.mxu0 0.0
        %5641 = vmatpush1.xpose.msra.mxu0 0.0
        %5642 = vmatprep.subr.mxu0 0.0
        %5643 = vmatpush1.xpose.msra.mxu0 0.0
        %5644 = vmatprep.subr.mxu0 0.0
        %5645 = vmatpush1.xpose.msra.mxu0 0.0
        %5646 = vmatprep.subr.mxu0 0.0
        %5647 = vmatpush1.xpose.msra.mxu0 0.0
        %5648 = vmatprep.subr.mxu0 0.0
        %5649 = vmatpush1.xpose.msra.mxu0 0.0
        %5650 = vmatprep.subr.mxu0 0.0
        %5651 = vmatpush1.xpose.msra.mxu0 0.0
        %5652 = vmatprep.subr.mxu0 0.0
        %5653 = vmatpush1.xpose.msra.mxu0 0.0
        %5654 = vmatprep.subr.mxu0 0.0
        %5655 = vmatpush1.xpose.msra.mxu0 0.0
        %5656 = vmatprep.subr.mxu0 0.0
        %5657 = vmatpush1.xpose.msra.mxu0 0.0
        %5658 = vmatprep.subr.mxu0 0.0
        %5659 = vmatpush1.xpose.msra.mxu0 0.0
        %5660 = vmatprep.subr.mxu0 0.0
        %5661 = vmatpush1.xpose.msra.mxu0 0.0
        %5662 = vmatprep.subr.mxu0 0.0
        %5663 = vmatpush1.xpose.msra.mxu0 0.0
        %5664 = vmatprep.subr.mxu0 0.0
        %5665 = vmatpush1.xpose.msra.mxu0 0.0
        %5666 = vmatprep.subr.mxu0 0.0
        %5667 = vmatpush1.xpose.msra.mxu0 0.0
        %5668 = vmatprep.subr.mxu0 0.0
        %5669 = vmatpush1.xpose.msra.mxu0 0.0
        %5670 = vmatprep.subr.mxu0 0.0
        %5671 = vmatpush1.xpose.msra.mxu0 0.0
        %5672 = vmatprep.subr.mxu0 0.0
        %5673 = vmatpush1.xpose.msra.mxu0 0.0
        %5674 = vmatprep.subr.mxu0 0.0
        %5675 = vmatpush1.xpose.msra.mxu0 0.0
        %5676 = vmatprep.subr.mxu0 0.0
        %5677 = vmatpush1.xpose.msra.mxu0 0.0
        %5678 = vmatprep.subr.mxu0 0.0
        %5679 = vmatpush1.xpose.msra.mxu0 0.0
        %5680 = vmatprep.subr.mxu0 0.0
        %5681 = vmatpush1.xpose.msra.mxu0 0.0
        %5682 = vmatprep.subr.mxu0 0.0
        %5683 = vmatpush1.xpose.msra.mxu0 0.0
        %5684 = vmatprep.subr.mxu0 0.0
        %5685 = vmatpush1.xpose.msra.mxu0 0.0
        %5686 = vmatprep.subr.mxu0 0.0
        %5687 = vmatpush1.xpose.msra.mxu0 0.0
        %5688 = vmatprep.subr.mxu0 0.0
        %5689 = vmatpush1.xpose.msra.mxu0 0.0
        %5690 = vmatprep.subr.mxu0 0.0
        %5691 = vmatpush1.xpose.msra.mxu0 0.0
        %5692 = vmatprep.subr.mxu0 0.0
        %5693 = vmatpush1.xpose.msra.mxu0 0.0
        %5694 = vmatprep.subr.mxu0 0.0
        %5695 = vmatpush1.xpose.msra.mxu0 0.0
        %5696 = vmatprep.subr.mxu0 0.0
        %5697 = vmatpush1.xpose.msra.mxu0 0.0
        %5698 = vmatprep.mubr.f32.mxu0 0.0
        %5699 = vmatmul.mubr.f32.gmra.mrb[0].mxu0 %v5630
        %v5700 = vpop.f32.mrb[0].mxu0
        %v5701 = vadd.f32 0.0, %v5700
        %v5702 = vpop.f32.mrb[0].mxu0
        %5703 = vdwg.mxu0
        %5704 = vrot.lane.b32.xlu0 %v4453, 104
        %v5705 = vpop.permute.xlu0 %5704
        %5706 = vrot.lane.b32.xlu0 %v4541, 104
        %v5707 = vpop.permute.xlu0 %5706
        %v5708 = vsel %vm1152, %v5705, 0
        %v5710 = vsel %vm1152, %v5707, 0
        %5712 = vmatprep.subr.mxu0 0.0
        %5713 = vmatpush1.xpose.msra.mxu0 %v5710
        %5714 = vmatprep.subr.mxu0 0.0
        %5715 = vmatpush1.xpose.msra.mxu0 0.0
        %5716 = vmatprep.subr.mxu0 0.0
        %5717 = vmatpush1.xpose.msra.mxu0 0.0
        %5718 = vmatprep.subr.mxu0 0.0
        %5719 = vmatpush1.xpose.msra.mxu0 0.0
        %5720 = vmatprep.subr.mxu0 0.0
        %5721 = vmatpush1.xpose.msra.mxu0 0.0
        %5722 = vmatprep.subr.mxu0 0.0
        %5723 = vmatpush1.xpose.msra.mxu0 0.0
        %5724 = vmatprep.subr.mxu0 0.0
        %5725 = vmatpush1.xpose.msra.mxu0 0.0
        %5726 = vmatprep.subr.mxu0 0.0
        %5727 = vmatpush1.xpose.msra.mxu0 0.0
        %5728 = vmatprep.subr.mxu0 0.0
        %5729 = vmatpush1.xpose.msra.mxu0 0.0
        %5730 = vmatprep.subr.mxu0 0.0
        %5731 = vmatpush1.xpose.msra.mxu0 0.0
        %5732 = vmatprep.subr.mxu0 0.0
        %5733 = vmatpush1.xpose.msra.mxu0 0.0
        %5734 = vmatprep.subr.mxu0 0.0
        %5735 = vmatpush1.xpose.msra.mxu0 0.0
        %5736 = vmatprep.subr.mxu0 0.0
        %5737 = vmatpush1.xpose.msra.mxu0 0.0
        %5738 = vmatprep.subr.mxu0 0.0
        %5739 = vmatpush1.xpose.msra.mxu0 0.0
        %5740 = vmatprep.subr.mxu0 0.0
        %5741 = vmatpush1.xpose.msra.mxu0 0.0
        %5742 = vmatprep.subr.mxu0 0.0
        %5743 = vmatpush1.xpose.msra.mxu0 0.0
        %5744 = vmatprep.subr.mxu0 0.0
        %5745 = vmatpush1.xpose.msra.mxu0 0.0
        %5746 = vmatprep.subr.mxu0 0.0
        %5747 = vmatpush1.xpose.msra.mxu0 0.0
        %5748 = vmatprep.subr.mxu0 0.0
        %5749 = vmatpush1.xpose.msra.mxu0 0.0
        %5750 = vmatprep.subr.mxu0 0.0
        %5751 = vmatpush1.xpose.msra.mxu0 0.0
        %5752 = vmatprep.subr.mxu0 0.0
        %5753 = vmatpush1.xpose.msra.mxu0 0.0
        %5754 = vmatprep.subr.mxu0 0.0
        %5755 = vmatpush1.xpose.msra.mxu0 0.0
        %5756 = vmatprep.subr.mxu0 0.0
        %5757 = vmatpush1.xpose.msra.mxu0 0.0
        %5758 = vmatprep.subr.mxu0 0.0
        %5759 = vmatpush1.xpose.msra.mxu0 0.0
        %5760 = vmatprep.subr.mxu0 0.0
        %5761 = vmatpush1.xpose.msra.mxu0 0.0
        %5762 = vmatprep.subr.mxu0 0.0
        %5763 = vmatpush1.xpose.msra.mxu0 0.0
        %5764 = vmatprep.subr.mxu0 0.0
        %5765 = vmatpush1.xpose.msra.mxu0 0.0
        %5766 = vmatprep.subr.mxu0 0.0
        %5767 = vmatpush1.xpose.msra.mxu0 0.0
        %5768 = vmatprep.subr.mxu0 0.0
        %5769 = vmatpush1.xpose.msra.mxu0 0.0
        %5770 = vmatprep.subr.mxu0 0.0
        %5771 = vmatpush1.xpose.msra.mxu0 0.0
        %5772 = vmatprep.subr.mxu0 0.0
        %5773 = vmatpush1.xpose.msra.mxu0 0.0
        %5774 = vmatprep.subr.mxu0 0.0
        %5775 = vmatpush1.xpose.msra.mxu0 0.0
        %5776 = vmatprep.mubr.f32.mxu0 0.0
        %5777 = vmatmul.mubr.f32.gmra.mrb[0].mxu0 %v5708
        %v5778 = vpop.f32.mrb[0].mxu0
        %v5779 = vadd.f32 0.0, %v5778
        %v5780 = vpop.f32.mrb[0].mxu0
        %5781 = vdwg.mxu0
        %v5782 = vmul.f32 %v5701, 0.35355338
        %v5783 = vmul.f32 %v5779, 0.35355338
        %v5784 = vadd.f32 %v5782, %v880
        %v5785 = vadd.f32 %v5783, %v884
        %v5786 = vsel %vm1152, %v5784, -inf
        %5787 = vmax.xlane.f32.xlu0 %v5786
        %v5788 = vpop.xlane.xlu0 %5787
        %v5789 = vsel %vm1152, %v5785, -inf
        %5790 = vmax.xlane.f32.xlu0 %v5789
        %v5791 = vpop.xlane.xlu0 %5790
        %v5792 = vsub.f32 %v5784, %v5788
        %v5793 = vsub.f32 %v5785, %v5791
        %v5794 = vmul.f32 %v5792, 1.442695
        %v5795 = vpow.pop %v5794
        %v5796 = vmul.f32 %v5793, 1.442695
        %v5797 = vpow.pop %v5796
        %v5798 = vsel %vm1152, %v5795, 0.0
        %5799 = vadd.xlane.f32.xlu0 %v5798
        %v5800 = vpop.xlane.xlu0 %5799
        %v5801 = vsel %vm1152, %v5797, 0.0
        %5802 = vadd.xlane.f32.xlu0 %v5801
        %v5803 = vpop.xlane.xlu0 %5802
        %v5804 = vrcp.pop %v5800
        %v5805 = vmul.f32 %v5795, %v5804
        %v5806 = vrcp.pop %v5803
        %v5807 = vmul.f32 %v5797, %v5806
        %5808 = vrot.lane.b32.xlu0 %v4624, 104
        %v5809 = vpop.permute.xlu0 %5808
        %v5812 = vsel %vm1152, %v5805, 0
        %5814 = vmatprep.subr.mxu0 0.0
        %5815 = vmatpush1.msra.mxu0 %v5809
        %5816 = vmatprep.subr.mxu0 0.0
        %5817 = vmatpush1.msra.mxu0 0.0
        %5818 = vmatprep.subr.mxu0 0.0
        %5819 = vmatpush1.msra.mxu0 0.0
        %5820 = vmatprep.subr.mxu0 0.0
        %5821 = vmatpush1.msra.mxu0 0.0
        %5822 = vmatprep.subr.mxu0 0.0
        %5823 = vmatpush1.msra.mxu0 0.0
        %5824 = vmatprep.subr.mxu0 0.0
        %5825 = vmatpush1.msra.mxu0 0.0
        %5826 = vmatprep.subr.mxu0 0.0
        %5827 = vmatpush1.msra.mxu0 0.0
        %5828 = vmatprep.subr.mxu0 0.0
        %5829 = vmatpush1.msra.mxu0 0.0
        %5830 = vmatprep.subr.mxu0 0.0
        %5831 = vmatpush1.msra.mxu0 0.0
        %5832 = vmatprep.subr.mxu0 0.0
        %5833 = vmatpush1.msra.mxu0 0.0
        %5834 = vmatprep.subr.mxu0 0.0
        %5835 = vmatpush1.msra.mxu0 0.0
        %5836 = vmatprep.subr.mxu0 0.0
        %5837 = vmatpush1.msra.mxu0 0.0
        %5838 = vmatprep.subr.mxu0 0.0
        %5839 = vmatpush1.msra.mxu0 0.0
        %5840 = vmatprep.subr.mxu0 0.0
        %5841 = vmatpush1.msra.mxu0 0.0
        %5842 = vmatprep.subr.mxu0 0.0
        %5843 = vmatpush1.msra.mxu0 0.0
        %5844 = vmatprep.subr.mxu0 0.0
        %5845 = vmatpush1.msra.mxu0 0.0
        %5846 = vmatprep.subr.mxu0 0.0
        %5847 = vmatpush1.msra.mxu0 0.0
        %5848 = vmatprep.subr.mxu0 0.0
        %5849 = vmatpush1.msra.mxu0 0.0
        %5850 = vmatprep.subr.mxu0 0.0
        %5851 = vmatpush1.msra.mxu0 0.0
        %5852 = vmatprep.subr.mxu0 0.0
        %5853 = vmatpush1.msra.mxu0 0.0
        %5854 = vmatprep.subr.mxu0 0.0
        %5855 = vmatpush1.msra.mxu0 0.0
        %5856 = vmatprep.subr.mxu0 0.0
        %5857 = vmatpush1.msra.mxu0 0.0
        %5858 = vmatprep.subr.mxu0 0.0
        %5859 = vmatpush1.msra.mxu0 0.0
        %5860 = vmatprep.subr.mxu0 0.0
        %5861 = vmatpush1.msra.mxu0 0.0
        %5862 = vmatprep.subr.mxu0 0.0
        %5863 = vmatpush1.msra.mxu0 0.0
        %5864 = vmatprep.subr.mxu0 0.0
        %5865 = vmatpush1.msra.mxu0 0.0
        %5866 = vmatprep.subr.mxu0 0.0
        %5867 = vmatpush1.msra.mxu0 0.0
        %5868 = vmatprep.subr.mxu0 0.0
        %5869 = vmatpush1.msra.mxu0 0.0
        %5870 = vmatprep.subr.mxu0 0.0
        %5871 = vmatpush1.msra.mxu0 0.0
        %5872 = vmatprep.subr.mxu0 0.0
        %5873 = vmatpush1.msra.mxu0 0.0
        %5874 = vmatprep.subr.mxu0 0.0
        %5875 = vmatpush1.msra.mxu0 0.0
        %5876 = vmatprep.subr.mxu0 0.0
        %5877 = vmatpush1.msra.mxu0 0.0
        %5878 = vmatprep.mubr.f32.mxu0 0.0
        %5879 = vmatmul.mubr.f32.gmra.mrb[0].mxu0 %v5812
        %v5880 = vpop.f32.mrb[0].mxu0
        %v5881 = vadd.f32 0.0, %v5880
        %v5882 = vpop.f32.mrb[0].mxu0
        %5883 = vdwg.mxu0
        %5884 = vrot.lane.b32.xlu0 %v4629, 104
        %v5885 = vpop.permute.xlu0 %5884
        %v5888 = vsel %vm1152, %v5807, 0
        %5890 = vmatprep.subr.mxu0 0.0
        %5891 = vmatpush1.msra.mxu0 %v5885
        %5892 = vmatprep.subr.mxu0 0.0
        %5893 = vmatpush1.msra.mxu0 0.0
        %5894 = vmatprep.subr.mxu0 0.0
        %5895 = vmatpush1.msra.mxu0 0.0
        %5896 = vmatprep.subr.mxu0 0.0
        %5897 = vmatpush1.msra.mxu0 0.0
        %5898 = vmatprep.subr.mxu0 0.0
        %5899 = vmatpush1.msra.mxu0 0.0
        %5900 = vmatprep.subr.mxu0 0.0
        %5901 = vmatpush1.msra.mxu0 0.0
        %5902 = vmatprep.subr.mxu0 0.0
        %5903 = vmatpush1.msra.mxu0 0.0
        %5904 = vmatprep.subr.mxu0 0.0
        %5905 = vmatpush1.msra.mxu0 0.0
        %5906 = vmatprep.subr.mxu0 0.0
        %5907 = vmatpush1.msra.mxu0 0.0
        %5908 = vmatprep.subr.mxu0 0.0
        %5909 = vmatpush1.msra.mxu0 0.0
        %5910 = vmatprep.subr.mxu0 0.0
        %5911 = vmatpush1.msra.mxu0 0.0
        %5912 = vmatprep.subr.mxu0 0.0
        %5913 = vmatpush1.msra.mxu0 0.0
        %5914 = vmatprep.subr.mxu0 0.0
        %5915 = vmatpush1.msra.mxu0 0.0
        %5916 = vmatprep.subr.mxu0 0.0
        %5917 = vmatpush1.msra.mxu0 0.0
        %5918 = vmatprep.subr.mxu0 0.0
        %5919 = vmatpush1.msra.mxu0 0.0
        %5920 = vmatprep.subr.mxu0 0.0
        %5921 = vmatpush1.msra.mxu0 0.0
        %5922 = vmatprep.subr.mxu0 0.0
        %5923 = vmatpush1.msra.mxu0 0.0
        %5924 = vmatprep.subr.mxu0 0.0
        %5925 = vmatpush1.msra.mxu0 0.0
        %5926 = vmatprep.subr.mxu0 0.0
        %5927 = vmatpush1.msra.mxu0 0.0
        %5928 = vmatprep.subr.mxu0 0.0
        %5929 = vmatpush1.msra.mxu0 0.0
        %5930 = vmatprep.subr.mxu0 0.0
        %5931 = vmatpush1.msra.mxu0 0.0
        %5932 = vmatprep.subr.mxu0 0.0
        %5933 = vmatpush1.msra.mxu0 0.0
        %5934 = vmatprep.subr.mxu0 0.0
        %5935 = vmatpush1.msra.mxu0 0.0
        %5936 = vmatprep.subr.mxu0 0.0
        %5937 = vmatpush1.msra.mxu0 0.0
        %5938 = vmatprep.subr.mxu0 0.0
        %5939 = vmatpush1.msra.mxu0 0.0
        %5940 = vmatprep.subr.mxu0 0.0
        %5941 = vmatpush1.msra.mxu0 0.0
        %5942 = vmatprep.subr.mxu0 0.0
        %5943 = vmatpush1.msra.mxu0 0.0
        %5944 = vmatprep.subr.mxu0 0.0
        %5945 = vmatpush1.msra.mxu0 0.0
        %5946 = vmatprep.subr.mxu0 0.0
        %5947 = vmatpush1.msra.mxu0 0.0
        %5948 = vmatprep.subr.mxu0 0.0
        %5949 = vmatpush1.msra.mxu0 0.0
        %5950 = vmatprep.subr.mxu0 0.0
        %5951 = vmatpush1.msra.mxu0 0.0
        %5952 = vmatprep.subr.mxu0 0.0
        %5953 = vmatpush1.msra.mxu0 0.0
        %5954 = vmatprep.mubr.f32.mxu0 0.0
        %5955 = vmatmul.mubr.f32.gmra.mrb[0].mxu0 %v5888
        %v5956 = vpop.f32.mrb[0].mxu0
        %v5957 = vadd.f32 0.0, %v5956
        %v5958 = vpop.f32.mrb[0].mxu0
        %5959 = vdwg.mxu0
        %5962 = vrot.lane.b32.xlu0 %v5212, 8
        %v5963 = vpop.permute.xlu0 %5962
        %5964 = vrot.lane.b32.xlu0 %v5289, 8
        %v5965 = vpop.permute.xlu0 %5964
        %5970 = vrot.lane.b32.xlu0 %v5547, 16
        %v5971 = vpop.permute.xlu0 %5970
        %5972 = vrot.lane.b32.xlu0 %v5623, 16
        %v5973 = vpop.permute.xlu0 %5972
        %5978 = vrot.lane.b32.xlu0 %v5881, 24
        %v5979 = vpop.permute.xlu0 %5978
        %5980 = vrot.lane.b32.xlu0 %v5957, 24
        %v5981 = vpop.permute.xlu0 %5980
        %v5984 = vsel %vm1152, %v4880, %v5963
        %v5985 = vsel %vm1152, %v4953, %v5965
        %v5986 = vsel %vm788, %v5984, %v5971
        %v5987 = vsel %vm788, %v5985, %v5973
        %v5988 = vsel %vm2509, %v5986, %v5979
        %v5989 = vsel %vm2509, %v5987, %v5981
        %s5990 = scalar_lea.vmem %s12, 32
        %v5991 = vld [vmem:[%s5990] sm:$0xff]
        %v5992 = vld [vmem:[%s5990 + $0x8] sm:$0xff]
        %v5993 = vld [vmem:[%s5990 + $0x10] sm:$0xff]
        %v5994 = vld [vmem:[%s5990 + $0x18] sm:$0xff]
        %s5995 = scalar_lea.vmem %s13, 1
        %v5996 = vld [vmem:[%s5995] sm:$0x1]
        %v5998 = vlaneseq
        %v5999 = vshrl.u32 %v5998, 7
        %v6000 = vsub.s32 0, %v5999
        %v6001 = vrot.slane %v5996, %v6000
        %v6004 = vsel %vm898, %v5988, 0
        %v6007 = vsel %vm898, %v5989, 0
        %6009 = vmatprep.subr.mxu0 0.0
        %6010 = vmatpush1.msra.mxu0 %v5991
        %6011 = vmatprep.subr.mxu0 0.0
        %6012 = vmatpush1.msra.mxu0 %v5992
        %6013 = vmatprep.subr.mxu0 0.0
        %6014 = vmatpush1.msra.mxu0 %v5993
        %6015 = vmatprep.subr.mxu0 0.0
        %6016 = vmatpush1.msra.mxu0 %v5994
        %6017 = vmatprep.subr.mxu0 0.0
        %6018 = vmatpush1.msra.mxu0 0.0
        %6019 = vmatprep.subr.mxu0 0.0
        %6020 = vmatpush1.msra.mxu0 0.0
        %6021 = vmatprep.subr.mxu0 0.0
        %6022 = vmatpush1.msra.mxu0 0.0
        %6023 = vmatprep.subr.mxu0 0.0
        %6024 = vmatpush1.msra.mxu0 0.0
        %6025 = vmatprep.subr.mxu0 0.0
        %6026 = vmatpush1.msra.mxu0 0.0
        %6027 = vmatprep.subr.mxu0 0.0
        %6028 = vmatpush1.msra.mxu0 0.0
        %6029 = vmatprep.subr.mxu0 0.0
        %6030 = vmatpush1.msra.mxu0 0.0
        %6031 = vmatprep.subr.mxu0 0.0
        %6032 = vmatpush1.msra.mxu0 0.0
        %6033 = vmatprep.subr.mxu0 0.0
        %6034 = vmatpush1.msra.mxu0 0.0
        %6035 = vmatprep.subr.mxu0 0.0
        %6036 = vmatpush1.msra.mxu0 0.0
        %6037 = vmatprep.subr.mxu0 0.0
        %6038 = vmatpush1.msra.mxu0 0.0
        %6039 = vmatprep.subr.mxu0 0.0
        %6040 = vmatpush1.msra.mxu0 0.0
        %6041 = vmatprep.subr.mxu0 0.0
        %6042 = vmatpush1.msra.mxu0 0.0
        %6043 = vmatprep.subr.mxu0 0.0
        %6044 = vmatpush1.msra.mxu0 0.0
        %6045 = vmatprep.subr.mxu0 0.0
        %6046 = vmatpush1.msra.mxu0 0.0
        %6047 = vmatprep.subr.mxu0 0.0
        %6048 = vmatpush1.msra.mxu0 0.0
        %6049 = vmatprep.subr.mxu0 0.0
        %6050 = vmatpush1.msra.mxu0 0.0
        %6051 = vmatprep.subr.mxu0 0.0
        %6052 = vmatpush1.msra.mxu0 0.0
        %6053 = vmatprep.subr.mxu0 0.0
        %6054 = vmatpush1.msra.mxu0 0.0
        %6055 = vmatprep.subr.mxu0 0.0
        %6056 = vmatpush1.msra.mxu0 0.0
        %6057 = vmatprep.subr.mxu0 0.0
        %6058 = vmatpush1.msra.mxu0 0.0
        %6059 = vmatprep.subr.mxu0 0.0
        %6060 = vmatpush1.msra.mxu0 0.0
        %6061 = vmatprep.subr.mxu0 0.0
        %6062 = vmatpush1.msra.mxu0 0.0
        %6063 = vmatprep.subr.mxu0 0.0
        %6064 = vmatpush1.msra.mxu0 0.0
        %6065 = vmatprep.subr.mxu0 0.0
        %6066 = vmatpush1.msra.mxu0 0.0
        %6067 = vmatprep.subr.mxu0 0.0
        %6068 = vmatpush1.msra.mxu0 0.0
        %6069 = vmatprep.subr.mxu0 0.0
        %6070 = vmatpush1.msra.mxu0 0.0
        %6071 = vmatprep.subr.mxu0 0.0
        %6072 = vmatpush1.msra.mxu0 0.0
        %6073 = vmatprep.mubr.f32.mxu0 0.0
        %6074 = vmatmul.mubr.f32.gmra.mrb[0].mxu0 %v6004
        %v6075 = vpop.f32.mrb[0].mxu0
        %v6076 = vadd.f32 %v6001, %v6075
        %v6077 = vpop.f32.mrb[0].mxu0
        %6078 = vmatprep.mubr.f32.mxu0 0.0
        %6079 = vmatmul.mubr.f32.gmra.mrb[0].mxu0 %v6007
        %v6080 = vpop.f32.mrb[0].mxu0
        %v6081 = vadd.f32 %v6001, %v6080
        %v6082 = vpop.f32.mrb[0].mxu0
        %6083 = vdwg.mxu0
        %v6084 = vadd.f32 %v4360, %v6076
        %v6085 = vadd.f32 %v4361, %v6081
        %v6086 = vsel %vm898, %v6084, 0.0
        %6087 = vadd.xlane.f32.xlu0 %v6086
        %v6088 = vpop.xlane.xlu0 %6087
        %v6089 = vsel %vm898, %v6085, 0.0
        %6090 = vadd.xlane.f32.xlu0 %v6089
        %v6091 = vpop.xlane.xlu0 %6090
        %v6092 = vmul.f32 %v6088, %v2612
        %v6093 = vmul.f32 %v6091, %v2612
        %v6094 = vsub.f32 %v6084, %v6092
        %v6095 = vsub.f32 %v6085, %v6093
        %v6096 = vmul.f32 %v6094, %v6094
        %v6097 = vmul.f32 %v6095, %v6095
        %v6098 = vsel %vm898, %v6096, 0.0
        %6099 = vadd.xlane.f32.xlu0 %v6098
        %v6100 = vpop.xlane.xlu0 %6099
        %v6101 = vsel %vm898, %v6097, 0.0
        %6102 = vadd.xlane.f32.xlu0 %v6101
        %v6103 = vpop.xlane.xlu0 %6102
        %v6104 = vmul.f32 %v6100, %v2612
        %v6105 = vmul.f32 %v6103, %v2612
        %v6106 = vadd.f32 %v6104, 1e-05
        %v6107 = vadd.f32 %v6105, 1e-05
        %v6108 = vrsqrt.pop %v6106
        %v6109 = vrsqrt.pop %v6107
        %v6110 = vmul.f32 %v6094, %v6108
        %v6111 = vmul.f32 %v6095, %v6109
        %s6112 = scalar_lea.vmem %s14, 1
        %v6113 = vld [vmem:[%s6112] sm:$0x1]
        %v6115 = vlaneseq
        %v6116 = vshrl.u32 %v6115, 7
        %v6117 = vsub.s32 0, %v6116
        %v6118 = vrot.slane %v6113, %v6117
        %v6120 = vmul.f32 %v6110, %v6118
        %v6121 = vmul.f32 %v6111, %v6118
        %s6122 = scalar_lea.vmem %s15, 1
        %v6123 = vld [vmem:[%s6122] sm:$0x1]
        %v6125 = vlaneseq
        %v6126 = vshrl.u32 %v6125, 7
        %v6127 = vsub.s32 0, %v6126
        %v6128 = vrot.slane %v6123, %v6127
        %v6130 = vadd.f32 %v6120, %v6128
        %v6131 = vadd.f32 %v6121, %v6128
        %s6132 = scalar_lea.vmem %s16, 512
        %v6133 = vld [vmem:[%s6132] sm:$0xff]
        %v6134 = vld [vmem:[%s6132 + $0x8] sm:$0xff]
        %v6135 = vld [vmem:[%s6132 + $0x10] sm:$0xff]
        %v6136 = vld [vmem:[%s6132 + $0x18] sm:$0xff]
        %v6137 = vld [vmem:[%s6132 + $0x20] sm:$0xff]
        %v6138 = vld [vmem:[%s6132 + $0x28] sm:$0xff]
        %v6139 = vld [vmem:[%s6132 + $0x30] sm:$0xff]
        %v6140 = vld [vmem:[%s6132 + $0x38] sm:$0xff]
        %v6141 = vld [vmem:[%s6132 + $0x40] sm:$0xff]
        %v6142 = vld [vmem:[%s6132 + $0x48] sm:$0xff]
        %v6143 = vld [vmem:[%s6132 + $0x50] sm:$0xff]
        %v6144 = vld [vmem:[%s6132 + $0x58] sm:$0xff]
        %v6145 = vld [vmem:[%s6132 + $0x60] sm:$0xff]
        %v6146 = vld [vmem:[%s6132 + $0x68] sm:$0xff]
        %v6147 = vld [vmem:[%s6132 + $0x70] sm:$0xff]
        %v6148 = vld [vmem:[%s6132 + $0x78] sm:$0xff]
        %v6149 = vld [vmem:[%s6132 + $0x80] sm:$0xff]
        %v6150 = vld [vmem:[%s6132 + $0x88] sm:$0xff]
        %v6151 = vld [vmem:[%s6132 + $0x90] sm:$0xff]
        %v6152 = vld [vmem:[%s6132 + $0x98] sm:$0xff]
        %v6153 = vld [vmem:[%s6132 + $0xa0] sm:$0xff]
        %v6154 = vld [vmem:[%s6132 + $0xa8] sm:$0xff]
        %v6155 = vld [vmem:[%s6132 + $0xb0] sm:$0xff]
        %v6156 = vld [vmem:[%s6132 + $0xb8] sm:$0xff]
        %v6157 = vld [vmem:[%s6132 + $0xc0] sm:$0xff]
        %v6158 = vld [vmem:[%s6132 + $0xc8] sm:$0xff]
        %v6159 = vld [vmem:[%s6132 + $0xd0] sm:$0xff]
        %v6160 = vld [vmem:[%s6132 + $0xd8] sm:$0xff]
        %v6161 = vld [vmem:[%s6132 + $0xe0] sm:$0xff]
        %v6162 = vld [vmem:[%s6132 + $0xe8] sm:$0xff]
        %v6163 = vld [vmem:[%s6132 + $0xf0] sm:$0xff]
        %v6164 = vld [vmem:[%s6132 + $0xf8] sm:$0xff]
        %v6165 = vld [vmem:[%s6132 + $0x100] sm:$0xff]
        %v6166 = vld [vmem:[%s6132 + $0x108] sm:$0xff]
        %v6167 = vld [vmem:[%s6132 + $0x110] sm:$0xff]
        %v6168 = vld [vmem:[%s6132 + $0x118] sm:$0xff]
        %v6169 = vld [vmem:[%s6132 + $0x120] sm:$0xff]
        %v6170 = vld [vmem:[%s6132 + $0x128] sm:$0xff]
        %v6171 = vld [vmem:[%s6132 + $0x130] sm:$0xff]
        %v6172 = vld [vmem:[%s6132 + $0x138] sm:$0xff]
        %v6173 = vld [vmem:[%s6132 + $0x140] sm:$0xff]
        %v6174 = vld [vmem:[%s6132 + $0x148] sm:$0xff]
        %v6175 = vld [vmem:[%s6132 + $0x150] sm:$0xff]
        %v6176 = vld [vmem:[%s6132 + $0x158] sm:$0xff]
        %v6177 = vld [vmem:[%s6132 + $0x160] sm:$0xff]
        %v6178 = vld [vmem:[%s6132 + $0x168] sm:$0xff]
        %v6179 = vld [vmem:[%s6132 + $0x170] sm:$0xff]
        %v6180 = vld [vmem:[%s6132 + $0x178] sm:$0xff]
        %v6181 = vld [vmem:[%s6132 + $0x180] sm:$0xff]
        %v6182 = vld [vmem:[%s6132 + $0x188] sm:$0xff]
        %v6183 = vld [vmem:[%s6132 + $0x190] sm:$0xff]
        %v6184 = vld [vmem:[%s6132 + $0x198] sm:$0xff]
        %v6185 = vld [vmem:[%s6132 + $0x1a0] sm:$0xff]
        %v6186 = vld [vmem:[%s6132 + $0x1a8] sm:$0xff]
        %v6187 = vld [vmem:[%s6132 + $0x1b0] sm:$0xff]
        %v6188 = vld [vmem:[%s6132 + $0x1b8] sm:$0xff]
        %v6189 = vld [vmem:[%s6132 + $0x1c0] sm:$0xff]
        %v6190 = vld [vmem:[%s6132 + $0x1c8] sm:$0xff]
        %v6191 = vld [vmem:[%s6132 + $0x1d0] sm:$0xff]
        %v6192 = vld [vmem:[%s6132 + $0x1d8] sm:$0xff]
        %v6193 = vld [vmem:[%s6132 + $0x1e0] sm:$0xff]
        %v6194 = vld [vmem:[%s6132 + $0x1e8] sm:$0xff]
        %v6195 = vld [vmem:[%s6132 + $0x1f0] sm:$0xff]
        %v6196 = vld [vmem:[%s6132 + $0x1f8] sm:$0xff]
        %s6197 = scalar_lea.vmem %s17, 16
        %v6198 = vld [vmem:[%s6197] sm:$0xff]
        %v6199 = vld [vmem:[%s6197 + $0x8] sm:$0xff]
        %v6202 = vlaneseq
        %v6203 = vshrl.u32 %v6202, 7
        %v6204 = vsub.s32 0, %v6203
        %v6205 = vrot.slane %v6198, %v6204
        %v6206 = vlaneseq
        %v6207 = vshrl.u32 %v6206, 7
        %v6208 = vsub.s32 1, %v6207
        %v6209 = vrot.slane %v6198, %v6208
        %v6210 = vlaneseq
        %v6211 = vshrl.u32 %v6210, 7
        %v6212 = vsub.s32 2, %v6211
        %v6213 = vrot.slane %v6198, %v6212
        %v6214 = vlaneseq
        %v6215 = vshrl.u32 %v6214, 7
        %v6216 = vsub.s32 3, %v6215
        %v6217 = vrot.slane %v6198, %v6216
        %v6218 = vlaneseq
        %v6219 = vshrl.u32 %v6218, 7
        %v6220 = vsub.s32 4, %v6219
        %v6221 = vrot.slane %v6198, %v6220
        %v6222 = vlaneseq
        %v6223 = vshrl.u32 %v6222, 7
        %v6224 = vsub.s32 5, %v6223
        %v6225 = vrot.slane %v6198, %v6224
        %v6226 = vlaneseq
        %v6227 = vshrl.u32 %v6226, 7
        %v6228 = vsub.s32 6, %v6227
        %v6229 = vrot.slane %v6198, %v6228
        %v6230 = vlaneseq
        %v6231 = vshrl.u32 %v6230, 7
        %v6232 = vsub.s32 7, %v6231
        %v6233 = vrot.slane %v6198, %v6232
        %v6234 = vlaneseq
        %v6235 = vshrl.u32 %v6234, 7
        %v6236 = vsub.s32 0, %v6235
        %v6237 = vrot.slane %v6199, %v6236
        %v6238 = vlaneseq
        %v6239 = vshrl.u32 %v6238, 7
        %v6240 = vsub.s32 1, %v6239
        %v6241 = vrot.slane %v6199, %v6240
        %v6242 = vlaneseq
        %v6243 = vshrl.u32 %v6242, 7
        %v6244 = vsub.s32 2, %v6243
        %v6245 = vrot.slane %v6199, %v6244
        %v6246 = vlaneseq
        %v6247 = vshrl.u32 %v6246, 7
        %v6248 = vsub.s32 3, %v6247
        %v6249 = vrot.slane %v6199, %v6248
        %v6250 = vlaneseq
        %v6251 = vshrl.u32 %v6250, 7
        %v6252 = vsub.s32 4, %v6251
        %v6253 = vrot.slane %v6199, %v6252
        %v6254 = vlaneseq
        %v6255 = vshrl.u32 %v6254, 7
        %v6256 = vsub.s32 5, %v6255
        %v6257 = vrot.slane %v6199, %v6256
        %v6258 = vlaneseq
        %v6259 = vshrl.u32 %v6258, 7
        %v6260 = vsub.s32 6, %v6259
        %v6261 = vrot.slane %v6199, %v6260
        %v6262 = vlaneseq
        %v6263 = vshrl.u32 %v6262, 7
        %v6264 = vsub.s32 7, %v6263
        %v6265 = vrot.slane %v6199, %v6264
        %v6283 = vsel %vm898, %v6130, 0
        %v6286 = vsel %vm898, %v6131, 0
        %6288 = vmatprep.subr.mxu0 %v6134
        %6289 = vmatpush1.msra.mxu0 %v6133
        %6290 = vmatprep.subr.mxu0 %v6150
        %6291 = vmatpush1.msra.mxu0 %v6149
        %6292 = vmatprep.subr.mxu0 %v6166
        %6293 = vmatpush1.msra.mxu0 %v6165
        %6294 = vmatprep.subr.mxu0 %v6182
        %6295 = vmatpush1.msra.mxu0 %v6181
        %6296 = vmatprep.subr.mxu0 0.0
        %6297 = vmatpush1.msra.mxu0 0.0
        %6298 = vmatprep.subr.mxu0 0.0
        %6299 = vmatpush1.msra.mxu0 0.0
        %6300 = vmatprep.subr.mxu0 0.0
        %6301 = vmatpush1.msra.mxu0 0.0
        %6302 = vmatprep.subr.mxu0 0.0
        %6303 = vmatpush1.msra.mxu0 0.0
        %6304 = vmatprep.subr.mxu0 0.0
        %6305 = vmatpush1.msra.mxu0 0.0
        %6306 = vmatprep.subr.mxu0 0.0
        %6307 = vmatpush1.msra.mxu0 0.0
        %6308 = vmatprep.subr.mxu0 0.0
        %6309 = vmatpush1.msra.mxu0 0.0
        %6310 = vmatprep.subr.mxu0 0.0
        %6311 = vmatpush1.msra.mxu0 0.0
        %6312 = vmatprep.subr.mxu0 0.0
        %6313 = vmatpush1.msra.mxu0 0.0
        %6314 = vmatprep.subr.mxu0 0.0
        %6315 = vmatpush1.msra.mxu0 0.0
        %6316 = vmatprep.subr.mxu0 0.0
        %6317 = vmatpush1.msra.mxu0 0.0
        %6318 = vmatprep.subr.mxu0 0.0
        %6319 = vmatpush1.msra.mxu0 0.0
        %6320 = vmatprep.subr.mxu0 0.0
        %6321 = vmatpush1.msra.mxu0 0.0
        %6322 = vmatprep.subr.mxu0 0.0
        %6323 = vmatpush1.msra.mxu0 0.0
        %6324 = vmatprep.subr.mxu0 0.0
        %6325 = vmatpush1.msra.mxu0 0.0
        %6326 = vmatprep.subr.mxu0 0.0
        %6327 = vmatpush1.msra.mxu0 0.0
        %6328 = vmatprep.subr.mxu0 0.0
        %6329 = vmatpush1.msra.mxu0 0.0
        %6330 = vmatprep.subr.mxu0 0.0
        %6331 = vmatpush1.msra.mxu0 0.0
        %6332 = vmatprep.subr.mxu0 0.0
        %6333 = vmatpush1.msra.mxu0 0.0
        %6334 = vmatprep.subr.mxu0 0.0
        %6335 = vmatpush1.msra.mxu0 0.0
        %6336 = vmatprep.subr.mxu0 0.0
        %6337 = vmatpush1.msra.mxu0 0.0
        %6338 = vmatprep.subr.mxu0 0.0
        %6339 = vmatpush1.msra.mxu0 0.0
        %6340 = vmatprep.subr.mxu0 0.0
        %6341 = vmatpush1.msra.mxu0 0.0
        %6342 = vmatprep.subr.mxu0 0.0
        %6343 = vmatpush1.msra.mxu0 0.0
        %6344 = vmatprep.subr.mxu0 0.0
        %6345 = vmatpush1.msra.mxu0 0.0
        %6346 = vmatprep.subr.mxu0 0.0
        %6347 = vmatpush1.msra.mxu0 0.0
        %6348 = vmatprep.subr.mxu0 0.0
        %6349 = vmatpush1.msra.mxu0 0.0
        %6350 = vmatprep.subr.mxu0 0.0
        %6351 = vmatpush1.msra.mxu0 0.0
        %6352 = vmatprep.mubr.f32.mxu0 0.0
        %6353 = vmatmul.mubr.f32.gmra.mrb[0].mxu0 %v6283
        %v6354 = vpop.f32.mrb[0].mxu0
        %v6355 = vadd.f32 %v6205, %v6354
        %v6356 = vpop.f32.mrb[0].mxu0
        %v6357 = vadd.f32 %v6209, %v6356
        %6358 = vmatprep.mubr.f32.mxu0 0.0
        %6359 = vmatmul.mubr.f32.gmra.mrb[0].mxu0 %v6286
        %v6360 = vpop.f32.mrb[0].mxu0
        %v6361 = vadd.f32 %v6205, %v6360
        %v6362 = vpop.f32.mrb[0].mxu0
        %v6363 = vadd.f32 %v6209, %v6362
        %6364 = vdwg.mxu0
        %6365 = vmatprep.subr.mxu0 %v6136
        %6366 = vmatpush1.msra.mxu0 %v6135
        %6367 = vmatprep.subr.mxu0 %v6152
        %6368 = vmatpush1.msra.mxu0 %v6151
        %6369 = vmatprep.subr.mxu0 %v6168
        %6370 = vmatpush1.msra.mxu0 %v6167
        %6371 = vmatprep.subr.mxu0 %v6184
        %6372 = vmatpush1.msra.mxu0 %v6183
        %6373 = vmatprep.subr.mxu0 0.0
        %6374 = vmatpush1.msra.mxu0 0.0
        %6375 = vmatprep.subr.mxu0 0.0
        %6376 = vmatpush1.msra.mxu0 0.0
        %6377 = vmatprep.subr.mxu0 0.0
        %6378 = vmatpush1.msra.mxu0 0.0
        %6379 = vmatprep.subr.mxu0 0.0
        %6380 = vmatpush1.msra.mxu0 0.0
        %6381 = vmatprep.subr.mxu0 0.0
        %6382 = vmatpush1.msra.mxu0 0.0
        %6383 = vmatprep.subr.mxu0 0.0
        %6384 = vmatpush1.msra.mxu0 0.0
        %6385 = vmatprep.subr.mxu0 0.0
        %6386 = vmatpush1.msra.mxu0 0.0
        %6387 = vmatprep.subr.mxu0 0.0
        %6388 = vmatpush1.msra.mxu0 0.0
        %6389 = vmatprep.subr.mxu0 0.0
        %6390 = vmatpush1.msra.mxu0 0.0
        %6391 = vmatprep.subr.mxu0 0.0
        %6392 = vmatpush1.msra.mxu0 0.0
        %6393 = vmatprep.subr.mxu0 0.0
        %6394 = vmatpush1.msra.mxu0 0.0
        %6395 = vmatprep.subr.mxu0 0.0
        %6396 = vmatpush1.msra.mxu0 0.0
        %6397 = vmatprep.subr.mxu0 0.0
        %6398 = vmatpush1.msra.mxu0 0.0
        %6399 = vmatprep.subr.mxu0 0.0
        %6400 = vmatpush1.msra.mxu0 0.0
        %6401 = vmatprep.subr.mxu0 0.0
        %6402 = vmatpush1.msra.mxu0 0.0
        %6403 = vmatprep.subr.mxu0 0.0
        %6404 = vmatpush1.msra.mxu0 0.0
        %6405 = vmatprep.subr.mxu0 0.0
        %6406 = vmatpush1.msra.mxu0 0.0
        %6407 = vmatprep.subr.mxu0 0.0
        %6408 = vmatpush1.msra.mxu0 0.0
        %6409 = vmatprep.subr.mxu0 0.0
        %6410 = vmatpush1.msra.mxu0 0.0
        %6411 = vmatprep.subr.mxu0 0.0
        %6412 = vmatpush1.msra.mxu0 0.0
        %6413 = vmatprep.subr.mxu0 0.0
        %6414 = vmatpush1.msra.mxu0 0.0
        %6415 = vmatprep.subr.mxu0 0.0
        %6416 = vmatpush1.msra.mxu0 0.0
        %6417 = vmatprep.subr.mxu0 0.0
        %6418 = vmatpush1.msra.mxu0 0.0
        %6419 = vmatprep.subr.mxu0 0.0
        %6420 = vmatpush1.msra.mxu0 0.0
        %6421 = vmatprep.subr.mxu0 0.0
        %6422 = vmatpush1.msra.mxu0 0.0
        %6423 = vmatprep.subr.mxu0 0.0
        %6424 = vmatpush1.msra.mxu0 0.0
        %6425 = vmatprep.subr.mxu0 0.0
        %6426 = vmatpush1.msra.mxu0 0.0
        %6427 = vmatprep.subr.mxu0 0.0
        %6428 = vmatpush1.msra.mxu0 0.0
        %6429 = vmatprep.mubr.f32.mxu0 0.0
        %6430 = vmatmul.mubr.f32.gmra.mrb[0].mxu0 %v6283
        %v6431 = vpop.f32.mrb[0].mxu0
        %v6432 = vadd.f32 %v6213, %v6431
        %v6433 = vpop.f32.mrb[0].mxu0
        %v6434 = vadd.f32 %v6217, %v6433
        %6435 = vmatprep.mubr.f32.mxu0 0.0
        %6436 = vmatmul.mubr.f32.gmra.mrb[0].mxu0 %v6286
        %v6437 = vpop.f32.mrb[0].mxu0
        %v6438 = vadd.f32 %v6213, %v6437
        %v6439 = vpop.f32.mrb[0].mxu0
        %v6440 = vadd.f32 %v6217, %v6439
        %6441 = vdwg.mxu0
        %6442 = vmatprep.subr.mxu0 %v6138
        %6443 = vmatpush1.msra.mxu0 %v6137
        %6444 = vmatprep.subr.mxu0 %v6154
        %6445 = vmatpush1.msra.mxu0 %v6153
        %6446 = vmatprep.subr.mxu0 %v6170
        %6447 = vmatpush1.msra.mxu0 %v6169
        %6448 = vmatprep.subr.mxu0 %v6186
        %6449 = vmatpush1.msra.mxu0 %v6185
        %6450 = vmatprep.subr.mxu0 0.0
        %6451 = vmatpush1.msra.mxu0 0.0
        %6452 = vmatprep.subr.mxu0 0.0
        %6453 = vmatpush1.msra.mxu0 0.0
        %6454 = vmatprep.subr.mxu0 0.0
        %6455 = vmatpush1.msra.mxu0 0.0
        %6456 = vmatprep.subr.mxu0 0.0
        %6457 = vmatpush1.msra.mxu0 0.0
        %6458 = vmatprep.subr.mxu0 0.0
        %6459 = vmatpush1.msra.mxu0 0.0
        %6460 = vmatprep.subr.mxu0 0.0
        %6461 = vmatpush1.msra.mxu0 0.0
        %6462 = vmatprep.subr.mxu0 0.0
        %6463 = vmatpush1.msra.mxu0 0.0
        %6464 = vmatprep.subr.mxu0 0.0
        %6465 = vmatpush1.msra.mxu0 0.0
        %6466 = vmatprep.subr.mxu0 0.0
        %6467 = vmatpush1.msra.mxu0 0.0
        %6468 = vmatprep.subr.mxu0 0.0
        %6469 = vmatpush1.msra.mxu0 0.0
        %6470 = vmatprep.subr.mxu0 0.0
        %6471 = vmatpush1.msra.mxu0 0.0
        %6472 = vmatprep.subr.mxu0 0.0
        %6473 = vmatpush1.msra.mxu0 0.0
        %6474 = vmatprep.subr.mxu0 0.0
        %6475 = vmatpush1.msra.mxu0 0.0
        %6476 = vmatprep.subr.mxu0 0.0
        %6477 = vmatpush1.msra.mxu0 0.0
        %6478 = vmatprep.subr.mxu0 0.0
        %6479 = vmatpush1.msra.mxu0 0.0
        %6480 = vmatprep.subr.mxu0 0.0
        %6481 = vmatpush1.msra.mxu0 0.0
        %6482 = vmatprep.subr.mxu0 0.0
        %6483 = vmatpush1.msra.mxu0 0.0
        %6484 = vmatprep.subr.mxu0 0.0
        %6485 = vmatpush1.msra.mxu0 0.0
        %6486 = vmatprep.subr.mxu0 0.0
        %6487 = vmatpush1.msra.mxu0 0.0
        %6488 = vmatprep.subr.mxu0 0.0
        %6489 = vmatpush1.msra.mxu0 0.0
        %6490 = vmatprep.subr.mxu0 0.0
        %6491 = vmatpush1.msra.mxu0 0.0
        %6492 = vmatprep.subr.mxu0 0.0
        %6493 = vmatpush1.msra.mxu0 0.0
        %6494 = vmatprep.subr.mxu0 0.0
        %6495 = vmatpush1.msra.mxu0 0.0
        %6496 = vmatprep.subr.mxu0 0.0
        %6497 = vmatpush1.msra.mxu0 0.0
        %6498 = vmatprep.subr.mxu0 0.0
        %6499 = vmatpush1.msra.mxu0 0.0
        %6500 = vmatprep.subr.mxu0 0.0
        %6501 = vmatpush1.msra.mxu0 0.0
        %6502 = vmatprep.subr.mxu0 0.0
        %6503 = vmatpush1.msra.mxu0 0.0
        %6504 = vmatprep.subr.mxu0 0.0
        %6505 = vmatpush1.msra.mxu0 0.0
        %6506 = vmatprep.mubr.f32.mxu0 0.0
        %6507 = vmatmul.mubr.f32.gmra.mrb[0].mxu0 %v6283
        %v6508 = vpop.f32.mrb[0].mxu0
        %v6509 = vadd.f32 %v6221, %v6508
        %v6510 = vpop.f32.mrb[0].mxu0
        %v6511 = vadd.f32 %v6225, %v6510
        %6512 = vmatprep.mubr.f32.mxu0 0.0
        %6513 = vmatmul.mubr.f32.gmra.mrb[0].mxu0 %v6286
        %v6514 = vpop.f32.mrb[0].mxu0
        %v6515 = vadd.f32 %v6221, %v6514
        %v6516 = vpop.f32.mrb[0].mxu0
        %v6517 = vadd.f32 %v6225, %v6516
        %6518 = vdwg.mxu0
        %6519 = vmatprep.subr.mxu0 %v6140
        %6520 = vmatpush1.msra.mxu0 %v6139
        %6521 = vmatprep.subr.mxu0 %v6156
        %6522 = vmatpush1.msra.mxu0 %v6155
        %6523 = vmatprep.subr.mxu0 %v6172
        %6524 = vmatpush1.msra.mxu0 %v6171
        %6525 = vmatprep.subr.mxu0 %v6188
        %6526 = vmatpush1.msra.mxu0 %v6187
        %6527 = vmatprep.subr.mxu0 0.0
        %6528 = vmatpush1.msra.mxu0 0.0
        %6529 = vmatprep.subr.mxu0 0.0
        %6530 = vmatpush1.msra.mxu0 0.0
        %6531 = vmatprep.subr.mxu0 0.0
        %6532 = vmatpush1.msra.mxu0 0.0
        %6533 = vmatprep.subr.mxu0 0.0
        %6534 = vmatpush1.msra.mxu0 0.0
        %6535 = vmatprep.subr.mxu0 0.0
        %6536 = vmatpush1.msra.mxu0 0.0
        %6537 = vmatprep.subr.mxu0 0.0
        %6538 = vmatpush1.msra.mxu0 0.0
        %6539 = vmatprep.subr.mxu0 0.0
        %6540 = vmatpush1.msra.mxu0 0.0
        %6541 = vmatprep.subr.mxu0 0.0
        %6542 = vmatpush1.msra.mxu0 0.0
        %6543 = vmatprep.subr.mxu0 0.0
        %6544 = vmatpush1.msra.mxu0 0.0
        %6545 = vmatprep.subr.mxu0 0.0
        %6546 = vmatpush1.msra.mxu0 0.0
        %6547 = vmatprep.subr.mxu0 0.0
        %6548 = vmatpush1.msra.mxu0 0.0
        %6549 = vmatprep.subr.mxu0 0.0
        %6550 = vmatpush1.msra.mxu0 0.0
        %6551 = vmatprep.subr.mxu0 0.0
        %6552 = vmatpush1.msra.mxu0 0.0
        %6553 = vmatprep.subr.mxu0 0.0
        %6554 = vmatpush1.msra.mxu0 0.0
        %6555 = vmatprep.subr.mxu0 0.0
        %6556 = vmatpush1.msra.mxu0 0.0
        %6557 = vmatprep.subr.mxu0 0.0
        %6558 = vmatpush1.msra.mxu0 0.0
        %6559 = vmatprep.subr.mxu0 0.0
        %6560 = vmatpush1.msra.mxu0 0.0
        %6561 = vmatprep.subr.mxu0 0.0
        %6562 = vmatpush1.msra.mxu0 0.0
        %6563 = vmatprep.subr.mxu0 0.0
        %6564 = vmatpush1.msra.mxu0 0.0
        %6565 = vmatprep.subr.mxu0 0.0
        %6566 = vmatpush1.msra.mxu0 0.0
        %6567 = vmatprep.subr.mxu0 0.0
        %6568 = vmatpush1.msra.mxu0 0.0
        %6569 = vmatprep.subr.mxu0 0.0
        %6570 = vmatpush1.msra.mxu0 0.0
        %6571 = vmatprep.subr.mxu0 0.0
        %6572 = vmatpush1.msra.mxu0 0.0
        %6573 = vmatprep.subr.mxu0 0.0
        %6574 = vmatpush1.msra.mxu0 0.0
        %6575 = vmatprep.subr.mxu0 0.0
        %6576 = vmatpush1.msra.mxu0 0.0
        %6577 = vmatprep.subr.mxu0 0.0
        %6578 = vmatpush1.msra.mxu0 0.0
        %6579 = vmatprep.subr.mxu0 0.0
        %6580 = vmatpush1.msra.mxu0 0.0
        %6581 = vmatprep.subr.mxu0 0.0
        %6582 = vmatpush1.msra.mxu0 0.0
        %6583 = vmatprep.mubr.f32.mxu0 0.0
        %6584 = vmatmul.mubr.f32.gmra.mrb[0].mxu0 %v6283
        %v6585 = vpop.f32.mrb[0].mxu0
        %v6586 = vadd.f32 %v6229, %v6585
        %v6587 = vpop.f32.mrb[0].mxu0
        %v6588 = vadd.f32 %v6233, %v6587
        %6589 = vmatprep.mubr.f32.mxu0 0.0
        %6590 = vmatmul.mubr.f32.gmra.mrb[0].mxu0 %v6286
        %v6591 = vpop.f32.mrb[0].mxu0
        %v6592 = vadd.f32 %v6229, %v6591
        %v6593 = vpop.f32.mrb[0].mxu0
        %v6594 = vadd.f32 %v6233, %v6593
        %6595 = vdwg.mxu0
        %6596 = vmatprep.subr.mxu0 %v6142
        %6597 = vmatpush1.msra.mxu0 %v6141
        %6598 = vmatprep.subr.mxu0 %v6158
        %6599 = vmatpush1.msra.mxu0 %v6157
        %6600 = vmatprep.subr.mxu0 %v6174
        %6601 = vmatpush1.msra.mxu0 %v6173
        %6602 = vmatprep.subr.mxu0 %v6190
        %6603 = vmatpush1.msra.mxu0 %v6189
        %6604 = vmatprep.subr.mxu0 0.0
        %6605 = vmatpush1.msra.mxu0 0.0
        %6606 = vmatprep.subr.mxu0 0.0
        %6607 = vmatpush1.msra.mxu0 0.0
        %6608 = vmatprep.subr.mxu0 0.0
        %6609 = vmatpush1.msra.mxu0 0.0
        %6610 = vmatprep.subr.mxu0 0.0
        %6611 = vmatpush1.msra.mxu0 0.0
        %6612 = vmatprep.subr.mxu0 0.0
        %6613 = vmatpush1.msra.mxu0 0.0
        %6614 = vmatprep.subr.mxu0 0.0
        %6615 = vmatpush1.msra.mxu0 0.0
        %6616 = vmatprep.subr.mxu0 0.0
        %6617 = vmatpush1.msra.mxu0 0.0
        %6618 = vmatprep.subr.mxu0 0.0
        %6619 = vmatpush1.msra.mxu0 0.0
        %6620 = vmatprep.subr.mxu0 0.0
        %6621 = vmatpush1.msra.mxu0 0.0
        %6622 = vmatprep.subr.mxu0 0.0
        %6623 = vmatpush1.msra.mxu0 0.0
        %6624 = vmatprep.subr.mxu0 0.0
        %6625 = vmatpush1.msra.mxu0 0.0
        %6626 = vmatprep.subr.mxu0 0.0
        %6627 = vmatpush1.msra.mxu0 0.0
        %6628 = vmatprep.subr.mxu0 0.0
        %6629 = vmatpush1.msra.mxu0 0.0
        %6630 = vmatprep.subr.mxu0 0.0
        %6631 = vmatpush1.msra.mxu0 0.0
        %6632 = vmatprep.subr.mxu0 0.0
        %6633 = vmatpush1.msra.mxu0 0.0
        %6634 = vmatprep.subr.mxu0 0.0
        %6635 = vmatpush1.msra.mxu0 0.0
        %6636 = vmatprep.subr.mxu0 0.0
        %6637 = vmatpush1.msra.mxu0 0.0
        %6638 = vmatprep.subr.mxu0 0.0
        %6639 = vmatpush1.msra.mxu0 0.0
        %6640 = vmatprep.subr.mxu0 0.0
        %6641 = vmatpush1.msra.mxu0 0.0
        %6642 = vmatprep.subr.mxu0 0.0
        %6643 = vmatpush1.msra.mxu0 0.0
        %6644 = vmatprep.subr.mxu0 0.0
        %6645 = vmatpush1.msra.mxu0 0.0
        %6646 = vmatprep.subr.mxu0 0.0
        %6647 = vmatpush1.msra.mxu0 0.0
        %6648 = vmatprep.subr.mxu0 0.0
        %6649 = vmatpush1.msra.mxu0 0.0
        %6650 = vmatprep.subr.mxu0 0.0
        %6651 = vmatpush1.msra.mxu0 0.0
        %6652 = vmatprep.subr.mxu0 0.0
        %6653 = vmatpush1.msra.mxu0 0.0
        %6654 = vmatprep.subr.mxu0 0.0
        %6655 = vmatpush1.msra.mxu0 0.0
        %6656 = vmatprep.subr.mxu0 0.0
        %6657 = vmatpush1.msra.mxu0 0.0
        %6658 = vmatprep.subr.mxu0 0.0
        %6659 = vmatpush1.msra.mxu0 0.0
        %6660 = vmatprep.mubr.f32.mxu0 0.0
        %6661 = vmatmul.mubr.f32.gmra.mrb[0].mxu0 %v6283
        %v6662 = vpop.f32.mrb[0].mxu0
        %v6663 = vadd.f32 %v6237, %v6662
        %v6664 = vpop.f32.mrb[0].mxu0
        %v6665 = vadd.f32 %v6241, %v6664
        %6666 = vmatprep.mubr.f32.mxu0 0.0
        %6667 = vmatmul.mubr.f32.gmra.mrb[0].mxu0 %v6286
        %v6668 = vpop.f32.mrb[0].mxu0
        %v6669 = vadd.f32 %v6237, %v6668
        %v6670 = vpop.f32.mrb[0].mxu0
        %v6671 = vadd.f32 %v6241, %v6670
        %6672 = vdwg.mxu0
        %6673 = vmatprep.subr.mxu0 %v6144
        %6674 = vmatpush1.msra.mxu0 %v6143
        %6675 = vmatprep.subr.mxu0 %v6160
        %6676 = vmatpush1.msra.mxu0 %v6159
        %6677 = vmatprep.subr.mxu0 %v6176
        %6678 = vmatpush1.msra.mxu0 %v6175
        %6679 = vmatprep.subr.mxu0 %v6192
        %6680 = vmatpush1.msra.mxu0 %v6191
        %6681 = vmatprep.subr.mxu0 0.0
        %6682 = vmatpush1.msra.mxu0 0.0
        %6683 = vmatprep.subr.mxu0 0.0
        %6684 = vmatpush1.msra.mxu0 0.0
        %6685 = vmatprep.subr.mxu0 0.0
        %6686 = vmatpush1.msra.mxu0 0.0
        %6687 = vmatprep.subr.mxu0 0.0
        %6688 = vmatpush1.msra.mxu0 0.0
        %6689 = vmatprep.subr.mxu0 0.0
        %6690 = vmatpush1.msra.mxu0 0.0
        %6691 = vmatprep.subr.mxu0 0.0
        %6692 = vmatpush1.msra.mxu0 0.0
        %6693 = vmatprep.subr.mxu0 0.0
        %6694 = vmatpush1.msra.mxu0 0.0
        %6695 = vmatprep.subr.mxu0 0.0
        %6696 = vmatpush1.msra.mxu0 0.0
        %6697 = vmatprep.subr.mxu0 0.0
        %6698 = vmatpush1.msra.mxu0 0.0
        %6699 = vmatprep.subr.mxu0 0.0
        %6700 = vmatpush1.msra.mxu0 0.0
        %6701 = vmatprep.subr.mxu0 0.0
        %6702 = vmatpush1.msra.mxu0 0.0
        %6703 = vmatprep.subr.mxu0 0.0
        %6704 = vmatpush1.msra.mxu0 0.0
        %6705 = vmatprep.subr.mxu0 0.0
        %6706 = vmatpush1.msra.mxu0 0.0
        %6707 = vmatprep.subr.mxu0 0.0
        %6708 = vmatpush1.msra.mxu0 0.0
        %6709 = vmatprep.subr.mxu0 0.0
        %6710 = vmatpush1.msra.mxu0 0.0
        %6711 = vmatprep.subr.mxu0 0.0
        %6712 = vmatpush1.msra.mxu0 0.0
        %6713 = vmatprep.subr.mxu0 0.0
        %6714 = vmatpush1.msra.mxu0 0.0
        %6715 = vmatprep.subr.mxu0 0.0
        %6716 = vmatpush1.msra.mxu0 0.0
        %6717 = vmatprep.subr.mxu0 0.0
        %6718 = vmatpush1.msra.mxu0 0.0
        %6719 = vmatprep.subr.mxu0 0.0
        %6720 = vmatpush1.msra.mxu0 0.0
        %6721 = vmatprep.subr.mxu0 0.0
        %6722 = vmatpush1.msra.mxu0 0.0
        %6723 = vmatprep.subr.mxu0 0.0
        %6724 = vmatpush1.msra.mxu0 0.0
        %6725 = vmatprep.subr.mxu0 0.0
        %6726 = vmatpush1.msra.mxu0 0.0
        %6727 = vmatprep.subr.mxu0 0.0
        %6728 = vmatpush1.msra.mxu0 0.0
        %6729 = vmatprep.subr.mxu0 0.0
        %6730 = vmatpush1.msra.mxu0 0.0
        %6731 = vmatprep.subr.mxu0 0.0
        %6732 = vmatpush1.msra.mxu0 0.0
        %6733 = vmatprep.subr.mxu0 0.0
        %6734 = vmatpush1.msra.mxu0 0.0
        %6735 = vmatprep.subr.mxu0 0.0
        %6736 = vmatpush1.msra.mxu0 0.0
        %6737 = vmatprep.mubr.f32.mxu0 0.0
        %6738 = vmatmul.mubr.f32.gmra.mrb[0].mxu0 %v6283
        %v6739 = vpop.f32.mrb[0].mxu0
        %v6740 = vadd.f32 %v6245, %v6739
        %v6741 = vpop.f32.mrb[0].mxu0
        %v6742 = vadd.f32 %v6249, %v6741
        %6743 = vmatprep.mubr.f32.mxu0 0.0
        %6744 = vmatmul.mubr.f32.gmra.mrb[0].mxu0 %v6286
        %v6745 = vpop.f32.mrb[0].mxu0
        %v6746 = vadd.f32 %v6245, %v6745
        %v6747 = vpop.f32.mrb[0].mxu0
        %v6748 = vadd.f32 %v6249, %v6747
        %6749 = vdwg.mxu0
        %6750 = vmatprep.subr.mxu0 %v6146
        %6751 = vmatpush1.msra.mxu0 %v6145
        %6752 = vmatprep.subr.mxu0 %v6162
        %6753 = vmatpush1.msra.mxu0 %v6161
        %6754 = vmatprep.subr.mxu0 %v6178
        %6755 = vmatpush1.msra.mxu0 %v6177
        %6756 = vmatprep.subr.mxu0 %v6194
        %6757 = vmatpush1.msra.mxu0 %v6193
        %6758 = vmatprep.subr.mxu0 0.0
        %6759 = vmatpush1.msra.mxu0 0.0
        %6760 = vmatprep.subr.mxu0 0.0
        %6761 = vmatpush1.msra.mxu0 0.0
        %6762 = vmatprep.subr.mxu0 0.0
        %6763 = vmatpush1.msra.mxu0 0.0
        %6764 = vmatprep.subr.mxu0 0.0
        %6765 = vmatpush1.msra.mxu0 0.0
        %6766 = vmatprep.subr.mxu0 0.0
        %6767 = vmatpush1.msra.mxu0 0.0
        %6768 = vmatprep.subr.mxu0 0.0
        %6769 = vmatpush1.msra.mxu0 0.0
        %6770 = vmatprep.subr.mxu0 0.0
        %6771 = vmatpush1.msra.mxu0 0.0
        %6772 = vmatprep.subr.mxu0 0.0
        %6773 = vmatpush1.msra.mxu0 0.0
        %6774 = vmatprep.subr.mxu0 0.0
        %6775 = vmatpush1.msra.mxu0 0.0
        %6776 = vmatprep.subr.mxu0 0.0
        %6777 = vmatpush1.msra.mxu0 0.0
        %6778 = vmatprep.subr.mxu0 0.0
        %6779 = vmatpush1.msra.mxu0 0.0
        %6780 = vmatprep.subr.mxu0 0.0
        %6781 = vmatpush1.msra.mxu0 0.0
        %6782 = vmatprep.subr.mxu0 0.0
        %6783 = vmatpush1.msra.mxu0 0.0
        %6784 = vmatprep.subr.mxu0 0.0
        %6785 = vmatpush1.msra.mxu0 0.0
        %6786 = vmatprep.subr.mxu0 0.0
        %6787 = vmatpush1.msra.mxu0 0.0
        %6788 = vmatprep.subr.mxu0 0.0
        %6789 = vmatpush1.msra.mxu0 0.0
        %6790 = vmatprep.subr.mxu0 0.0
        %6791 = vmatpush1.msra.mxu0 0.0
        %6792 = vmatprep.subr.mxu0 0.0
        %6793 = vmatpush1.msra.mxu0 0.0
        %6794 = vmatprep.subr.mxu0 0.0
        %6795 = vmatpush1.msra.mxu0 0.0
        %6796 = vmatprep.subr.mxu0 0.0
        %6797 = vmatpush1.msra.mxu0 0.0
        %6798 = vmatprep.subr.mxu0 0.0
        %6799 = vmatpush1.msra.mxu0 0.0
        %6800 = vmatprep.subr.mxu0 0.0
        %6801 = vmatpush1.msra.mxu0 0.0
        %6802 = vmatprep.subr.mxu0 0.0
        %6803 = vmatpush1.msra.mxu0 0.0
        %6804 = vmatprep.subr.mxu0 0.0
        %6805 = vmatpush1.msra.mxu0 0.0
        %6806 = vmatprep.subr.mxu0 0.0
        %6807 = vmatpush1.msra.mxu0 0.0
        %6808 = vmatprep.subr.mxu0 0.0
        %6809 = vmatpush1.msra.mxu0 0.0
        %6810 = vmatprep.subr.mxu0 0.0
        %6811 = vmatpush1.msra.mxu0 0.0
        %6812 = vmatprep.subr.mxu0 0.0
        %6813 = vmatpush1.msra.mxu0 0.0
        %6814 = vmatprep.mubr.f32.mxu0 0.0
        %6815 = vmatmul.mubr.f32.gmra.mrb[0].mxu0 %v6283
        %v6816 = vpop.f32.mrb[0].mxu0
        %v6817 = vadd.f32 %v6253, %v6816
        %v6818 = vpop.f32.mrb[0].mxu0
        %v6819 = vadd.f32 %v6257, %v6818
        %6820 = vmatprep.mubr.f32.mxu0 0.0
        %6821 = vmatmul.mubr.f32.gmra.mrb[0].mxu0 %v6286
        %v6822 = vpop.f32.mrb[0].mxu0
        %v6823 = vadd.f32 %v6253, %v6822
        %v6824 = vpop.f32.mrb[0].mxu0
        %v6825 = vadd.f32 %v6257, %v6824
        %6826 = vdwg.mxu0
        %6827 = vmatprep.subr.mxu0 %v6148
        %6828 = vmatpush1.msra.mxu0 %v6147
        %6829 = vmatprep.subr.mxu0 %v6164
        %6830 = vmatpush1.msra.mxu0 %v6163
        %6831 = vmatprep.subr.mxu0 %v6180
        %6832 = vmatpush1.msra.mxu0 %v6179
        %6833 = vmatprep.subr.mxu0 %v6196
        %6834 = vmatpush1.msra.mxu0 %v6195
        %6835 = vmatprep.subr.mxu0 0.0
        %6836 = vmatpush1.msra.mxu0 0.0
        %6837 = vmatprep.subr.mxu0 0.0
        %6838 = vmatpush1.msra.mxu0 0.0
        %6839 = vmatprep.subr.mxu0 0.0
        %6840 = vmatpush1.msra.mxu0 0.0
        %6841 = vmatprep.subr.mxu0 0.0
        %6842 = vmatpush1.msra.mxu0 0.0
        %6843 = vmatprep.subr.mxu0 0.0
        %6844 = vmatpush1.msra.mxu0 0.0
        %6845 = vmatprep.subr.mxu0 0.0
        %6846 = vmatpush1.msra.mxu0 0.0
        %6847 = vmatprep.subr.mxu0 0.0
        %6848 = vmatpush1.msra.mxu0 0.0
        %6849 = vmatprep.subr.mxu0 0.0
        %6850 = vmatpush1.msra.mxu0 0.0
        %6851 = vmatprep.subr.mxu0 0.0
        %6852 = vmatpush1.msra.mxu0 0.0
        %6853 = vmatprep.subr.mxu0 0.0
        %6854 = vmatpush1.msra.mxu0 0.0
        %6855 = vmatprep.subr.mxu0 0.0
        %6856 = vmatpush1.msra.mxu0 0.0
        %6857 = vmatprep.subr.mxu0 0.0
        %6858 = vmatpush1.msra.mxu0 0.0
        %6859 = vmatprep.subr.mxu0 0.0
        %6860 = vmatpush1.msra.mxu0 0.0
        %6861 = vmatprep.subr.mxu0 0.0
        %6862 = vmatpush1.msra.mxu0 0.0
        %6863 = vmatprep.subr.mxu0 0.0
        %6864 = vmatpush1.msra.mxu0 0.0
        %6865 = vmatprep.subr.mxu0 0.0
        %6866 = vmatpush1.msra.mxu0 0.0
        %6867 = vmatprep.subr.mxu0 0.0
        %6868 = vmatpush1.msra.mxu0 0.0
        %6869 = vmatprep.subr.mxu0 0.0
        %6870 = vmatpush1.msra.mxu0 0.0
        %6871 = vmatprep.subr.mxu0 0.0
        %6872 = vmatpush1.msra.mxu0 0.0
        %6873 = vmatprep.subr.mxu0 0.0
        %6874 = vmatpush1.msra.mxu0 0.0
        %6875 = vmatprep.subr.mxu0 0.0
        %6876 = vmatpush1.msra.mxu0 0.0
        %6877 = vmatprep.subr.mxu0 0.0
        %6878 = vmatpush1.msra.mxu0 0.0
        %6879 = vmatprep.subr.mxu0 0.0
        %6880 = vmatpush1.msra.mxu0 0.0
        %6881 = vmatprep.subr.mxu0 0.0
        %6882 = vmatpush1.msra.mxu0 0.0
        %6883 = vmatprep.subr.mxu0 0.0
        %6884 = vmatpush1.msra.mxu0 0.0
        %6885 = vmatprep.subr.mxu0 0.0
        %6886 = vmatpush1.msra.mxu0 0.0
        %6887 = vmatprep.subr.mxu0 0.0
        %6888 = vmatpush1.msra.mxu0 0.0
        %6889 = vmatprep.subr.mxu0 0.0
        %6890 = vmatpush1.msra.mxu0 0.0
        %6891 = vmatprep.mubr.f32.mxu0 0.0
        %6892 = vmatmul.mubr.f32.gmra.mrb[0].mxu0 %v6283
        %v6893 = vpop.f32.mrb[0].mxu0
        %v6894 = vadd.f32 %v6261, %v6893
        %v6895 = vpop.f32.mrb[0].mxu0
        %v6896 = vadd.f32 %v6265, %v6895
        %6897 = vmatprep.mubr.f32.mxu0 0.0
        %6898 = vmatmul.mubr.f32.gmra.mrb[0].mxu0 %v6286
        %v6899 = vpop.f32.mrb[0].mxu0
        %v6900 = vadd.f32 %v6261, %v6899
        %v6901 = vpop.f32.mrb[0].mxu0
        %v6902 = vadd.f32 %v6265, %v6901
        %6903 = vdwg.mxu0
        %v6904 = vmax.f32 %v6355, 0.0
        %v6905 = vmax.f32 %v6357, 0.0
        %v6906 = vmax.f32 %v6432, 0.0
        %v6907 = vmax.f32 %v6434, 0.0
        %v6908 = vmax.f32 %v6509, 0.0
        %v6909 = vmax.f32 %v6511, 0.0
        %v6910 = vmax.f32 %v6586, 0.0
        %v6911 = vmax.f32 %v6588, 0.0
        %v6912 = vmax.f32 %v6663, 0.0
        %v6913 = vmax.f32 %v6665, 0.0
        %v6914 = vmax.f32 %v6740, 0.0
        %v6915 = vmax.f32 %v6742, 0.0
        %v6916 = vmax.f32 %v6817, 0.0
        %v6917 = vmax.f32 %v6819, 0.0
        %v6918 = vmax.f32 %v6894, 0.0
        %v6919 = vmax.f32 %v6896, 0.0
        %v6920 = vmax.f32 %v6361, 0.0
        %v6921 = vmax.f32 %v6363, 0.0
        %v6922 = vmax.f32 %v6438, 0.0
        %v6923 = vmax.f32 %v6440, 0.0
        %v6924 = vmax.f32 %v6515, 0.0
        %v6925 = vmax.f32 %v6517, 0.0
        %v6926 = vmax.f32 %v6592, 0.0
        %v6927 = vmax.f32 %v6594, 0.0
        %v6928 = vmax.f32 %v6669, 0.0
        %v6929 = vmax.f32 %v6671, 0.0
        %v6930 = vmax.f32 %v6746, 0.0
        %v6931 = vmax.f32 %v6748, 0.0
        %v6932 = vmax.f32 %v6823, 0.0
        %v6933 = vmax.f32 %v6825, 0.0
        %v6934 = vmax.f32 %v6900, 0.0
        %v6935 = vmax.f32 %v6902, 0.0
        %s6936 = scalar_lea.vmem %s18, 2048
        %v6937 = vld [vmem:[%s6936] sm:$0xff]
        %v6938 = vld [vmem:[%s6936 + $0x8] sm:$0xff]
        %v6939 = vld [vmem:[%s6936 + $0x10] sm:$0xff]
        %v6940 = vld [vmem:[%s6936 + $0x18] sm:$0xff]
        %v6941 = vld [vmem:[%s6936 + $0x20] sm:$0xff]
        %v6942 = vld [vmem:[%s6936 + $0x28] sm:$0xff]
        %v6943 = vld [vmem:[%s6936 + $0x30] sm:$0xff]
        %v6944 = vld [vmem:[%s6936 + $0x38] sm:$0xff]
        %v6945 = vld [vmem:[%s6936 + $0x40] sm:$0xff]
        %v6946 = vld [vmem:[%s6936 + $0x48] sm:$0xff]
        %v6947 = vld [vmem:[%s6936 + $0x50] sm:$0xff]
        %v6948 = vld [vmem:[%s6936 + $0x58] sm:$0xff]
        %v6949 = vld [vmem:[%s6936 + $0x60] sm:$0xff]
        %v6950 = vld [vmem:[%s6936 + $0x68] sm:$0xff]
        %v6951 = vld [vmem:[%s6936 + $0x70] sm:$0xff]
        %v6952 = vld [vmem:[%s6936 + $0x78] sm:$0xff]
        %v6953 = vld [vmem:[%s6936 + $0x80] sm:$0xff]
        %v6954 = vld [vmem:[%s6936 + $0x88] sm:$0xff]
        %v6955 = vld [vmem:[%s6936 + $0x90] sm:$0xff]
        %v6956 = vld [vmem:[%s6936 + $0x98] sm:$0xff]
        %v6957 = vld [vmem:[%s6936 + $0xa0] sm:$0xff]
        %v6958 = vld [vmem:[%s6936 + $0xa8] sm:$0xff]
        %v6959 = vld [vmem:[%s6936 + $0xb0] sm:$0xff]
        %v6960 = vld [vmem:[%s6936 + $0xb8] sm:$0xff]
        %v6961 = vld [vmem:[%s6936 + $0xc0] sm:$0xff]
        %v6962 = vld [vmem:[%s6936 + $0xc8] sm:$0xff]
        %v6963 = vld [vmem:[%s6936 + $0xd0] sm:$0xff]
        %v6964 = vld [vmem:[%s6936 + $0xd8] sm:$0xff]
        %v6965 = vld [vmem:[%s6936 + $0xe0] sm:$0xff]
        %v6966 = vld [vmem:[%s6936 + $0xe8] sm:$0xff]
        %v6967 = vld [vmem:[%s6936 + $0xf0] sm:$0xff]
        %v6968 = vld [vmem:[%s6936 + $0xf8] sm:$0xff]
        %v6969 = vld [vmem:[%s6936 + $0x100] sm:$0xff]
        %v6970 = vld [vmem:[%s6936 + $0x108] sm:$0xff]
        %v6971 = vld [vmem:[%s6936 + $0x110] sm:$0xff]
        %v6972 = vld [vmem:[%s6936 + $0x118] sm:$0xff]
        %v6973 = vld [vmem:[%s6936 + $0x120] sm:$0xff]
        %v6974 = vld [vmem:[%s6936 + $0x128] sm:$0xff]
        %v6975 = vld [vmem:[%s6936 + $0x130] sm:$0xff]
        %v6976 = vld [vmem:[%s6936 + $0x138] sm:$0xff]
        %v6977 = vld [vmem:[%s6936 + $0x140] sm:$0xff]
        %v6978 = vld [vmem:[%s6936 + $0x148] sm:$0xff]
        %v6979 = vld [vmem:[%s6936 + $0x150] sm:$0xff]
        %v6980 = vld [vmem:[%s6936 + $0x158] sm:$0xff]
        %v6981 = vld [vmem:[%s6936 + $0x160] sm:$0xff]
        %v6982 = vld [vmem:[%s6936 + $0x168] sm:$0xff]
        %v6983 = vld [vmem:[%s6936 + $0x170] sm:$0xff]
        %v6984 = vld [vmem:[%s6936 + $0x178] sm:$0xff]
        %v6985 = vld [vmem:[%s6936 + $0x180] sm:$0xff]
        %v6986 = vld [vmem:[%s6936 + $0x188] sm:$0xff]
        %v6987 = vld [vmem:[%s6936 + $0x190] sm:$0xff]
        %v6988 = vld [vmem:[%s6936 + $0x198] sm:$0xff]
        %v6989 = vld [vmem:[%s6936 + $0x1a0] sm:$0xff]
        %v6990 = vld [vmem:[%s6936 + $0x1a8] sm:$0xff]
        %v6991 = vld [vmem:[%s6936 + $0x1b0] sm:$0xff]
        %v6992 = vld [vmem:[%s6936 + $0x1b8] sm:$0xff]
        %v6993 = vld [vmem:[%s6936 + $0x1c0] sm:$0xff]
        %v6994 = vld [vmem:[%s6936 + $0x1c8] sm:$0xff]
        %v6995 = vld [vmem:[%s6936 + $0x1d0] sm:$0xff]
        %v6996 = vld [vmem:[%s6936 + $0x1d8] sm:$0xff]
        %v6997 = vld [vmem:[%s6936 + $0x1e0] sm:$0xff]
        %v6998 = vld [vmem:[%s6936 + $0x1e8] sm:$0xff]
        %v6999 = vld [vmem:[%s6936 + $0x1f0] sm:$0xff]
        %v7000 = vld [vmem:[%s6936 + $0x1f8] sm:$0xff]
        %v7001 = vld [vmem:[%s6936 + $0x200] sm:$0xff]
        %v7002 = vld [vmem:[%s6936 + $0x208] sm:$0xff]
        %v7003 = vld [vmem:[%s6936 + $0x210] sm:$0xff]
        %v7004 = vld [vmem:[%s6936 + $0x218] sm:$0xff]
        %v7005 = vld [vmem:[%s6936 + $0x220] sm:$0xff]
        %v7006 = vld [vmem:[%s6936 + $0x228] sm:$0xff]
        %v7007 = vld [vmem:[%s6936 + $0x230] sm:$0xff]
        %v7008 = vld [vmem:[%s6936 + $0x238] sm:$0xff]
        %v7009 = vld [vmem:[%s6936 + $0x240] sm:$0xff]
        %v7010 = vld [vmem:[%s6936 + $0x248] sm:$0xff]
        %v7011 = vld [vmem:[%s6936 + $0x250] sm:$0xff]
        %v7012 = vld [vmem:[%s6936 + $0x258] sm:$0xff]
        %v7013 = vld [vmem:[%s6936 + $0x260] sm:$0xff]
        %v7014 = vld [vmem:[%s6936 + $0x268] sm:$0xff]
        %v7015 = vld [vmem:[%s6936 + $0x270] sm:$0xff]
        %v7016 = vld [vmem:[%s6936 + $0x278] sm:$0xff]
        %v7017 = vld [vmem:[%s6936 + $0x280] sm:$0xff]
        %v7018 = vld [vmem:[%s6936 + $0x288] sm:$0xff]
        %v7019 = vld [vmem:[%s6936 + $0x290] sm:$0xff]
        %v7020 = vld [vmem:[%s6936 + $0x298] sm:$0xff]
        %v7021 = vld [vmem:[%s6936 + $0x2a0] sm:$0xff]
        %v7022 = vld [vmem:[%s6936 + $0x2a8] sm:$0xff]
        %v7023 = vld [vmem:[%s6936 + $0x2b0] sm:$0xff]
        %v7024 = vld [vmem:[%s6936 + $0x2b8] sm:$0xff]
        %v7025 = vld [vmem:[%s6936 + $0x2c0] sm:$0xff]
        %v7026 = vld [vmem:[%s6936 + $0x2c8] sm:$0xff]
        %v7027 = vld [vmem:[%s6936 + $0x2d0] sm:$0xff]
        %v7028 = vld [vmem:[%s6936 + $0x2d8] sm:$0xff]
        %v7029 = vld [vmem:[%s6936 + $0x2e0] sm:$0xff]
        %v7030 = vld [vmem:[%s6936 + $0x2e8] sm:$0xff]
        %v7031 = vld [vmem:[%s6936 + $0x2f0] sm:$0xff]
        %v7032 = vld [vmem:[%s6936 + $0x2f8] sm:$0xff]
        %v7033 = vld [vmem:[%s6936 + $0x300] sm:$0xff]
        %v7034 = vld [vmem:[%s6936 + $0x308] sm:$0xff]
        %v7035 = vld [vmem:[%s6936 + $0x310] sm:$0xff]
        %v7036 = vld [vmem:[%s6936 + $0x318] sm:$0xff]
        %v7037 = vld [vmem:[%s6936 + $0x320] sm:$0xff]
        %v7038 = vld [vmem:[%s6936 + $0x328] sm:$0xff]
        %v7039 = vld [vmem:[%s6936 + $0x330] sm:$0xff]
        %v7040 = vld [vmem:[%s6936 + $0x338] sm:$0xff]
        %v7041 = vld [vmem:[%s6936 + $0x340] sm:$0xff]
        %v7042 = vld [vmem:[%s6936 + $0x348] sm:$0xff]
        %v7043 = vld [vmem:[%s6936 + $0x350] sm:$0xff]
        %v7044 = vld [vmem:[%s6936 + $0x358] sm:$0xff]
        %v7045 = vld [vmem:[%s6936 + $0x360] sm:$0xff]
        %v7046 = vld [vmem:[%s6936 + $0x368] sm:$0xff]
        %v7047 = vld [vmem:[%s6936 + $0x370] sm:$0xff]
        %v7048 = vld [vmem:[%s6936 + $0x378] sm:$0xff]
        %v7049 = vld [vmem:[%s6936 + $0x380] sm:$0xff]
        %v7050 = vld [vmem:[%s6936 + $0x388] sm:$0xff]
        %v7051 = vld [vmem:[%s6936 + $0x390] sm:$0xff]
        %v7052 = vld [vmem:[%s6936 + $0x398] sm:$0xff]
        %v7053 = vld [vmem:[%s6936 + $0x3a0] sm:$0xff]
        %v7054 = vld [vmem:[%s6936 + $0x3a8] sm:$0xff]
        %v7055 = vld [vmem:[%s6936 + $0x3b0] sm:$0xff]
        %v7056 = vld [vmem:[%s6936 + $0x3b8] sm:$0xff]
        %v7057 = vld [vmem:[%s6936 + $0x3c0] sm:$0xff]
        %v7058 = vld [vmem:[%s6936 + $0x3c8] sm:$0xff]
        %v7059 = vld [vmem:[%s6936 + $0x3d0] sm:$0xff]
        %v7060 = vld [vmem:[%s6936 + $0x3d8] sm:$0xff]
        %v7061 = vld [vmem:[%s6936 + $0x3e0] sm:$0xff]
        %v7062 = vld [vmem:[%s6936 + $0x3e8] sm:$0xff]
        %v7063 = vld [vmem:[%s6936 + $0x3f0] sm:$0xff]
        %v7064 = vld [vmem:[%s6936 + $0x3f8] sm:$0xff]
        %v7065 = vld [vmem:[%s6936 + $0x400] sm:$0xff]
        %v7066 = vld [vmem:[%s6936 + $0x408] sm:$0xff]
        %v7067 = vld [vmem:[%s6936 + $0x410] sm:$0xff]
        %v7068 = vld [vmem:[%s6936 + $0x418] sm:$0xff]
        %v7069 = vld [vmem:[%s6936 + $0x420] sm:$0xff]
        %v7070 = vld [vmem:[%s6936 + $0x428] sm:$0xff]
        %v7071 = vld [vmem:[%s6936 + $0x430] sm:$0xff]
        %v7072 = vld [vmem:[%s6936 + $0x438] sm:$0xff]
        %v7073 = vld [vmem:[%s6936 + $0x440] sm:$0xff]
        %v7074 = vld [vmem:[%s6936 + $0x448] sm:$0xff]
        %v7075 = vld [vmem:[%s6936 + $0x450] sm:$0xff]
        %v7076 = vld [vmem:[%s6936 + $0x458] sm:$0xff]
        %v7077 = vld [vmem:[%s6936 + $0x460] sm:$0xff]
        %v7078 = vld [vmem:[%s6936 + $0x468] sm:$0xff]
        %v7079 = vld [vmem:[%s6936 + $0x470] sm:$0xff]
        %v7080 = vld [vmem:[%s6936 + $0x478] sm:$0xff]
        %v7081 = vld [vmem:[%s6936 + $0x480] sm:$0xff]
        %v7082 = vld [vmem:[%s6936 + $0x488] sm:$0xff]
        %v7083 = vld [vmem:[%s6936 + $0x490] sm:$0xff]
        %v7084 = vld [vmem:[%s6936 + $0x498] sm:$0xff]
        %v7085 = vld [vmem:[%s6936 + $0x4a0] sm:$0xff]
        %v7086 = vld [vmem:[%s6936 + $0x4a8] sm:$0xff]
        %v7087 = vld [vmem:[%s6936 + $0x4b0] sm:$0xff]
        %v7088 = vld [vmem:[%s6936 + $0x4b8] sm:$0xff]
        %v7089 = vld [vmem:[%s6936 + $0x4c0] sm:$0xff]
        %v7090 = vld [vmem:[%s6936 + $0x4c8] sm:$0xff]
        %v7091 = vld [vmem:[%s6936 + $0x4d0] sm:$0xff]
        %v7092 = vld [vmem:[%s6936 + $0x4d8] sm:$0xff]
        %v7093 = vld [vmem:[%s6936 + $0x4e0] sm:$0xff]
        %v7094 = vld [vmem:[%s6936 + $0x4e8] sm:$0xff]
        %v7095 = vld [vmem:[%s6936 + $0x4f0] sm:$0xff]
        %v7096 = vld [vmem:[%s6936 + $0x4f8] sm:$0xff]
        %v7097 = vld [vmem:[%s6936 + $0x500] sm:$0xff]
        %v7098 = vld [vmem:[%s6936 + $0x508] sm:$0xff]
        %v7099 = vld [vmem:[%s6936 + $0x510] sm:$0xff]
        %v7100 = vld [vmem:[%s6936 + $0x518] sm:$0xff]
        %v7101 = vld [vmem:[%s6936 + $0x520] sm:$0xff]
        %v7102 = vld [vmem:[%s6936 + $0x528] sm:$0xff]
        %v7103 = vld [vmem:[%s6936 + $0x530] sm:$0xff]
        %v7104 = vld [vmem:[%s6936 + $0x538] sm:$0xff]
        %v7105 = vld [vmem:[%s6936 + $0x540] sm:$0xff]
        %v7106 = vld [vmem:[%s6936 + $0x548] sm:$0xff]
        %v7107 = vld [vmem:[%s6936 + $0x550] sm:$0xff]
        %v7108 = vld [vmem:[%s6936 + $0x558] sm:$0xff]
        %v7109 = vld [vmem:[%s6936 + $0x560] sm:$0xff]
        %v7110 = vld [vmem:[%s6936 + $0x568] sm:$0xff]
        %v7111 = vld [vmem:[%s6936 + $0x570] sm:$0xff]
        %v7112 = vld [vmem:[%s6936 + $0x578] sm:$0xff]
        %v7113 = vld [vmem:[%s6936 + $0x580] sm:$0xff]
        %v7114 = vld [vmem:[%s6936 + $0x588] sm:$0xff]
        %v7115 = vld [vmem:[%s6936 + $0x590] sm:$0xff]
        %v7116 = vld [vmem:[%s6936 + $0x598] sm:$0xff]
        %v7117 = vld [vmem:[%s6936 + $0x5a0] sm:$0xff]
        %v7118 = vld [vmem:[%s6936 + $0x5a8] sm:$0xff]
        %v7119 = vld [vmem:[%s6936 + $0x5b0] sm:$0xff]
        %v7120 = vld [vmem:[%s6936 + $0x5b8] sm:$0xff]
        %v7121 = vld [vmem:[%s6936 + $0x5c0] sm:$0xff]
        %v7122 = vld [vmem:[%s6936 + $0x5c8] sm:$0xff]
        %v7123 = vld [vmem:[%s6936 + $0x5d0] sm:$0xff]
        %v7124 = vld [vmem:[%s6936 + $0x5d8] sm:$0xff]
        %v7125 = vld [vmem:[%s6936 + $0x5e0] sm:$0xff]
        %v7126 = vld [vmem:[%s6936 + $0x5e8] sm:$0xff]
        %v7127 = vld [vmem:[%s6936 + $0x5f0] sm:$0xff]
        %v7128 = vld [vmem:[%s6936 + $0x5f8] sm:$0xff]
        %v7129 = vld [vmem:[%s6936 + $0x600] sm:$0xff]
        %v7130 = vld [vmem:[%s6936 + $0x608] sm:$0xff]
        %v7131 = vld [vmem:[%s6936 + $0x610] sm:$0xff]
        %v7132 = vld [vmem:[%s6936 + $0x618] sm:$0xff]
        %v7133 = vld [vmem:[%s6936 + $0x620] sm:$0xff]
        %v7134 = vld [vmem:[%s6936 + $0x628] sm:$0xff]
        %v7135 = vld [vmem:[%s6936 + $0x630] sm:$0xff]
        %v7136 = vld [vmem:[%s6936 + $0x638] sm:$0xff]
        %v7137 = vld [vmem:[%s6936 + $0x640] sm:$0xff]
        %v7138 = vld [vmem:[%s6936 + $0x648] sm:$0xff]
        %v7139 = vld [vmem:[%s6936 + $0x650] sm:$0xff]
        %v7140 = vld [vmem:[%s6936 + $0x658] sm:$0xff]
        %v7141 = vld [vmem:[%s6936 + $0x660] sm:$0xff]
        %v7142 = vld [vmem:[%s6936 + $0x668] sm:$0xff]
        %v7143 = vld [vmem:[%s6936 + $0x670] sm:$0xff]
        %v7144 = vld [vmem:[%s6936 + $0x678] sm:$0xff]
        %v7145 = vld [vmem:[%s6936 + $0x680] sm:$0xff]
        %v7146 = vld [vmem:[%s6936 + $0x688] sm:$0xff]
        %v7147 = vld [vmem:[%s6936 + $0x690] sm:$0xff]
        %v7148 = vld [vmem:[%s6936 + $0x698] sm:$0xff]
        %v7149 = vld [vmem:[%s6936 + $0x6a0] sm:$0xff]
        %v7150 = vld [vmem:[%s6936 + $0x6a8] sm:$0xff]
        %v7151 = vld [vmem:[%s6936 + $0x6b0] sm:$0xff]
        %v7152 = vld [vmem:[%s6936 + $0x6b8] sm:$0xff]
        %v7153 = vld [vmem:[%s6936 + $0x6c0] sm:$0xff]
        %v7154 = vld [vmem:[%s6936 + $0x6c8] sm:$0xff]
        %v7155 = vld [vmem:[%s6936 + $0x6d0] sm:$0xff]
        %v7156 = vld [vmem:[%s6936 + $0x6d8] sm:$0xff]
        %v7157 = vld [vmem:[%s6936 + $0x6e0] sm:$0xff]
        %v7158 = vld [vmem:[%s6936 + $0x6e8] sm:$0xff]
        %v7159 = vld [vmem:[%s6936 + $0x6f0] sm:$0xff]
        %v7160 = vld [vmem:[%s6936 + $0x6f8] sm:$0xff]
        %v7161 = vld [vmem:[%s6936 + $0x700] sm:$0xff]
        %v7162 = vld [vmem:[%s6936 + $0x708] sm:$0xff]
        %v7163 = vld [vmem:[%s6936 + $0x710] sm:$0xff]
        %v7164 = vld [vmem:[%s6936 + $0x718] sm:$0xff]
        %v7165 = vld [vmem:[%s6936 + $0x720] sm:$0xff]
        %v7166 = vld [vmem:[%s6936 + $0x728] sm:$0xff]
        %v7167 = vld [vmem:[%s6936 + $0x730] sm:$0xff]
        %v7168 = vld [vmem:[%s6936 + $0x738] sm:$0xff]
        %v7169 = vld [vmem:[%s6936 + $0x740] sm:$0xff]
        %v7170 = vld [vmem:[%s6936 + $0x748] sm:$0xff]
        %v7171 = vld [vmem:[%s6936 + $0x750] sm:$0xff]
        %v7172 = vld [vmem:[%s6936 + $0x758] sm:$0xff]
        %v7173 = vld [vmem:[%s6936 + $0x760] sm:$0xff]
        %v7174 = vld [vmem:[%s6936 + $0x768] sm:$0xff]
        %v7175 = vld [vmem:[%s6936 + $0x770] sm:$0xff]
        %v7176 = vld [vmem:[%s6936 + $0x778] sm:$0xff]
        %v7177 = vld [vmem:[%s6936 + $0x780] sm:$0xff]
        %v7178 = vld [vmem:[%s6936 + $0x788] sm:$0xff]
        %v7179 = vld [vmem:[%s6936 + $0x790] sm:$0xff]
        %v7180 = vld [vmem:[%s6936 + $0x798] sm:$0xff]
        %v7181 = vld [vmem:[%s6936 + $0x7a0] sm:$0xff]
        %v7182 = vld [vmem:[%s6936 + $0x7a8] sm:$0xff]
        %v7183 = vld [vmem:[%s6936 + $0x7b0] sm:$0xff]
        %v7184 = vld [vmem:[%s6936 + $0x7b8] sm:$0xff]
        %v7185 = vld [vmem:[%s6936 + $0x7c0] sm:$0xff]
        %v7186 = vld [vmem:[%s6936 + $0x7c8] sm:$0xff]
        %v7187 = vld [vmem:[%s6936 + $0x7d0] sm:$0xff]
        %v7188 = vld [vmem:[%s6936 + $0x7d8] sm:$0xff]
        %v7189 = vld [vmem:[%s6936 + $0x7e0] sm:$0xff]
        %v7190 = vld [vmem:[%s6936 + $0x7e8] sm:$0xff]
        %v7191 = vld [vmem:[%s6936 + $0x7f0] sm:$0xff]
        %v7192 = vld [vmem:[%s6936 + $0x7f8] sm:$0xff]
        %s7193 = scalar_lea.vmem %s19, 1
        %v7194 = vld [vmem:[%s7193] sm:$0x1]
        %v7196 = vlaneseq
        %v7197 = vshrl.u32 %v7196, 7
        %v7198 = vsub.s32 0, %v7197
        %v7199 = vrot.slane %v7194, %v7198
        %7201 = vmatprep.subr.mxu0 0.0
        %7202 = vmatpush1.msra.mxu0 %v6937
        %7203 = vmatprep.subr.mxu0 0.0
        %7204 = vmatpush1.msra.mxu0 %v6938
        %7205 = vmatprep.subr.mxu0 0.0
        %7206 = vmatpush1.msra.mxu0 %v6939
        %7207 = vmatprep.subr.mxu0 0.0
        %7208 = vmatpush1.msra.mxu0 %v6940
        %7209 = vmatprep.subr.mxu0 0.0
        %7210 = vmatpush1.msra.mxu0 %v6941
        %7211 = vmatprep.subr.mxu0 0.0
        %7212 = vmatpush1.msra.mxu0 %v6942
        %7213 = vmatprep.subr.mxu0 0.0
        %7214 = vmatpush1.msra.mxu0 %v6943
        %7215 = vmatprep.subr.mxu0 0.0
        %7216 = vmatpush1.msra.mxu0 %v6944
        %7217 = vmatprep.subr.mxu0 0.0
        %7218 = vmatpush1.msra.mxu0 %v6945
        %7219 = vmatprep.subr.mxu0 0.0
        %7220 = vmatpush1.msra.mxu0 %v6946
        %7221 = vmatprep.subr.mxu0 0.0
        %7222 = vmatpush1.msra.mxu0 %v6947
        %7223 = vmatprep.subr.mxu0 0.0
        %7224 = vmatpush1.msra.mxu0 %v6948
        %7225 = vmatprep.subr.mxu0 0.0
        %7226 = vmatpush1.msra.mxu0 %v6949
        %7227 = vmatprep.subr.mxu0 0.0
        %7228 = vmatpush1.msra.mxu0 %v6950
        %7229 = vmatprep.subr.mxu0 0.0
        %7230 = vmatpush1.msra.mxu0 %v6951
        %7231 = vmatprep.subr.mxu0 0.0
        %7232 = vmatpush1.msra.mxu0 %v6952
        %7233 = vmatprep.subr.mxu0 0.0
        %7234 = vmatpush1.msra.mxu0 %v6953
        %7235 = vmatprep.subr.mxu0 0.0
        %7236 = vmatpush1.msra.mxu0 %v6954
        %7237 = vmatprep.subr.mxu0 0.0
        %7238 = vmatpush1.msra.mxu0 %v6955
        %7239 = vmatprep.subr.mxu0 0.0
        %7240 = vmatpush1.msra.mxu0 %v6956
        %7241 = vmatprep.subr.mxu0 0.0
        %7242 = vmatpush1.msra.mxu0 %v6957
        %7243 = vmatprep.subr.mxu0 0.0
        %7244 = vmatpush1.msra.mxu0 %v6958
        %7245 = vmatprep.subr.mxu0 0.0
        %7246 = vmatpush1.msra.mxu0 %v6959
        %7247 = vmatprep.subr.mxu0 0.0
        %7248 = vmatpush1.msra.mxu0 %v6960
        %7249 = vmatprep.subr.mxu0 0.0
        %7250 = vmatpush1.msra.mxu0 %v6961
        %7251 = vmatprep.subr.mxu0 0.0
        %7252 = vmatpush1.msra.mxu0 %v6962
        %7253 = vmatprep.subr.mxu0 0.0
        %7254 = vmatpush1.msra.mxu0 %v6963
        %7255 = vmatprep.subr.mxu0 0.0
        %7256 = vmatpush1.msra.mxu0 %v6964
        %7257 = vmatprep.subr.mxu0 0.0
        %7258 = vmatpush1.msra.mxu0 %v6965
        %7259 = vmatprep.subr.mxu0 0.0
        %7260 = vmatpush1.msra.mxu0 %v6966
        %7261 = vmatprep.subr.mxu0 0.0
        %7262 = vmatpush1.msra.mxu0 %v6967
        %7263 = vmatprep.subr.mxu0 0.0
        %7264 = vmatpush1.msra.mxu0 %v6968
        %7265 = vmatprep.mubr.f32.mxu0 %v6905
        %7266 = vmatmul.mubr.f32.gmra.mrb[0].mxu0 %v6904
        %v7267 = vpop.f32.mrb[0].mxu0
        %v7268 = vadd.f32 %v7199, %v7267
        %v7269 = vpop.f32.mrb[0].mxu0
        %7270 = vmatprep.mubr.f32.mxu0 %v6921
        %7271 = vmatmul.mubr.f32.gmra.mrb[0].mxu0 %v6920
        %v7272 = vpop.f32.mrb[0].mxu0
        %v7273 = vadd.f32 %v7199, %v7272
        %v7274 = vpop.f32.mrb[0].mxu0
        %7275 = vdwg.mxu0
        %7276 = vmatprep.subr.mxu0 0.0
        %7277 = vmatpush1.msra.mxu0 %v6969
        %7278 = vmatprep.subr.mxu0 0.0
        %7279 = vmatpush1.msra.mxu0 %v6970
        %7280 = vmatprep.subr.mxu0 0.0
        %7281 = vmatpush1.msra.mxu0 %v6971
        %7282 = vmatprep.subr.mxu0 0.0
        %7283 = vmatpush1.msra.mxu0 %v6972
        %7284 = vmatprep.subr.mxu0 0.0
        %7285 = vmatpush1.msra.mxu0 %v6973
        %7286 = vmatprep.subr.mxu0 0.0
        %7287 = vmatpush1.msra.mxu0 %v6974
        %7288 = vmatprep.subr.mxu0 0.0
        %7289 = vmatpush1.msra.mxu0 %v6975
        %7290 = vmatprep.subr.mxu0 0.0
        %7291 = vmatpush1.msra.mxu0 %v6976
        %7292 = vmatprep.subr.mxu0 0.0
        %7293 = vmatpush1.msra.mxu0 %v6977
        %7294 = vmatprep.subr.mxu0 0.0
        %7295 = vmatpush1.msra.mxu0 %v6978
        %7296 = vmatprep.subr.mxu0 0.0
        %7297 = vmatpush1.msra.mxu0 %v6979
        %7298 = vmatprep.subr.mxu0 0.0
        %7299 = vmatpush1.msra.mxu0 %v6980
        %7300 = vmatprep.subr.mxu0 0.0
        %7301 = vmatpush1.msra.mxu0 %v6981
        %7302 = vmatprep.subr.mxu0 0.0
        %7303 = vmatpush1.msra.mxu0 %v6982
        %7304 = vmatprep.subr.mxu0 0.0
        %7305 = vmatpush1.msra.mxu0 %v6983
        %7306 = vmatprep.subr.mxu0 0.0
        %7307 = vmatpush1.msra.mxu0 %v6984
        %7308 = vmatprep.subr.mxu0 0.0
        %7309 = vmatpush1.msra.mxu0 %v6985
        %7310 = vmatprep.subr.mxu0 0.0
        %7311 = vmatpush1.msra.mxu0 %v6986
        %7312 = vmatprep.subr.mxu0 0.0
        %7313 = vmatpush1.msra.mxu0 %v6987
        %7314 = vmatprep.subr.mxu0 0.0
        %7315 = vmatpush1.msra.mxu0 %v6988
        %7316 = vmatprep.subr.mxu0 0.0
        %7317 = vmatpush1.msra.mxu0 %v6989
        %7318 = vmatprep.subr.mxu0 0.0
        %7319 = vmatpush1.msra.mxu0 %v6990
        %7320 = vmatprep.subr.mxu0 0.0
        %7321 = vmatpush1.msra.mxu0 %v6991
        %7322 = vmatprep.subr.mxu0 0.0
        %7323 = vmatpush1.msra.mxu0 %v6992
        %7324 = vmatprep.subr.mxu0 0.0
        %7325 = vmatpush1.msra.mxu0 %v6993
        %7326 = vmatprep.subr.mxu0 0.0
        %7327 = vmatpush1.msra.mxu0 %v6994
        %7328 = vmatprep.subr.mxu0 0.0
        %7329 = vmatpush1.msra.mxu0 %v6995
        %7330 = vmatprep.subr.mxu0 0.0
        %7331 = vmatpush1.msra.mxu0 %v6996
        %7332 = vmatprep.subr.mxu0 0.0
        %7333 = vmatpush1.msra.mxu0 %v6997
        %7334 = vmatprep.subr.mxu0 0.0
        %7335 = vmatpush1.msra.mxu0 %v6998
        %7336 = vmatprep.subr.mxu0 0.0
        %7337 = vmatpush1.msra.mxu0 %v6999
        %7338 = vmatprep.subr.mxu0 0.0
        %7339 = vmatpush1.msra.mxu0 %v7000
        %7340 = vmatprep.mubr.f32.mxu0 %v6907
        %7341 = vmatmul.mubr.f32.gmra.mrb[0].mxu0 %v6906
        %v7342 = vpop.f32.mrb[0].mxu0
        %v7343 = vadd.f32 %v7268, %v7342
        %v7344 = vpop.f32.mrb[0].mxu0
        %7345 = vmatprep.mubr.f32.mxu0 %v6923
        %7346 = vmatmul.mubr.f32.gmra.mrb[0].mxu0 %v6922
        %v7347 = vpop.f32.mrb[0].mxu0
        %v7348 = vadd.f32 %v7273, %v7347
        %v7349 = vpop.f32.mrb[0].mxu0
        %7350 = vdwg.mxu0
        %7351 = vmatprep.subr.mxu0 0.0
        %7352 = vmatpush1.msra.mxu0 %v7001
        %7353 = vmatprep.subr.mxu0 0.0
        %7354 = vmatpush1.msra.mxu0 %v7002
        %7355 = vmatprep.subr.mxu0 0.0
        %7356 = vmatpush1.msra.mxu0 %v7003
        %7357 = vmatprep.subr.mxu0 0.0
        %7358 = vmatpush1.msra.mxu0 %v7004
        %7359 = vmatprep.subr.mxu0 0.0
        %7360 = vmatpush1.msra.mxu0 %v7005
        %7361 = vmatprep.subr.mxu0 0.0
        %7362 = vmatpush1.msra.mxu0 %v7006
        %7363 = vmatprep.subr.mxu0 0.0
        %7364 = vmatpush1.msra.mxu0 %v7007
        %7365 = vmatprep.subr.mxu0 0.0
        %7366 = vmatpush1.msra.mxu0 %v7008
        %7367 = vmatprep.subr.mxu0 0.0
        %7368 = vmatpush1.msra.mxu0 %v7009
        %7369 = vmatprep.subr.mxu0 0.0
        %7370 = vmatpush1.msra.mxu0 %v7010
        %7371 = vmatprep.subr.mxu0 0.0
        %7372 = vmatpush1.msra.mxu0 %v7011
        %7373 = vmatprep.subr.mxu0 0.0
        %7374 = vmatpush1.msra.mxu0 %v7012
        %7375 = vmatprep.subr.mxu0 0.0
        %7376 = vmatpush1.msra.mxu0 %v7013
        %7377 = vmatprep.subr.mxu0 0.0
        %7378 = vmatpush1.msra.mxu0 %v7014
        %7379 = vmatprep.subr.mxu0 0.0
        %7380 = vmatpush1.msra.mxu0 %v7015
        %7381 = vmatprep.subr.mxu0 0.0
        %7382 = vmatpush1.msra.mxu0 %v7016
        %7383 = vmatprep.subr.mxu0 0.0
        %7384 = vmatpush1.msra.mxu0 %v7017
        %7385 = vmatprep.subr.mxu0 0.0
        %7386 = vmatpush1.msra.mxu0 %v7018
        %7387 = vmatprep.subr.mxu0 0.0
        %7388 = vmatpush1.msra.mxu0 %v7019
        %7389 = vmatprep.subr.mxu0 0.0
        %7390 = vmatpush1.msra.mxu0 %v7020
        %7391 = vmatprep.subr.mxu0 0.0
        %7392 = vmatpush1.msra.mxu0 %v7021
        %7393 = vmatprep.subr.mxu0 0.0
        %7394 = vmatpush1.msra.mxu0 %v7022
        %7395 = vmatprep.subr.mxu0 0.0
        %7396 = vmatpush1.msra.mxu0 %v7023
        %7397 = vmatprep.subr.mxu0 0.0
        %7398 = vmatpush1.msra.mxu0 %v7024
        %7399 = vmatprep.subr.mxu0 0.0
        %7400 = vmatpush1.msra.mxu0 %v7025
        %7401 = vmatprep.subr.mxu0 0.0
        %7402 = vmatpush1.msra.mxu0 %v7026
        %7403 = vmatprep.subr.mxu0 0.0
        %7404 = vmatpush1.msra.mxu0 %v7027
        %7405 = vmatprep.subr.mxu0 0.0
        %7406 = vmatpush1.msra.mxu0 %v7028
        %7407 = vmatprep.subr.mxu0 0.0
        %7408 = vmatpush1.msra.mxu0 %v7029
        %7409 = vmatprep.subr.mxu0 0.0
        %7410 = vmatpush1.msra.mxu0 %v7030
        %7411 = vmatprep.subr.mxu0 0.0
        %7412 = vmatpush1.msra.mxu0 %v7031
        %7413 = vmatprep.subr.mxu0 0.0
        %7414 = vmatpush1.msra.mxu0 %v7032
        %7415 = vmatprep.mubr.f32.mxu0 %v6909
        %7416 = vmatmul.mubr.f32.gmra.mrb[0].mxu0 %v6908
        %v7417 = vpop.f32.mrb[0].mxu0
        %v7418 = vadd.f32 %v7343, %v7417
        %v7419 = vpop.f32.mrb[0].mxu0
        %7420 = vmatprep.mubr.f32.mxu0 %v6925
        %7421 = vmatmul.mubr.f32.gmra.mrb[0].mxu0 %v6924
        %v7422 = vpop.f32.mrb[0].mxu0
        %v7423 = vadd.f32 %v7348, %v7422
        %v7424 = vpop.f32.mrb[0].mxu0
        %7425 = vdwg.mxu0
        %7426 = vmatprep.subr.mxu0 0.0
        %7427 = vmatpush1.msra.mxu0 %v7033
        %7428 = vmatprep.subr.mxu0 0.0
        %7429 = vmatpush1.msra.mxu0 %v7034
        %7430 = vmatprep.subr.mxu0 0.0
        %7431 = vmatpush1.msra.mxu0 %v7035
        %7432 = vmatprep.subr.mxu0 0.0
        %7433 = vmatpush1.msra.mxu0 %v7036
        %7434 = vmatprep.subr.mxu0 0.0
        %7435 = vmatpush1.msra.mxu0 %v7037
        %7436 = vmatprep.subr.mxu0 0.0
        %7437 = vmatpush1.msra.mxu0 %v7038
        %7438 = vmatprep.subr.mxu0 0.0
        %7439 = vmatpush1.msra.mxu0 %v7039
        %7440 = vmatprep.subr.mxu0 0.0
        %7441 = vmatpush1.msra.mxu0 %v7040
        %7442 = vmatprep.subr.mxu0 0.0
        %7443 = vmatpush1.msra.mxu0 %v7041
        %7444 = vmatprep.subr.mxu0 0.0
        %7445 = vmatpush1.msra.mxu0 %v7042
        %7446 = vmatprep.subr.mxu0 0.0
        %7447 = vmatpush1.msra.mxu0 %v7043
        %7448 = vmatprep.subr.mxu0 0.0
        %7449 = vmatpush1.msra.mxu0 %v7044
        %7450 = vmatprep.subr.mxu0 0.0
        %7451 = vmatpush1.msra.mxu0 %v7045
        %7452 = vmatprep.subr.mxu0 0.0
        %7453 = vmatpush1.msra.mxu0 %v7046
        %7454 = vmatprep.subr.mxu0 0.0
        %7455 = vmatpush1.msra.mxu0 %v7047
        %7456 = vmatprep.subr.mxu0 0.0
        %7457 = vmatpush1.msra.mxu0 %v7048
        %7458 = vmatprep.subr.mxu0 0.0
        %7459 = vmatpush1.msra.mxu0 %v7049
        %7460 = vmatprep.subr.mxu0 0.0
        %7461 = vmatpush1.msra.mxu0 %v7050
        %7462 = vmatprep.subr.mxu0 0.0
        %7463 = vmatpush1.msra.mxu0 %v7051
        %7464 = vmatprep.subr.mxu0 0.0
        %7465 = vmatpush1.msra.mxu0 %v7052
        %7466 = vmatprep.subr.mxu0 0.0
        %7467 = vmatpush1.msra.mxu0 %v7053
        %7468 = vmatprep.subr.mxu0 0.0
        %7469 = vmatpush1.msra.mxu0 %v7054
        %7470 = vmatprep.subr.mxu0 0.0
        %7471 = vmatpush1.msra.mxu0 %v7055
        %7472 = vmatprep.subr.mxu0 0.0
        %7473 = vmatpush1.msra.mxu0 %v7056
        %7474 = vmatprep.subr.mxu0 0.0
        %7475 = vmatpush1.msra.mxu0 %v7057
        %7476 = vmatprep.subr.mxu0 0.0
        %7477 = vmatpush1.msra.mxu0 %v7058
        %7478 = vmatprep.subr.mxu0 0.0
        %7479 = vmatpush1.msra.mxu0 %v7059
        %7480 = vmatprep.subr.mxu0 0.0
        %7481 = vmatpush1.msra.mxu0 %v7060
        %7482 = vmatprep.subr.mxu0 0.0
        %7483 = vmatpush1.msra.mxu0 %v7061
        %7484 = vmatprep.subr.mxu0 0.0
        %7485 = vmatpush1.msra.mxu0 %v7062
        %7486 = vmatprep.subr.mxu0 0.0
        %7487 = vmatpush1.msra.mxu0 %v7063
        %7488 = vmatprep.subr.mxu0 0.0
        %7489 = vmatpush1.msra.mxu0 %v7064
        %7490 = vmatprep.mubr.f32.mxu0 %v6911
        %7491 = vmatmul.mubr.f32.gmra.mrb[0].mxu0 %v6910
        %v7492 = vpop.f32.mrb[0].mxu0
        %v7493 = vadd.f32 %v7418, %v7492
        %v7494 = vpop.f32.mrb[0].mxu0
        %7495 = vmatprep.mubr.f32.mxu0 %v6927
        %7496 = vmatmul.mubr.f32.gmra.mrb[0].mxu0 %v6926
        %v7497 = vpop.f32.mrb[0].mxu0
        %v7498 = vadd.f32 %v7423, %v7497
        %v7499 = vpop.f32.mrb[0].mxu0
        %7500 = vdwg.mxu0
        %7501 = vmatprep.subr.mxu0 0.0
        %7502 = vmatpush1.msra.mxu0 %v7065
        %7503 = vmatprep.subr.mxu0 0.0
        %7504 = vmatpush1.msra.mxu0 %v7066
        %7505 = vmatprep.subr.mxu0 0.0
        %7506 = vmatpush1.msra.mxu0 %v7067
        %7507 = vmatprep.subr.mxu0 0.0
        %7508 = vmatpush1.msra.mxu0 %v7068
        %7509 = vmatprep.subr.mxu0 0.0
        %7510 = vmatpush1.msra.mxu0 %v7069
        %7511 = vmatprep.subr.mxu0 0.0
        %7512 = vmatpush1.msra.mxu0 %v7070
        %7513 = vmatprep.subr.mxu0 0.0
        %7514 = vmatpush1.msra.mxu0 %v7071
        %7515 = vmatprep.subr.mxu0 0.0
        %7516 = vmatpush1.msra.mxu0 %v7072
        %7517 = vmatprep.subr.mxu0 0.0
        %7518 = vmatpush1.msra.mxu0 %v7073
        %7519 = vmatprep.subr.mxu0 0.0
        %7520 = vmatpush1.msra.mxu0 %v7074
        %7521 = vmatprep.subr.mxu0 0.0
        %7522 = vmatpush1.msra.mxu0 %v7075
        %7523 = vmatprep.subr.mxu0 0.0
        %7524 = vmatpush1.msra.mxu0 %v7076
        %7525 = vmatprep.subr.mxu0 0.0
        %7526 = vmatpush1.msra.mxu0 %v7077
        %7527 = vmatprep.subr.mxu0 0.0
        %7528 = vmatpush1.msra.mxu0 %v7078
        %7529 = vmatprep.subr.mxu0 0.0
        %7530 = vmatpush1.msra.mxu0 %v7079
        %7531 = vmatprep.subr.mxu0 0.0
        %7532 = vmatpush1.msra.mxu0 %v7080
        %7533 = vmatprep.subr.mxu0 0.0
        %7534 = vmatpush1.msra.mxu0 %v7081
        %7535 = vmatprep.subr.mxu0 0.0
        %7536 = vmatpush1.msra.mxu0 %v7082
        %7537 = vmatprep.subr.mxu0 0.0
        %7538 = vmatpush1.msra.mxu0 %v7083
        %7539 = vmatprep.subr.mxu0 0.0
        %7540 = vmatpush1.msra.mxu0 %v7084
        %7541 = vmatprep.subr.mxu0 0.0
        %7542 = vmatpush1.msra.mxu0 %v7085
        %7543 = vmatprep.subr.mxu0 0.0
        %7544 = vmatpush1.msra.mxu0 %v7086
        %7545 = vmatprep.subr.mxu0 0.0
        %7546 = vmatpush1.msra.mxu0 %v7087
        %7547 = vmatprep.subr.mxu0 0.0
        %7548 = vmatpush1.msra.mxu0 %v7088
        %7549 = vmatprep.subr.mxu0 0.0
        %7550 = vmatpush1.msra.mxu0 %v7089
        %7551 = vmatprep.subr.mxu0 0.0
        %7552 = vmatpush1.msra.mxu0 %v7090
        %7553 = vmatprep.subr.mxu0 0.0
        %7554 = vmatpush1.msra.mxu0 %v7091
        %7555 = vmatprep.subr.mxu0 0.0
        %7556 = vmatpush1.msra.mxu0 %v7092
        %7557 = vmatprep.subr.mxu0 0.0
        %7558 = vmatpush1.msra.mxu0 %v7093
        %7559 = vmatprep.subr.mxu0 0.0
        %7560 = vmatpush1.msra.mxu0 %v7094
        %7561 = vmatprep.subr.mxu0 0.0
        %7562 = vmatpush1.msra.mxu0 %v7095
        %7563 = vmatprep.subr.mxu0 0.0
        %7564 = vmatpush1.msra.mxu0 %v7096
        %7565 = vmatprep.mubr.f32.mxu0 %v6913
        %7566 = vmatmul.mubr.f32.gmra.mrb[0].mxu0 %v6912
        %v7567 = vpop.f32.mrb[0].mxu0
        %v7568 = vadd.f32 %v7493, %v7567
        %v7569 = vpop.f32.mrb[0].mxu0
        %7570 = vmatprep.mubr.f32.mxu0 %v6929
        %7571 = vmatmul.mubr.f32.gmra.mrb[0].mxu0 %v6928
        %v7572 = vpop.f32.mrb[0].mxu0
        %v7573 = vadd.f32 %v7498, %v7572
        %v7574 = vpop.f32.mrb[0].mxu0
        %7575 = vdwg.mxu0
        %7576 = vmatprep.subr.mxu0 0.0
        %7577 = vmatpush1.msra.mxu0 %v7097
        %7578 = vmatprep.subr.mxu0 0.0
        %7579 = vmatpush1.msra.mxu0 %v7098
        %7580 = vmatprep.subr.mxu0 0.0
        %7581 = vmatpush1.msra.mxu0 %v7099
        %7582 = vmatprep.subr.mxu0 0.0
        %7583 = vmatpush1.msra.mxu0 %v7100
        %7584 = vmatprep.subr.mxu0 0.0
        %7585 = vmatpush1.msra.mxu0 %v7101
        %7586 = vmatprep.subr.mxu0 0.0
        %7587 = vmatpush1.msra.mxu0 %v7102
        %7588 = vmatprep.subr.mxu0 0.0
        %7589 = vmatpush1.msra.mxu0 %v7103
        %7590 = vmatprep.subr.mxu0 0.0
        %7591 = vmatpush1.msra.mxu0 %v7104
        %7592 = vmatprep.subr.mxu0 0.0
        %7593 = vmatpush1.msra.mxu0 %v7105
        %7594 = vmatprep.subr.mxu0 0.0
        %7595 = vmatpush1.msra.mxu0 %v7106
        %7596 = vmatprep.subr.mxu0 0.0
        %7597 = vmatpush1.msra.mxu0 %v7107
        %7598 = vmatprep.subr.mxu0 0.0
        %7599 = vmatpush1.msra.mxu0 %v7108
        %7600 = vmatprep.subr.mxu0 0.0
        %7601 = vmatpush1.msra.mxu0 %v7109
        %7602 = vmatprep.subr.mxu0 0.0
        %7603 = vmatpush1.msra.mxu0 %v7110
        %7604 = vmatprep.subr.mxu0 0.0
        %7605 = vmatpush1.msra.mxu0 %v7111
        %7606 = vmatprep.subr.mxu0 0.0
        %7607 = vmatpush1.msra.mxu0 %v7112
        %7608 = vmatprep.subr.mxu0 0.0
        %7609 = vmatpush1.msra.mxu0 %v7113
        %7610 = vmatprep.subr.mxu0 0.0
        %7611 = vmatpush1.msra.mxu0 %v7114
        %7612 = vmatprep.subr.mxu0 0.0
        %7613 = vmatpush1.msra.mxu0 %v7115
        %7614 = vmatprep.subr.mxu0 0.0
        %7615 = vmatpush1.msra.mxu0 %v7116
        %7616 = vmatprep.subr.mxu0 0.0
        %7617 = vmatpush1.msra.mxu0 %v7117
        %7618 = vmatprep.subr.mxu0 0.0
        %7619 = vmatpush1.msra.mxu0 %v7118
        %7620 = vmatprep.subr.mxu0 0.0
        %7621 = vmatpush1.msra.mxu0 %v7119
        %7622 = vmatprep.subr.mxu0 0.0
        %7623 = vmatpush1.msra.mxu0 %v7120
        %7624 = vmatprep.subr.mxu0 0.0
        %7625 = vmatpush1.msra.mxu0 %v7121
        %7626 = vmatprep.subr.mxu0 0.0
        %7627 = vmatpush1.msra.mxu0 %v7122
        %7628 = vmatprep.subr.mxu0 0.0
        %7629 = vmatpush1.msra.mxu0 %v7123
        %7630 = vmatprep.subr.mxu0 0.0
        %7631 = vmatpush1.msra.mxu0 %v7124
        %7632 = vmatprep.subr.mxu0 0.0
        %7633 = vmatpush1.msra.mxu0 %v7125
        %7634 = vmatprep.subr.mxu0 0.0
        %7635 = vmatpush1.msra.mxu0 %v7126
        %7636 = vmatprep.subr.mxu0 0.0
        %7637 = vmatpush1.msra.mxu0 %v7127
        %7638 = vmatprep.subr.mxu0 0.0
        %7639 = vmatpush1.msra.mxu0 %v7128
        %7640 = vmatprep.mubr.f32.mxu0 %v6915
        %7641 = vmatmul.mubr.f32.gmra.mrb[0].mxu0 %v6914
        %v7642 = vpop.f32.mrb[0].mxu0
        %v7643 = vadd.f32 %v7568, %v7642
        %v7644 = vpop.f32.mrb[0].mxu0
        %7645 = vmatprep.mubr.f32.mxu0 %v6931
        %7646 = vmatmul.mubr.f32.gmra.mrb[0].mxu0 %v6930
        %v7647 = vpop.f32.mrb[0].mxu0
        %v7648 = vadd.f32 %v7573, %v7647
        %v7649 = vpop.f32.mrb[0].mxu0
        %7650 = vdwg.mxu0
        %7651 = vmatprep.subr.mxu0 0.0
        %7652 = vmatpush1.msra.mxu0 %v7129
        %7653 = vmatprep.subr.mxu0 0.0
        %7654 = vmatpush1.msra.mxu0 %v7130
        %7655 = vmatprep.subr.mxu0 0.0
        %7656 = vmatpush1.msra.mxu0 %v7131
        %7657 = vmatprep.subr.mxu0 0.0
        %7658 = vmatpush1.msra.mxu0 %v7132
        %7659 = vmatprep.subr.mxu0 0.0
        %7660 = vmatpush1.msra.mxu0 %v7133
        %7661 = vmatprep.subr.mxu0 0.0
        %7662 = vmatpush1.msra.mxu0 %v7134
        %7663 = vmatprep.subr.mxu0 0.0
        %7664 = vmatpush1.msra.mxu0 %v7135
        %7665 = vmatprep.subr.mxu0 0.0
        %7666 = vmatpush1.msra.mxu0 %v7136
        %7667 = vmatprep.subr.mxu0 0.0
        %7668 = vmatpush1.msra.mxu0 %v7137
        %7669 = vmatprep.subr.mxu0 0.0
        %7670 = vmatpush1.msra.mxu0 %v7138
        %7671 = vmatprep.subr.mxu0 0.0
        %7672 = vmatpush1.msra.mxu0 %v7139
        %7673 = vmatprep.subr.mxu0 0.0
        %7674 = vmatpush1.msra.mxu0 %v7140
        %7675 = vmatprep.subr.mxu0 0.0
        %7676 = vmatpush1.msra.mxu0 %v7141
        %7677 = vmatprep.subr.mxu0 0.0
        %7678 = vmatpush1.msra.mxu0 %v7142
        %7679 = vmatprep.subr.mxu0 0.0
        %7680 = vmatpush1.msra.mxu0 %v7143
        %7681 = vmatprep.subr.mxu0 0.0
        %7682 = vmatpush1.msra.mxu0 %v7144
        %7683 = vmatprep.subr.mxu0 0.0
        %7684 = vmatpush1.msra.mxu0 %v7145
        %7685 = vmatprep.subr.mxu0 0.0
        %7686 = vmatpush1.msra.mxu0 %v7146
        %7687 = vmatprep.subr.mxu0 0.0
        %7688 = vmatpush1.msra.mxu0 %v7147
        %7689 = vmatprep.subr.mxu0 0.0
        %7690 = vmatpush1.msra.mxu0 %v7148
        %7691 = vmatprep.subr.mxu0 0.0
        %7692 = vmatpush1.msra.mxu0 %v7149
        %7693 = vmatprep.subr.mxu0 0.0
        %7694 = vmatpush1.msra.mxu0 %v7150
        %7695 = vmatprep.subr.mxu0 0.0
        %7696 = vmatpush1.msra.mxu0 %v7151
        %7697 = vmatprep.subr.mxu0 0.0
        %7698 = vmatpush1.msra.mxu0 %v7152
        %7699 = vmatprep.subr.mxu0 0.0
        %7700 = vmatpush1.msra.mxu0 %v7153
        %7701 = vmatprep.subr.mxu0 0.0
        %7702 = vmatpush1.msra.mxu0 %v7154
        %7703 = vmatprep.subr.mxu0 0.0
        %7704 = vmatpush1.msra.mxu0 %v7155
        %7705 = vmatprep.subr.mxu0 0.0
        %7706 = vmatpush1.msra.mxu0 %v7156
        %7707 = vmatprep.subr.mxu0 0.0
        %7708 = vmatpush1.msra.mxu0 %v7157
        %7709 = vmatprep.subr.mxu0 0.0
        %7710 = vmatpush1.msra.mxu0 %v7158
        %7711 = vmatprep.subr.mxu0 0.0
        %7712 = vmatpush1.msra.mxu0 %v7159
        %7713 = vmatprep.subr.mxu0 0.0
        %7714 = vmatpush1.msra.mxu0 %v7160
        %7715 = vmatprep.mubr.f32.mxu0 %v6917
        %7716 = vmatmul.mubr.f32.gmra.mrb[0].mxu0 %v6916
        %v7717 = vpop.f32.mrb[0].mxu0
        %v7718 = vadd.f32 %v7643, %v7717
        %v7719 = vpop.f32.mrb[0].mxu0
        %7720 = vmatprep.mubr.f32.mxu0 %v6933
        %7721 = vmatmul.mubr.f32.gmra.mrb[0].mxu0 %v6932
        %v7722 = vpop.f32.mrb[0].mxu0
        %v7723 = vadd.f32 %v7648, %v7722
        %v7724 = vpop.f32.mrb[0].mxu0
        %7725 = vdwg.mxu0
        %7726 = vmatprep.subr.mxu0 0.0
        %7727 = vmatpush1.msra.mxu0 %v7161
        %7728 = vmatprep.subr.mxu0 0.0
        %7729 = vmatpush1.msra.mxu0 %v7162
        %7730 = vmatprep.subr.mxu0 0.0
        %7731 = vmatpush1.msra.mxu0 %v7163
        %7732 = vmatprep.subr.mxu0 0.0
        %7733 = vmatpush1.msra.mxu0 %v7164
        %7734 = vmatprep.subr.mxu0 0.0
        %7735 = vmatpush1.msra.mxu0 %v7165
        %7736 = vmatprep.subr.mxu0 0.0
        %7737 = vmatpush1.msra.mxu0 %v7166
        %7738 = vmatprep.subr.mxu0 0.0
        %7739 = vmatpush1.msra.mxu0 %v7167
        %7740 = vmatprep.subr.mxu0 0.0
        %7741 = vmatpush1.msra.mxu0 %v7168
        %7742 = vmatprep.subr.mxu0 0.0
        %7743 = vmatpush1.msra.mxu0 %v7169
        %7744 = vmatprep.subr.mxu0 0.0
        %7745 = vmatpush1.msra.mxu0 %v7170
        %7746 = vmatprep.subr.mxu0 0.0
        %7747 = vmatpush1.msra.mxu0 %v7171
        %7748 = vmatprep.subr.mxu0 0.0
        %7749 = vmatpush1.msra.mxu0 %v7172
        %7750 = vmatprep.subr.mxu0 0.0
        %7751 = vmatpush1.msra.mxu0 %v7173
        %7752 = vmatprep.subr.mxu0 0.0
        %7753 = vmatpush1.msra.mxu0 %v7174
        %7754 = vmatprep.subr.mxu0 0.0
        %7755 = vmatpush1.msra.mxu0 %v7175
        %7756 = vmatprep.subr.mxu0 0.0
        %7757 = vmatpush1.msra.mxu0 %v7176
        %7758 = vmatprep.subr.mxu0 0.0
        %7759 = vmatpush1.msra.mxu0 %v7177
        %7760 = vmatprep.subr.mxu0 0.0
        %7761 = vmatpush1.msra.mxu0 %v7178
        %7762 = vmatprep.subr.mxu0 0.0
        %7763 = vmatpush1.msra.mxu0 %v7179
        %7764 = vmatprep.subr.mxu0 0.0
        %7765 = vmatpush1.msra.mxu0 %v7180
        %7766 = vmatprep.subr.mxu0 0.0
        %7767 = vmatpush1.msra.mxu0 %v7181
        %7768 = vmatprep.subr.mxu0 0.0
        %7769 = vmatpush1.msra.mxu0 %v7182
        %7770 = vmatprep.subr.mxu0 0.0
        %7771 = vmatpush1.msra.mxu0 %v7183
        %7772 = vmatprep.subr.mxu0 0.0
        %7773 = vmatpush1.msra.mxu0 %v7184
        %7774 = vmatprep.subr.mxu0 0.0
        %7775 = vmatpush1.msra.mxu0 %v7185
        %7776 = vmatprep.subr.mxu0 0.0
        %7777 = vmatpush1.msra.mxu0 %v7186
        %7778 = vmatprep.subr.mxu0 0.0
        %7779 = vmatpush1.msra.mxu0 %v7187
        %7780 = vmatprep.subr.mxu0 0.0
        %7781 = vmatpush1.msra.mxu0 %v7188
        %7782 = vmatprep.subr.mxu0 0.0
        %7783 = vmatpush1.msra.mxu0 %v7189
        %7784 = vmatprep.subr.mxu0 0.0
        %7785 = vmatpush1.msra.mxu0 %v7190
        %7786 = vmatprep.subr.mxu0 0.0
        %7787 = vmatpush1.msra.mxu0 %v7191
        %7788 = vmatprep.subr.mxu0 0.0
        %7789 = vmatpush1.msra.mxu0 %v7192
        %7790 = vmatprep.mubr.f32.mxu0 %v6919
        %7791 = vmatmul.mubr.f32.gmra.mrb[0].mxu0 %v6918
        %v7792 = vpop.f32.mrb[0].mxu0
        %v7793 = vadd.f32 %v7718, %v7792
        %v7794 = vpop.f32.mrb[0].mxu0
        %7795 = vmatprep.mubr.f32.mxu0 %v6935
        %7796 = vmatmul.mubr.f32.gmra.mrb[0].mxu0 %v6934
        %v7797 = vpop.f32.mrb[0].mxu0
        %v7798 = vadd.f32 %v7723, %v7797
        %v7799 = vpop.f32.mrb[0].mxu0
        %7800 = vdwg.mxu0
        %v7801 = vadd.f32 %v6130, %v7793
        %v7802 = vadd.f32 %v6131, %v7798
        %v7803 = vsel %vm898, %v7801, 0.0
        %7804 = vadd.xlane.f32.xlu0 %v7803
        %v7805 = vpop.xlane.xlu0 %7804
        %v7806 = vsel %vm898, %v7802, 0.0
        %7807 = vadd.xlane.f32.xlu0 %v7806
        %v7808 = vpop.xlane.xlu0 %7807
        %v7809 = vmul.f32 %v7805, %v2612
        %v7810 = vmul.f32 %v7808, %v2612
        %v7811 = vsub.f32 %v7801, %v7809
        %v7812 = vsub.f32 %v7802, %v7810
        %v7813 = vmul.f32 %v7811, %v7811
        %v7814 = vmul.f32 %v7812, %v7812
        %v7815 = vsel %vm898, %v7813, 0.0
        %7816 = vadd.xlane.f32.xlu0 %v7815
        %v7817 = vpop.xlane.xlu0 %7816
        %v7818 = vsel %vm898, %v7814, 0.0
        %7819 = vadd.xlane.f32.xlu0 %v7818
        %v7820 = vpop.xlane.xlu0 %7819
        %v7821 = vmul.f32 %v7817, %v2612
        %v7822 = vmul.f32 %v7820, %v2612
        %v7823 = vadd.f32 %v7821, 1e-05
        %v7824 = vadd.f32 %v7822, 1e-05
        %v7825 = vrsqrt.pop %v7823
        %v7826 = vrsqrt.pop %v7824
        %v7827 = vmul.f32 %v7811, %v7825
        %v7828 = vmul.f32 %v7812, %v7826
        %s7829 = scalar_lea.vmem %s20, 1
        %v7830 = vld [vmem:[%s7829] sm:$0x1]
        %v7832 = vlaneseq
        %v7833 = vshrl.u32 %v7832, 7
        %v7834 = vsub.s32 0, %v7833
        %v7835 = vrot.slane %v7830, %v7834
        %v7837 = vmul.f32 %v7827, %v7835
        %v7838 = vmul.f32 %v7828, %v7835
        %s7839 = scalar_lea.vmem %s21, 1
        %v7840 = vld [vmem:[%s7839] sm:$0x1]
        %v7842 = vlaneseq
        %v7843 = vshrl.u32 %v7842, 7
        %v7844 = vsub.s32 0, %v7843
        %v7845 = vrot.slane %v7840, %v7844
        %v7847 = vadd.f32 %v7837, %v7845
        %v7848 = vadd.f32 %v7838, %v7845
        %v7849 = vld [vmem:[%s22] sm:$0xff]
        %v7850 = vld [vmem:[%s22 + $0x8] sm:$0xff]
        %v7851 = vld [vmem:[%s22 + $0x10] sm:$0xff]
        %v7852 = vld [vmem:[%s22 + $0x18] sm:$0xff]
        %v7853 = vld [vmem:[%s23] sm:$0x1]
        %v7855 = vlaneseq
        %v7856 = vshrl.u32 %v7855, 7
        %v7857 = vsub.s32 0, %v7856
        %v7858 = vrot.slane %v7853, %v7857
        %v7862 = vrot.slane %v7847, 7
        %v7863 = vrot.slane %v7848, 6
        %vm7864 = vcmask 1041409
        %v7865 = vsel %vm7864, %v7863, %v7862
        %v7866 = vsel %vm898, %v7865, 0
        %7868 = vmatprep.subr.mxu0 0.0
        %7869 = vmatpush1.msra.mxu0 %v7849
        %7870 = vmatprep.subr.mxu0 0.0
        %7871 = vmatpush1.msra.mxu0 %v7850
        %7872 = vmatprep.subr.mxu0 0.0
        %7873 = vmatpush1.msra.mxu0 %v7851
        %7874 = vmatprep.subr.mxu0 0.0
        %7875 = vmatpush1.msra.mxu0 %v7852
        %7876 = vmatprep.subr.mxu0 0.0
        %7877 = vmatpush1.msra.mxu0 0.0
        %7878 = vmatprep.subr.mxu0 0.0
        %7879 = vmatpush1.msra.mxu0 0.0
        %7880 = vmatprep.subr.mxu0 0.0
        %7881 = vmatpush1.msra.mxu0 0.0
        %7882 = vmatprep.subr.mxu0 0.0
        %7883 = vmatpush1.msra.mxu0 0.0
        %7884 = vmatprep.subr.mxu0 0.0
        %7885 = vmatpush1.msra.mxu0 0.0
        %7886 = vmatprep.subr.mxu0 0.0
        %7887 = vmatpush1.msra.mxu0 0.0
        %7888 = vmatprep.subr.mxu0 0.0
        %7889 = vmatpush1.msra.mxu0 0.0
        %7890 = vmatprep.subr.mxu0 0.0
        %7891 = vmatpush1.msra.mxu0 0.0
        %7892 = vmatprep.subr.mxu0 0.0
        %7893 = vmatpush1.msra.mxu0 0.0
        %7894 = vmatprep.subr.mxu0 0.0
        %7895 = vmatpush1.msra.mxu0 0.0
        %7896 = vmatprep.subr.mxu0 0.0
        %7897 = vmatpush1.msra.mxu0 0.0
        %7898 = vmatprep.subr.mxu0 0.0
        %7899 = vmatpush1.msra.mxu0 0.0
        %7900 = vmatprep.subr.mxu0 0.0
        %7901 = vmatpush1.msra.mxu0 0.0
        %7902 = vmatprep.subr.mxu0 0.0
        %7903 = vmatpush1.msra.mxu0 0.0
        %7904 = vmatprep.subr.mxu0 0.0
        %7905 = vmatpush1.msra.mxu0 0.0
        %7906 = vmatprep.subr.mxu0 0.0
        %7907 = vmatpush1.msra.mxu0 0.0
        %7908 = vmatprep.subr.mxu0 0.0
        %7909 = vmatpush1.msra.mxu0 0.0
        %7910 = vmatprep.subr.mxu0 0.0
        %7911 = vmatpush1.msra.mxu0 0.0
        %7912 = vmatprep.subr.mxu0 0.0
        %7913 = vmatpush1.msra.mxu0 0.0
        %7914 = vmatprep.subr.mxu0 0.0
        %7915 = vmatpush1.msra.mxu0 0.0
        %7916 = vmatprep.subr.mxu0 0.0
        %7917 = vmatpush1.msra.mxu0 0.0
        %7918 = vmatprep.subr.mxu0 0.0
        %7919 = vmatpush1.msra.mxu0 0.0
        %7920 = vmatprep.subr.mxu0 0.0
        %7921 = vmatpush1.msra.mxu0 0.0
        %7922 = vmatprep.subr.mxu0 0.0
        %7923 = vmatpush1.msra.mxu0 0.0
        %7924 = vmatprep.subr.mxu0 0.0
        %7925 = vmatpush1.msra.mxu0 0.0
        %7926 = vmatprep.subr.mxu0 0.0
        %7927 = vmatpush1.msra.mxu0 0.0
        %7928 = vmatprep.subr.mxu0 0.0
        %7929 = vmatpush1.msra.mxu0 0.0
        %7930 = vmatprep.subr.mxu0 0.0
        %7931 = vmatpush1.msra.mxu0 0.0
        %7932 = vmatprep.mubr.f32.mxu0 0.0
        %7933 = vmatmul.mubr.f32.gmra.mrb[0].mxu0 %v7866
        %v7934 = vpop.f32.mrb[0].mxu0
        %v7935 = vadd.f32 %v7858, %v7934
        %v7936 = vpop.f32.mrb[0].mxu0
        %7937 = vdwg.mxu0
        %v7938 = vld [vmem:[%s774] sm:$0x1]
        %v7939 = vld [vmem:[%s774 + $0x1] sm:$0x1]
        %7941 = vset.pattern.permute.xlu0 0
        %7942 = vperm.xlu0 %7941, %v7938
        %v7943 = vpop.permute.xlu0 %7942
        %v7945 = vlaneseq
        %v7946 = vshrl.u32 %v7945, 7
        %v7947 = vsub.s32 0, %v7946
        %v7948 = vrot.slane %v7943, %v7947
        %7950 = vset.pattern.permute.xlu0 0
        %7951 = vperm.xlu0 %7950, %v7939
        %v7952 = vpop.permute.xlu0 %7951
        %v7954 = vlaneseq
        %v7955 = vshrl.u32 %v7954, 7
        %v7956 = vsub.s32 0, %v7955
        %v7957 = vrot.slane %v7952, %v7956
        %v7960 = vcombine.low %v7948, %v7957
        %v7962 = vunpack.c.l.s4 1966171168
        %v7963 = vunpack.c.0.s8 %v7962
        %v7964 = vlaneseq
        %v7965 = vshrl.u32 %v7964, 7
        %v7966 = vsub.s32 %v7963, %v7965
        %v7967 = vrot.slane %v7960, %v7966
        %v7969 = vunpack.c.l.s4 1966171168
        %v7970 = vunpack.c.0.s8 %v7969
        %v7971 = vlaneseq
        %v7972 = vshrl.u32 %v7971, 7
        %v7973 = vsub.s32 %v7970, %v7972
        %v7974 = vrot.slane %v7967, %v7973
        %v7976 = vmul.f32 %v7935, %v7974
        %v7979 = vunpack.c.l.s4 1966171168
        %v7980 = vunpack.c.0.s8 %v7979
        %v7981 = vlaneseq
        %v7982 = vshrl.u32 %v7981, 7
        %v7983 = vsub.s32 %v7980, %v7982
        %v7984 = vrot.slane %v7976, %v7983
        %v7985 = vcombine.high %v7984, %v7984
        %v7987 = vunpack.c.l.s4 1966171168
        %v7988 = vunpack.c.0.s8 %v7987
        %v7989 = vlaneseq
        %v7990 = vshrl.u32 %v7989, 7
        %v7991 = vsub.s32 %v7988, %v7990
        %v7992 = vrot.slane %v7984, %v7991
        %v7994 = vunpack.c.l.s4 1966171168
        %v7995 = vunpack.c.0.s8 %v7994
        %v7996 = vlaneseq
        %v7997 = vshrl.u32 %v7996, 7
        %v7998 = vsub.s32 %v7995, %v7997
        %v7999 = vrot.slane %v7985, %v7998
        %vm8002 = vcmask 253952
        %8003 = vst.msk [vmem:[%s759] sm:$0x1] %vm8002, %v7992
        %8004 = vst.msk [vmem:[%s759 + $0x1] sm:$0x1] %vm8002, %v7999
        %s8005 = sand.u32 %s565, 1
        %s8006 = scalar_lea.sflag [#allocation3], %s8005
        %s8007 = sand.u32 %s565, 1
        %s8008 = smul.addr %s8007, 2
        %s8009 = scalar_lea.vmem [#allocation2], %s8008
        // Predicated region
        $region117: #{tpu_custom_call.1} parent=115 // pred_check
          %p8010 = pneg %p575
        $region118: #{tpu_custom_call.1} parent=115 // pred_check_branch
          %8012 = sbr.rel (%p8010) target = $region120
        $region119: #{tpu_custom_call.1} parent=115 // pred_region
          %s8013 = smul.u32 2, %s38
          %s8015 = ssub.s32 32, 32
          %8016 = vsyncadd %s8006, %s8015
          %s8017 = smul.addr %s8013, 16
          %s8018 = scalar_lea.hbm %s24, %s8017
          %s8019 = sshll.u32 %s8009, 4
          %s8020 = int_to_ptr.vmem [resolvable:$true] %s8019
          %8025 = dma.vmem_to_hbm [thread:$0]  %s8020, 32, %s8018, %s8006, 16, 16, 1
        $region120: #{tpu_custom_call.1} parent=115 // pred_fallthru
          _
      $region116: #{tpu_custom_call.1} parent=5 // pred_fallthru
        _
      %p8026 = scmp.le.s32.totalorder 2, %s33
      // Predicated region
      $region121: #{tpu_custom_call.1} parent=5 // pred_check
        %p8027 = pneg %p8026
      $region122: #{tpu_custom_call.1} parent=5 // pred_check_branch
        %8029 = sbr.rel (%p8027) target = $region124
      $region123: #{tpu_custom_call.1} parent=5 // pred_region
        %s8030 = ssub.s32 %s33, 2
        // Predicated region
        $region125: #{tpu_custom_call.1} parent=123 // pred_check
          %p8031 = pneg %p581
        $region126: #{tpu_custom_call.1} parent=123 // pred_check_branch
          %8033 = sbr.rel (%p8031) target = $region128
        $region127: #{tpu_custom_call.1} parent=123 // pred_region
          %s8034 = sand.u32 %s566, 1
          %s8035 = scalar_lea.sflag [#allocation3], %s8034
          %s8036 = sand.u32 %s566, 1
          %s8037 = smul.addr %s8036, 2
          %s8038 = scalar_lea.vmem [#allocation2], %s8037
          %8039 = dma.done %s8035, 32
        $region128: #{tpu_custom_call.1} parent=123 // pred_fallthru
          _
      $region124: #{tpu_custom_call.1} parent=5 // pred_fallthru
        _
    $region6: #{tpu_custom_call.1} parent=1 // loop_footer
      %s37 = sadd.s32 1, %s33
    $region7: #{tpu_custom_call.1} parent=1 // loop_footer_branch
      %32 = sbr.rel target = $region3
    $region8: #{tpu_custom_call.1} parent=1 // loop_exit
      _
    %8040 = vsyncpa [#allocation3], 1
    %s8041 = scalar_lea.sflag [#allocation3], 1
    %8042 = vsyncpa %s8041, 1

</llo_original>
